<compile_context>
chip_gen: v5e
topology: v5e:2x2
jax: 0.10.0
libtpu: 0.0.40
codegen_flags: <defaults>
</compile_context>

<pallas_src>
import math

import numpy as np

import jax
import jax.numpy as jnp
from jax.experimental import pallas as pl
from jax.experimental.pallas import tpu as pltpu

# ----- hyper-parameters (the `args` dict of MnistModel, small demo sizes) -----
B = 2            # batch
IMG = 8          # image side  -> x is (B, 1, 8, 8), 64 pixels
DIN = 8          # input_size
H = 32           # hidden_size
U = 4            # num_units (RIMs)
K_TOP = 2        # k (active units per step)
NH_IN = 2        # num_input_heads
KS_IN = 16       # key_size_input
QS_IN = 16       # query_size_input (== key size so per-head dots concat-fold)
VS_IN = 16       # value_size_input
NH_C = 2         # comm heads (ctor passes num_input_heads)
KS_C = 16        # key_size_comm
QS_C = 16        # query_size_comm
VS_C = H         # value_size_comm == hidden_size (needed for residual add)
NOUT = 10        # MNIST classes
NOUT_PAD = 128   # lane-dense padded output width

N_CHUNKS = (IMG * IMG) // DIN      # 8 splits of the flattened image
T_STEPS = N_CHUNKS - 1             # reference iterates xs[:-1] -> 7 RIM steps
UH = U * H                         # 128
UV = U * VS_IN                     # 64

PACKED_NAMES = ["a_sx", "b_sx", "a_c", "b_c", "a_v", "b_v",
                "w_null", "b_null", "sseg", "e_v", "e_vn", "e_h",
                "w_i", "w_h", "wq_c", "wk_c", "wv_c", "wo_c",
                "w_out", "b_out"]


# ============================== kernel ======================================
def rim_mnist_kernel(x_ref, hs0_ref, cs0_ref,
                     a_sx_ref, b_sx_ref, a_c_ref, b_c_ref, a_v_ref, b_v_ref,
                     w_null_ref, b_null_ref, sseg_ref,
                     e_v_ref, e_vn_ref, e_h_ref,
                     w_i_ref, w_h_ref,
                     wq_c_ref, wk_c_ref, wv_c_ref, wo_c_ref,
                     w_out_ref, b_out_ref,
                     out_ref):
    f32 = jnp.float32
    x_all = x_ref[...]                                   # (T*B, DIN), rows (t, b)

    # ---- hoist all per-timestep input projections out of the recurrence ----
    # wqk_all[row, u*H+m] = (Wq @ k_x)[m] / (NH*sqrt(KS)), tiled over units
    wqk_all = jnp.dot(x_all, a_sx_ref[...], preferred_element_type=f32) + b_sx_ref[...]
    # cbias_all[row, u]   = bq . k_x / (NH*sqrt(KS))   (same value in all U cols)
    cbias_all = jnp.dot(x_all, a_c_ref[...], preferred_element_type=f32) + b_c_ref[...]
    # vx_all[row, u*VS+j] = mean_over_heads value(x_t)[j], tiled over units
    vx_all = jnp.dot(x_all, a_v_ref[...], preferred_element_type=f32) + b_v_ref[...]

    # weights, loaded once
    w_null = w_null_ref[...]
    b_null = b_null_ref[...]
    sseg = sseg_ref[...]
    e_v = e_v_ref[...]
    e_vn = e_vn_ref[...]
    e_h = e_h_ref[...]
    w_i = w_i_ref[...]
    w_h = w_h_ref[...]
    wq_c = wq_c_ref[...]
    wk_c = wk_c_ref[...]
    wv_c = wv_c_ref[...]
    wo_c = wo_c_ref[...]

    hs = hs0_ref[...]                                    # (B, U*H) lane-dense state
    cs = cs0_ref[...]                                    # (B, U*H)

    inv_c = 1.0 / math.sqrt(KS_C)

    for t in range(T_STEPS):                             # tiny trip count: unroll fully
        r0, r1 = t * B, (t + 1) * B
        wqk_t = wqk_all[r0:r1, :]                        # (B, U*H)
        vx_t = vx_all[r0:r1, :]                          # (B, U*VS)
        cb_t = cbias_all[r0:r1, :]                       # (B, U)

        # -------- input attention scores (head mean folded into weights) ----
        s_x = jnp.dot(hs * wqk_t, sseg, preferred_element_type=f32) + cb_t     # (B, U)
        s_n = jnp.dot(hs, w_null, preferred_element_type=f32) + b_null         # (B, U)

        # -------- top-k unit selection (first-index tie break) --------------
        su = s_x[:, :, None]
        sj = s_x[:, None, :]
        iu = jax.lax.broadcasted_iota(jnp.int32, (B, U, U), 1)
        ij = jax.lax.broadcasted_iota(jnp.int32, (B, U, U), 2)
        before = (sj > su) | ((sj == su) & (ij < iu))
        rank = jnp.sum(before.astype(jnp.int32), axis=2)
        mask = (rank < K_TOP).astype(f32)                                       # (B, U)

        # softmax over the two slots {x_t, null} == sigmoid of score difference
        p0 = jax.nn.sigmoid(s_x - s_n)
        a0 = mask * p0
        a1 = mask * (1.0 - p0)
        # LSTM input, flattened (B, U*VS); null-value contribution carried by e_vn
        inp = (jnp.dot(a0, e_v, preferred_element_type=f32) * vx_t
               + jnp.dot(a1, e_vn, preferred_element_type=f32))

        # -------- per-unit LSTM: block-diag, gate-major [i|f|o|g] ------------
        pre = (jnp.dot(inp, w_i, preferred_element_type=f32)
               + jnp.dot(hs, w_h, preferred_element_type=f32))                  # (B, 4*U*H)
        i_t = jax.nn.sigmoid(pre[:, 0 * UH:1 * UH])
        f_t = jax.nn.sigmoid(pre[:, 1 * UH:2 * UH])
        o_t = jax.nn.sigmoid(pre[:, 2 * UH:3 * UH])
        g_t = jnp.tanh(pre[:, 3 * UH:4 * UH])
        c_new = cs * f_t + i_t * g_t
        h_new = o_t * jnp.tanh(c_new)                                           # (B, U*H)

        # -------- communication attention (per-head block-diag weights) -----
        ctx = jnp.zeros((B, UH), f32)
        for h in range(NH_C):
            qh = jnp.dot(h_new, wq_c[h], preferred_element_type=f32).reshape(B, U, QS_C)
            kh = jnp.dot(h_new, wk_c[h], preferred_element_type=f32).reshape(B, U, KS_C)
            vh = jnp.dot(h_new, wv_c[h], preferred_element_type=f32).reshape(B, U, VS_C)
            att = jnp.einsum('buq,bvq->buv', qh, kh,
                             preferred_element_type=f32) * inv_c
            att = jax.nn.softmax(att, axis=-1)
            # NOTE: the reference multiplies att by the query-side top-k mask here;
            # omitted because masked query rows only affect their own unit's output,
            # which the final gate overwrites with h_old (forward-identical).
            ch = jnp.einsum('buv,bvd->bud', att, vh,
                            preferred_element_type=f32).reshape(B, UH)
            ctx = ctx + jnp.dot(ch, wo_c[h], preferred_element_type=f32)
        h_comm = ctx + h_new                                                    # residual

        # -------- gate inactive units back to previous state -----------------
        m128 = jnp.dot(mask, e_h, preferred_element_type=f32)                   # (B, U*H)
        hs = m128 * h_comm + (1.0 - m128) * hs
        cs = m128 * c_new + (1.0 - m128) * cs

    # -------- final Linear, padded to 128 lanes for a dense store -----------
    out_ref[...] = jnp.dot(hs, w_out_ref[...], preferred_element_type=f32) + b_out_ref[...]


# ============================ param handling ================================
def make_params(key):
    """Raw parameters mirroring RIMCell + the final nn.Linear."""
    ks = jax.random.split(key, 14)
    r = lambda k, shape, s=0.1: (s * jax.random.normal(k, shape)).astype(jnp.float32)
    return {
        "wk": r(ks[0], (DIN, NH_IN * KS_IN)), "bk": r(ks[1], (NH_IN * KS_IN,), 0.02),
        "wv": r(ks[2], (DIN, NH_IN * VS_IN)), "bv": r(ks[3], (NH_IN * VS_IN,), 0.02),
        "wq": r(ks[4], (H, NH_IN * QS_IN)),   "bq": r(ks[5], (NH_IN * QS_IN,), 0.02),
        "wi": r(ks[6], (U, VS_IN, 4 * H)),    "wh": r(ks[7], (U, H, 4 * H)),
        "wqc": r(ks[8], (U, H, NH_C * QS_C)), "wkc": r(ks[9], (U, H, NH_C * KS_C)),
        "wvc": r(ks[10], (U, H, NH_C * VS_C)), "wco": r(ks[11], (U, NH_C * VS_C, VS_C)),
        "wlin": r(ks[12], (U * H, NOUT)),     "blin": r(ks[13], (NOUT,), 0.02),
    }


def pack_params(p):
    """Host-side exact algebraic repack: block-diagonal / gate-major / head-major
    weights, folded null-input biases, folded head-mean & score scaling."""
    f = lambda a: np.asarray(a, np.float32)
    Wk, bk = f(p["wk"]), f(p["bk"])
    Wv, bv = f(p["wv"]), f(p["bv"])
    Wq, bq = f(p["wq"]), f(p["bq"])
    Wi, Wh = f(p["wi"]), f(p["wh"])
    Wqc, Wkc, Wvc, Wco = f(p["wqc"]), f(p["wkc"]), f(p["wvc"]), f(p["wco"])
    Wlin, blin = f(p["wlin"]), f(p["blin"])

    inv = 1.0 / (NH_IN * math.sqrt(KS_IN))       # mean-over-heads + /sqrt(key_size)

    # score_x projection of x (per unit it contracts with hs):  tiled across units
    a_sx_u = (Wk @ Wq.T) * inv                   # (DIN, H)
    b_sx_u = (bk @ Wq.T) * inv                   # (H,)
    a_sx = np.tile(a_sx_u, (1, U))               # (DIN, U*H)
    b_sx = np.tile(b_sx_u, U)[None, :]           # (1, U*H)

    # score_x bias term  bq . k_x  (replicated into U columns)
    a_c = np.tile(((Wk @ bq) * inv)[:, None], (1, U))           # (DIN, U)
    b_c = np.full((1, U), float(bq @ bk) * inv, np.float32)

    # null-input score:  hs_u . (Wq @ bk) + bq . bk   (block-diagonal columns)
    wq_bk = (Wq @ bk) * inv                                     # (H,)
    w_null = np.zeros((UH, U), np.float32)
    sseg = np.zeros((UH, U), np.float32)                        # per-unit segment sum
    for u in range(U):
        w_null[u * H:(u + 1) * H, u] = wq_bk
        sseg[u * H:(u + 1) * H, u] = 1.0
    b_null = np.full((1, U), float(bq @ bk) * inv, np.float32)

    # head-averaged value projection (Linear of zero row == bias), tiled over units
    Wv_mean = Wv.reshape(DIN, NH_IN, VS_IN).mean(axis=1)        # (DIN, VS)
    bv_mean = bv.reshape(NH_IN, VS_IN).mean(axis=0)             # (VS,)
    a_v = np.tile(Wv_mean, (1, U))                              # (DIN, U*VS)
    b_v = np.tile(bv_mean, U)[None, :]                          # (1, U*VS)

    # expansion matrices  (B,U) -> (B,U*VS) / (B,U*H)
    e_v = np.zeros((U, UV), np.float32)
    e_vn = np.zeros((U, UV), np.float32)                        # carries null value
    e_h = np.zeros((U, UH), np.float32)
    for u in range(U):
        e_v[u, u * VS_IN:(u + 1) * VS_IN] = 1.0
        e_vn[u, u * VS_IN:(u + 1) * VS_IN] = bv_mean
        e_h[u, u * H:(u + 1) * H] = 1.0

    # block-diagonal LSTM weights, gate-major output columns [i | f | o | g]
    w_i = np.zeros((UV, 4 * UH), np.float32)
    w_h = np.zeros((UH, 4 * UH), np.float32)
    for g in range(4):
        for u in range(U):
            cols = slice(g * UH + u * H, g * UH + (u + 1) * H)
            w_i[u * VS_IN:(u + 1) * VS_IN, cols] = Wi[u, :, g * H:(g + 1) * H]
            w_h[u * H:(u + 1) * H, cols] = Wh[u, :, g * H:(g + 1) * H]

    # per-head block-diagonal communication-attention weights
    wq_c = np.zeros((NH_C, UH, U * QS_C), np.float32)
    wk_c = np.zeros((NH_C, UH, U * KS_C), np.float32)
    wv_c = np.zeros((NH_C, UH, U * VS_C), np.float32)
    wo_c = np.zeros((NH_C, U * VS_C, UH), np.float32)
    for h in range(NH_C):
        for u in range(U):
            wq_c[h, u * H:(u + 1) * H, u * QS_C:(u + 1) * QS_C] = Wqc[u, :, h * QS_C:(h + 1) * QS_C]
            wk_c[h, u * H:(u + 1) * H, u * KS_C:(u + 1) * KS_C] = Wkc[u, :, h * KS_C:(h + 1) * KS_C]
            wv_c[h, u * H:(u + 1) * H, u * VS_C:(u + 1) * VS_C] = Wvc[u, :, h * VS_C:(h + 1) * VS_C]
            wo_c[h, u * VS_C:(u + 1) * VS_C, u * H:(u + 1) * H] = Wco[u, h * VS_C:(h + 1) * VS_C, :]

    # final Linear padded to a lane-dense 128-wide output
    w_out = np.zeros((UH, NOUT_PAD), np.float32)
    w_out[:, :NOUT] = Wlin
    b_out = np.zeros((1, NOUT_PAD), np.float32)
    b_out[0, :NOUT] = blin

    packed = dict(a_sx=a_sx, b_sx=b_sx, a_c=a_c, b_c=b_c, a_v=a_v, b_v=b_v,
                  w_null=w_null, b_null=b_null, sseg=sseg,
                  e_v=e_v, e_vn=e_vn, e_h=e_h, w_i=w_i, w_h=w_h,
                  wq_c=wq_c, wk_c=wk_c, wv_c=wv_c, wo_c=wo_c,
                  w_out=w_out, b_out=b_out)
    return {k: jnp.asarray(v) for k, v in packed.items()}


# ============================== wrapper =====================================
def _full_spec(a):
    nd = a.ndim
    return pl.BlockSpec(a.shape, lambda i, _nd=nd: (0,) * _nd)


@jax.jit
def mnist_forward(x, hs0, cs0, packed):
    x = x.astype(jnp.float32)
    bsz = x.shape[0]
    x_flat = x.reshape(bsz, -1)
    # chunks of input_size; reference loops over all splits but the last one
    x_steps = x_flat[:, :T_STEPS * DIN].reshape(bsz, T_STEPS, DIN)
    x_all = x_steps.transpose(1, 0, 2).reshape(T_STEPS * bsz, DIN)   # rows (t, b)

    hs_flat = hs0.astype(jnp.float32).reshape(bsz, UH)
    cs_flat = cs0.astype(jnp.float32).reshape(bsz, UH)

    args = (x_all, hs_flat, cs_flat) + tuple(packed[n] for n in PACKED_NAMES)

    out = pl.pallas_call(
        rim_mnist_kernel,
        out_shape=jax.ShapeDtypeStruct((bsz, NOUT_PAD), jnp.float32),
        grid=(1,),                                    # single invocation; T unrolled inside
        in_specs=[_full_spec(a) for a in args],
        out_specs=pl.BlockSpec((bsz, NOUT_PAD), lambda i: (0, 0)),
        compiler_params=pltpu.CompilerParams(dimension_semantics=("arbitrary",)),
    )(*args)
    return out[:, :NOUT]


# ================================ main ======================================
if __name__ == "__main__":
    root = jax.random.PRNGKey(0)
    kx, kh, kc, kp = jax.random.split(root, 4)

    # small MNIST-like image, flattened to 64 pixels inside the wrapper
    x = jax.random.uniform(kx, (B, 1, IMG, IMG), dtype=jnp.float32)
    # hs / cs ~ randn, as in the torch forward (made deterministic here)
    hs0 = jax.random.normal(kh, (B, U, H), dtype=jnp.float32)
    cs0 = jax.random.normal(kc, (B, U, H), dtype=jnp.float32)

    raw_params = make_params(kp)
    packed = pack_params(raw_params)

    preds = mnist_forward(x, hs0, cs0, packed)
    preds = jax.block_until_ready(preds)

    assert preds.shape == (B, NOUT), preds.shape
    assert bool(jnp.all(jnp.isfinite(preds)))
    print("KERNEL_OK")
</pallas_src>

<mosaic_0001>
module attributes {stable_mosaic.version = 11 : i64} {
  func.func @rim_mnist_kernel(%arg0: i32, %arg1: memref<14x8xf32, #tpu.memory_space<vmem>>, %arg2: memref<2x128xf32, #tpu.memory_space<vmem>>, %arg3: memref<2x128xf32, #tpu.memory_space<vmem>>, %arg4: memref<8x128xf32, #tpu.memory_space<vmem>>, %arg5: memref<1x128xf32, #tpu.memory_space<vmem>>, %arg6: memref<8x4xf32, #tpu.memory_space<vmem>>, %arg7: memref<1x4xf32, #tpu.memory_space<vmem>>, %arg8: memref<8x64xf32, #tpu.memory_space<vmem>>, %arg9: memref<1x64xf32, #tpu.memory_space<vmem>>, %arg10: memref<128x4xf32, #tpu.memory_space<vmem>>, %arg11: memref<1x4xf32, #tpu.memory_space<vmem>>, %arg12: memref<128x4xf32, #tpu.memory_space<vmem>>, %arg13: memref<4x64xf32, #tpu.memory_space<vmem>>, %arg14: memref<4x64xf32, #tpu.memory_space<vmem>>, %arg15: memref<4x128xf32, #tpu.memory_space<vmem>>, %arg16: memref<64x512xf32, #tpu.memory_space<vmem>>, %arg17: memref<128x512xf32, #tpu.memory_space<vmem>>, %arg18: memref<2x128x64xf32, #tpu.memory_space<vmem>>, %arg19: memref<2x128x64xf32, #tpu.memory_space<vmem>>, %arg20: memref<2x128x128xf32, #tpu.memory_space<vmem>>, %arg21: memref<2x128x128xf32, #tpu.memory_space<vmem>>, %arg22: memref<128x128xf32, #tpu.memory_space<vmem>>, %arg23: memref<1x128xf32, #tpu.memory_space<vmem>>, %arg24: memref<2x128xf32, #tpu.memory_space<vmem>>) attributes {dimension_semantics = [#tpu.dimension_semantics<arbitrary>], iteration_bounds = array<i64: 1>, scalar_prefetch = 0 : i64, scratch_operands = 0 : i64, tpu.core_type = #tpu.core_type<tc>, window_params = [{pipeline_mode = #tpu.pipeline_mode<synchronous>, transform_indices = @transform_0, window_bounds = array<i64: 14, 8>}, {pipeline_mode = #tpu.pipeline_mode<synchronous>, transform_indices = @transform_1, window_bounds = array<i64: 2, 128>}, {pipeline_mode = #tpu.pipeline_mode<synchronous>, transform_indices = @transform_2, window_bounds = array<i64: 2, 128>}, {pipeline_mode = #tpu.pipeline_mode<synchronous>, transform_indices = @transform_3, window_bounds = array<i64: 8, 128>}, {pipeline_mode = #tpu.pipeline_mode<synchronous>, transform_indices = @transform_4, window_bounds = array<i64: 1, 128>}, {pipeline_mode = #tpu.pipeline_mode<synchronous>, transform_indices = @transform_5, window_bounds = array<i64: 8, 4>}, {pipeline_mode = #tpu.pipeline_mode<synchronous>, transform_indices = @transform_6, window_bounds = array<i64: 1, 4>}, {pipeline_mode = #tpu.pipeline_mode<synchronous>, transform_indices = @transform_7, window_bounds = array<i64: 8, 64>}, {pipeline_mode = #tpu.pipeline_mode<synchronous>, transform_indices = @transform_8, window_bounds = array<i64: 1, 64>}, {pipeline_mode = #tpu.pipeline_mode<synchronous>, transform_indices = @transform_9, window_bounds = array<i64: 128, 4>}, {pipeline_mode = #tpu.pipeline_mode<synchronous>, transform_indices = @transform_10, window_bounds = array<i64: 1, 4>}, {pipeline_mode = #tpu.pipeline_mode<synchronous>, transform_indices = @transform_11, window_bounds = array<i64: 128, 4>}, {pipeline_mode = #tpu.pipeline_mode<synchronous>, transform_indices = @transform_12, window_bounds = array<i64: 4, 64>}, {pipeline_mode = #tpu.pipeline_mode<synchronous>, transform_indices = @transform_13, window_bounds = array<i64: 4, 64>}, {pipeline_mode = #tpu.pipeline_mode<synchronous>, transform_indices = @transform_14, window_bounds = array<i64: 4, 128>}, {pipeline_mode = #tpu.pipeline_mode<synchronous>, transform_indices = @transform_15, window_bounds = array<i64: 64, 512>}, {pipeline_mode = #tpu.pipeline_mode<synchronous>, transform_indices = @transform_16, window_bounds = array<i64: 128, 512>}, {pipeline_mode = #tpu.pipeline_mode<synchronous>, transform_indices = @transform_17, window_bounds = array<i64: 2, 128, 64>}, {pipeline_mode = #tpu.pipeline_mode<synchronous>, transform_indices = @transform_18, window_bounds = array<i64: 2, 128, 64>}, {pipeline_mode = #tpu.pipeline_mode<synchronous>, transform_indices = @transform_19, window_bounds = array<i64: 2, 128, 128>}, {pipeline_mode = #tpu.pipeline_mode<synchronous>, transform_indices = @transform_20, window_bounds = array<i64: 2, 128, 128>}, {pipeline_mode = #tpu.pipeline_mode<synchronous>, transform_indices = @transform_21, window_bounds = array<i64: 128, 128>}, {pipeline_mode = #tpu.pipeline_mode<synchronous>, transform_indices = @transform_22, window_bounds = array<i64: 1, 128>}, {pipeline_mode = #tpu.pipeline_mode<synchronous>, transform_indices = @transform_23, window_bounds = array<i64: 2, 128>}]} {
    %c0 = arith.constant 0 : index
    %c0_0 = arith.constant 0 : index
    %0 = vector.load %arg1[%c0, %c0_0] : memref<14x8xf32, #tpu.memory_space<vmem>>, vector<14x8xf32>
    %c0_1 = arith.constant 0 : index
    %c0_2 = arith.constant 0 : index
    %1 = vector.load %arg4[%c0_1, %c0_2] : memref<8x128xf32, #tpu.memory_space<vmem>>, vector<8x128xf32>
    %cst = arith.constant dense<0.000000e+00> : vector<14x128xf32>
    %2 = tpu.matmul %0, %1, %cst {dimension_numbers = #tpu.dot_dimension_numbers<[1], [0], [0], [1], [0, 0, 1, 1], [], []>} : vector<14x8xf32>, vector<8x128xf32>, vector<14x128xf32> -> vector<14x128xf32>
    %c0_3 = arith.constant 0 : index
    %c0_4 = arith.constant 0 : index
    %3 = vector.load %arg5[%c0_3, %c0_4] : memref<1x128xf32, #tpu.memory_space<vmem>>, vector<1x128xf32>
    %4 = vector.broadcast %3 : vector<1x128xf32> to vector<14x128xf32>
    %5 = arith.addf %2, %4 : vector<14x128xf32>
    %c0_5 = arith.constant 0 : index
    %c0_6 = arith.constant 0 : index
    %6 = vector.load %arg6[%c0_5, %c0_6] : memref<8x4xf32, #tpu.memory_space<vmem>>, vector<8x4xf32>
    %cst_7 = arith.constant dense<0.000000e+00> : vector<14x4xf32>
    %7 = tpu.matmul %0, %6, %cst_7 {dimension_numbers = #tpu.dot_dimension_numbers<[1], [0], [0], [1], [0, 0, 1, 1], [], []>} : vector<14x8xf32>, vector<8x4xf32>, vector<14x4xf32> -> vector<14x4xf32>
    %c0_8 = arith.constant 0 : index
    %c0_9 = arith.constant 0 : index
    %8 = vector.load %arg7[%c0_8, %c0_9] : memref<1x4xf32, #tpu.memory_space<vmem>>, vector<1x4xf32>
    %9 = vector.broadcast %8 : vector<1x4xf32> to vector<14x4xf32>
    %10 = arith.addf %7, %9 : vector<14x4xf32>
    %c0_10 = arith.constant 0 : index
    %c0_11 = arith.constant 0 : index
    %11 = vector.load %arg8[%c0_10, %c0_11] : memref<8x64xf32, #tpu.memory_space<vmem>>, vector<8x64xf32>
    %cst_12 = arith.constant dense<0.000000e+00> : vector<14x64xf32>
    %12 = tpu.matmul %0, %11, %cst_12 {dimension_numbers = #tpu.dot_dimension_numbers<[1], [0], [0], [1], [0, 0, 1, 1], [], []>} : vector<14x8xf32>, vector<8x64xf32>, vector<14x64xf32> -> vector<14x64xf32>
    %c0_13 = arith.constant 0 : index
    %c0_14 = arith.constant 0 : index
    %13 = vector.load %arg9[%c0_13, %c0_14] : memref<1x64xf32, #tpu.memory_space<vmem>>, vector<1x64xf32>
    %14 = vector.broadcast %13 : vector<1x64xf32> to vector<14x64xf32>
    %15 = arith.addf %12, %14 : vector<14x64xf32>
    %c0_15 = arith.constant 0 : index
    %c0_16 = arith.constant 0 : index
    %16 = vector.load %arg10[%c0_15, %c0_16] : memref<128x4xf32, #tpu.memory_space<vmem>>, vector<128x4xf32>
    %c0_17 = arith.constant 0 : index
    %c0_18 = arith.constant 0 : index
    %17 = vector.load %arg11[%c0_17, %c0_18] : memref<1x4xf32, #tpu.memory_space<vmem>>, vector<1x4xf32>
    %c0_19 = arith.constant 0 : index
    %c0_20 = arith.constant 0 : index
    %18 = vector.load %arg12[%c0_19, %c0_20] : memref<128x4xf32, #tpu.memory_space<vmem>>, vector<128x4xf32>
    %c0_21 = arith.constant 0 : index
    %c0_22 = arith.constant 0 : index
    %19 = vector.load %arg13[%c0_21, %c0_22] : memref<4x64xf32, #tpu.memory_space<vmem>>, vector<4x64xf32>
    %c0_23 = arith.constant 0 : index
    %c0_24 = arith.constant 0 : index
    %20 = vector.load %arg14[%c0_23, %c0_24] : memref<4x64xf32, #tpu.memory_space<vmem>>, vector<4x64xf32>
    %c0_25 = arith.constant 0 : index
    %c0_26 = arith.constant 0 : index
    %21 = vector.load %arg15[%c0_25, %c0_26] : memref<4x128xf32, #tpu.memory_space<vmem>>, vector<4x128xf32>
    %c0_27 = arith.constant 0 : index
    %c0_28 = arith.constant 0 : index
    %22 = vector.load %arg16[%c0_27, %c0_28] : memref<64x512xf32, #tpu.memory_space<vmem>>, vector<64x512xf32>
    %c0_29 = arith.constant 0 : index
    %c0_30 = arith.constant 0 : index
    %23 = vector.load %arg17[%c0_29, %c0_30] : memref<128x512xf32, #tpu.memory_space<vmem>>, vector<128x512xf32>
    %c0_31 = arith.constant 0 : index
    %c0_32 = arith.constant 0 : index
    %c0_33 = arith.constant 0 : index
    %24 = vector.load %arg18[%c0_31, %c0_32, %c0_33] : memref<2x128x64xf32, #tpu.memory_space<vmem>>, vector<2x128x64xf32>
    %c0_34 = arith.constant 0 : index
    %c0_35 = arith.constant 0 : index
    %c0_36 = arith.constant 0 : index
    %25 = vector.load %arg19[%c0_34, %c0_35, %c0_36] : memref<2x128x64xf32, #tpu.memory_space<vmem>>, vector<2x128x64xf32>
    %c0_37 = arith.constant 0 : index
    %c0_38 = arith.constant 0 : index
    %c0_39 = arith.constant 0 : index
    %26 = vector.load %arg20[%c0_37, %c0_38, %c0_39] : memref<2x128x128xf32, #tpu.memory_space<vmem>>, vector<2x128x128xf32>
    %c0_40 = arith.constant 0 : index
    %c0_41 = arith.constant 0 : index
    %c0_42 = arith.constant 0 : index
    %27 = vector.load %arg21[%c0_40, %c0_41, %c0_42] : memref<2x128x128xf32, #tpu.memory_space<vmem>>, vector<2x128x128xf32>
    %c0_43 = arith.constant 0 : index
    %c0_44 = arith.constant 0 : index
    %28 = vector.load %arg2[%c0_43, %c0_44] : memref<2x128xf32, #tpu.memory_space<vmem>>, vector<2x128xf32>
    %c0_45 = arith.constant 0 : index
    %c0_46 = arith.constant 0 : index
    %29 = vector.load %arg3[%c0_45, %c0_46] : memref<2x128xf32, #tpu.memory_space<vmem>>, vector<2x128xf32>
    %30 = vector.extract_strided_slice %5 {offsets = [0, 0], sizes = [2, 128], strides = [1, 1]} : vector<14x128xf32> to vector<2x128xf32>
    %31 = vector.extract_strided_slice %15 {offsets = [0, 0], sizes = [2, 64], strides = [1, 1]} : vector<14x64xf32> to vector<2x64xf32>
    %32 = vector.extract_strided_slice %10 {offsets = [0, 0], sizes = [2, 4], strides = [1, 1]} : vector<14x4xf32> to vector<2x4xf32>
    %33 = arith.mulf %28, %30 : vector<2x128xf32>
    %cst_47 = arith.constant dense<0.000000e+00> : vector<2x4xf32>
    %34 = tpu.matmul %33, %18, %cst_47 {dimension_numbers = #tpu.dot_dimension_numbers<[1], [0], [0], [1], [0, 0, 1, 1], [], []>} : vector<2x128xf32>, vector<128x4xf32>, vector<2x4xf32> -> vector<2x4xf32>
    %35 = arith.addf %34, %32 : vector<2x4xf32>
    %cst_48 = arith.constant dense<0.000000e+00> : vector<2x4xf32>
    %36 = tpu.matmul %28, %16, %cst_48 {dimension_numbers = #tpu.dot_dimension_numbers<[1], [0], [0], [1], [0, 0, 1, 1], [], []>} : vector<2x128xf32>, vector<128x4xf32>, vector<2x4xf32> -> vector<2x4xf32>
    %37 = vector.broadcast %17 : vector<1x4xf32> to vector<2x4xf32>
    %38 = arith.addf %36, %37 : vector<2x4xf32>
    %39 = vector.shape_cast %35 : vector<2x4xf32> to vector<2x4x1xf32>
    %40 = vector.shape_cast %35 : vector<2x4xf32> to vector<2x1x4xf32>
    %41 = tpu.iota {dimensions = array<i32: 1>} : vector<2x4x4xi32>
    %42 = tpu.iota {dimensions = array<i32: 2>} : vector<2x4x4xi32>
    %43 = vector.broadcast %40 : vector<2x1x4xf32> to vector<2x4x4xf32>
    %44 = vector.broadcast %39 : vector<2x4x1xf32> to vector<2x4x4xf32>
    %45 = arith.cmpf ogt, %43, %44 : vector<2x4x4xf32>
    %46 = vector.broadcast %40 : vector<2x1x4xf32> to vector<2x4x4xf32>
    %47 = vector.broadcast %39 : vector<2x4x1xf32> to vector<2x4x4xf32>
    %48 = arith.cmpf oeq, %46, %47 : vector<2x4x4xf32>
    %49 = arith.cmpi slt, %42, %41 : vector<2x4x4xi32>
    %50 = arith.andi %48, %49 : vector<2x4x4xi1>
    %51 = arith.ori %45, %50 : vector<2x4x4xi1>
    %52 = arith.extui %51 : vector<2x4x4xi1> to vector<2x4x4xi32>
    %cst_49 = arith.constant dense<0> : vector<2x4xi32>
    %53 = vector.multi_reduction <add>, %52, %cst_49 [2] : vector<2x4x4xi32> to vector<2x4xi32>
    %c2_i32 = arith.constant 2 : i32
    %54 = vector.broadcast %c2_i32 : i32 to vector<2x4xi32>
    %55 = arith.cmpi slt, %53, %54 : vector<2x4xi32>
    %56 = arith.extui %55 : vector<2x4xi1> to vector<2x4xi32>
    %57 = arith.sitofp %56 : vector<2x4xi32> to vector<2x4xf32>
    %58 = arith.subf %35, %38 : vector<2x4xf32>
    %59 = arith.negf %58 : vector<2x4xf32>
    %60 = math.exp %59 : vector<2x4xf32>
    %cst_50 = arith.constant 1.000000e+00 : f32
    %61 = vector.broadcast %cst_50 : f32 to vector<2x4xf32>
    %62 = arith.addf %61, %60 : vector<2x4xf32>
    %63 = arith.divf %61, %62 : vector<2x4xf32>
    %64 = arith.mulf %57, %63 : vector<2x4xf32>
    %cst_51 = arith.constant 1.000000e+00 : f32
    %65 = vector.broadcast %cst_51 : f32 to vector<2x4xf32>
    %66 = arith.subf %65, %63 : vector<2x4xf32>
    %67 = arith.mulf %57, %66 : vector<2x4xf32>
    %cst_52 = arith.constant dense<0.000000e+00> : vector<2x64xf32>
    %68 = tpu.matmul %64, %19, %cst_52 {dimension_numbers = #tpu.dot_dimension_numbers<[1], [0], [0], [1], [0, 0, 1, 1], [], []>} : vector<2x4xf32>, vector<4x64xf32>, vector<2x64xf32> -> vector<2x64xf32>
    %69 = arith.mulf %68, %31 : vector<2x64xf32>
    %cst_53 = arith.constant dense<0.000000e+00> : vector<2x64xf32>
    %70 = tpu.matmul %67, %20, %cst_53 {dimension_numbers = #tpu.dot_dimension_numbers<[1], [0], [0], [1], [0, 0, 1, 1], [], []>} : vector<2x4xf32>, vector<4x64xf32>, vector<2x64xf32> -> vector<2x64xf32>
    %71 = arith.addf %69, %70 : vector<2x64xf32>
    %cst_54 = arith.constant dense<0.000000e+00> : vector<2x512xf32>
    %72 = tpu.matmul %71, %22, %cst_54 {dimension_numbers = #tpu.dot_dimension_numbers<[1], [0], [0], [1], [0, 0, 1, 1], [], []>} : vector<2x64xf32>, vector<64x512xf32>, vector<2x512xf32> -> vector<2x512xf32>
    %cst_55 = arith.constant dense<0.000000e+00> : vector<2x512xf32>
    %73 = tpu.matmul %28, %23, %cst_55 {dimension_numbers = #tpu.dot_dimension_numbers<[1], [0], [0], [1], [0, 0, 1, 1], [], []>} : vector<2x128xf32>, vector<128x512xf32>, vector<2x512xf32> -> vector<2x512xf32>
    %74 = arith.addf %72, %73 : vector<2x512xf32>
    %75 = vector.extract_strided_slice %74 {offsets = [0, 0], sizes = [2, 128], strides = [1, 1]} : vector<2x512xf32> to vector<2x128xf32>
    %76 = arith.negf %75 : vector<2x128xf32>
    %77 = math.exp %76 : vector<2x128xf32>
    %cst_56 = arith.constant 1.000000e+00 : f32
    %78 = vector.broadcast %cst_56 : f32 to vector<2x128xf32>
    %79 = arith.addf %78, %77 : vector<2x128xf32>
    %80 = arith.divf %78, %79 : vector<2x128xf32>
    %81 = vector.extract_strided_slice %74 {offsets = [0, 128], sizes = [2, 128], strides = [1, 1]} : vector<2x512xf32> to vector<2x128xf32>
    %82 = arith.negf %81 : vector<2x128xf32>
    %83 = math.exp %82 : vector<2x128xf32>
    %cst_57 = arith.constant 1.000000e+00 : f32
    %84 = vector.broadcast %cst_57 : f32 to vector<2x128xf32>
    %85 = arith.addf %84, %83 : vector<2x128xf32>
    %86 = arith.divf %84, %85 : vector<2x128xf32>
    %87 = vector.extract_strided_slice %74 {offsets = [0, 256], sizes = [2, 128], strides = [1, 1]} : vector<2x512xf32> to vector<2x128xf32>
    %88 = arith.negf %87 : vector<2x128xf32>
    %89 = math.exp %88 : vector<2x128xf32>
    %cst_58 = arith.constant 1.000000e+00 : f32
    %90 = vector.broadcast %cst_58 : f32 to vector<2x128xf32>
    %91 = arith.addf %90, %89 : vector<2x128xf32>
    %92 = arith.divf %90, %91 : vector<2x128xf32>
    %93 = vector.extract_strided_slice %74 {offsets = [0, 384], sizes = [2, 128], strides = [1, 1]} : vector<2x512xf32> to vector<2x128xf32>
    %94 = math.tanh %93 : vector<2x128xf32>
    %95 = arith.mulf %29, %86 : vector<2x128xf32>
    %96 = arith.mulf %80, %94 : vector<2x128xf32>
    %97 = arith.addf %95, %96 : vector<2x128xf32>
    %98 = math.tanh %97 : vector<2x128xf32>
    %99 = arith.mulf %92, %98 : vector<2x128xf32>
    %cst_59 = arith.constant 0.000000e+00 : f32
    %100 = vector.broadcast %cst_59 : f32 to vector<2x128xf32>
    %101 = vector.extract_strided_slice %24 {offsets = [0, 0, 0], sizes = [1, 128, 64], strides = [1, 1, 1]} : vector<2x128x64xf32> to vector<1x128x64xf32>
    %102 = vector.shape_cast %101 : vector<1x128x64xf32> to vector<128x64xf32>
    %cst_60 = arith.constant dense<0.000000e+00> : vector<2x64xf32>
    %103 = tpu.matmul %99, %102, %cst_60 {dimension_numbers = #tpu.dot_dimension_numbers<[1], [0], [0], [1], [0, 0, 1, 1], [], []>} : vector<2x128xf32>, vector<128x64xf32>, vector<2x64xf32> -> vector<2x64xf32>
    %104 = vector.shape_cast %103 : vector<2x64xf32> to vector<2x4x16xf32>
    %105 = vector.extract_strided_slice %25 {offsets = [0, 0, 0], sizes = [1, 128, 64], strides = [1, 1, 1]} : vector<2x128x64xf32> to vector<1x128x64xf32>
    %106 = vector.shape_cast %105 : vector<1x128x64xf32> to vector<128x64xf32>
    %cst_61 = arith.constant dense<0.000000e+00> : vector<2x64xf32>
    %107 = tpu.matmul %99, %106, %cst_61 {dimension_numbers = #tpu.dot_dimension_numbers<[1], [0], [0], [1], [0, 0, 1, 1], [], []>} : vector<2x128xf32>, vector<128x64xf32>, vector<2x64xf32> -> vector<2x64xf32>
    %108 = vector.shape_cast %107 : vector<2x64xf32> to vector<2x4x16xf32>
    %109 = vector.extract_strided_slice %26 {offsets = [0, 0, 0], sizes = [1, 128, 128], strides = [1, 1, 1]} : vector<2x128x128xf32> to vector<1x128x128xf32>
    %110 = vector.shape_cast %109 : vector<1x128x128xf32> to vector<128x128xf32>
    %cst_62 = arith.constant dense<0.000000e+00> : vector<2x128xf32>
    %111 = tpu.matmul %99, %110, %cst_62 {dimension_numbers = #tpu.dot_dimension_numbers<[1], [0], [0], [1], [0, 0, 1, 1], [], []>} : vector<2x128xf32>, vector<128x128xf32>, vector<2x128xf32> -> vector<2x128xf32>
    %112 = vector.shape_cast %111 : vector<2x128xf32> to vector<2x4x32xf32>
    "tpu.trace_start"() <{level = 10 : i32, message = "buq,bvq->buv"}> : () -> ()
    %cst_63 = arith.constant dense<0.000000e+00> : vector<2x4x4xf32>
    %113 = tpu.matmul %104, %108, %cst_63 {dimension_numbers = #tpu.dot_dimension_numbers<[2], [2], [1], [1], [0, 0, 0, 1, 1, 1], [0], [0]>} : vector<2x4x16xf32>, vector<2x4x16xf32>, vector<2x4x4xf32> -> vector<2x4x4xf32>
    "tpu.trace_stop"() : () -> ()
    %cst_64 = arith.constant 2.500000e-01 : f32
    %114 = vector.broadcast %cst_64 : f32 to vector<2x4x4xf32>
    %115 = arith.mulf %113, %114 : vector<2x4x4xf32>
    %cst_65 = arith.constant dense<0xFF800000> : vector<2x4xf32>
    %116 = vector.multi_reduction <maximumf>, %115, %cst_65 [2] : vector<2x4x4xf32> to vector<2x4xf32>
    %cst_66 = arith.constant 0xFF800000 : f32
    %117 = vector.broadcast %cst_66 : f32 to vector<2x4xf32>
    %118 = arith.maximumf %117, %116 : vector<2x4xf32>
    %119 = vector.shape_cast %118 : vector<2x4xf32> to vector<2x4x1xf32>
    %120 = vector.broadcast %119 : vector<2x4x1xf32> to vector<2x4x4xf32>
    %121 = arith.subf %115, %120 : vector<2x4x4xf32>
    %122 = math.exp %121 : vector<2x4x4xf32>
    %cst_67 = arith.constant dense<0.000000e+00> : vector<2x4xf32>
    %123 = vector.multi_reduction <add>, %122, %cst_67 [2] : vector<2x4x4xf32> to vector<2x4xf32>
    %124 = vector.shape_cast %123 : vector<2x4xf32> to vector<2x4x1xf32>
    %125 = vector.broadcast %124 : vector<2x4x1xf32> to vector<2x4x4xf32>
    %126 = arith.divf %122, %125 : vector<2x4x4xf32>
    "tpu.trace_start"() <{level = 10 : i32, message = "buv,bvd->bud"}> : () -> ()
    %cst_68 = arith.constant dense<0.000000e+00> : vector<2x4x32xf32>
    %127 = tpu.matmul %126, %112, %cst_68 {dimension_numbers = #tpu.dot_dimension_numbers<[2], [1], [1], [2], [0, 0, 0, 1, 1, 2], [0], [0]>} : vector<2x4x4xf32>, vector<2x4x32xf32>, vector<2x4x32xf32> -> vector<2x4x32xf32>
    "tpu.trace_stop"() : () -> ()
    %128 = vector.shape_cast %127 : vector<2x4x32xf32> to vector<2x128xf32>
    %129 = vector.extract_strided_slice %27 {offsets = [0, 0, 0], sizes = [1, 128, 128], strides = [1, 1, 1]} : vector<2x128x128xf32> to vector<1x128x128xf32>
    %130 = vector.shape_cast %129 : vector<1x128x128xf32> to vector<128x128xf32>
    %cst_69 = arith.constant dense<0.000000e+00> : vector<2x128xf32>
    %131 = tpu.matmul %128, %130, %cst_69 {dimension_numbers = #tpu.dot_dimension_numbers<[1], [0], [0], [1], [0, 0, 1, 1], [], []>} : vector<2x128xf32>, vector<128x128xf32>, vector<2x128xf32> -> vector<2x128xf32>
    %132 = arith.addf %100, %131 : vector<2x128xf32>
    %133 = vector.extract_strided_slice %24 {offsets = [1, 0, 0], sizes = [1, 128, 64], strides = [1, 1, 1]} : vector<2x128x64xf32> to vector<1x128x64xf32>
    %134 = vector.shape_cast %133 : vector<1x128x64xf32> to vector<128x64xf32>
    %cst_70 = arith.constant dense<0.000000e+00> : vector<2x64xf32>
    %135 = tpu.matmul %99, %134, %cst_70 {dimension_numbers = #tpu.dot_dimension_numbers<[1], [0], [0], [1], [0, 0, 1, 1], [], []>} : vector<2x128xf32>, vector<128x64xf32>, vector<2x64xf32> -> vector<2x64xf32>
    %136 = vector.shape_cast %135 : vector<2x64xf32> to vector<2x4x16xf32>
    %137 = vector.extract_strided_slice %25 {offsets = [1, 0, 0], sizes = [1, 128, 64], strides = [1, 1, 1]} : vector<2x128x64xf32> to vector<1x128x64xf32>
    %138 = vector.shape_cast %137 : vector<1x128x64xf32> to vector<128x64xf32>
    %cst_71 = arith.constant dense<0.000000e+00> : vector<2x64xf32>
    %139 = tpu.matmul %99, %138, %cst_71 {dimension_numbers = #tpu.dot_dimension_numbers<[1], [0], [0], [1], [0, 0, 1, 1], [], []>} : vector<2x128xf32>, vector<128x64xf32>, vector<2x64xf32> -> vector<2x64xf32>
    %140 = vector.shape_cast %139 : vector<2x64xf32> to vector<2x4x16xf32>
    %141 = vector.extract_strided_slice %26 {offsets = [1, 0, 0], sizes = [1, 128, 128], strides = [1, 1, 1]} : vector<2x128x128xf32> to vector<1x128x128xf32>
    %142 = vector.shape_cast %141 : vector<1x128x128xf32> to vector<128x128xf32>
    %cst_72 = arith.constant dense<0.000000e+00> : vector<2x128xf32>
    %143 = tpu.matmul %99, %142, %cst_72 {dimension_numbers = #tpu.dot_dimension_numbers<[1], [0], [0], [1], [0, 0, 1, 1], [], []>} : vector<2x128xf32>, vector<128x128xf32>, vector<2x128xf32> -> vector<2x128xf32>
    %144 = vector.shape_cast %143 : vector<2x128xf32> to vector<2x4x32xf32>
    "tpu.trace_start"() <{level = 10 : i32, message = "buq,bvq->buv"}> : () -> ()
    %cst_73 = arith.constant dense<0.000000e+00> : vector<2x4x4xf32>
    %145 = tpu.matmul %136, %140, %cst_73 {dimension_numbers = #tpu.dot_dimension_numbers<[2], [2], [1], [1], [0, 0, 0, 1, 1, 1], [0], [0]>} : vector<2x4x16xf32>, vector<2x4x16xf32>, vector<2x4x4xf32> -> vector<2x4x4xf32>
    "tpu.trace_stop"() : () -> ()
    %cst_74 = arith.constant 2.500000e-01 : f32
    %146 = vector.broadcast %cst_74 : f32 to vector<2x4x4xf32>
    %147 = arith.mulf %145, %146 : vector<2x4x4xf32>
    %cst_75 = arith.constant dense<0xFF800000> : vector<2x4xf32>
    %148 = vector.multi_reduction <maximumf>, %147, %cst_75 [2] : vector<2x4x4xf32> to vector<2x4xf32>
    %cst_76 = arith.constant 0xFF800000 : f32
    %149 = vector.broadcast %cst_76 : f32 to vector<2x4xf32>
    %150 = arith.maximumf %149, %148 : vector<2x4xf32>
    %151 = vector.shape_cast %150 : vector<2x4xf32> to vector<2x4x1xf32>
    %152 = vector.broadcast %151 : vector<2x4x1xf32> to vector<2x4x4xf32>
    %153 = arith.subf %147, %152 : vector<2x4x4xf32>
    %154 = math.exp %153 : vector<2x4x4xf32>
    %cst_77 = arith.constant dense<0.000000e+00> : vector<2x4xf32>
    %155 = vector.multi_reduction <add>, %154, %cst_77 [2] : vector<2x4x4xf32> to vector<2x4xf32>
    %156 = vector.shape_cast %155 : vector<2x4xf32> to vector<2x4x1xf32>
    %157 = vector.broadcast %156 : vector<2x4x1xf32> to vector<2x4x4xf32>
    %158 = arith.divf %154, %157 : vector<2x4x4xf32>
    "tpu.trace_start"() <{level = 10 : i32, message = "buv,bvd->bud"}> : () -> ()
    %cst_78 = arith.constant dense<0.000000e+00> : vector<2x4x32xf32>
    %159 = tpu.matmul %158, %144, %cst_78 {dimension_numbers = #tpu.dot_dimension_numbers<[2], [1], [1], [2], [0, 0, 0, 1, 1, 2], [0], [0]>} : vector<2x4x4xf32>, vector<2x4x32xf32>, vector<2x4x32xf32> -> vector<2x4x32xf32>
    "tpu.trace_stop"() : () -> ()
    %160 = vector.shape_cast %159 : vector<2x4x32xf32> to vector<2x128xf32>
    %161 = vector.extract_strided_slice %27 {offsets = [1, 0, 0], sizes = [1, 128, 128], strides = [1, 1, 1]} : vector<2x128x128xf32> to vector<1x128x128xf32>
    %162 = vector.shape_cast %161 : vector<1x128x128xf32> to vector<128x128xf32>
    %cst_79 = arith.constant dense<0.000000e+00> : vector<2x128xf32>
    %163 = tpu.matmul %160, %162, %cst_79 {dimension_numbers = #tpu.dot_dimension_numbers<[1], [0], [0], [1], [0, 0, 1, 1], [], []>} : vector<2x128xf32>, vector<128x128xf32>, vector<2x128xf32> -> vector<2x128xf32>
    %164 = arith.addf %132, %163 : vector<2x128xf32>
    %165 = arith.addf %164, %99 : vector<2x128xf32>
    %cst_80 = arith.constant dense<0.000000e+00> : vector<2x128xf32>
    %166 = tpu.matmul %57, %21, %cst_80 {dimension_numbers = #tpu.dot_dimension_numbers<[1], [0], [0], [1], [0, 0, 1, 1], [], []>} : vector<2x4xf32>, vector<4x128xf32>, vector<2x128xf32> -> vector<2x128xf32>
    %167 = arith.mulf %166, %165 : vector<2x128xf32>
    %cst_81 = arith.constant 1.000000e+00 : f32
    %168 = vector.broadcast %cst_81 : f32 to vector<2x128xf32>
    %169 = arith.subf %168, %166 : vector<2x128xf32>
    %170 = arith.mulf %169, %28 : vector<2x128xf32>
    %171 = arith.addf %167, %170 : vector<2x128xf32>
    %172 = arith.mulf %166, %97 : vector<2x128xf32>
    %cst_82 = arith.constant 1.000000e+00 : f32
    %173 = vector.broadcast %cst_82 : f32 to vector<2x128xf32>
    %174 = arith.subf %173, %166 : vector<2x128xf32>
    %175 = arith.mulf %174, %29 : vector<2x128xf32>
    %176 = arith.addf %172, %175 : vector<2x128xf32>
    %177 = vector.extract_strided_slice %5 {offsets = [2, 0], sizes = [2, 128], strides = [1, 1]} : vector<14x128xf32> to vector<2x128xf32>
    %178 = vector.extract_strided_slice %15 {offsets = [2, 0], sizes = [2, 64], strides = [1, 1]} : vector<14x64xf32> to vector<2x64xf32>
    %179 = vector.extract_strided_slice %10 {offsets = [2, 0], sizes = [2, 4], strides = [1, 1]} : vector<14x4xf32> to vector<2x4xf32>
    %180 = arith.mulf %171, %177 : vector<2x128xf32>
    %cst_83 = arith.constant dense<0.000000e+00> : vector<2x4xf32>
    %181 = tpu.matmul %180, %18, %cst_83 {dimension_numbers = #tpu.dot_dimension_numbers<[1], [0], [0], [1], [0, 0, 1, 1], [], []>} : vector<2x128xf32>, vector<128x4xf32>, vector<2x4xf32> -> vector<2x4xf32>
    %182 = arith.addf %181, %179 : vector<2x4xf32>
    %cst_84 = arith.constant dense<0.000000e+00> : vector<2x4xf32>
    %183 = tpu.matmul %171, %16, %cst_84 {dimension_numbers = #tpu.dot_dimension_numbers<[1], [0], [0], [1], [0, 0, 1, 1], [], []>} : vector<2x128xf32>, vector<128x4xf32>, vector<2x4xf32> -> vector<2x4xf32>
    %184 = vector.broadcast %17 : vector<1x4xf32> to vector<2x4xf32>
    %185 = arith.addf %183, %184 : vector<2x4xf32>
    %186 = vector.shape_cast %182 : vector<2x4xf32> to vector<2x4x1xf32>
    %187 = vector.shape_cast %182 : vector<2x4xf32> to vector<2x1x4xf32>
    %188 = tpu.iota {dimensions = array<i32: 1>} : vector<2x4x4xi32>
    %189 = tpu.iota {dimensions = array<i32: 2>} : vector<2x4x4xi32>
    %190 = vector.broadcast %187 : vector<2x1x4xf32> to vector<2x4x4xf32>
    %191 = vector.broadcast %186 : vector<2x4x1xf32> to vector<2x4x4xf32>
    %192 = arith.cmpf ogt, %190, %191 : vector<2x4x4xf32>
    %193 = vector.broadcast %187 : vector<2x1x4xf32> to vector<2x4x4xf32>
    %194 = vector.broadcast %186 : vector<2x4x1xf32> to vector<2x4x4xf32>
    %195 = arith.cmpf oeq, %193, %194 : vector<2x4x4xf32>
    %196 = arith.cmpi slt, %189, %188 : vector<2x4x4xi32>
    %197 = arith.andi %195, %196 : vector<2x4x4xi1>
    %198 = arith.ori %192, %197 : vector<2x4x4xi1>
    %199 = arith.extui %198 : vector<2x4x4xi1> to vector<2x4x4xi32>
    %cst_85 = arith.constant dense<0> : vector<2x4xi32>
    %200 = vector.multi_reduction <add>, %199, %cst_85 [2] : vector<2x4x4xi32> to vector<2x4xi32>
    %c2_i32_86 = arith.constant 2 : i32
    %201 = vector.broadcast %c2_i32_86 : i32 to vector<2x4xi32>
    %202 = arith.cmpi slt, %200, %201 : vector<2x4xi32>
    %203 = arith.extui %202 : vector<2x4xi1> to vector<2x4xi32>
    %204 = arith.sitofp %203 : vector<2x4xi32> to vector<2x4xf32>
    %205 = arith.subf %182, %185 : vector<2x4xf32>
    %206 = arith.negf %205 : vector<2x4xf32>
    %207 = math.exp %206 : vector<2x4xf32>
    %cst_87 = arith.constant 1.000000e+00 : f32
    %208 = vector.broadcast %cst_87 : f32 to vector<2x4xf32>
    %209 = arith.addf %208, %207 : vector<2x4xf32>
    %210 = arith.divf %208, %209 : vector<2x4xf32>
    %211 = arith.mulf %204, %210 : vector<2x4xf32>
    %cst_88 = arith.constant 1.000000e+00 : f32
    %212 = vector.broadcast %cst_88 : f32 to vector<2x4xf32>
    %213 = arith.subf %212, %210 : vector<2x4xf32>
    %214 = arith.mulf %204, %213 : vector<2x4xf32>
    %cst_89 = arith.constant dense<0.000000e+00> : vector<2x64xf32>
    %215 = tpu.matmul %211, %19, %cst_89 {dimension_numbers = #tpu.dot_dimension_numbers<[1], [0], [0], [1], [0, 0, 1, 1], [], []>} : vector<2x4xf32>, vector<4x64xf32>, vector<2x64xf32> -> vector<2x64xf32>
    %216 = arith.mulf %215, %178 : vector<2x64xf32>
    %cst_90 = arith.constant dense<0.000000e+00> : vector<2x64xf32>
    %217 = tpu.matmul %214, %20, %cst_90 {dimension_numbers = #tpu.dot_dimension_numbers<[1], [0], [0], [1], [0, 0, 1, 1], [], []>} : vector<2x4xf32>, vector<4x64xf32>, vector<2x64xf32> -> vector<2x64xf32>
    %218 = arith.addf %216, %217 : vector<2x64xf32>
    %cst_91 = arith.constant dense<0.000000e+00> : vector<2x512xf32>
    %219 = tpu.matmul %218, %22, %cst_91 {dimension_numbers = #tpu.dot_dimension_numbers<[1], [0], [0], [1], [0, 0, 1, 1], [], []>} : vector<2x64xf32>, vector<64x512xf32>, vector<2x512xf32> -> vector<2x512xf32>
    %cst_92 = arith.constant dense<0.000000e+00> : vector<2x512xf32>
    %220 = tpu.matmul %171, %23, %cst_92 {dimension_numbers = #tpu.dot_dimension_numbers<[1], [0], [0], [1], [0, 0, 1, 1], [], []>} : vector<2x128xf32>, vector<128x512xf32>, vector<2x512xf32> -> vector<2x512xf32>
    %221 = arith.addf %219, %220 : vector<2x512xf32>
    %222 = vector.extract_strided_slice %221 {offsets = [0, 0], sizes = [2, 128], strides = [1, 1]} : vector<2x512xf32> to vector<2x128xf32>
    %223 = arith.negf %222 : vector<2x128xf32>
    %224 = math.exp %223 : vector<2x128xf32>
    %cst_93 = arith.constant 1.000000e+00 : f32
    %225 = vector.broadcast %cst_93 : f32 to vector<2x128xf32>
    %226 = arith.addf %225, %224 : vector<2x128xf32>
    %227 = arith.divf %225, %226 : vector<2x128xf32>
    %228 = vector.extract_strided_slice %221 {offsets = [0, 128], sizes = [2, 128], strides = [1, 1]} : vector<2x512xf32> to vector<2x128xf32>
    %229 = arith.negf %228 : vector<2x128xf32>
    %230 = math.exp %229 : vector<2x128xf32>
    %cst_94 = arith.constant 1.000000e+00 : f32
    %231 = vector.broadcast %cst_94 : f32 to vector<2x128xf32>
    %232 = arith.addf %231, %230 : vector<2x128xf32>
    %233 = arith.divf %231, %232 : vector<2x128xf32>
    %234 = vector.extract_strided_slice %221 {offsets = [0, 256], sizes = [2, 128], strides = [1, 1]} : vector<2x512xf32> to vector<2x128xf32>
    %235 = arith.negf %234 : vector<2x128xf32>
    %236 = math.exp %235 : vector<2x128xf32>
    %cst_95 = arith.constant 1.000000e+00 : f32
    %237 = vector.broadcast %cst_95 : f32 to vector<2x128xf32>
    %238 = arith.addf %237, %236 : vector<2x128xf32>
    %239 = arith.divf %237, %238 : vector<2x128xf32>
    %240 = vector.extract_strided_slice %221 {offsets = [0, 384], sizes = [2, 128], strides = [1, 1]} : vector<2x512xf32> to vector<2x128xf32>
    %241 = math.tanh %240 : vector<2x128xf32>
    %242 = arith.mulf %176, %233 : vector<2x128xf32>
    %243 = arith.mulf %227, %241 : vector<2x128xf32>
    %244 = arith.addf %242, %243 : vector<2x128xf32>
    %245 = math.tanh %244 : vector<2x128xf32>
    %246 = arith.mulf %239, %245 : vector<2x128xf32>
    %cst_96 = arith.constant 0.000000e+00 : f32
    %247 = vector.broadcast %cst_96 : f32 to vector<2x128xf32>
    %248 = vector.extract_strided_slice %24 {offsets = [0, 0, 0], sizes = [1, 128, 64], strides = [1, 1, 1]} : vector<2x128x64xf32> to vector<1x128x64xf32>
    %249 = vector.shape_cast %248 : vector<1x128x64xf32> to vector<128x64xf32>
    %cst_97 = arith.constant dense<0.000000e+00> : vector<2x64xf32>
    %250 = tpu.matmul %246, %249, %cst_97 {dimension_numbers = #tpu.dot_dimension_numbers<[1], [0], [0], [1], [0, 0, 1, 1], [], []>} : vector<2x128xf32>, vector<128x64xf32>, vector<2x64xf32> -> vector<2x64xf32>
    %251 = vector.shape_cast %250 : vector<2x64xf32> to vector<2x4x16xf32>
    %252 = vector.extract_strided_slice %25 {offsets = [0, 0, 0], sizes = [1, 128, 64], strides = [1, 1, 1]} : vector<2x128x64xf32> to vector<1x128x64xf32>
    %253 = vector.shape_cast %252 : vector<1x128x64xf32> to vector<128x64xf32>
    %cst_98 = arith.constant dense<0.000000e+00> : vector<2x64xf32>
    %254 = tpu.matmul %246, %253, %cst_98 {dimension_numbers = #tpu.dot_dimension_numbers<[1], [0], [0], [1], [0, 0, 1, 1], [], []>} : vector<2x128xf32>, vector<128x64xf32>, vector<2x64xf32> -> vector<2x64xf32>
    %255 = vector.shape_cast %254 : vector<2x64xf32> to vector<2x4x16xf32>
    %256 = vector.extract_strided_slice %26 {offsets = [0, 0, 0], sizes = [1, 128, 128], strides = [1, 1, 1]} : vector<2x128x128xf32> to vector<1x128x128xf32>
    %257 = vector.shape_cast %256 : vector<1x128x128xf32> to vector<128x128xf32>
    %cst_99 = arith.constant dense<0.000000e+00> : vector<2x128xf32>
    %258 = tpu.matmul %246, %257, %cst_99 {dimension_numbers = #tpu.dot_dimension_numbers<[1], [0], [0], [1], [0, 0, 1, 1], [], []>} : vector<2x128xf32>, vector<128x128xf32>, vector<2x128xf32> -> vector<2x128xf32>
    %259 = vector.shape_cast %258 : vector<2x128xf32> to vector<2x4x32xf32>
    "tpu.trace_start"() <{level = 10 : i32, message = "buq,bvq->buv"}> : () -> ()
    %cst_100 = arith.constant dense<0.000000e+00> : vector<2x4x4xf32>
    %260 = tpu.matmul %251, %255, %cst_100 {dimension_numbers = #tpu.dot_dimension_numbers<[2], [2], [1], [1], [0, 0, 0, 1, 1, 1], [0], [0]>} : vector<2x4x16xf32>, vector<2x4x16xf32>, vector<2x4x4xf32> -> vector<2x4x4xf32>
    "tpu.trace_stop"() : () -> ()
    %cst_101 = arith.constant 2.500000e-01 : f32
    %261 = vector.broadcast %cst_101 : f32 to vector<2x4x4xf32>
    %262 = arith.mulf %260, %261 : vector<2x4x4xf32>
    %cst_102 = arith.constant dense<0xFF800000> : vector<2x4xf32>
    %263 = vector.multi_reduction <maximumf>, %262, %cst_102 [2] : vector<2x4x4xf32> to vector<2x4xf32>
    %cst_103 = arith.constant 0xFF800000 : f32
    %264 = vector.broadcast %cst_103 : f32 to vector<2x4xf32>
    %265 = arith.maximumf %264, %263 : vector<2x4xf32>
    %266 = vector.shape_cast %265 : vector<2x4xf32> to vector<2x4x1xf32>
    %267 = vector.broadcast %266 : vector<2x4x1xf32> to vector<2x4x4xf32>
    %268 = arith.subf %262, %267 : vector<2x4x4xf32>
    %269 = math.exp %268 : vector<2x4x4xf32>
    %cst_104 = arith.constant dense<0.000000e+00> : vector<2x4xf32>
    %270 = vector.multi_reduction <add>, %269, %cst_104 [2] : vector<2x4x4xf32> to vector<2x4xf32>
    %271 = vector.shape_cast %270 : vector<2x4xf32> to vector<2x4x1xf32>
    %272 = vector.broadcast %271 : vector<2x4x1xf32> to vector<2x4x4xf32>
    %273 = arith.divf %269, %272 : vector<2x4x4xf32>
    "tpu.trace_start"() <{level = 10 : i32, message = "buv,bvd->bud"}> : () -> ()
    %cst_105 = arith.constant dense<0.000000e+00> : vector<2x4x32xf32>
    %274 = tpu.matmul %273, %259, %cst_105 {dimension_numbers = #tpu.dot_dimension_numbers<[2], [1], [1], [2], [0, 0, 0, 1, 1, 2], [0], [0]>} : vector<2x4x4xf32>, vector<2x4x32xf32>, vector<2x4x32xf32> -> vector<2x4x32xf32>
    "tpu.trace_stop"() : () -> ()
    %275 = vector.shape_cast %274 : vector<2x4x32xf32> to vector<2x128xf32>
    %276 = vector.extract_strided_slice %27 {offsets = [0, 0, 0], sizes = [1, 128, 128], strides = [1, 1, 1]} : vector<2x128x128xf32> to vector<1x128x128xf32>
    %277 = vector.shape_cast %276 : vector<1x128x128xf32> to vector<128x128xf32>
    %cst_106 = arith.constant dense<0.000000e+00> : vector<2x128xf32>
    %278 = tpu.matmul %275, %277, %cst_106 {dimension_numbers = #tpu.dot_dimension_numbers<[1], [0], [0], [1], [0, 0, 1, 1], [], []>} : vector<2x128xf32>, vector<128x128xf32>, vector<2x128xf32> -> vector<2x128xf32>
    %279 = arith.addf %247, %278 : vector<2x128xf32>
    %280 = vector.extract_strided_slice %24 {offsets = [1, 0, 0], sizes = [1, 128, 64], strides = [1, 1, 1]} : vector<2x128x64xf32> to vector<1x128x64xf32>
    %281 = vector.shape_cast %280 : vector<1x128x64xf32> to vector<128x64xf32>
    %cst_107 = arith.constant dense<0.000000e+00> : vector<2x64xf32>
    %282 = tpu.matmul %246, %281, %cst_107 {dimension_numbers = #tpu.dot_dimension_numbers<[1], [0], [0], [1], [0, 0, 1, 1], [], []>} : vector<2x128xf32>, vector<128x64xf32>, vector<2x64xf32> -> vector<2x64xf32>
    %283 = vector.shape_cast %282 : vector<2x64xf32> to vector<2x4x16xf32>
    %284 = vector.extract_strided_slice %25 {offsets = [1, 0, 0], sizes = [1, 128, 64], strides = [1, 1, 1]} : vector<2x128x64xf32> to vector<1x128x64xf32>
    %285 = vector.shape_cast %284 : vector<1x128x64xf32> to vector<128x64xf32>
    %cst_108 = arith.constant dense<0.000000e+00> : vector<2x64xf32>
    %286 = tpu.matmul %246, %285, %cst_108 {dimension_numbers = #tpu.dot_dimension_numbers<[1], [0], [0], [1], [0, 0, 1, 1], [], []>} : vector<2x128xf32>, vector<128x64xf32>, vector<2x64xf32> -> vector<2x64xf32>
    %287 = vector.shape_cast %286 : vector<2x64xf32> to vector<2x4x16xf32>
    %288 = vector.extract_strided_slice %26 {offsets = [1, 0, 0], sizes = [1, 128, 128], strides = [1, 1, 1]} : vector<2x128x128xf32> to vector<1x128x128xf32>
    %289 = vector.shape_cast %288 : vector<1x128x128xf32> to vector<128x128xf32>
    %cst_109 = arith.constant dense<0.000000e+00> : vector<2x128xf32>
    %290 = tpu.matmul %246, %289, %cst_109 {dimension_numbers = #tpu.dot_dimension_numbers<[1], [0], [0], [1], [0, 0, 1, 1], [], []>} : vector<2x128xf32>, vector<128x128xf32>, vector<2x128xf32> -> vector<2x128xf32>
    %291 = vector.shape_cast %290 : vector<2x128xf32> to vector<2x4x32xf32>
    "tpu.trace_start"() <{level = 10 : i32, message = "buq,bvq->buv"}> : () -> ()
    %cst_110 = arith.constant dense<0.000000e+00> : vector<2x4x4xf32>
    %292 = tpu.matmul %283, %287, %cst_110 {dimension_numbers = #tpu.dot_dimension_numbers<[2], [2], [1], [1], [0, 0, 0, 1, 1, 1], [0], [0]>} : vector<2x4x16xf32>, vector<2x4x16xf32>, vector<2x4x4xf32> -> vector<2x4x4xf32>
    "tpu.trace_stop"() : () -> ()
    %cst_111 = arith.constant 2.500000e-01 : f32
    %293 = vector.broadcast %cst_111 : f32 to vector<2x4x4xf32>
    %294 = arith.mulf %292, %293 : vector<2x4x4xf32>
    %cst_112 = arith.constant dense<0xFF800000> : vector<2x4xf32>
    %295 = vector.multi_reduction <maximumf>, %294, %cst_112 [2] : vector<2x4x4xf32> to vector<2x4xf32>
    %cst_113 = arith.constant 0xFF800000 : f32
    %296 = vector.broadcast %cst_113 : f32 to vector<2x4xf32>
    %297 = arith.maximumf %296, %295 : vector<2x4xf32>
    %298 = vector.shape_cast %297 : vector<2x4xf32> to vector<2x4x1xf32>
    %299 = vector.broadcast %298 : vector<2x4x1xf32> to vector<2x4x4xf32>
    %300 = arith.subf %294, %299 : vector<2x4x4xf32>
    %301 = math.exp %300 : vector<2x4x4xf32>
    %cst_114 = arith.constant dense<0.000000e+00> : vector<2x4xf32>
    %302 = vector.multi_reduction <add>, %301, %cst_114 [2] : vector<2x4x4xf32> to vector<2x4xf32>
    %303 = vector.shape_cast %302 : vector<2x4xf32> to vector<2x4x1xf32>
    %304 = vector.broadcast %303 : vector<2x4x1xf32> to vector<2x4x4xf32>
    %305 = arith.divf %301, %304 : vector<2x4x4xf32>
    "tpu.trace_start"() <{level = 10 : i32, message = "buv,bvd->bud"}> : () -> ()
    %cst_115 = arith.constant dense<0.000000e+00> : vector<2x4x32xf32>
    %306 = tpu.matmul %305, %291, %cst_115 {dimension_numbers = #tpu.dot_dimension_numbers<[2], [1], [1], [2], [0, 0, 0, 1, 1, 2], [0], [0]>} : vector<2x4x4xf32>, vector<2x4x32xf32>, vector<2x4x32xf32> -> vector<2x4x32xf32>
    "tpu.trace_stop"() : () -> ()
    %307 = vector.shape_cast %306 : vector<2x4x32xf32> to vector<2x128xf32>
    %308 = vector.extract_strided_slice %27 {offsets = [1, 0, 0], sizes = [1, 128, 128], strides = [1, 1, 1]} : vector<2x128x128xf32> to vector<1x128x128xf32>
    %309 = vector.shape_cast %308 : vector<1x128x128xf32> to vector<128x128xf32>
    %cst_116 = arith.constant dense<0.000000e+00> : vector<2x128xf32>
    %310 = tpu.matmul %307, %309, %cst_116 {dimension_numbers = #tpu.dot_dimension_numbers<[1], [0], [0], [1], [0, 0, 1, 1], [], []>} : vector<2x128xf32>, vector<128x128xf32>, vector<2x128xf32> -> vector<2x128xf32>
    %311 = arith.addf %279, %310 : vector<2x128xf32>
    %312 = arith.addf %311, %246 : vector<2x128xf32>
    %cst_117 = arith.constant dense<0.000000e+00> : vector<2x128xf32>
    %313 = tpu.matmul %204, %21, %cst_117 {dimension_numbers = #tpu.dot_dimension_numbers<[1], [0], [0], [1], [0, 0, 1, 1], [], []>} : vector<2x4xf32>, vector<4x128xf32>, vector<2x128xf32> -> vector<2x128xf32>
    %314 = arith.mulf %313, %312 : vector<2x128xf32>
    %cst_118 = arith.constant 1.000000e+00 : f32
    %315 = vector.broadcast %cst_118 : f32 to vector<2x128xf32>
    %316 = arith.subf %315, %313 : vector<2x128xf32>
    %317 = arith.mulf %316, %171 : vector<2x128xf32>
    %318 = arith.addf %314, %317 : vector<2x128xf32>
    %319 = arith.mulf %313, %244 : vector<2x128xf32>
    %cst_119 = arith.constant 1.000000e+00 : f32
    %320 = vector.broadcast %cst_119 : f32 to vector<2x128xf32>
    %321 = arith.subf %320, %313 : vector<2x128xf32>
    %322 = arith.mulf %321, %176 : vector<2x128xf32>
    %323 = arith.addf %319, %322 : vector<2x128xf32>
    %324 = vector.extract_strided_slice %5 {offsets = [4, 0], sizes = [2, 128], strides = [1, 1]} : vector<14x128xf32> to vector<2x128xf32>
    %325 = vector.extract_strided_slice %15 {offsets = [4, 0], sizes = [2, 64], strides = [1, 1]} : vector<14x64xf32> to vector<2x64xf32>
    %326 = vector.extract_strided_slice %10 {offsets = [4, 0], sizes = [2, 4], strides = [1, 1]} : vector<14x4xf32> to vector<2x4xf32>
    %327 = arith.mulf %318, %324 : vector<2x128xf32>
    %cst_120 = arith.constant dense<0.000000e+00> : vector<2x4xf32>
    %328 = tpu.matmul %327, %18, %cst_120 {dimension_numbers = #tpu.dot_dimension_numbers<[1], [0], [0], [1], [0, 0, 1, 1], [], []>} : vector<2x128xf32>, vector<128x4xf32>, vector<2x4xf32> -> vector<2x4xf32>
    %329 = arith.addf %328, %326 : vector<2x4xf32>
    %cst_121 = arith.constant dense<0.000000e+00> : vector<2x4xf32>
    %330 = tpu.matmul %318, %16, %cst_121 {dimension_numbers = #tpu.dot_dimension_numbers<[1], [0], [0], [1], [0, 0, 1, 1], [], []>} : vector<2x128xf32>, vector<128x4xf32>, vector<2x4xf32> -> vector<2x4xf32>
    %331 = vector.broadcast %17 : vector<1x4xf32> to vector<2x4xf32>
    %332 = arith.addf %330, %331 : vector<2x4xf32>
    %333 = vector.shape_cast %329 : vector<2x4xf32> to vector<2x4x1xf32>
    %334 = vector.shape_cast %329 : vector<2x4xf32> to vector<2x1x4xf32>
    %335 = tpu.iota {dimensions = array<i32: 1>} : vector<2x4x4xi32>
    %336 = tpu.iota {dimensions = array<i32: 2>} : vector<2x4x4xi32>
    %337 = vector.broadcast %334 : vector<2x1x4xf32> to vector<2x4x4xf32>
    %338 = vector.broadcast %333 : vector<2x4x1xf32> to vector<2x4x4xf32>
    %339 = arith.cmpf ogt, %337, %338 : vector<2x4x4xf32>
    %340 = vector.broadcast %334 : vector<2x1x4xf32> to vector<2x4x4xf32>
    %341 = vector.broadcast %333 : vector<2x4x1xf32> to vector<2x4x4xf32>
    %342 = arith.cmpf oeq, %340, %341 : vector<2x4x4xf32>
    %343 = arith.cmpi slt, %336, %335 : vector<2x4x4xi32>
    %344 = arith.andi %342, %343 : vector<2x4x4xi1>
    %345 = arith.ori %339, %344 : vector<2x4x4xi1>
    %346 = arith.extui %345 : vector<2x4x4xi1> to vector<2x4x4xi32>
    %cst_122 = arith.constant dense<0> : vector<2x4xi32>
    %347 = vector.multi_reduction <add>, %346, %cst_122 [2] : vector<2x4x4xi32> to vector<2x4xi32>
    %c2_i32_123 = arith.constant 2 : i32
    %348 = vector.broadcast %c2_i32_123 : i32 to vector<2x4xi32>
    %349 = arith.cmpi slt, %347, %348 : vector<2x4xi32>
    %350 = arith.extui %349 : vector<2x4xi1> to vector<2x4xi32>
    %351 = arith.sitofp %350 : vector<2x4xi32> to vector<2x4xf32>
    %352 = arith.subf %329, %332 : vector<2x4xf32>
    %353 = arith.negf %352 : vector<2x4xf32>
    %354 = math.exp %353 : vector<2x4xf32>
    %cst_124 = arith.constant 1.000000e+00 : f32
    %355 = vector.broadcast %cst_124 : f32 to vector<2x4xf32>
    %356 = arith.addf %355, %354 : vector<2x4xf32>
    %357 = arith.divf %355, %356 : vector<2x4xf32>
    %358 = arith.mulf %351, %357 : vector<2x4xf32>
    %cst_125 = arith.constant 1.000000e+00 : f32
    %359 = vector.broadcast %cst_125 : f32 to vector<2x4xf32>
    %360 = arith.subf %359, %357 : vector<2x4xf32>
    %361 = arith.mulf %351, %360 : vector<2x4xf32>
    %cst_126 = arith.constant dense<0.000000e+00> : vector<2x64xf32>
    %362 = tpu.matmul %358, %19, %cst_126 {dimension_numbers = #tpu.dot_dimension_numbers<[1], [0], [0], [1], [0, 0, 1, 1], [], []>} : vector<2x4xf32>, vector<4x64xf32>, vector<2x64xf32> -> vector<2x64xf32>
    %363 = arith.mulf %362, %325 : vector<2x64xf32>
    %cst_127 = arith.constant dense<0.000000e+00> : vector<2x64xf32>
    %364 = tpu.matmul %361, %20, %cst_127 {dimension_numbers = #tpu.dot_dimension_numbers<[1], [0], [0], [1], [0, 0, 1, 1], [], []>} : vector<2x4xf32>, vector<4x64xf32>, vector<2x64xf32> -> vector<2x64xf32>
    %365 = arith.addf %363, %364 : vector<2x64xf32>
    %cst_128 = arith.constant dense<0.000000e+00> : vector<2x512xf32>
    %366 = tpu.matmul %365, %22, %cst_128 {dimension_numbers = #tpu.dot_dimension_numbers<[1], [0], [0], [1], [0, 0, 1, 1], [], []>} : vector<2x64xf32>, vector<64x512xf32>, vector<2x512xf32> -> vector<2x512xf32>
    %cst_129 = arith.constant dense<0.000000e+00> : vector<2x512xf32>
    %367 = tpu.matmul %318, %23, %cst_129 {dimension_numbers = #tpu.dot_dimension_numbers<[1], [0], [0], [1], [0, 0, 1, 1], [], []>} : vector<2x128xf32>, vector<128x512xf32>, vector<2x512xf32> -> vector<2x512xf32>
    %368 = arith.addf %366, %367 : vector<2x512xf32>
    %369 = vector.extract_strided_slice %368 {offsets = [0, 0], sizes = [2, 128], strides = [1, 1]} : vector<2x512xf32> to vector<2x128xf32>
    %370 = arith.negf %369 : vector<2x128xf32>
    %371 = math.exp %370 : vector<2x128xf32>
    %cst_130 = arith.constant 1.000000e+00 : f32
    %372 = vector.broadcast %cst_130 : f32 to vector<2x128xf32>
    %373 = arith.addf %372, %371 : vector<2x128xf32>
    %374 = arith.divf %372, %373 : vector<2x128xf32>
    %375 = vector.extract_strided_slice %368 {offsets = [0, 128], sizes = [2, 128], strides = [1, 1]} : vector<2x512xf32> to vector<2x128xf32>
    %376 = arith.negf %375 : vector<2x128xf32>
    %377 = math.exp %376 : vector<2x128xf32>
    %cst_131 = arith.constant 1.000000e+00 : f32
    %378 = vector.broadcast %cst_131 : f32 to vector<2x128xf32>
    %379 = arith.addf %378, %377 : vector<2x128xf32>
    %380 = arith.divf %378, %379 : vector<2x128xf32>
    %381 = vector.extract_strided_slice %368 {offsets = [0, 256], sizes = [2, 128], strides = [1, 1]} : vector<2x512xf32> to vector<2x128xf32>
    %382 = arith.negf %381 : vector<2x128xf32>
    %383 = math.exp %382 : vector<2x128xf32>
    %cst_132 = arith.constant 1.000000e+00 : f32
    %384 = vector.broadcast %cst_132 : f32 to vector<2x128xf32>
    %385 = arith.addf %384, %383 : vector<2x128xf32>
    %386 = arith.divf %384, %385 : vector<2x128xf32>
    %387 = vector.extract_strided_slice %368 {offsets = [0, 384], sizes = [2, 128], strides = [1, 1]} : vector<2x512xf32> to vector<2x128xf32>
    %388 = math.tanh %387 : vector<2x128xf32>
    %389 = arith.mulf %323, %380 : vector<2x128xf32>
    %390 = arith.mulf %374, %388 : vector<2x128xf32>
    %391 = arith.addf %389, %390 : vector<2x128xf32>
    %392 = math.tanh %391 : vector<2x128xf32>
    %393 = arith.mulf %386, %392 : vector<2x128xf32>
    %cst_133 = arith.constant 0.000000e+00 : f32
    %394 = vector.broadcast %cst_133 : f32 to vector<2x128xf32>
    %395 = vector.extract_strided_slice %24 {offsets = [0, 0, 0], sizes = [1, 128, 64], strides = [1, 1, 1]} : vector<2x128x64xf32> to vector<1x128x64xf32>
    %396 = vector.shape_cast %395 : vector<1x128x64xf32> to vector<128x64xf32>
    %cst_134 = arith.constant dense<0.000000e+00> : vector<2x64xf32>
    %397 = tpu.matmul %393, %396, %cst_134 {dimension_numbers = #tpu.dot_dimension_numbers<[1], [0], [0], [1], [0, 0, 1, 1], [], []>} : vector<2x128xf32>, vector<128x64xf32>, vector<2x64xf32> -> vector<2x64xf32>
    %398 = vector.shape_cast %397 : vector<2x64xf32> to vector<2x4x16xf32>
    %399 = vector.extract_strided_slice %25 {offsets = [0, 0, 0], sizes = [1, 128, 64], strides = [1, 1, 1]} : vector<2x128x64xf32> to vector<1x128x64xf32>
    %400 = vector.shape_cast %399 : vector<1x128x64xf32> to vector<128x64xf32>
    %cst_135 = arith.constant dense<0.000000e+00> : vector<2x64xf32>
    %401 = tpu.matmul %393, %400, %cst_135 {dimension_numbers = #tpu.dot_dimension_numbers<[1], [0], [0], [1], [0, 0, 1, 1], [], []>} : vector<2x128xf32>, vector<128x64xf32>, vector<2x64xf32> -> vector<2x64xf32>
    %402 = vector.shape_cast %401 : vector<2x64xf32> to vector<2x4x16xf32>
    %403 = vector.extract_strided_slice %26 {offsets = [0, 0, 0], sizes = [1, 128, 128], strides = [1, 1, 1]} : vector<2x128x128xf32> to vector<1x128x128xf32>
    %404 = vector.shape_cast %403 : vector<1x128x128xf32> to vector<128x128xf32>
    %cst_136 = arith.constant dense<0.000000e+00> : vector<2x128xf32>
    %405 = tpu.matmul %393, %404, %cst_136 {dimension_numbers = #tpu.dot_dimension_numbers<[1], [0], [0], [1], [0, 0, 1, 1], [], []>} : vector<2x128xf32>, vector<128x128xf32>, vector<2x128xf32> -> vector<2x128xf32>
    %406 = vector.shape_cast %405 : vector<2x128xf32> to vector<2x4x32xf32>
    "tpu.trace_start"() <{level = 10 : i32, message = "buq,bvq->buv"}> : () -> ()
    %cst_137 = arith.constant dense<0.000000e+00> : vector<2x4x4xf32>
    %407 = tpu.matmul %398, %402, %cst_137 {dimension_numbers = #tpu.dot_dimension_numbers<[2], [2], [1], [1], [0, 0, 0, 1, 1, 1], [0], [0]>} : vector<2x4x16xf32>, vector<2x4x16xf32>, vector<2x4x4xf32> -> vector<2x4x4xf32>
    "tpu.trace_stop"() : () -> ()
    %cst_138 = arith.constant 2.500000e-01 : f32
    %408 = vector.broadcast %cst_138 : f32 to vector<2x4x4xf32>
    %409 = arith.mulf %407, %408 : vector<2x4x4xf32>
    %cst_139 = arith.constant dense<0xFF800000> : vector<2x4xf32>
    %410 = vector.multi_reduction <maximumf>, %409, %cst_139 [2] : vector<2x4x4xf32> to vector<2x4xf32>
    %cst_140 = arith.constant 0xFF800000 : f32
    %411 = vector.broadcast %cst_140 : f32 to vector<2x4xf32>
    %412 = arith.maximumf %411, %410 : vector<2x4xf32>
    %413 = vector.shape_cast %412 : vector<2x4xf32> to vector<2x4x1xf32>
    %414 = vector.broadcast %413 : vector<2x4x1xf32> to vector<2x4x4xf32>
    %415 = arith.subf %409, %414 : vector<2x4x4xf32>
    %416 = math.exp %415 : vector<2x4x4xf32>
    %cst_141 = arith.constant dense<0.000000e+00> : vector<2x4xf32>
    %417 = vector.multi_reduction <add>, %416, %cst_141 [2] : vector<2x4x4xf32> to vector<2x4xf32>
    %418 = vector.shape_cast %417 : vector<2x4xf32> to vector<2x4x1xf32>
    %419 = vector.broadcast %418 : vector<2x4x1xf32> to vector<2x4x4xf32>
    %420 = arith.divf %416, %419 : vector<2x4x4xf32>
    "tpu.trace_start"() <{level = 10 : i32, message = "buv,bvd->bud"}> : () -> ()
    %cst_142 = arith.constant dense<0.000000e+00> : vector<2x4x32xf32>
    %421 = tpu.matmul %420, %406, %cst_142 {dimension_numbers = #tpu.dot_dimension_numbers<[2], [1], [1], [2], [0, 0, 0, 1, 1, 2], [0], [0]>} : vector<2x4x4xf32>, vector<2x4x32xf32>, vector<2x4x32xf32> -> vector<2x4x32xf32>
    "tpu.trace_stop"() : () -> ()
    %422 = vector.shape_cast %421 : vector<2x4x32xf32> to vector<2x128xf32>
    %423 = vector.extract_strided_slice %27 {offsets = [0, 0, 0], sizes = [1, 128, 128], strides = [1, 1, 1]} : vector<2x128x128xf32> to vector<1x128x128xf32>
    %424 = vector.shape_cast %423 : vector<1x128x128xf32> to vector<128x128xf32>
    %cst_143 = arith.constant dense<0.000000e+00> : vector<2x128xf32>
    %425 = tpu.matmul %422, %424, %cst_143 {dimension_numbers = #tpu.dot_dimension_numbers<[1], [0], [0], [1], [0, 0, 1, 1], [], []>} : vector<2x128xf32>, vector<128x128xf32>, vector<2x128xf32> -> vector<2x128xf32>
    %426 = arith.addf %394, %425 : vector<2x128xf32>
    %427 = vector.extract_strided_slice %24 {offsets = [1, 0, 0], sizes = [1, 128, 64], strides = [1, 1, 1]} : vector<2x128x64xf32> to vector<1x128x64xf32>
    %428 = vector.shape_cast %427 : vector<1x128x64xf32> to vector<128x64xf32>
    %cst_144 = arith.constant dense<0.000000e+00> : vector<2x64xf32>
    %429 = tpu.matmul %393, %428, %cst_144 {dimension_numbers = #tpu.dot_dimension_numbers<[1], [0], [0], [1], [0, 0, 1, 1], [], []>} : vector<2x128xf32>, vector<128x64xf32>, vector<2x64xf32> -> vector<2x64xf32>
    %430 = vector.shape_cast %429 : vector<2x64xf32> to vector<2x4x16xf32>
    %431 = vector.extract_strided_slice %25 {offsets = [1, 0, 0], sizes = [1, 128, 64], strides = [1, 1, 1]} : vector<2x128x64xf32> to vector<1x128x64xf32>
    %432 = vector.shape_cast %431 : vector<1x128x64xf32> to vector<128x64xf32>
    %cst_145 = arith.constant dense<0.000000e+00> : vector<2x64xf32>
    %433 = tpu.matmul %393, %432, %cst_145 {dimension_numbers = #tpu.dot_dimension_numbers<[1], [0], [0], [1], [0, 0, 1, 1], [], []>} : vector<2x128xf32>, vector<128x64xf32>, vector<2x64xf32> -> vector<2x64xf32>
    %434 = vector.shape_cast %433 : vector<2x64xf32> to vector<2x4x16xf32>
    %435 = vector.extract_strided_slice %26 {offsets = [1, 0, 0], sizes = [1, 128, 128], strides = [1, 1, 1]} : vector<2x128x128xf32> to vector<1x128x128xf32>
    %436 = vector.shape_cast %435 : vector<1x128x128xf32> to vector<128x128xf32>
    %cst_146 = arith.constant dense<0.000000e+00> : vector<2x128xf32>
    %437 = tpu.matmul %393, %436, %cst_146 {dimension_numbers = #tpu.dot_dimension_numbers<[1], [0], [0], [1], [0, 0, 1, 1], [], []>} : vector<2x128xf32>, vector<128x128xf32>, vector<2x128xf32> -> vector<2x128xf32>
    %438 = vector.shape_cast %437 : vector<2x128xf32> to vector<2x4x32xf32>
    "tpu.trace_start"() <{level = 10 : i32, message = "buq,bvq->buv"}> : () -> ()
    %cst_147 = arith.constant dense<0.000000e+00> : vector<2x4x4xf32>
    %439 = tpu.matmul %430, %434, %cst_147 {dimension_numbers = #tpu.dot_dimension_numbers<[2], [2], [1], [1], [0, 0, 0, 1, 1, 1], [0], [0]>} : vector<2x4x16xf32>, vector<2x4x16xf32>, vector<2x4x4xf32> -> vector<2x4x4xf32>
    "tpu.trace_stop"() : () -> ()
    %cst_148 = arith.constant 2.500000e-01 : f32
    %440 = vector.broadcast %cst_148 : f32 to vector<2x4x4xf32>
    %441 = arith.mulf %439, %440 : vector<2x4x4xf32>
    %cst_149 = arith.constant dense<0xFF800000> : vector<2x4xf32>
    %442 = vector.multi_reduction <maximumf>, %441, %cst_149 [2] : vector<2x4x4xf32> to vector<2x4xf32>
    %cst_150 = arith.constant 0xFF800000 : f32
    %443 = vector.broadcast %cst_150 : f32 to vector<2x4xf32>
    %444 = arith.maximumf %443, %442 : vector<2x4xf32>
    %445 = vector.shape_cast %444 : vector<2x4xf32> to vector<2x4x1xf32>
    %446 = vector.broadcast %445 : vector<2x4x1xf32> to vector<2x4x4xf32>
    %447 = arith.subf %441, %446 : vector<2x4x4xf32>
    %448 = math.exp %447 : vector<2x4x4xf32>
    %cst_151 = arith.constant dense<0.000000e+00> : vector<2x4xf32>
    %449 = vector.multi_reduction <add>, %448, %cst_151 [2] : vector<2x4x4xf32> to vector<2x4xf32>
    %450 = vector.shape_cast %449 : vector<2x4xf32> to vector<2x4x1xf32>
    %451 = vector.broadcast %450 : vector<2x4x1xf32> to vector<2x4x4xf32>
    %452 = arith.divf %448, %451 : vector<2x4x4xf32>
    "tpu.trace_start"() <{level = 10 : i32, message = "buv,bvd->bud"}> : () -> ()
    %cst_152 = arith.constant dense<0.000000e+00> : vector<2x4x32xf32>
    %453 = tpu.matmul %452, %438, %cst_152 {dimension_numbers = #tpu.dot_dimension_numbers<[2], [1], [1], [2], [0, 0, 0, 1, 1, 2], [0], [0]>} : vector<2x4x4xf32>, vector<2x4x32xf32>, vector<2x4x32xf32> -> vector<2x4x32xf32>
    "tpu.trace_stop"() : () -> ()
    %454 = vector.shape_cast %453 : vector<2x4x32xf32> to vector<2x128xf32>
    %455 = vector.extract_strided_slice %27 {offsets = [1, 0, 0], sizes = [1, 128, 128], strides = [1, 1, 1]} : vector<2x128x128xf32> to vector<1x128x128xf32>
    %456 = vector.shape_cast %455 : vector<1x128x128xf32> to vector<128x128xf32>
    %cst_153 = arith.constant dense<0.000000e+00> : vector<2x128xf32>
    %457 = tpu.matmul %454, %456, %cst_153 {dimension_numbers = #tpu.dot_dimension_numbers<[1], [0], [0], [1], [0, 0, 1, 1], [], []>} : vector<2x128xf32>, vector<128x128xf32>, vector<2x128xf32> -> vector<2x128xf32>
    %458 = arith.addf %426, %457 : vector<2x128xf32>
    %459 = arith.addf %458, %393 : vector<2x128xf32>
    %cst_154 = arith.constant dense<0.000000e+00> : vector<2x128xf32>
    %460 = tpu.matmul %351, %21, %cst_154 {dimension_numbers = #tpu.dot_dimension_numbers<[1], [0], [0], [1], [0, 0, 1, 1], [], []>} : vector<2x4xf32>, vector<4x128xf32>, vector<2x128xf32> -> vector<2x128xf32>
    %461 = arith.mulf %460, %459 : vector<2x128xf32>
    %cst_155 = arith.constant 1.000000e+00 : f32
    %462 = vector.broadcast %cst_155 : f32 to vector<2x128xf32>
    %463 = arith.subf %462, %460 : vector<2x128xf32>
    %464 = arith.mulf %463, %318 : vector<2x128xf32>
    %465 = arith.addf %461, %464 : vector<2x128xf32>
    %466 = arith.mulf %460, %391 : vector<2x128xf32>
    %cst_156 = arith.constant 1.000000e+00 : f32
    %467 = vector.broadcast %cst_156 : f32 to vector<2x128xf32>
    %468 = arith.subf %467, %460 : vector<2x128xf32>
    %469 = arith.mulf %468, %323 : vector<2x128xf32>
    %470 = arith.addf %466, %469 : vector<2x128xf32>
    %471 = vector.extract_strided_slice %5 {offsets = [6, 0], sizes = [2, 128], strides = [1, 1]} : vector<14x128xf32> to vector<2x128xf32>
    %472 = vector.extract_strided_slice %15 {offsets = [6, 0], sizes = [2, 64], strides = [1, 1]} : vector<14x64xf32> to vector<2x64xf32>
    %473 = vector.extract_strided_slice %10 {offsets = [6, 0], sizes = [2, 4], strides = [1, 1]} : vector<14x4xf32> to vector<2x4xf32>
    %474 = arith.mulf %465, %471 : vector<2x128xf32>
    %cst_157 = arith.constant dense<0.000000e+00> : vector<2x4xf32>
    %475 = tpu.matmul %474, %18, %cst_157 {dimension_numbers = #tpu.dot_dimension_numbers<[1], [0], [0], [1], [0, 0, 1, 1], [], []>} : vector<2x128xf32>, vector<128x4xf32>, vector<2x4xf32> -> vector<2x4xf32>
    %476 = arith.addf %475, %473 : vector<2x4xf32>
    %cst_158 = arith.constant dense<0.000000e+00> : vector<2x4xf32>
    %477 = tpu.matmul %465, %16, %cst_158 {dimension_numbers = #tpu.dot_dimension_numbers<[1], [0], [0], [1], [0, 0, 1, 1], [], []>} : vector<2x128xf32>, vector<128x4xf32>, vector<2x4xf32> -> vector<2x4xf32>
    %478 = vector.broadcast %17 : vector<1x4xf32> to vector<2x4xf32>
    %479 = arith.addf %477, %478 : vector<2x4xf32>
    %480 = vector.shape_cast %476 : vector<2x4xf32> to vector<2x4x1xf32>
    %481 = vector.shape_cast %476 : vector<2x4xf32> to vector<2x1x4xf32>
    %482 = tpu.iota {dimensions = array<i32: 1>} : vector<2x4x4xi32>
    %483 = tpu.iota {dimensions = array<i32: 2>} : vector<2x4x4xi32>
    %484 = vector.broadcast %481 : vector<2x1x4xf32> to vector<2x4x4xf32>
    %485 = vector.broadcast %480 : vector<2x4x1xf32> to vector<2x4x4xf32>
    %486 = arith.cmpf ogt, %484, %485 : vector<2x4x4xf32>
    %487 = vector.broadcast %481 : vector<2x1x4xf32> to vector<2x4x4xf32>
    %488 = vector.broadcast %480 : vector<2x4x1xf32> to vector<2x4x4xf32>
    %489 = arith.cmpf oeq, %487, %488 : vector<2x4x4xf32>
    %490 = arith.cmpi slt, %483, %482 : vector<2x4x4xi32>
    %491 = arith.andi %489, %490 : vector<2x4x4xi1>
    %492 = arith.ori %486, %491 : vector<2x4x4xi1>
    %493 = arith.extui %492 : vector<2x4x4xi1> to vector<2x4x4xi32>
    %cst_159 = arith.constant dense<0> : vector<2x4xi32>
    %494 = vector.multi_reduction <add>, %493, %cst_159 [2] : vector<2x4x4xi32> to vector<2x4xi32>
    %c2_i32_160 = arith.constant 2 : i32
    %495 = vector.broadcast %c2_i32_160 : i32 to vector<2x4xi32>
    %496 = arith.cmpi slt, %494, %495 : vector<2x4xi32>
    %497 = arith.extui %496 : vector<2x4xi1> to vector<2x4xi32>
    %498 = arith.sitofp %497 : vector<2x4xi32> to vector<2x4xf32>
    %499 = arith.subf %476, %479 : vector<2x4xf32>
    %500 = arith.negf %499 : vector<2x4xf32>
    %501 = math.exp %500 : vector<2x4xf32>
    %cst_161 = arith.constant 1.000000e+00 : f32
    %502 = vector.broadcast %cst_161 : f32 to vector<2x4xf32>
    %503 = arith.addf %502, %501 : vector<2x4xf32>
    %504 = arith.divf %502, %503 : vector<2x4xf32>
    %505 = arith.mulf %498, %504 : vector<2x4xf32>
    %cst_162 = arith.constant 1.000000e+00 : f32
    %506 = vector.broadcast %cst_162 : f32 to vector<2x4xf32>
    %507 = arith.subf %506, %504 : vector<2x4xf32>
    %508 = arith.mulf %498, %507 : vector<2x4xf32>
    %cst_163 = arith.constant dense<0.000000e+00> : vector<2x64xf32>
    %509 = tpu.matmul %505, %19, %cst_163 {dimension_numbers = #tpu.dot_dimension_numbers<[1], [0], [0], [1], [0, 0, 1, 1], [], []>} : vector<2x4xf32>, vector<4x64xf32>, vector<2x64xf32> -> vector<2x64xf32>
    %510 = arith.mulf %509, %472 : vector<2x64xf32>
    %cst_164 = arith.constant dense<0.000000e+00> : vector<2x64xf32>
    %511 = tpu.matmul %508, %20, %cst_164 {dimension_numbers = #tpu.dot_dimension_numbers<[1], [0], [0], [1], [0, 0, 1, 1], [], []>} : vector<2x4xf32>, vector<4x64xf32>, vector<2x64xf32> -> vector<2x64xf32>
    %512 = arith.addf %510, %511 : vector<2x64xf32>
    %cst_165 = arith.constant dense<0.000000e+00> : vector<2x512xf32>
    %513 = tpu.matmul %512, %22, %cst_165 {dimension_numbers = #tpu.dot_dimension_numbers<[1], [0], [0], [1], [0, 0, 1, 1], [], []>} : vector<2x64xf32>, vector<64x512xf32>, vector<2x512xf32> -> vector<2x512xf32>
    %cst_166 = arith.constant dense<0.000000e+00> : vector<2x512xf32>
    %514 = tpu.matmul %465, %23, %cst_166 {dimension_numbers = #tpu.dot_dimension_numbers<[1], [0], [0], [1], [0, 0, 1, 1], [], []>} : vector<2x128xf32>, vector<128x512xf32>, vector<2x512xf32> -> vector<2x512xf32>
    %515 = arith.addf %513, %514 : vector<2x512xf32>
    %516 = vector.extract_strided_slice %515 {offsets = [0, 0], sizes = [2, 128], strides = [1, 1]} : vector<2x512xf32> to vector<2x128xf32>
    %517 = arith.negf %516 : vector<2x128xf32>
    %518 = math.exp %517 : vector<2x128xf32>
    %cst_167 = arith.constant 1.000000e+00 : f32
    %519 = vector.broadcast %cst_167 : f32 to vector<2x128xf32>
    %520 = arith.addf %519, %518 : vector<2x128xf32>
    %521 = arith.divf %519, %520 : vector<2x128xf32>
    %522 = vector.extract_strided_slice %515 {offsets = [0, 128], sizes = [2, 128], strides = [1, 1]} : vector<2x512xf32> to vector<2x128xf32>
    %523 = arith.negf %522 : vector<2x128xf32>
    %524 = math.exp %523 : vector<2x128xf32>
    %cst_168 = arith.constant 1.000000e+00 : f32
    %525 = vector.broadcast %cst_168 : f32 to vector<2x128xf32>
    %526 = arith.addf %525, %524 : vector<2x128xf32>
    %527 = arith.divf %525, %526 : vector<2x128xf32>
    %528 = vector.extract_strided_slice %515 {offsets = [0, 256], sizes = [2, 128], strides = [1, 1]} : vector<2x512xf32> to vector<2x128xf32>
    %529 = arith.negf %528 : vector<2x128xf32>
    %530 = math.exp %529 : vector<2x128xf32>
    %cst_169 = arith.constant 1.000000e+00 : f32
    %531 = vector.broadcast %cst_169 : f32 to vector<2x128xf32>
    %532 = arith.addf %531, %530 : vector<2x128xf32>
    %533 = arith.divf %531, %532 : vector<2x128xf32>
    %534 = vector.extract_strided_slice %515 {offsets = [0, 384], sizes = [2, 128], strides = [1, 1]} : vector<2x512xf32> to vector<2x128xf32>
    %535 = math.tanh %534 : vector<2x128xf32>
    %536 = arith.mulf %470, %527 : vector<2x128xf32>
    %537 = arith.mulf %521, %535 : vector<2x128xf32>
    %538 = arith.addf %536, %537 : vector<2x128xf32>
    %539 = math.tanh %538 : vector<2x128xf32>
    %540 = arith.mulf %533, %539 : vector<2x128xf32>
    %cst_170 = arith.constant 0.000000e+00 : f32
    %541 = vector.broadcast %cst_170 : f32 to vector<2x128xf32>
    %542 = vector.extract_strided_slice %24 {offsets = [0, 0, 0], sizes = [1, 128, 64], strides = [1, 1, 1]} : vector<2x128x64xf32> to vector<1x128x64xf32>
    %543 = vector.shape_cast %542 : vector<1x128x64xf32> to vector<128x64xf32>
    %cst_171 = arith.constant dense<0.000000e+00> : vector<2x64xf32>
    %544 = tpu.matmul %540, %543, %cst_171 {dimension_numbers = #tpu.dot_dimension_numbers<[1], [0], [0], [1], [0, 0, 1, 1], [], []>} : vector<2x128xf32>, vector<128x64xf32>, vector<2x64xf32> -> vector<2x64xf32>
    %545 = vector.shape_cast %544 : vector<2x64xf32> to vector<2x4x16xf32>
    %546 = vector.extract_strided_slice %25 {offsets = [0, 0, 0], sizes = [1, 128, 64], strides = [1, 1, 1]} : vector<2x128x64xf32> to vector<1x128x64xf32>
    %547 = vector.shape_cast %546 : vector<1x128x64xf32> to vector<128x64xf32>
    %cst_172 = arith.constant dense<0.000000e+00> : vector<2x64xf32>
    %548 = tpu.matmul %540, %547, %cst_172 {dimension_numbers = #tpu.dot_dimension_numbers<[1], [0], [0], [1], [0, 0, 1, 1], [], []>} : vector<2x128xf32>, vector<128x64xf32>, vector<2x64xf32> -> vector<2x64xf32>
    %549 = vector.shape_cast %548 : vector<2x64xf32> to vector<2x4x16xf32>
    %550 = vector.extract_strided_slice %26 {offsets = [0, 0, 0], sizes = [1, 128, 128], strides = [1, 1, 1]} : vector<2x128x128xf32> to vector<1x128x128xf32>
    %551 = vector.shape_cast %550 : vector<1x128x128xf32> to vector<128x128xf32>
    %cst_173 = arith.constant dense<0.000000e+00> : vector<2x128xf32>
    %552 = tpu.matmul %540, %551, %cst_173 {dimension_numbers = #tpu.dot_dimension_numbers<[1], [0], [0], [1], [0, 0, 1, 1], [], []>} : vector<2x128xf32>, vector<128x128xf32>, vector<2x128xf32> -> vector<2x128xf32>
    %553 = vector.shape_cast %552 : vector<2x128xf32> to vector<2x4x32xf32>
    "tpu.trace_start"() <{level = 10 : i32, message = "buq,bvq->buv"}> : () -> ()
    %cst_174 = arith.constant dense<0.000000e+00> : vector<2x4x4xf32>
    %554 = tpu.matmul %545, %549, %cst_174 {dimension_numbers = #tpu.dot_dimension_numbers<[2], [2], [1], [1], [0, 0, 0, 1, 1, 1], [0], [0]>} : vector<2x4x16xf32>, vector<2x4x16xf32>, vector<2x4x4xf32> -> vector<2x4x4xf32>
    "tpu.trace_stop"() : () -> ()
    %cst_175 = arith.constant 2.500000e-01 : f32
    %555 = vector.broadcast %cst_175 : f32 to vector<2x4x4xf32>
    %556 = arith.mulf %554, %555 : vector<2x4x4xf32>
    %cst_176 = arith.constant dense<0xFF800000> : vector<2x4xf32>
    %557 = vector.multi_reduction <maximumf>, %556, %cst_176 [2] : vector<2x4x4xf32> to vector<2x4xf32>
    %cst_177 = arith.constant 0xFF800000 : f32
    %558 = vector.broadcast %cst_177 : f32 to vector<2x4xf32>
    %559 = arith.maximumf %558, %557 : vector<2x4xf32>
    %560 = vector.shape_cast %559 : vector<2x4xf32> to vector<2x4x1xf32>
    %561 = vector.broadcast %560 : vector<2x4x1xf32> to vector<2x4x4xf32>
    %562 = arith.subf %556, %561 : vector<2x4x4xf32>
    %563 = math.exp %562 : vector<2x4x4xf32>
    %cst_178 = arith.constant dense<0.000000e+00> : vector<2x4xf32>
    %564 = vector.multi_reduction <add>, %563, %cst_178 [2] : vector<2x4x4xf32> to vector<2x4xf32>
    %565 = vector.shape_cast %564 : vector<2x4xf32> to vector<2x4x1xf32>
    %566 = vector.broadcast %565 : vector<2x4x1xf32> to vector<2x4x4xf32>
    %567 = arith.divf %563, %566 : vector<2x4x4xf32>
    "tpu.trace_start"() <{level = 10 : i32, message = "buv,bvd->bud"}> : () -> ()
    %cst_179 = arith.constant dense<0.000000e+00> : vector<2x4x32xf32>
    %568 = tpu.matmul %567, %553, %cst_179 {dimension_numbers = #tpu.dot_dimension_numbers<[2], [1], [1], [2], [0, 0, 0, 1, 1, 2], [0], [0]>} : vector<2x4x4xf32>, vector<2x4x32xf32>, vector<2x4x32xf32> -> vector<2x4x32xf32>
    "tpu.trace_stop"() : () -> ()
    %569 = vector.shape_cast %568 : vector<2x4x32xf32> to vector<2x128xf32>
    %570 = vector.extract_strided_slice %27 {offsets = [0, 0, 0], sizes = [1, 128, 128], strides = [1, 1, 1]} : vector<2x128x128xf32> to vector<1x128x128xf32>
    %571 = vector.shape_cast %570 : vector<1x128x128xf32> to vector<128x128xf32>
    %cst_180 = arith.constant dense<0.000000e+00> : vector<2x128xf32>
    %572 = tpu.matmul %569, %571, %cst_180 {dimension_numbers = #tpu.dot_dimension_numbers<[1], [0], [0], [1], [0, 0, 1, 1], [], []>} : vector<2x128xf32>, vector<128x128xf32>, vector<2x128xf32> -> vector<2x128xf32>
    %573 = arith.addf %541, %572 : vector<2x128xf32>
    %574 = vector.extract_strided_slice %24 {offsets = [1, 0, 0], sizes = [1, 128, 64], strides = [1, 1, 1]} : vector<2x128x64xf32> to vector<1x128x64xf32>
    %575 = vector.shape_cast %574 : vector<1x128x64xf32> to vector<128x64xf32>
    %cst_181 = arith.constant dense<0.000000e+00> : vector<2x64xf32>
    %576 = tpu.matmul %540, %575, %cst_181 {dimension_numbers = #tpu.dot_dimension_numbers<[1], [0], [0], [1], [0, 0, 1, 1], [], []>} : vector<2x128xf32>, vector<128x64xf32>, vector<2x64xf32> -> vector<2x64xf32>
    %577 = vector.shape_cast %576 : vector<2x64xf32> to vector<2x4x16xf32>
    %578 = vector.extract_strided_slice %25 {offsets = [1, 0, 0], sizes = [1, 128, 64], strides = [1, 1, 1]} : vector<2x128x64xf32> to vector<1x128x64xf32>
    %579 = vector.shape_cast %578 : vector<1x128x64xf32> to vector<128x64xf32>
    %cst_182 = arith.constant dense<0.000000e+00> : vector<2x64xf32>
    %580 = tpu.matmul %540, %579, %cst_182 {dimension_numbers = #tpu.dot_dimension_numbers<[1], [0], [0], [1], [0, 0, 1, 1], [], []>} : vector<2x128xf32>, vector<128x64xf32>, vector<2x64xf32> -> vector<2x64xf32>
    %581 = vector.shape_cast %580 : vector<2x64xf32> to vector<2x4x16xf32>
    %582 = vector.extract_strided_slice %26 {offsets = [1, 0, 0], sizes = [1, 128, 128], strides = [1, 1, 1]} : vector<2x128x128xf32> to vector<1x128x128xf32>
    %583 = vector.shape_cast %582 : vector<1x128x128xf32> to vector<128x128xf32>
    %cst_183 = arith.constant dense<0.000000e+00> : vector<2x128xf32>
    %584 = tpu.matmul %540, %583, %cst_183 {dimension_numbers = #tpu.dot_dimension_numbers<[1], [0], [0], [1], [0, 0, 1, 1], [], []>} : vector<2x128xf32>, vector<128x128xf32>, vector<2x128xf32> -> vector<2x128xf32>
    %585 = vector.shape_cast %584 : vector<2x128xf32> to vector<2x4x32xf32>
    "tpu.trace_start"() <{level = 10 : i32, message = "buq,bvq->buv"}> : () -> ()
    %cst_184 = arith.constant dense<0.000000e+00> : vector<2x4x4xf32>
    %586 = tpu.matmul %577, %581, %cst_184 {dimension_numbers = #tpu.dot_dimension_numbers<[2], [2], [1], [1], [0, 0, 0, 1, 1, 1], [0], [0]>} : vector<2x4x16xf32>, vector<2x4x16xf32>, vector<2x4x4xf32> -> vector<2x4x4xf32>
    "tpu.trace_stop"() : () -> ()
    %cst_185 = arith.constant 2.500000e-01 : f32
    %587 = vector.broadcast %cst_185 : f32 to vector<2x4x4xf32>
    %588 = arith.mulf %586, %587 : vector<2x4x4xf32>
    %cst_186 = arith.constant dense<0xFF800000> : vector<2x4xf32>
    %589 = vector.multi_reduction <maximumf>, %588, %cst_186 [2] : vector<2x4x4xf32> to vector<2x4xf32>
    %cst_187 = arith.constant 0xFF800000 : f32
    %590 = vector.broadcast %cst_187 : f32 to vector<2x4xf32>
    %591 = arith.maximumf %590, %589 : vector<2x4xf32>
    %592 = vector.shape_cast %591 : vector<2x4xf32> to vector<2x4x1xf32>
    %593 = vector.broadcast %592 : vector<2x4x1xf32> to vector<2x4x4xf32>
    %594 = arith.subf %588, %593 : vector<2x4x4xf32>
    %595 = math.exp %594 : vector<2x4x4xf32>
    %cst_188 = arith.constant dense<0.000000e+00> : vector<2x4xf32>
    %596 = vector.multi_reduction <add>, %595, %cst_188 [2] : vector<2x4x4xf32> to vector<2x4xf32>
    %597 = vector.shape_cast %596 : vector<2x4xf32> to vector<2x4x1xf32>
    %598 = vector.broadcast %597 : vector<2x4x1xf32> to vector<2x4x4xf32>
    %599 = arith.divf %595, %598 : vector<2x4x4xf32>
    "tpu.trace_start"() <{level = 10 : i32, message = "buv,bvd->bud"}> : () -> ()
    %cst_189 = arith.constant dense<0.000000e+00> : vector<2x4x32xf32>
    %600 = tpu.matmul %599, %585, %cst_189 {dimension_numbers = #tpu.dot_dimension_numbers<[2], [1], [1], [2], [0, 0, 0, 1, 1, 2], [0], [0]>} : vector<2x4x4xf32>, vector<2x4x32xf32>, vector<2x4x32xf32> -> vector<2x4x32xf32>
    "tpu.trace_stop"() : () -> ()
    %601 = vector.shape_cast %600 : vector<2x4x32xf32> to vector<2x128xf32>
    %602 = vector.extract_strided_slice %27 {offsets = [1, 0, 0], sizes = [1, 128, 128], strides = [1, 1, 1]} : vector<2x128x128xf32> to vector<1x128x128xf32>
    %603 = vector.shape_cast %602 : vector<1x128x128xf32> to vector<128x128xf32>
    %cst_190 = arith.constant dense<0.000000e+00> : vector<2x128xf32>
    %604 = tpu.matmul %601, %603, %cst_190 {dimension_numbers = #tpu.dot_dimension_numbers<[1], [0], [0], [1], [0, 0, 1, 1], [], []>} : vector<2x128xf32>, vector<128x128xf32>, vector<2x128xf32> -> vector<2x128xf32>
    %605 = arith.addf %573, %604 : vector<2x128xf32>
    %606 = arith.addf %605, %540 : vector<2x128xf32>
    %cst_191 = arith.constant dense<0.000000e+00> : vector<2x128xf32>
    %607 = tpu.matmul %498, %21, %cst_191 {dimension_numbers = #tpu.dot_dimension_numbers<[1], [0], [0], [1], [0, 0, 1, 1], [], []>} : vector<2x4xf32>, vector<4x128xf32>, vector<2x128xf32> -> vector<2x128xf32>
    %608 = arith.mulf %607, %606 : vector<2x128xf32>
    %cst_192 = arith.constant 1.000000e+00 : f32
    %609 = vector.broadcast %cst_192 : f32 to vector<2x128xf32>
    %610 = arith.subf %609, %607 : vector<2x128xf32>
    %611 = arith.mulf %610, %465 : vector<2x128xf32>
    %612 = arith.addf %608, %611 : vector<2x128xf32>
    %613 = arith.mulf %607, %538 : vector<2x128xf32>
    %cst_193 = arith.constant 1.000000e+00 : f32
    %614 = vector.broadcast %cst_193 : f32 to vector<2x128xf32>
    %615 = arith.subf %614, %607 : vector<2x128xf32>
    %616 = arith.mulf %615, %470 : vector<2x128xf32>
    %617 = arith.addf %613, %616 : vector<2x128xf32>
    %618 = vector.extract_strided_slice %5 {offsets = [8, 0], sizes = [2, 128], strides = [1, 1]} : vector<14x128xf32> to vector<2x128xf32>
    %619 = vector.extract_strided_slice %15 {offsets = [8, 0], sizes = [2, 64], strides = [1, 1]} : vector<14x64xf32> to vector<2x64xf32>
    %620 = vector.extract_strided_slice %10 {offsets = [8, 0], sizes = [2, 4], strides = [1, 1]} : vector<14x4xf32> to vector<2x4xf32>
    %621 = arith.mulf %612, %618 : vector<2x128xf32>
    %cst_194 = arith.constant dense<0.000000e+00> : vector<2x4xf32>
    %622 = tpu.matmul %621, %18, %cst_194 {dimension_numbers = #tpu.dot_dimension_numbers<[1], [0], [0], [1], [0, 0, 1, 1], [], []>} : vector<2x128xf32>, vector<128x4xf32>, vector<2x4xf32> -> vector<2x4xf32>
    %623 = arith.addf %622, %620 : vector<2x4xf32>
    %cst_195 = arith.constant dense<0.000000e+00> : vector<2x4xf32>
    %624 = tpu.matmul %612, %16, %cst_195 {dimension_numbers = #tpu.dot_dimension_numbers<[1], [0], [0], [1], [0, 0, 1, 1], [], []>} : vector<2x128xf32>, vector<128x4xf32>, vector<2x4xf32> -> vector<2x4xf32>
    %625 = vector.broadcast %17 : vector<1x4xf32> to vector<2x4xf32>
    %626 = arith.addf %624, %625 : vector<2x4xf32>
    %627 = vector.shape_cast %623 : vector<2x4xf32> to vector<2x4x1xf32>
    %628 = vector.shape_cast %623 : vector<2x4xf32> to vector<2x1x4xf32>
    %629 = tpu.iota {dimensions = array<i32: 1>} : vector<2x4x4xi32>
    %630 = tpu.iota {dimensions = array<i32: 2>} : vector<2x4x4xi32>
    %631 = vector.broadcast %628 : vector<2x1x4xf32> to vector<2x4x4xf32>
    %632 = vector.broadcast %627 : vector<2x4x1xf32> to vector<2x4x4xf32>
    %633 = arith.cmpf ogt, %631, %632 : vector<2x4x4xf32>
    %634 = vector.broadcast %628 : vector<2x1x4xf32> to vector<2x4x4xf32>
    %635 = vector.broadcast %627 : vector<2x4x1xf32> to vector<2x4x4xf32>
    %636 = arith.cmpf oeq, %634, %635 : vector<2x4x4xf32>
    %637 = arith.cmpi slt, %630, %629 : vector<2x4x4xi32>
    %638 = arith.andi %636, %637 : vector<2x4x4xi1>
    %639 = arith.ori %633, %638 : vector<2x4x4xi1>
    %640 = arith.extui %639 : vector<2x4x4xi1> to vector<2x4x4xi32>
    %cst_196 = arith.constant dense<0> : vector<2x4xi32>
    %641 = vector.multi_reduction <add>, %640, %cst_196 [2] : vector<2x4x4xi32> to vector<2x4xi32>
    %c2_i32_197 = arith.constant 2 : i32
    %642 = vector.broadcast %c2_i32_197 : i32 to vector<2x4xi32>
    %643 = arith.cmpi slt, %641, %642 : vector<2x4xi32>
    %644 = arith.extui %643 : vector<2x4xi1> to vector<2x4xi32>
    %645 = arith.sitofp %644 : vector<2x4xi32> to vector<2x4xf32>
    %646 = arith.subf %623, %626 : vector<2x4xf32>
    %647 = arith.negf %646 : vector<2x4xf32>
    %648 = math.exp %647 : vector<2x4xf32>
    %cst_198 = arith.constant 1.000000e+00 : f32
    %649 = vector.broadcast %cst_198 : f32 to vector<2x4xf32>
    %650 = arith.addf %649, %648 : vector<2x4xf32>
    %651 = arith.divf %649, %650 : vector<2x4xf32>
    %652 = arith.mulf %645, %651 : vector<2x4xf32>
    %cst_199 = arith.constant 1.000000e+00 : f32
    %653 = vector.broadcast %cst_199 : f32 to vector<2x4xf32>
    %654 = arith.subf %653, %651 : vector<2x4xf32>
    %655 = arith.mulf %645, %654 : vector<2x4xf32>
    %cst_200 = arith.constant dense<0.000000e+00> : vector<2x64xf32>
    %656 = tpu.matmul %652, %19, %cst_200 {dimension_numbers = #tpu.dot_dimension_numbers<[1], [0], [0], [1], [0, 0, 1, 1], [], []>} : vector<2x4xf32>, vector<4x64xf32>, vector<2x64xf32> -> vector<2x64xf32>
    %657 = arith.mulf %656, %619 : vector<2x64xf32>
    %cst_201 = arith.constant dense<0.000000e+00> : vector<2x64xf32>
    %658 = tpu.matmul %655, %20, %cst_201 {dimension_numbers = #tpu.dot_dimension_numbers<[1], [0], [0], [1], [0, 0, 1, 1], [], []>} : vector<2x4xf32>, vector<4x64xf32>, vector<2x64xf32> -> vector<2x64xf32>
    %659 = arith.addf %657, %658 : vector<2x64xf32>
    %cst_202 = arith.constant dense<0.000000e+00> : vector<2x512xf32>
    %660 = tpu.matmul %659, %22, %cst_202 {dimension_numbers = #tpu.dot_dimension_numbers<[1], [0], [0], [1], [0, 0, 1, 1], [], []>} : vector<2x64xf32>, vector<64x512xf32>, vector<2x512xf32> -> vector<2x512xf32>
    %cst_203 = arith.constant dense<0.000000e+00> : vector<2x512xf32>
    %661 = tpu.matmul %612, %23, %cst_203 {dimension_numbers = #tpu.dot_dimension_numbers<[1], [0], [0], [1], [0, 0, 1, 1], [], []>} : vector<2x128xf32>, vector<128x512xf32>, vector<2x512xf32> -> vector<2x512xf32>
    %662 = arith.addf %660, %661 : vector<2x512xf32>
    %663 = vector.extract_strided_slice %662 {offsets = [0, 0], sizes = [2, 128], strides = [1, 1]} : vector<2x512xf32> to vector<2x128xf32>
    %664 = arith.negf %663 : vector<2x128xf32>
    %665 = math.exp %664 : vector<2x128xf32>
    %cst_204 = arith.constant 1.000000e+00 : f32
    %666 = vector.broadcast %cst_204 : f32 to vector<2x128xf32>
    %667 = arith.addf %666, %665 : vector<2x128xf32>
    %668 = arith.divf %666, %667 : vector<2x128xf32>
    %669 = vector.extract_strided_slice %662 {offsets = [0, 128], sizes = [2, 128], strides = [1, 1]} : vector<2x512xf32> to vector<2x128xf32>
    %670 = arith.negf %669 : vector<2x128xf32>
    %671 = math.exp %670 : vector<2x128xf32>
    %cst_205 = arith.constant 1.000000e+00 : f32
    %672 = vector.broadcast %cst_205 : f32 to vector<2x128xf32>
    %673 = arith.addf %672, %671 : vector<2x128xf32>
    %674 = arith.divf %672, %673 : vector<2x128xf32>
    %675 = vector.extract_strided_slice %662 {offsets = [0, 256], sizes = [2, 128], strides = [1, 1]} : vector<2x512xf32> to vector<2x128xf32>
    %676 = arith.negf %675 : vector<2x128xf32>
    %677 = math.exp %676 : vector<2x128xf32>
    %cst_206 = arith.constant 1.000000e+00 : f32
    %678 = vector.broadcast %cst_206 : f32 to vector<2x128xf32>
    %679 = arith.addf %678, %677 : vector<2x128xf32>
    %680 = arith.divf %678, %679 : vector<2x128xf32>
    %681 = vector.extract_strided_slice %662 {offsets = [0, 384], sizes = [2, 128], strides = [1, 1]} : vector<2x512xf32> to vector<2x128xf32>
    %682 = math.tanh %681 : vector<2x128xf32>
    %683 = arith.mulf %617, %674 : vector<2x128xf32>
    %684 = arith.mulf %668, %682 : vector<2x128xf32>
    %685 = arith.addf %683, %684 : vector<2x128xf32>
    %686 = math.tanh %685 : vector<2x128xf32>
    %687 = arith.mulf %680, %686 : vector<2x128xf32>
    %cst_207 = arith.constant 0.000000e+00 : f32
    %688 = vector.broadcast %cst_207 : f32 to vector<2x128xf32>
    %689 = vector.extract_strided_slice %24 {offsets = [0, 0, 0], sizes = [1, 128, 64], strides = [1, 1, 1]} : vector<2x128x64xf32> to vector<1x128x64xf32>
    %690 = vector.shape_cast %689 : vector<1x128x64xf32> to vector<128x64xf32>
    %cst_208 = arith.constant dense<0.000000e+00> : vector<2x64xf32>
    %691 = tpu.matmul %687, %690, %cst_208 {dimension_numbers = #tpu.dot_dimension_numbers<[1], [0], [0], [1], [0, 0, 1, 1], [], []>} : vector<2x128xf32>, vector<128x64xf32>, vector<2x64xf32> -> vector<2x64xf32>
    %692 = vector.shape_cast %691 : vector<2x64xf32> to vector<2x4x16xf32>
    %693 = vector.extract_strided_slice %25 {offsets = [0, 0, 0], sizes = [1, 128, 64], strides = [1, 1, 1]} : vector<2x128x64xf32> to vector<1x128x64xf32>
    %694 = vector.shape_cast %693 : vector<1x128x64xf32> to vector<128x64xf32>
    %cst_209 = arith.constant dense<0.000000e+00> : vector<2x64xf32>
    %695 = tpu.matmul %687, %694, %cst_209 {dimension_numbers = #tpu.dot_dimension_numbers<[1], [0], [0], [1], [0, 0, 1, 1], [], []>} : vector<2x128xf32>, vector<128x64xf32>, vector<2x64xf32> -> vector<2x64xf32>
    %696 = vector.shape_cast %695 : vector<2x64xf32> to vector<2x4x16xf32>
    %697 = vector.extract_strided_slice %26 {offsets = [0, 0, 0], sizes = [1, 128, 128], strides = [1, 1, 1]} : vector<2x128x128xf32> to vector<1x128x128xf32>
    %698 = vector.shape_cast %697 : vector<1x128x128xf32> to vector<128x128xf32>
    %cst_210 = arith.constant dense<0.000000e+00> : vector<2x128xf32>
    %699 = tpu.matmul %687, %698, %cst_210 {dimension_numbers = #tpu.dot_dimension_numbers<[1], [0], [0], [1], [0, 0, 1, 1], [], []>} : vector<2x128xf32>, vector<128x128xf32>, vector<2x128xf32> -> vector<2x128xf32>
    %700 = vector.shape_cast %699 : vector<2x128xf32> to vector<2x4x32xf32>
    "tpu.trace_start"() <{level = 10 : i32, message = "buq,bvq->buv"}> : () -> ()
    %cst_211 = arith.constant dense<0.000000e+00> : vector<2x4x4xf32>
    %701 = tpu.matmul %692, %696, %cst_211 {dimension_numbers = #tpu.dot_dimension_numbers<[2], [2], [1], [1], [0, 0, 0, 1, 1, 1], [0], [0]>} : vector<2x4x16xf32>, vector<2x4x16xf32>, vector<2x4x4xf32> -> vector<2x4x4xf32>
    "tpu.trace_stop"() : () -> ()
    %cst_212 = arith.constant 2.500000e-01 : f32
    %702 = vector.broadcast %cst_212 : f32 to vector<2x4x4xf32>
    %703 = arith.mulf %701, %702 : vector<2x4x4xf32>
    %cst_213 = arith.constant dense<0xFF800000> : vector<2x4xf32>
    %704 = vector.multi_reduction <maximumf>, %703, %cst_213 [2] : vector<2x4x4xf32> to vector<2x4xf32>
    %cst_214 = arith.constant 0xFF800000 : f32
    %705 = vector.broadcast %cst_214 : f32 to vector<2x4xf32>
    %706 = arith.maximumf %705, %704 : vector<2x4xf32>
    %707 = vector.shape_cast %706 : vector<2x4xf32> to vector<2x4x1xf32>
    %708 = vector.broadcast %707 : vector<2x4x1xf32> to vector<2x4x4xf32>
    %709 = arith.subf %703, %708 : vector<2x4x4xf32>
    %710 = math.exp %709 : vector<2x4x4xf32>
    %cst_215 = arith.constant dense<0.000000e+00> : vector<2x4xf32>
    %711 = vector.multi_reduction <add>, %710, %cst_215 [2] : vector<2x4x4xf32> to vector<2x4xf32>
    %712 = vector.shape_cast %711 : vector<2x4xf32> to vector<2x4x1xf32>
    %713 = vector.broadcast %712 : vector<2x4x1xf32> to vector<2x4x4xf32>
    %714 = arith.divf %710, %713 : vector<2x4x4xf32>
    "tpu.trace_start"() <{level = 10 : i32, message = "buv,bvd->bud"}> : () -> ()
    %cst_216 = arith.constant dense<0.000000e+00> : vector<2x4x32xf32>
    %715 = tpu.matmul %714, %700, %cst_216 {dimension_numbers = #tpu.dot_dimension_numbers<[2], [1], [1], [2], [0, 0, 0, 1, 1, 2], [0], [0]>} : vector<2x4x4xf32>, vector<2x4x32xf32>, vector<2x4x32xf32> -> vector<2x4x32xf32>
    "tpu.trace_stop"() : () -> ()
    %716 = vector.shape_cast %715 : vector<2x4x32xf32> to vector<2x128xf32>
    %717 = vector.extract_strided_slice %27 {offsets = [0, 0, 0], sizes = [1, 128, 128], strides = [1, 1, 1]} : vector<2x128x128xf32> to vector<1x128x128xf32>
    %718 = vector.shape_cast %717 : vector<1x128x128xf32> to vector<128x128xf32>
    %cst_217 = arith.constant dense<0.000000e+00> : vector<2x128xf32>
    %719 = tpu.matmul %716, %718, %cst_217 {dimension_numbers = #tpu.dot_dimension_numbers<[1], [0], [0], [1], [0, 0, 1, 1], [], []>} : vector<2x128xf32>, vector<128x128xf32>, vector<2x128xf32> -> vector<2x128xf32>
    %720 = arith.addf %688, %719 : vector<2x128xf32>
    %721 = vector.extract_strided_slice %24 {offsets = [1, 0, 0], sizes = [1, 128, 64], strides = [1, 1, 1]} : vector<2x128x64xf32> to vector<1x128x64xf32>
    %722 = vector.shape_cast %721 : vector<1x128x64xf32> to vector<128x64xf32>
    %cst_218 = arith.constant dense<0.000000e+00> : vector<2x64xf32>
    %723 = tpu.matmul %687, %722, %cst_218 {dimension_numbers = #tpu.dot_dimension_numbers<[1], [0], [0], [1], [0, 0, 1, 1], [], []>} : vector<2x128xf32>, vector<128x64xf32>, vector<2x64xf32> -> vector<2x64xf32>
    %724 = vector.shape_cast %723 : vector<2x64xf32> to vector<2x4x16xf32>
    %725 = vector.extract_strided_slice %25 {offsets = [1, 0, 0], sizes = [1, 128, 64], strides = [1, 1, 1]} : vector<2x128x64xf32> to vector<1x128x64xf32>
    %726 = vector.shape_cast %725 : vector<1x128x64xf32> to vector<128x64xf32>
    %cst_219 = arith.constant dense<0.000000e+00> : vector<2x64xf32>
    %727 = tpu.matmul %687, %726, %cst_219 {dimension_numbers = #tpu.dot_dimension_numbers<[1], [0], [0], [1], [0, 0, 1, 1], [], []>} : vector<2x128xf32>, vector<128x64xf32>, vector<2x64xf32> -> vector<2x64xf32>
    %728 = vector.shape_cast %727 : vector<2x64xf32> to vector<2x4x16xf32>
    %729 = vector.extract_strided_slice %26 {offsets = [1, 0, 0], sizes = [1, 128, 128], strides = [1, 1, 1]} : vector<2x128x128xf32> to vector<1x128x128xf32>
    %730 = vector.shape_cast %729 : vector<1x128x128xf32> to vector<128x128xf32>
    %cst_220 = arith.constant dense<0.000000e+00> : vector<2x128xf32>
    %731 = tpu.matmul %687, %730, %cst_220 {dimension_numbers = #tpu.dot_dimension_numbers<[1], [0], [0], [1], [0, 0, 1, 1], [], []>} : vector<2x128xf32>, vector<128x128xf32>, vector<2x128xf32> -> vector<2x128xf32>
    %732 = vector.shape_cast %731 : vector<2x128xf32> to vector<2x4x32xf32>
    "tpu.trace_start"() <{level = 10 : i32, message = "buq,bvq->buv"}> : () -> ()
    %cst_221 = arith.constant dense<0.000000e+00> : vector<2x4x4xf32>
    %733 = tpu.matmul %724, %728, %cst_221 {dimension_numbers = #tpu.dot_dimension_numbers<[2], [2], [1], [1], [0, 0, 0, 1, 1, 1], [0], [0]>} : vector<2x4x16xf32>, vector<2x4x16xf32>, vector<2x4x4xf32> -> vector<2x4x4xf32>
    "tpu.trace_stop"() : () -> ()
    %cst_222 = arith.constant 2.500000e-01 : f32
    %734 = vector.broadcast %cst_222 : f32 to vector<2x4x4xf32>
    %735 = arith.mulf %733, %734 : vector<2x4x4xf32>
    %cst_223 = arith.constant dense<0xFF800000> : vector<2x4xf32>
    %736 = vector.multi_reduction <maximumf>, %735, %cst_223 [2] : vector<2x4x4xf32> to vector<2x4xf32>
    %cst_224 = arith.constant 0xFF800000 : f32
    %737 = vector.broadcast %cst_224 : f32 to vector<2x4xf32>
    %738 = arith.maximumf %737, %736 : vector<2x4xf32>
    %739 = vector.shape_cast %738 : vector<2x4xf32> to vector<2x4x1xf32>
    %740 = vector.broadcast %739 : vector<2x4x1xf32> to vector<2x4x4xf32>
    %741 = arith.subf %735, %740 : vector<2x4x4xf32>
    %742 = math.exp %741 : vector<2x4x4xf32>
    %cst_225 = arith.constant dense<0.000000e+00> : vector<2x4xf32>
    %743 = vector.multi_reduction <add>, %742, %cst_225 [2] : vector<2x4x4xf32> to vector<2x4xf32>
    %744 = vector.shape_cast %743 : vector<2x4xf32> to vector<2x4x1xf32>
    %745 = vector.broadcast %744 : vector<2x4x1xf32> to vector<2x4x4xf32>
    %746 = arith.divf %742, %745 : vector<2x4x4xf32>
    "tpu.trace_start"() <{level = 10 : i32, message = "buv,bvd->bud"}> : () -> ()
    %cst_226 = arith.constant dense<0.000000e+00> : vector<2x4x32xf32>
    %747 = tpu.matmul %746, %732, %cst_226 {dimension_numbers = #tpu.dot_dimension_numbers<[2], [1], [1], [2], [0, 0, 0, 1, 1, 2], [0], [0]>} : vector<2x4x4xf32>, vector<2x4x32xf32>, vector<2x4x32xf32> -> vector<2x4x32xf32>
    "tpu.trace_stop"() : () -> ()
    %748 = vector.shape_cast %747 : vector<2x4x32xf32> to vector<2x128xf32>
    %749 = vector.extract_strided_slice %27 {offsets = [1, 0, 0], sizes = [1, 128, 128], strides = [1, 1, 1]} : vector<2x128x128xf32> to vector<1x128x128xf32>
    %750 = vector.shape_cast %749 : vector<1x128x128xf32> to vector<128x128xf32>
    %cst_227 = arith.constant dense<0.000000e+00> : vector<2x128xf32>
    %751 = tpu.matmul %748, %750, %cst_227 {dimension_numbers = #tpu.dot_dimension_numbers<[1], [0], [0], [1], [0, 0, 1, 1], [], []>} : vector<2x128xf32>, vector<128x128xf32>, vector<2x128xf32> -> vector<2x128xf32>
    %752 = arith.addf %720, %751 : vector<2x128xf32>
    %753 = arith.addf %752, %687 : vector<2x128xf32>
    %cst_228 = arith.constant dense<0.000000e+00> : vector<2x128xf32>
    %754 = tpu.matmul %645, %21, %cst_228 {dimension_numbers = #tpu.dot_dimension_numbers<[1], [0], [0], [1], [0, 0, 1, 1], [], []>} : vector<2x4xf32>, vector<4x128xf32>, vector<2x128xf32> -> vector<2x128xf32>
    %755 = arith.mulf %754, %753 : vector<2x128xf32>
    %cst_229 = arith.constant 1.000000e+00 : f32
    %756 = vector.broadcast %cst_229 : f32 to vector<2x128xf32>
    %757 = arith.subf %756, %754 : vector<2x128xf32>
    %758 = arith.mulf %757, %612 : vector<2x128xf32>
    %759 = arith.addf %755, %758 : vector<2x128xf32>
    %760 = arith.mulf %754, %685 : vector<2x128xf32>
    %cst_230 = arith.constant 1.000000e+00 : f32
    %761 = vector.broadcast %cst_230 : f32 to vector<2x128xf32>
    %762 = arith.subf %761, %754 : vector<2x128xf32>
    %763 = arith.mulf %762, %617 : vector<2x128xf32>
    %764 = arith.addf %760, %763 : vector<2x128xf32>
    %765 = vector.extract_strided_slice %5 {offsets = [10, 0], sizes = [2, 128], strides = [1, 1]} : vector<14x128xf32> to vector<2x128xf32>
    %766 = vector.extract_strided_slice %15 {offsets = [10, 0], sizes = [2, 64], strides = [1, 1]} : vector<14x64xf32> to vector<2x64xf32>
    %767 = vector.extract_strided_slice %10 {offsets = [10, 0], sizes = [2, 4], strides = [1, 1]} : vector<14x4xf32> to vector<2x4xf32>
    %768 = arith.mulf %759, %765 : vector<2x128xf32>
    %cst_231 = arith.constant dense<0.000000e+00> : vector<2x4xf32>
    %769 = tpu.matmul %768, %18, %cst_231 {dimension_numbers = #tpu.dot_dimension_numbers<[1], [0], [0], [1], [0, 0, 1, 1], [], []>} : vector<2x128xf32>, vector<128x4xf32>, vector<2x4xf32> -> vector<2x4xf32>
    %770 = arith.addf %769, %767 : vector<2x4xf32>
    %cst_232 = arith.constant dense<0.000000e+00> : vector<2x4xf32>
    %771 = tpu.matmul %759, %16, %cst_232 {dimension_numbers = #tpu.dot_dimension_numbers<[1], [0], [0], [1], [0, 0, 1, 1], [], []>} : vector<2x128xf32>, vector<128x4xf32>, vector<2x4xf32> -> vector<2x4xf32>
    %772 = vector.broadcast %17 : vector<1x4xf32> to vector<2x4xf32>
    %773 = arith.addf %771, %772 : vector<2x4xf32>
    %774 = vector.shape_cast %770 : vector<2x4xf32> to vector<2x4x1xf32>
    %775 = vector.shape_cast %770 : vector<2x4xf32> to vector<2x1x4xf32>
    %776 = tpu.iota {dimensions = array<i32: 1>} : vector<2x4x4xi32>
    %777 = tpu.iota {dimensions = array<i32: 2>} : vector<2x4x4xi32>
    %778 = vector.broadcast %775 : vector<2x1x4xf32> to vector<2x4x4xf32>
    %779 = vector.broadcast %774 : vector<2x4x1xf32> to vector<2x4x4xf32>
    %780 = arith.cmpf ogt, %778, %779 : vector<2x4x4xf32>
    %781 = vector.broadcast %775 : vector<2x1x4xf32> to vector<2x4x4xf32>
    %782 = vector.broadcast %774 : vector<2x4x1xf32> to vector<2x4x4xf32>
    %783 = arith.cmpf oeq, %781, %782 : vector<2x4x4xf32>
    %784 = arith.cmpi slt, %777, %776 : vector<2x4x4xi32>
    %785 = arith.andi %783, %784 : vector<2x4x4xi1>
    %786 = arith.ori %780, %785 : vector<2x4x4xi1>
    %787 = arith.extui %786 : vector<2x4x4xi1> to vector<2x4x4xi32>
    %cst_233 = arith.constant dense<0> : vector<2x4xi32>
    %788 = vector.multi_reduction <add>, %787, %cst_233 [2] : vector<2x4x4xi32> to vector<2x4xi32>
    %c2_i32_234 = arith.constant 2 : i32
    %789 = vector.broadcast %c2_i32_234 : i32 to vector<2x4xi32>
    %790 = arith.cmpi slt, %788, %789 : vector<2x4xi32>
    %791 = arith.extui %790 : vector<2x4xi1> to vector<2x4xi32>
    %792 = arith.sitofp %791 : vector<2x4xi32> to vector<2x4xf32>
    %793 = arith.subf %770, %773 : vector<2x4xf32>
    %794 = arith.negf %793 : vector<2x4xf32>
    %795 = math.exp %794 : vector<2x4xf32>
    %cst_235 = arith.constant 1.000000e+00 : f32
    %796 = vector.broadcast %cst_235 : f32 to vector<2x4xf32>
    %797 = arith.addf %796, %795 : vector<2x4xf32>
    %798 = arith.divf %796, %797 : vector<2x4xf32>
    %799 = arith.mulf %792, %798 : vector<2x4xf32>
    %cst_236 = arith.constant 1.000000e+00 : f32
    %800 = vector.broadcast %cst_236 : f32 to vector<2x4xf32>
    %801 = arith.subf %800, %798 : vector<2x4xf32>
    %802 = arith.mulf %792, %801 : vector<2x4xf32>
    %cst_237 = arith.constant dense<0.000000e+00> : vector<2x64xf32>
    %803 = tpu.matmul %799, %19, %cst_237 {dimension_numbers = #tpu.dot_dimension_numbers<[1], [0], [0], [1], [0, 0, 1, 1], [], []>} : vector<2x4xf32>, vector<4x64xf32>, vector<2x64xf32> -> vector<2x64xf32>
    %804 = arith.mulf %803, %766 : vector<2x64xf32>
    %cst_238 = arith.constant dense<0.000000e+00> : vector<2x64xf32>
    %805 = tpu.matmul %802, %20, %cst_238 {dimension_numbers = #tpu.dot_dimension_numbers<[1], [0], [0], [1], [0, 0, 1, 1], [], []>} : vector<2x4xf32>, vector<4x64xf32>, vector<2x64xf32> -> vector<2x64xf32>
    %806 = arith.addf %804, %805 : vector<2x64xf32>
    %cst_239 = arith.constant dense<0.000000e+00> : vector<2x512xf32>
    %807 = tpu.matmul %806, %22, %cst_239 {dimension_numbers = #tpu.dot_dimension_numbers<[1], [0], [0], [1], [0, 0, 1, 1], [], []>} : vector<2x64xf32>, vector<64x512xf32>, vector<2x512xf32> -> vector<2x512xf32>
    %cst_240 = arith.constant dense<0.000000e+00> : vector<2x512xf32>
    %808 = tpu.matmul %759, %23, %cst_240 {dimension_numbers = #tpu.dot_dimension_numbers<[1], [0], [0], [1], [0, 0, 1, 1], [], []>} : vector<2x128xf32>, vector<128x512xf32>, vector<2x512xf32> -> vector<2x512xf32>
    %809 = arith.addf %807, %808 : vector<2x512xf32>
    %810 = vector.extract_strided_slice %809 {offsets = [0, 0], sizes = [2, 128], strides = [1, 1]} : vector<2x512xf32> to vector<2x128xf32>
    %811 = arith.negf %810 : vector<2x128xf32>
    %812 = math.exp %811 : vector<2x128xf32>
    %cst_241 = arith.constant 1.000000e+00 : f32
    %813 = vector.broadcast %cst_241 : f32 to vector<2x128xf32>
    %814 = arith.addf %813, %812 : vector<2x128xf32>
    %815 = arith.divf %813, %814 : vector<2x128xf32>
    %816 = vector.extract_strided_slice %809 {offsets = [0, 128], sizes = [2, 128], strides = [1, 1]} : vector<2x512xf32> to vector<2x128xf32>
    %817 = arith.negf %816 : vector<2x128xf32>
    %818 = math.exp %817 : vector<2x128xf32>
    %cst_242 = arith.constant 1.000000e+00 : f32
    %819 = vector.broadcast %cst_242 : f32 to vector<2x128xf32>
    %820 = arith.addf %819, %818 : vector<2x128xf32>
    %821 = arith.divf %819, %820 : vector<2x128xf32>
    %822 = vector.extract_strided_slice %809 {offsets = [0, 256], sizes = [2, 128], strides = [1, 1]} : vector<2x512xf32> to vector<2x128xf32>
    %823 = arith.negf %822 : vector<2x128xf32>
    %824 = math.exp %823 : vector<2x128xf32>
    %cst_243 = arith.constant 1.000000e+00 : f32
    %825 = vector.broadcast %cst_243 : f32 to vector<2x128xf32>
    %826 = arith.addf %825, %824 : vector<2x128xf32>
    %827 = arith.divf %825, %826 : vector<2x128xf32>
    %828 = vector.extract_strided_slice %809 {offsets = [0, 384], sizes = [2, 128], strides = [1, 1]} : vector<2x512xf32> to vector<2x128xf32>
    %829 = math.tanh %828 : vector<2x128xf32>
    %830 = arith.mulf %764, %821 : vector<2x128xf32>
    %831 = arith.mulf %815, %829 : vector<2x128xf32>
    %832 = arith.addf %830, %831 : vector<2x128xf32>
    %833 = math.tanh %832 : vector<2x128xf32>
    %834 = arith.mulf %827, %833 : vector<2x128xf32>
    %cst_244 = arith.constant 0.000000e+00 : f32
    %835 = vector.broadcast %cst_244 : f32 to vector<2x128xf32>
    %836 = vector.extract_strided_slice %24 {offsets = [0, 0, 0], sizes = [1, 128, 64], strides = [1, 1, 1]} : vector<2x128x64xf32> to vector<1x128x64xf32>
    %837 = vector.shape_cast %836 : vector<1x128x64xf32> to vector<128x64xf32>
    %cst_245 = arith.constant dense<0.000000e+00> : vector<2x64xf32>
    %838 = tpu.matmul %834, %837, %cst_245 {dimension_numbers = #tpu.dot_dimension_numbers<[1], [0], [0], [1], [0, 0, 1, 1], [], []>} : vector<2x128xf32>, vector<128x64xf32>, vector<2x64xf32> -> vector<2x64xf32>
    %839 = vector.shape_cast %838 : vector<2x64xf32> to vector<2x4x16xf32>
    %840 = vector.extract_strided_slice %25 {offsets = [0, 0, 0], sizes = [1, 128, 64], strides = [1, 1, 1]} : vector<2x128x64xf32> to vector<1x128x64xf32>
    %841 = vector.shape_cast %840 : vector<1x128x64xf32> to vector<128x64xf32>
    %cst_246 = arith.constant dense<0.000000e+00> : vector<2x64xf32>
    %842 = tpu.matmul %834, %841, %cst_246 {dimension_numbers = #tpu.dot_dimension_numbers<[1], [0], [0], [1], [0, 0, 1, 1], [], []>} : vector<2x128xf32>, vector<128x64xf32>, vector<2x64xf32> -> vector<2x64xf32>
    %843 = vector.shape_cast %842 : vector<2x64xf32> to vector<2x4x16xf32>
    %844 = vector.extract_strided_slice %26 {offsets = [0, 0, 0], sizes = [1, 128, 128], strides = [1, 1, 1]} : vector<2x128x128xf32> to vector<1x128x128xf32>
    %845 = vector.shape_cast %844 : vector<1x128x128xf32> to vector<128x128xf32>
    %cst_247 = arith.constant dense<0.000000e+00> : vector<2x128xf32>
    %846 = tpu.matmul %834, %845, %cst_247 {dimension_numbers = #tpu.dot_dimension_numbers<[1], [0], [0], [1], [0, 0, 1, 1], [], []>} : vector<2x128xf32>, vector<128x128xf32>, vector<2x128xf32> -> vector<2x128xf32>
    %847 = vector.shape_cast %846 : vector<2x128xf32> to vector<2x4x32xf32>
    "tpu.trace_start"() <{level = 10 : i32, message = "buq,bvq->buv"}> : () -> ()
    %cst_248 = arith.constant dense<0.000000e+00> : vector<2x4x4xf32>
    %848 = tpu.matmul %839, %843, %cst_248 {dimension_numbers = #tpu.dot_dimension_numbers<[2], [2], [1], [1], [0, 0, 0, 1, 1, 1], [0], [0]>} : vector<2x4x16xf32>, vector<2x4x16xf32>, vector<2x4x4xf32> -> vector<2x4x4xf32>
    "tpu.trace_stop"() : () -> ()
    %cst_249 = arith.constant 2.500000e-01 : f32
    %849 = vector.broadcast %cst_249 : f32 to vector<2x4x4xf32>
    %850 = arith.mulf %848, %849 : vector<2x4x4xf32>
    %cst_250 = arith.constant dense<0xFF800000> : vector<2x4xf32>
    %851 = vector.multi_reduction <maximumf>, %850, %cst_250 [2] : vector<2x4x4xf32> to vector<2x4xf32>
    %cst_251 = arith.constant 0xFF800000 : f32
    %852 = vector.broadcast %cst_251 : f32 to vector<2x4xf32>
    %853 = arith.maximumf %852, %851 : vector<2x4xf32>
    %854 = vector.shape_cast %853 : vector<2x4xf32> to vector<2x4x1xf32>
    %855 = vector.broadcast %854 : vector<2x4x1xf32> to vector<2x4x4xf32>
    %856 = arith.subf %850, %855 : vector<2x4x4xf32>
    %857 = math.exp %856 : vector<2x4x4xf32>
    %cst_252 = arith.constant dense<0.000000e+00> : vector<2x4xf32>
    %858 = vector.multi_reduction <add>, %857, %cst_252 [2] : vector<2x4x4xf32> to vector<2x4xf32>
    %859 = vector.shape_cast %858 : vector<2x4xf32> to vector<2x4x1xf32>
    %860 = vector.broadcast %859 : vector<2x4x1xf32> to vector<2x4x4xf32>
    %861 = arith.divf %857, %860 : vector<2x4x4xf32>
    "tpu.trace_start"() <{level = 10 : i32, message = "buv,bvd->bud"}> : () -> ()
    %cst_253 = arith.constant dense<0.000000e+00> : vector<2x4x32xf32>
    %862 = tpu.matmul %861, %847, %cst_253 {dimension_numbers = #tpu.dot_dimension_numbers<[2], [1], [1], [2], [0, 0, 0, 1, 1, 2], [0], [0]>} : vector<2x4x4xf32>, vector<2x4x32xf32>, vector<2x4x32xf32> -> vector<2x4x32xf32>
    "tpu.trace_stop"() : () -> ()
    %863 = vector.shape_cast %862 : vector<2x4x32xf32> to vector<2x128xf32>
    %864 = vector.extract_strided_slice %27 {offsets = [0, 0, 0], sizes = [1, 128, 128], strides = [1, 1, 1]} : vector<2x128x128xf32> to vector<1x128x128xf32>
    %865 = vector.shape_cast %864 : vector<1x128x128xf32> to vector<128x128xf32>
    %cst_254 = arith.constant dense<0.000000e+00> : vector<2x128xf32>
    %866 = tpu.matmul %863, %865, %cst_254 {dimension_numbers = #tpu.dot_dimension_numbers<[1], [0], [0], [1], [0, 0, 1, 1], [], []>} : vector<2x128xf32>, vector<128x128xf32>, vector<2x128xf32> -> vector<2x128xf32>
    %867 = arith.addf %835, %866 : vector<2x128xf32>
    %868 = vector.extract_strided_slice %24 {offsets = [1, 0, 0], sizes = [1, 128, 64], strides = [1, 1, 1]} : vector<2x128x64xf32> to vector<1x128x64xf32>
    %869 = vector.shape_cast %868 : vector<1x128x64xf32> to vector<128x64xf32>
    %cst_255 = arith.constant dense<0.000000e+00> : vector<2x64xf32>
    %870 = tpu.matmul %834, %869, %cst_255 {dimension_numbers = #tpu.dot_dimension_numbers<[1], [0], [0], [1], [0, 0, 1, 1], [], []>} : vector<2x128xf32>, vector<128x64xf32>, vector<2x64xf32> -> vector<2x64xf32>
    %871 = vector.shape_cast %870 : vector<2x64xf32> to vector<2x4x16xf32>
    %872 = vector.extract_strided_slice %25 {offsets = [1, 0, 0], sizes = [1, 128, 64], strides = [1, 1, 1]} : vector<2x128x64xf32> to vector<1x128x64xf32>
    %873 = vector.shape_cast %872 : vector<1x128x64xf32> to vector<128x64xf32>
    %cst_256 = arith.constant dense<0.000000e+00> : vector<2x64xf32>
    %874 = tpu.matmul %834, %873, %cst_256 {dimension_numbers = #tpu.dot_dimension_numbers<[1], [0], [0], [1], [0, 0, 1, 1], [], []>} : vector<2x128xf32>, vector<128x64xf32>, vector<2x64xf32> -> vector<2x64xf32>
    %875 = vector.shape_cast %874 : vector<2x64xf32> to vector<2x4x16xf32>
    %876 = vector.extract_strided_slice %26 {offsets = [1, 0, 0], sizes = [1, 128, 128], strides = [1, 1, 1]} : vector<2x128x128xf32> to vector<1x128x128xf32>
    %877 = vector.shape_cast %876 : vector<1x128x128xf32> to vector<128x128xf32>
    %cst_257 = arith.constant dense<0.000000e+00> : vector<2x128xf32>
    %878 = tpu.matmul %834, %877, %cst_257 {dimension_numbers = #tpu.dot_dimension_numbers<[1], [0], [0], [1], [0, 0, 1, 1], [], []>} : vector<2x128xf32>, vector<128x128xf32>, vector<2x128xf32> -> vector<2x128xf32>
    %879 = vector.shape_cast %878 : vector<2x128xf32> to vector<2x4x32xf32>
    "tpu.trace_start"() <{level = 10 : i32, message = "buq,bvq->buv"}> : () -> ()
    %cst_258 = arith.constant dense<0.000000e+00> : vector<2x4x4xf32>
    %880 = tpu.matmul %871, %875, %cst_258 {dimension_numbers = #tpu.dot_dimension_numbers<[2], [2], [1], [1], [0, 0, 0, 1, 1, 1], [0], [0]>} : vector<2x4x16xf32>, vector<2x4x16xf32>, vector<2x4x4xf32> -> vector<2x4x4xf32>
    "tpu.trace_stop"() : () -> ()
    %cst_259 = arith.constant 2.500000e-01 : f32
    %881 = vector.broadcast %cst_259 : f32 to vector<2x4x4xf32>
    %882 = arith.mulf %880, %881 : vector<2x4x4xf32>
    %cst_260 = arith.constant dense<0xFF800000> : vector<2x4xf32>
    %883 = vector.multi_reduction <maximumf>, %882, %cst_260 [2] : vector<2x4x4xf32> to vector<2x4xf32>
    %cst_261 = arith.constant 0xFF800000 : f32
    %884 = vector.broadcast %cst_261 : f32 to vector<2x4xf32>
    %885 = arith.maximumf %884, %883 : vector<2x4xf32>
    %886 = vector.shape_cast %885 : vector<2x4xf32> to vector<2x4x1xf32>
    %887 = vector.broadcast %886 : vector<2x4x1xf32> to vector<2x4x4xf32>
    %888 = arith.subf %882, %887 : vector<2x4x4xf32>
    %889 = math.exp %888 : vector<2x4x4xf32>
    %cst_262 = arith.constant dense<0.000000e+00> : vector<2x4xf32>
    %890 = vector.multi_reduction <add>, %889, %cst_262 [2] : vector<2x4x4xf32> to vector<2x4xf32>
    %891 = vector.shape_cast %890 : vector<2x4xf32> to vector<2x4x1xf32>
    %892 = vector.broadcast %891 : vector<2x4x1xf32> to vector<2x4x4xf32>
    %893 = arith.divf %889, %892 : vector<2x4x4xf32>
    "tpu.trace_start"() <{level = 10 : i32, message = "buv,bvd->bud"}> : () -> ()
    %cst_263 = arith.constant dense<0.000000e+00> : vector<2x4x32xf32>
    %894 = tpu.matmul %893, %879, %cst_263 {dimension_numbers = #tpu.dot_dimension_numbers<[2], [1], [1], [2], [0, 0, 0, 1, 1, 2], [0], [0]>} : vector<2x4x4xf32>, vector<2x4x32xf32>, vector<2x4x32xf32> -> vector<2x4x32xf32>
    "tpu.trace_stop"() : () -> ()
    %895 = vector.shape_cast %894 : vector<2x4x32xf32> to vector<2x128xf32>
    %896 = vector.extract_strided_slice %27 {offsets = [1, 0, 0], sizes = [1, 128, 128], strides = [1, 1, 1]} : vector<2x128x128xf32> to vector<1x128x128xf32>
    %897 = vector.shape_cast %896 : vector<1x128x128xf32> to vector<128x128xf32>
    %cst_264 = arith.constant dense<0.000000e+00> : vector<2x128xf32>
    %898 = tpu.matmul %895, %897, %cst_264 {dimension_numbers = #tpu.dot_dimension_numbers<[1], [0], [0], [1], [0, 0, 1, 1], [], []>} : vector<2x128xf32>, vector<128x128xf32>, vector<2x128xf32> -> vector<2x128xf32>
    %899 = arith.addf %867, %898 : vector<2x128xf32>
    %900 = arith.addf %899, %834 : vector<2x128xf32>
    %cst_265 = arith.constant dense<0.000000e+00> : vector<2x128xf32>
    %901 = tpu.matmul %792, %21, %cst_265 {dimension_numbers = #tpu.dot_dimension_numbers<[1], [0], [0], [1], [0, 0, 1, 1], [], []>} : vector<2x4xf32>, vector<4x128xf32>, vector<2x128xf32> -> vector<2x128xf32>
    %902 = arith.mulf %901, %900 : vector<2x128xf32>
    %cst_266 = arith.constant 1.000000e+00 : f32
    %903 = vector.broadcast %cst_266 : f32 to vector<2x128xf32>
    %904 = arith.subf %903, %901 : vector<2x128xf32>
    %905 = arith.mulf %904, %759 : vector<2x128xf32>
    %906 = arith.addf %902, %905 : vector<2x128xf32>
    %907 = arith.mulf %901, %832 : vector<2x128xf32>
    %cst_267 = arith.constant 1.000000e+00 : f32
    %908 = vector.broadcast %cst_267 : f32 to vector<2x128xf32>
    %909 = arith.subf %908, %901 : vector<2x128xf32>
    %910 = arith.mulf %909, %764 : vector<2x128xf32>
    %911 = arith.addf %907, %910 : vector<2x128xf32>
    %912 = vector.extract_strided_slice %5 {offsets = [12, 0], sizes = [2, 128], strides = [1, 1]} : vector<14x128xf32> to vector<2x128xf32>
    %913 = vector.extract_strided_slice %15 {offsets = [12, 0], sizes = [2, 64], strides = [1, 1]} : vector<14x64xf32> to vector<2x64xf32>
    %914 = vector.extract_strided_slice %10 {offsets = [12, 0], sizes = [2, 4], strides = [1, 1]} : vector<14x4xf32> to vector<2x4xf32>
    %915 = arith.mulf %906, %912 : vector<2x128xf32>
    %cst_268 = arith.constant dense<0.000000e+00> : vector<2x4xf32>
    %916 = tpu.matmul %915, %18, %cst_268 {dimension_numbers = #tpu.dot_dimension_numbers<[1], [0], [0], [1], [0, 0, 1, 1], [], []>} : vector<2x128xf32>, vector<128x4xf32>, vector<2x4xf32> -> vector<2x4xf32>
    %917 = arith.addf %916, %914 : vector<2x4xf32>
    %cst_269 = arith.constant dense<0.000000e+00> : vector<2x4xf32>
    %918 = tpu.matmul %906, %16, %cst_269 {dimension_numbers = #tpu.dot_dimension_numbers<[1], [0], [0], [1], [0, 0, 1, 1], [], []>} : vector<2x128xf32>, vector<128x4xf32>, vector<2x4xf32> -> vector<2x4xf32>
    %919 = vector.broadcast %17 : vector<1x4xf32> to vector<2x4xf32>
    %920 = arith.addf %918, %919 : vector<2x4xf32>
    %921 = vector.shape_cast %917 : vector<2x4xf32> to vector<2x4x1xf32>
    %922 = vector.shape_cast %917 : vector<2x4xf32> to vector<2x1x4xf32>
    %923 = tpu.iota {dimensions = array<i32: 1>} : vector<2x4x4xi32>
    %924 = tpu.iota {dimensions = array<i32: 2>} : vector<2x4x4xi32>
    %925 = vector.broadcast %922 : vector<2x1x4xf32> to vector<2x4x4xf32>
    %926 = vector.broadcast %921 : vector<2x4x1xf32> to vector<2x4x4xf32>
    %927 = arith.cmpf ogt, %925, %926 : vector<2x4x4xf32>
    %928 = vector.broadcast %922 : vector<2x1x4xf32> to vector<2x4x4xf32>
    %929 = vector.broadcast %921 : vector<2x4x1xf32> to vector<2x4x4xf32>
    %930 = arith.cmpf oeq, %928, %929 : vector<2x4x4xf32>
    %931 = arith.cmpi slt, %924, %923 : vector<2x4x4xi32>
    %932 = arith.andi %930, %931 : vector<2x4x4xi1>
    %933 = arith.ori %927, %932 : vector<2x4x4xi1>
    %934 = arith.extui %933 : vector<2x4x4xi1> to vector<2x4x4xi32>
    %cst_270 = arith.constant dense<0> : vector<2x4xi32>
    %935 = vector.multi_reduction <add>, %934, %cst_270 [2] : vector<2x4x4xi32> to vector<2x4xi32>
    %c2_i32_271 = arith.constant 2 : i32
    %936 = vector.broadcast %c2_i32_271 : i32 to vector<2x4xi32>
    %937 = arith.cmpi slt, %935, %936 : vector<2x4xi32>
    %938 = arith.extui %937 : vector<2x4xi1> to vector<2x4xi32>
    %939 = arith.sitofp %938 : vector<2x4xi32> to vector<2x4xf32>
    %940 = arith.subf %917, %920 : vector<2x4xf32>
    %941 = arith.negf %940 : vector<2x4xf32>
    %942 = math.exp %941 : vector<2x4xf32>
    %cst_272 = arith.constant 1.000000e+00 : f32
    %943 = vector.broadcast %cst_272 : f32 to vector<2x4xf32>
    %944 = arith.addf %943, %942 : vector<2x4xf32>
    %945 = arith.divf %943, %944 : vector<2x4xf32>
    %946 = arith.mulf %939, %945 : vector<2x4xf32>
    %cst_273 = arith.constant 1.000000e+00 : f32
    %947 = vector.broadcast %cst_273 : f32 to vector<2x4xf32>
    %948 = arith.subf %947, %945 : vector<2x4xf32>
    %949 = arith.mulf %939, %948 : vector<2x4xf32>
    %cst_274 = arith.constant dense<0.000000e+00> : vector<2x64xf32>
    %950 = tpu.matmul %946, %19, %cst_274 {dimension_numbers = #tpu.dot_dimension_numbers<[1], [0], [0], [1], [0, 0, 1, 1], [], []>} : vector<2x4xf32>, vector<4x64xf32>, vector<2x64xf32> -> vector<2x64xf32>
    %951 = arith.mulf %950, %913 : vector<2x64xf32>
    %cst_275 = arith.constant dense<0.000000e+00> : vector<2x64xf32>
    %952 = tpu.matmul %949, %20, %cst_275 {dimension_numbers = #tpu.dot_dimension_numbers<[1], [0], [0], [1], [0, 0, 1, 1], [], []>} : vector<2x4xf32>, vector<4x64xf32>, vector<2x64xf32> -> vector<2x64xf32>
    %953 = arith.addf %951, %952 : vector<2x64xf32>
    %cst_276 = arith.constant dense<0.000000e+00> : vector<2x512xf32>
    %954 = tpu.matmul %953, %22, %cst_276 {dimension_numbers = #tpu.dot_dimension_numbers<[1], [0], [0], [1], [0, 0, 1, 1], [], []>} : vector<2x64xf32>, vector<64x512xf32>, vector<2x512xf32> -> vector<2x512xf32>
    %cst_277 = arith.constant dense<0.000000e+00> : vector<2x512xf32>
    %955 = tpu.matmul %906, %23, %cst_277 {dimension_numbers = #tpu.dot_dimension_numbers<[1], [0], [0], [1], [0, 0, 1, 1], [], []>} : vector<2x128xf32>, vector<128x512xf32>, vector<2x512xf32> -> vector<2x512xf32>
    %956 = arith.addf %954, %955 : vector<2x512xf32>
    %957 = vector.extract_strided_slice %956 {offsets = [0, 0], sizes = [2, 128], strides = [1, 1]} : vector<2x512xf32> to vector<2x128xf32>
    %958 = arith.negf %957 : vector<2x128xf32>
    %959 = math.exp %958 : vector<2x128xf32>
    %cst_278 = arith.constant 1.000000e+00 : f32
    %960 = vector.broadcast %cst_278 : f32 to vector<2x128xf32>
    %961 = arith.addf %960, %959 : vector<2x128xf32>
    %962 = arith.divf %960, %961 : vector<2x128xf32>
    %963 = vector.extract_strided_slice %956 {offsets = [0, 128], sizes = [2, 128], strides = [1, 1]} : vector<2x512xf32> to vector<2x128xf32>
    %964 = arith.negf %963 : vector<2x128xf32>
    %965 = math.exp %964 : vector<2x128xf32>
    %cst_279 = arith.constant 1.000000e+00 : f32
    %966 = vector.broadcast %cst_279 : f32 to vector<2x128xf32>
    %967 = arith.addf %966, %965 : vector<2x128xf32>
    %968 = arith.divf %966, %967 : vector<2x128xf32>
    %969 = vector.extract_strided_slice %956 {offsets = [0, 256], sizes = [2, 128], strides = [1, 1]} : vector<2x512xf32> to vector<2x128xf32>
    %970 = arith.negf %969 : vector<2x128xf32>
    %971 = math.exp %970 : vector<2x128xf32>
    %cst_280 = arith.constant 1.000000e+00 : f32
    %972 = vector.broadcast %cst_280 : f32 to vector<2x128xf32>
    %973 = arith.addf %972, %971 : vector<2x128xf32>
    %974 = arith.divf %972, %973 : vector<2x128xf32>
    %975 = vector.extract_strided_slice %956 {offsets = [0, 384], sizes = [2, 128], strides = [1, 1]} : vector<2x512xf32> to vector<2x128xf32>
    %976 = math.tanh %975 : vector<2x128xf32>
    %977 = arith.mulf %911, %968 : vector<2x128xf32>
    %978 = arith.mulf %962, %976 : vector<2x128xf32>
    %979 = arith.addf %977, %978 : vector<2x128xf32>
    %980 = math.tanh %979 : vector<2x128xf32>
    %981 = arith.mulf %974, %980 : vector<2x128xf32>
    %cst_281 = arith.constant 0.000000e+00 : f32
    %982 = vector.broadcast %cst_281 : f32 to vector<2x128xf32>
    %983 = vector.extract_strided_slice %24 {offsets = [0, 0, 0], sizes = [1, 128, 64], strides = [1, 1, 1]} : vector<2x128x64xf32> to vector<1x128x64xf32>
    %984 = vector.shape_cast %983 : vector<1x128x64xf32> to vector<128x64xf32>
    %cst_282 = arith.constant dense<0.000000e+00> : vector<2x64xf32>
    %985 = tpu.matmul %981, %984, %cst_282 {dimension_numbers = #tpu.dot_dimension_numbers<[1], [0], [0], [1], [0, 0, 1, 1], [], []>} : vector<2x128xf32>, vector<128x64xf32>, vector<2x64xf32> -> vector<2x64xf32>
    %986 = vector.shape_cast %985 : vector<2x64xf32> to vector<2x4x16xf32>
    %987 = vector.extract_strided_slice %25 {offsets = [0, 0, 0], sizes = [1, 128, 64], strides = [1, 1, 1]} : vector<2x128x64xf32> to vector<1x128x64xf32>
    %988 = vector.shape_cast %987 : vector<1x128x64xf32> to vector<128x64xf32>
    %cst_283 = arith.constant dense<0.000000e+00> : vector<2x64xf32>
    %989 = tpu.matmul %981, %988, %cst_283 {dimension_numbers = #tpu.dot_dimension_numbers<[1], [0], [0], [1], [0, 0, 1, 1], [], []>} : vector<2x128xf32>, vector<128x64xf32>, vector<2x64xf32> -> vector<2x64xf32>
    %990 = vector.shape_cast %989 : vector<2x64xf32> to vector<2x4x16xf32>
    %991 = vector.extract_strided_slice %26 {offsets = [0, 0, 0], sizes = [1, 128, 128], strides = [1, 1, 1]} : vector<2x128x128xf32> to vector<1x128x128xf32>
    %992 = vector.shape_cast %991 : vector<1x128x128xf32> to vector<128x128xf32>
    %cst_284 = arith.constant dense<0.000000e+00> : vector<2x128xf32>
    %993 = tpu.matmul %981, %992, %cst_284 {dimension_numbers = #tpu.dot_dimension_numbers<[1], [0], [0], [1], [0, 0, 1, 1], [], []>} : vector<2x128xf32>, vector<128x128xf32>, vector<2x128xf32> -> vector<2x128xf32>
    %994 = vector.shape_cast %993 : vector<2x128xf32> to vector<2x4x32xf32>
    "tpu.trace_start"() <{level = 10 : i32, message = "buq,bvq->buv"}> : () -> ()
    %cst_285 = arith.constant dense<0.000000e+00> : vector<2x4x4xf32>
    %995 = tpu.matmul %986, %990, %cst_285 {dimension_numbers = #tpu.dot_dimension_numbers<[2], [2], [1], [1], [0, 0, 0, 1, 1, 1], [0], [0]>} : vector<2x4x16xf32>, vector<2x4x16xf32>, vector<2x4x4xf32> -> vector<2x4x4xf32>
    "tpu.trace_stop"() : () -> ()
    %cst_286 = arith.constant 2.500000e-01 : f32
    %996 = vector.broadcast %cst_286 : f32 to vector<2x4x4xf32>
    %997 = arith.mulf %995, %996 : vector<2x4x4xf32>
    %cst_287 = arith.constant dense<0xFF800000> : vector<2x4xf32>
    %998 = vector.multi_reduction <maximumf>, %997, %cst_287 [2] : vector<2x4x4xf32> to vector<2x4xf32>
    %cst_288 = arith.constant 0xFF800000 : f32
    %999 = vector.broadcast %cst_288 : f32 to vector<2x4xf32>
    %1000 = arith.maximumf %999, %998 : vector<2x4xf32>
    %1001 = vector.shape_cast %1000 : vector<2x4xf32> to vector<2x4x1xf32>
    %1002 = vector.broadcast %1001 : vector<2x4x1xf32> to vector<2x4x4xf32>
    %1003 = arith.subf %997, %1002 : vector<2x4x4xf32>
    %1004 = math.exp %1003 : vector<2x4x4xf32>
    %cst_289 = arith.constant dense<0.000000e+00> : vector<2x4xf32>
    %1005 = vector.multi_reduction <add>, %1004, %cst_289 [2] : vector<2x4x4xf32> to vector<2x4xf32>
    %1006 = vector.shape_cast %1005 : vector<2x4xf32> to vector<2x4x1xf32>
    %1007 = vector.broadcast %1006 : vector<2x4x1xf32> to vector<2x4x4xf32>
    %1008 = arith.divf %1004, %1007 : vector<2x4x4xf32>
    "tpu.trace_start"() <{level = 10 : i32, message = "buv,bvd->bud"}> : () -> ()
    %cst_290 = arith.constant dense<0.000000e+00> : vector<2x4x32xf32>
    %1009 = tpu.matmul %1008, %994, %cst_290 {dimension_numbers = #tpu.dot_dimension_numbers<[2], [1], [1], [2], [0, 0, 0, 1, 1, 2], [0], [0]>} : vector<2x4x4xf32>, vector<2x4x32xf32>, vector<2x4x32xf32> -> vector<2x4x32xf32>
    "tpu.trace_stop"() : () -> ()
    %1010 = vector.shape_cast %1009 : vector<2x4x32xf32> to vector<2x128xf32>
    %1011 = vector.extract_strided_slice %27 {offsets = [0, 0, 0], sizes = [1, 128, 128], strides = [1, 1, 1]} : vector<2x128x128xf32> to vector<1x128x128xf32>
    %1012 = vector.shape_cast %1011 : vector<1x128x128xf32> to vector<128x128xf32>
    %cst_291 = arith.constant dense<0.000000e+00> : vector<2x128xf32>
    %1013 = tpu.matmul %1010, %1012, %cst_291 {dimension_numbers = #tpu.dot_dimension_numbers<[1], [0], [0], [1], [0, 0, 1, 1], [], []>} : vector<2x128xf32>, vector<128x128xf32>, vector<2x128xf32> -> vector<2x128xf32>
    %1014 = arith.addf %982, %1013 : vector<2x128xf32>
    %1015 = vector.extract_strided_slice %24 {offsets = [1, 0, 0], sizes = [1, 128, 64], strides = [1, 1, 1]} : vector<2x128x64xf32> to vector<1x128x64xf32>
    %1016 = vector.shape_cast %1015 : vector<1x128x64xf32> to vector<128x64xf32>
    %cst_292 = arith.constant dense<0.000000e+00> : vector<2x64xf32>
    %1017 = tpu.matmul %981, %1016, %cst_292 {dimension_numbers = #tpu.dot_dimension_numbers<[1], [0], [0], [1], [0, 0, 1, 1], [], []>} : vector<2x128xf32>, vector<128x64xf32>, vector<2x64xf32> -> vector<2x64xf32>
    %1018 = vector.shape_cast %1017 : vector<2x64xf32> to vector<2x4x16xf32>
    %1019 = vector.extract_strided_slice %25 {offsets = [1, 0, 0], sizes = [1, 128, 64], strides = [1, 1, 1]} : vector<2x128x64xf32> to vector<1x128x64xf32>
    %1020 = vector.shape_cast %1019 : vector<1x128x64xf32> to vector<128x64xf32>
    %cst_293 = arith.constant dense<0.000000e+00> : vector<2x64xf32>
    %1021 = tpu.matmul %981, %1020, %cst_293 {dimension_numbers = #tpu.dot_dimension_numbers<[1], [0], [0], [1], [0, 0, 1, 1], [], []>} : vector<2x128xf32>, vector<128x64xf32>, vector<2x64xf32> -> vector<2x64xf32>
    %1022 = vector.shape_cast %1021 : vector<2x64xf32> to vector<2x4x16xf32>
    %1023 = vector.extract_strided_slice %26 {offsets = [1, 0, 0], sizes = [1, 128, 128], strides = [1, 1, 1]} : vector<2x128x128xf32> to vector<1x128x128xf32>
    %1024 = vector.shape_cast %1023 : vector<1x128x128xf32> to vector<128x128xf32>
    %cst_294 = arith.constant dense<0.000000e+00> : vector<2x128xf32>
    %1025 = tpu.matmul %981, %1024, %cst_294 {dimension_numbers = #tpu.dot_dimension_numbers<[1], [0], [0], [1], [0, 0, 1, 1], [], []>} : vector<2x128xf32>, vector<128x128xf32>, vector<2x128xf32> -> vector<2x128xf32>
    %1026 = vector.shape_cast %1025 : vector<2x128xf32> to vector<2x4x32xf32>
    "tpu.trace_start"() <{level = 10 : i32, message = "buq,bvq->buv"}> : () -> ()
    %cst_295 = arith.constant dense<0.000000e+00> : vector<2x4x4xf32>
    %1027 = tpu.matmul %1018, %1022, %cst_295 {dimension_numbers = #tpu.dot_dimension_numbers<[2], [2], [1], [1], [0, 0, 0, 1, 1, 1], [0], [0]>} : vector<2x4x16xf32>, vector<2x4x16xf32>, vector<2x4x4xf32> -> vector<2x4x4xf32>
    "tpu.trace_stop"() : () -> ()
    %cst_296 = arith.constant 2.500000e-01 : f32
    %1028 = vector.broadcast %cst_296 : f32 to vector<2x4x4xf32>
    %1029 = arith.mulf %1027, %1028 : vector<2x4x4xf32>
    %cst_297 = arith.constant dense<0xFF800000> : vector<2x4xf32>
    %1030 = vector.multi_reduction <maximumf>, %1029, %cst_297 [2] : vector<2x4x4xf32> to vector<2x4xf32>
    %cst_298 = arith.constant 0xFF800000 : f32
    %1031 = vector.broadcast %cst_298 : f32 to vector<2x4xf32>
    %1032 = arith.maximumf %1031, %1030 : vector<2x4xf32>
    %1033 = vector.shape_cast %1032 : vector<2x4xf32> to vector<2x4x1xf32>
    %1034 = vector.broadcast %1033 : vector<2x4x1xf32> to vector<2x4x4xf32>
    %1035 = arith.subf %1029, %1034 : vector<2x4x4xf32>
    %1036 = math.exp %1035 : vector<2x4x4xf32>
    %cst_299 = arith.constant dense<0.000000e+00> : vector<2x4xf32>
    %1037 = vector.multi_reduction <add>, %1036, %cst_299 [2] : vector<2x4x4xf32> to vector<2x4xf32>
    %1038 = vector.shape_cast %1037 : vector<2x4xf32> to vector<2x4x1xf32>
    %1039 = vector.broadcast %1038 : vector<2x4x1xf32> to vector<2x4x4xf32>
    %1040 = arith.divf %1036, %1039 : vector<2x4x4xf32>
    "tpu.trace_start"() <{level = 10 : i32, message = "buv,bvd->bud"}> : () -> ()
    %cst_300 = arith.constant dense<0.000000e+00> : vector<2x4x32xf32>
    %1041 = tpu.matmul %1040, %1026, %cst_300 {dimension_numbers = #tpu.dot_dimension_numbers<[2], [1], [1], [2], [0, 0, 0, 1, 1, 2], [0], [0]>} : vector<2x4x4xf32>, vector<2x4x32xf32>, vector<2x4x32xf32> -> vector<2x4x32xf32>
    "tpu.trace_stop"() : () -> ()
    %1042 = vector.shape_cast %1041 : vector<2x4x32xf32> to vector<2x128xf32>
    %1043 = vector.extract_strided_slice %27 {offsets = [1, 0, 0], sizes = [1, 128, 128], strides = [1, 1, 1]} : vector<2x128x128xf32> to vector<1x128x128xf32>
    %1044 = vector.shape_cast %1043 : vector<1x128x128xf32> to vector<128x128xf32>
    %cst_301 = arith.constant dense<0.000000e+00> : vector<2x128xf32>
    %1045 = tpu.matmul %1042, %1044, %cst_301 {dimension_numbers = #tpu.dot_dimension_numbers<[1], [0], [0], [1], [0, 0, 1, 1], [], []>} : vector<2x128xf32>, vector<128x128xf32>, vector<2x128xf32> -> vector<2x128xf32>
    %1046 = arith.addf %1014, %1045 : vector<2x128xf32>
    %1047 = arith.addf %1046, %981 : vector<2x128xf32>
    %cst_302 = arith.constant dense<0.000000e+00> : vector<2x128xf32>
    %1048 = tpu.matmul %939, %21, %cst_302 {dimension_numbers = #tpu.dot_dimension_numbers<[1], [0], [0], [1], [0, 0, 1, 1], [], []>} : vector<2x4xf32>, vector<4x128xf32>, vector<2x128xf32> -> vector<2x128xf32>
    %1049 = arith.mulf %1048, %1047 : vector<2x128xf32>
    %cst_303 = arith.constant 1.000000e+00 : f32
    %1050 = vector.broadcast %cst_303 : f32 to vector<2x128xf32>
    %1051 = arith.subf %1050, %1048 : vector<2x128xf32>
    %1052 = arith.mulf %1051, %906 : vector<2x128xf32>
    %1053 = arith.addf %1049, %1052 : vector<2x128xf32>
    %c0_304 = arith.constant 0 : index
    %c0_305 = arith.constant 0 : index
    %1054 = vector.load %arg22[%c0_304, %c0_305] : memref<128x128xf32, #tpu.memory_space<vmem>>, vector<128x128xf32>
    %cst_306 = arith.constant dense<0.000000e+00> : vector<2x128xf32>
    %1055 = tpu.matmul %1053, %1054, %cst_306 {dimension_numbers = #tpu.dot_dimension_numbers<[1], [0], [0], [1], [0, 0, 1, 1], [], []>} : vector<2x128xf32>, vector<128x128xf32>, vector<2x128xf32> -> vector<2x128xf32>
    %c0_307 = arith.constant 0 : index
    %c0_308 = arith.constant 0 : index
    %1056 = vector.load %arg23[%c0_307, %c0_308] : memref<1x128xf32, #tpu.memory_space<vmem>>, vector<1x128xf32>
    %1057 = vector.broadcast %1056 : vector<1x128xf32> to vector<2x128xf32>
    %1058 = arith.addf %1055, %1057 : vector<2x128xf32>
    %c0_309 = arith.constant 0 : index
    %c0_310 = arith.constant 0 : index
    %1059 = vector.load %arg24[%c0_309, %c0_310] : memref<2x128xf32, #tpu.memory_space<vmem>>, vector<2x128xf32>
    tpu.vector_store %arg24[%c0_309, %c0_310], %1058 {strides = array<i32>} : memref<2x128xf32, #tpu.memory_space<vmem>>, vector<2x128xf32>,
    return
  }
  func.func @transform_0(%arg0: i32) -> (i32, i32) {
    %c0_i32 = arith.constant 0 : i32
    %c0_i32_0 = arith.constant 0 : i32
    %c0_i32_1 = arith.constant 0 : i32
    return %c0_i32, %c0_i32_0 : i32, i32
  }
  func.func @transform_1(%arg0: i32) -> (i32, i32) {
    %c0_i32 = arith.constant 0 : i32
    %c0_i32_0 = arith.constant 0 : i32
    %c0_i32_1 = arith.constant 0 : i32
    return %c0_i32, %c0_i32_0 : i32, i32
  }
  func.func @transform_2(%arg0: i32) -> (i32, i32) {
    %c0_i32 = arith.constant 0 : i32
    %c0_i32_0 = arith.constant 0 : i32
    %c0_i32_1 = arith.constant 0 : i32
    return %c0_i32, %c0_i32_0 : i32, i32
  }
  func.func @transform_3(%arg0: i32) -> (i32, i32) {
    %c0_i32 = arith.constant 0 : i32
    %c0_i32_0 = arith.constant 0 : i32
    %c0_i32_1 = arith.constant 0 : i32
    return %c0_i32, %c0_i32_0 : i32, i32
  }
  func.func @transform_4(%arg0: i32) -> (i32, i32) {
    %c0_i32 = arith.constant 0 : i32
    %c0_i32_0 = arith.constant 0 : i32
    %c0_i32_1 = arith.constant 0 : i32
    return %c0_i32, %c0_i32_0 : i32, i32
  }
  func.func @transform_5(%arg0: i32) -> (i32, i32) {
    %c0_i32 = arith.constant 0 : i32
    %c0_i32_0 = arith.constant 0 : i32
    %c0_i32_1 = arith.constant 0 : i32
    return %c0_i32, %c0_i32_0 : i32, i32
  }
  func.func @transform_6(%arg0: i32) -> (i32, i32) {
    %c0_i32 = arith.constant 0 : i32
    %c0_i32_0 = arith.constant 0 : i32
    %c0_i32_1 = arith.constant 0 : i32
    return %c0_i32, %c0_i32_0 : i32, i32
  }
  func.func @transform_7(%arg0: i32) -> (i32, i32) {
    %c0_i32 = arith.constant 0 : i32
    %c0_i32_0 = arith.constant 0 : i32
    %c0_i32_1 = arith.constant 0 : i32
    return %c0_i32, %c0_i32_0 : i32, i32
  }
  func.func @transform_8(%arg0: i32) -> (i32, i32) {
    %c0_i32 = arith.constant 0 : i32
    %c0_i32_0 = arith.constant 0 : i32
    %c0_i32_1 = arith.constant 0 : i32
    return %c0_i32, %c0_i32_0 : i32, i32
  }
  func.func @transform_9(%arg0: i32) -> (i32, i32) {
    %c0_i32 = arith.constant 0 : i32
    %c0_i32_0 = arith.constant 0 : i32
    %c0_i32_1 = arith.constant 0 : i32
    return %c0_i32, %c0_i32_0 : i32, i32
  }
  func.func @transform_10(%arg0: i32) -> (i32, i32) {
    %c0_i32 = arith.constant 0 : i32
    %c0_i32_0 = arith.constant 0 : i32
    %c0_i32_1 = arith.constant 0 : i32
    return %c0_i32, %c0_i32_0 : i32, i32
  }
  func.func @transform_11(%arg0: i32) -> (i32, i32) {
    %c0_i32 = arith.constant 0 : i32
    %c0_i32_0 = arith.constant 0 : i32
    %c0_i32_1 = arith.constant 0 : i32
    return %c0_i32, %c0_i32_0 : i32, i32
  }
  func.func @transform_12(%arg0: i32) -> (i32, i32) {
    %c0_i32 = arith.constant 0 : i32
    %c0_i32_0 = arith.constant 0 : i32
    %c0_i32_1 = arith.constant 0 : i32
    return %c0_i32, %c0_i32_0 : i32, i32
  }
  func.func @transform_13(%arg0: i32) -> (i32, i32) {
    %c0_i32 = arith.constant 0 : i32
    %c0_i32_0 = arith.constant 0 : i32
    %c0_i32_1 = arith.constant 0 : i32
    return %c0_i32, %c0_i32_0 : i32, i32
  }
  func.func @transform_14(%arg0: i32) -> (i32, i32) {
    %c0_i32 = arith.constant 0 : i32
    %c0_i32_0 = arith.constant 0 : i32
    %c0_i32_1 = arith.constant 0 : i32
    return %c0_i32, %c0_i32_0 : i32, i32
  }
  func.func @transform_15(%arg0: i32) -> (i32, i32) {
    %c0_i32 = arith.constant 0 : i32
    %c0_i32_0 = arith.constant 0 : i32
    %c0_i32_1 = arith.constant 0 : i32
    return %c0_i32, %c0_i32_0 : i32, i32
  }
  func.func @transform_16(%arg0: i32) -> (i32, i32) {
    %c0_i32 = arith.constant 0 : i32
    %c0_i32_0 = arith.constant 0 : i32
    %c0_i32_1 = arith.constant 0 : i32
    return %c0_i32, %c0_i32_0 : i32, i32
  }
  func.func @transform_17(%arg0: i32) -> (i32, i32, i32) {
    %c0_i32 = arith.constant 0 : i32
    %c0_i32_0 = arith.constant 0 : i32
    %c0_i32_1 = arith.constant 0 : i32
    %c0_i32_2 = arith.constant 0 : i32
    return %c0_i32, %c0_i32_0, %c0_i32_1 : i32, i32, i32
  }
  func.func @transform_18(%arg0: i32) -> (i32, i32, i32) {
    %c0_i32 = arith.constant 0 : i32
    %c0_i32_0 = arith.constant 0 : i32
    %c0_i32_1 = arith.constant 0 : i32
    %c0_i32_2 = arith.constant 0 : i32
    return %c0_i32, %c0_i32_0, %c0_i32_1 : i32, i32, i32
  }
  func.func @transform_19(%arg0: i32) -> (i32, i32, i32) {
    %c0_i32 = arith.constant 0 : i32
    %c0_i32_0 = arith.constant 0 : i32
    %c0_i32_1 = arith.constant 0 : i32
    %c0_i32_2 = arith.constant 0 : i32
    return %c0_i32, %c0_i32_0, %c0_i32_1 : i32, i32, i32
  }
  func.func @transform_20(%arg0: i32) -> (i32, i32, i32) {
    %c0_i32 = arith.constant 0 : i32
    %c0_i32_0 = arith.constant 0 : i32
    %c0_i32_1 = arith.constant 0 : i32
    %c0_i32_2 = arith.constant 0 : i32
    return %c0_i32, %c0_i32_0, %c0_i32_1 : i32, i32, i32
  }
  func.func @transform_21(%arg0: i32) -> (i32, i32) {
    %c0_i32 = arith.constant 0 : i32
    %c0_i32_0 = arith.constant 0 : i32
    %c0_i32_1 = arith.constant 0 : i32
    return %c0_i32, %c0_i32_0 : i32, i32
  }
  func.func @transform_22(%arg0: i32) -> (i32, i32) {
    %c0_i32 = arith.constant 0 : i32
    %c0_i32_0 = arith.constant 0 : i32
    %c0_i32_1 = arith.constant 0 : i32
    return %c0_i32, %c0_i32_0 : i32, i32
  }
  func.func @transform_23(%arg0: i32) -> (i32, i32) {
    %c0_i32 = arith.constant 0 : i32
    %c0_i32_0 = arith.constant 0 : i32
    %c0_i32_1 = arith.constant 0 : i32
    return %c0_i32, %c0_i32_0 : i32, i32
  }
}

</mosaic_0001>

<llo_original>
// kernel: mnist_forward.1
$region0: #{mnist_forward.1}
  #allocation0 [shape = 'u32[]', space=smem, size = 0x4, offset = 0x4, fixed_abs, tag = 'smem constant byte address 0x4 - core index']
  #allocation1 [shape = 'u32[72,128]{1,0:T(1,128)}', space=vmem, size = 0x9000, scoped, tag = 'internal scratch']
  %s0 = inlined_call_operand.vmem [shape: f32[14,8], index: 0, kind: input, shape index: {}]
  %s1 = inlined_call_operand.vmem [shape: f32[2,128], index: 1, kind: input, shape index: {}]
  %s2 = inlined_call_operand.vmem [shape: f32[2,128], index: 2, kind: input, shape index: {}]
  %s3 = inlined_call_operand.vmem [shape: f32[8,128], index: 3, kind: input, shape index: {}]
  %s4 = inlined_call_operand.vmem [shape: f32[1,128], index: 4, kind: input, shape index: {}]
  %s5 = inlined_call_operand.vmem [shape: f32[8,4], index: 5, kind: input, shape index: {}]
  %s6 = inlined_call_operand.vmem [shape: f32[1,4], index: 6, kind: input, shape index: {}]
  %s7 = inlined_call_operand.vmem [shape: f32[8,64], index: 7, kind: input, shape index: {}]
  %s8 = inlined_call_operand.vmem [shape: f32[1,64], index: 8, kind: input, shape index: {}]
  %s9 = inlined_call_operand.vmem [shape: f32[128,4], index: 9, kind: input, shape index: {}]
  %s10 = inlined_call_operand.vmem [shape: f32[1,4], index: 10, kind: input, shape index: {}]
  %s11 = inlined_call_operand.vmem [shape: f32[128,4], index: 11, kind: input, shape index: {}]
  %s12 = inlined_call_operand.vmem [shape: f32[4,64], index: 12, kind: input, shape index: {}]
  %s13 = inlined_call_operand.vmem [shape: f32[4,64], index: 13, kind: input, shape index: {}]
  %s14 = inlined_call_operand.vmem [shape: f32[4,128], index: 14, kind: input, shape index: {}]
  %s15 = inlined_call_operand.vmem [shape: f32[64,512], index: 15, kind: input, shape index: {}]
  %s16 = inlined_call_operand.vmem [shape: f32[128,512], index: 16, kind: input, shape index: {}]
  %s17 = inlined_call_operand.vmem [shape: f32[2,128,64], index: 17, kind: input, shape index: {}]
  %s18 = inlined_call_operand.vmem [shape: f32[2,128,64], index: 18, kind: input, shape index: {}]
  %s19 = inlined_call_operand.hbm [shape: f32[2,128,128], index: 19, kind: input, shape index: {}]
  %s20 = inlined_call_operand.hbm [shape: f32[2,128,128], index: 20, kind: input, shape index: {}]
  %s21 = inlined_call_operand.hbm [shape: f32[128,128], index: 21, kind: input, shape index: {}]
  %s22 = inlined_call_operand.vmem [shape: f32[1,128], index: 22, kind: input, shape index: {}]
  %s23 = inlined_call_operand.hbm [shape: f32[2,128], index: 23, kind: output, shape index: {}]
  %s24 = sld [smem:[#allocation0]]
  $region114: #{mnist_forward.1} parent=0
    _
  %s26 = ssub.s32 1, %s24
  %s27 = scalar_select 0, %s26, %s24
  $region1: #{mnist_forward.1} parent=0
    #allocation2 [shape = 'u8[131072]{0}', space=vmem, size = 0x20000, scoped, tag = 'input window, operand 19, single buffered']
    #allocation3 [shape = 's32[1]{0}', space=sflag, size = 0x4, scoped, tag = 'scoped memory for mnist_forward.1']
    #allocation4 [shape = 's32[1]{0}', space=sflag, size = 0x4, scoped, tag = 'scoped memory for mnist_forward.1']
    #allocation5 [shape = 'u8[131072]{0}', space=vmem, size = 0x20000, scoped, tag = 'input window, operand 20, single buffered']
    #allocation6 [shape = 's32[1]{0}', space=sflag, size = 0x4, scoped, tag = 'scoped memory for mnist_forward.1']
    #allocation7 [shape = 'u8[65536]{0}', space=vmem, size = 0x10000, scoped, tag = 'input window, operand 21, single buffered']
    #allocation8 [shape = 'u8[1024]{0}', space=vmem, size = 0x400, scoped, tag = 'output window, operand 0, single buffered']
    %28 = vsyncpa [#allocation3], 0
    %29 = vsyncpa [#allocation6], 0
    %30 = vsyncpa [#allocation4], 0
    // Predicated region
    $region2: #{mnist_forward.1} parent=1 // pred_check
      _
    $region3: #{mnist_forward.1} parent=1 // pred_check_branch
      %32 = sbr.rel (0) target = $region5
    $region4: #{mnist_forward.1} parent=1 // pred_region
      _
    $region5: #{mnist_forward.1} parent=1 // pred_fallthru
      _
    // Predicated region
    $region6: #{mnist_forward.1} parent=1 // pred_check
      _
    $region7: #{mnist_forward.1} parent=1 // pred_check_branch
      %34 = sbr.rel (0) target = $region9
    $region8: #{mnist_forward.1} parent=1 // pred_region
      _
    $region9: #{mnist_forward.1} parent=1 // pred_fallthru
      _
    // Predicated region
    $region10: #{mnist_forward.1} parent=1 // pred_check
      _
    $region11: #{mnist_forward.1} parent=1 // pred_check_branch
      %36 = sbr.rel (0) target = $region13
    $region12: #{mnist_forward.1} parent=1 // pred_region
      _
    $region13: #{mnist_forward.1} parent=1 // pred_fallthru
      _
    // Predicated region
    $region14: #{mnist_forward.1} parent=1 // pred_check
      _
    $region15: #{mnist_forward.1} parent=1 // pred_check_branch
      %38 = sbr.rel (0) target = $region17
    $region16: #{mnist_forward.1} parent=1 // pred_region
      _
    $region17: #{mnist_forward.1} parent=1 // pred_fallthru
      _
    // Predicated region
    $region18: #{mnist_forward.1} parent=1 // pred_check
      _
    $region19: #{mnist_forward.1} parent=1 // pred_check_branch
      %40 = sbr.rel (0) target = $region21
    $region20: #{mnist_forward.1} parent=1 // pred_region
      _
    $region21: #{mnist_forward.1} parent=1 // pred_fallthru
      _
    // Predicated region
    $region22: #{mnist_forward.1} parent=1 // pred_check
      _
    $region23: #{mnist_forward.1} parent=1 // pred_check_branch
      %42 = sbr.rel (0) target = $region25
    $region24: #{mnist_forward.1} parent=1 // pred_region
      _
    $region25: #{mnist_forward.1} parent=1 // pred_fallthru
      _
    // Predicated region
    $region26: #{mnist_forward.1} parent=1 // pred_check
      _
    $region27: #{mnist_forward.1} parent=1 // pred_check_branch
      %44 = sbr.rel (0) target = $region29
    $region28: #{mnist_forward.1} parent=1 // pred_region
      _
    $region29: #{mnist_forward.1} parent=1 // pred_fallthru
      _
    // Predicated region
    $region30: #{mnist_forward.1} parent=1 // pred_check
      _
    $region31: #{mnist_forward.1} parent=1 // pred_check_branch
      %46 = sbr.rel (0) target = $region33
    $region32: #{mnist_forward.1} parent=1 // pred_region
      _
    $region33: #{mnist_forward.1} parent=1 // pred_fallthru
      _
    // Predicated region
    $region34: #{mnist_forward.1} parent=1 // pred_check
      _
    $region35: #{mnist_forward.1} parent=1 // pred_check_branch
      %48 = sbr.rel (0) target = $region37
    $region36: #{mnist_forward.1} parent=1 // pred_region
      _
    $region37: #{mnist_forward.1} parent=1 // pred_fallthru
      _
    // Predicated region
    $region38: #{mnist_forward.1} parent=1 // pred_check
      _
    $region39: #{mnist_forward.1} parent=1 // pred_check_branch
      %50 = sbr.rel (0) target = $region41
    $region40: #{mnist_forward.1} parent=1 // pred_region
      _
    $region41: #{mnist_forward.1} parent=1 // pred_fallthru
      _
    // Predicated region
    $region42: #{mnist_forward.1} parent=1 // pred_check
      _
    $region43: #{mnist_forward.1} parent=1 // pred_check_branch
      %52 = sbr.rel (0) target = $region45
    $region44: #{mnist_forward.1} parent=1 // pred_region
      _
    $region45: #{mnist_forward.1} parent=1 // pred_fallthru
      _
    // Predicated region
    $region46: #{mnist_forward.1} parent=1 // pred_check
      _
    $region47: #{mnist_forward.1} parent=1 // pred_check_branch
      %54 = sbr.rel (0) target = $region49
    $region48: #{mnist_forward.1} parent=1 // pred_region
      _
    $region49: #{mnist_forward.1} parent=1 // pred_fallthru
      _
    // Predicated region
    $region50: #{mnist_forward.1} parent=1 // pred_check
      _
    $region51: #{mnist_forward.1} parent=1 // pred_check_branch
      %56 = sbr.rel (0) target = $region53
    $region52: #{mnist_forward.1} parent=1 // pred_region
      _
    $region53: #{mnist_forward.1} parent=1 // pred_fallthru
      _
    // Predicated region
    $region54: #{mnist_forward.1} parent=1 // pred_check
      _
    $region55: #{mnist_forward.1} parent=1 // pred_check_branch
      %58 = sbr.rel (0) target = $region57
    $region56: #{mnist_forward.1} parent=1 // pred_region
      _
    $region57: #{mnist_forward.1} parent=1 // pred_fallthru
      _
    // Predicated region
    $region58: #{mnist_forward.1} parent=1 // pred_check
      _
    $region59: #{mnist_forward.1} parent=1 // pred_check_branch
      %60 = sbr.rel (0) target = $region61
    $region60: #{mnist_forward.1} parent=1 // pred_region
      _
    $region61: #{mnist_forward.1} parent=1 // pred_fallthru
      _
    // Predicated region
    $region62: #{mnist_forward.1} parent=1 // pred_check
      _
    $region63: #{mnist_forward.1} parent=1 // pred_check_branch
      %62 = sbr.rel (0) target = $region65
    $region64: #{mnist_forward.1} parent=1 // pred_region
      _
    $region65: #{mnist_forward.1} parent=1 // pred_fallthru
      _
    // Predicated region
    $region66: #{mnist_forward.1} parent=1 // pred_check
      _
    $region67: #{mnist_forward.1} parent=1 // pred_check_branch
      %64 = sbr.rel (0) target = $region69
    $region68: #{mnist_forward.1} parent=1 // pred_region
      _
    $region69: #{mnist_forward.1} parent=1 // pred_fallthru
      _
    // Predicated region
    $region70: #{mnist_forward.1} parent=1 // pred_check
      _
    $region71: #{mnist_forward.1} parent=1 // pred_check_branch
      %66 = sbr.rel (0) target = $region73
    $region72: #{mnist_forward.1} parent=1 // pred_region
      _
    $region73: #{mnist_forward.1} parent=1 // pred_fallthru
      _
    // Predicated region
    $region74: #{mnist_forward.1} parent=1 // pred_check
      _
    $region75: #{mnist_forward.1} parent=1 // pred_check_branch
      %68 = sbr.rel (0) target = $region77
    $region76: #{mnist_forward.1} parent=1 // pred_region
      _
    $region77: #{mnist_forward.1} parent=1 // pred_fallthru
      _
    // Predicated region
    $region78: #{mnist_forward.1} parent=1 // pred_check
      _
    $region79: #{mnist_forward.1} parent=1 // pred_check_branch
      %70 = sbr.rel (0) target = $region81
    $region80: #{mnist_forward.1} parent=1 // pred_region
      %72 = vsyncadd [#allocation3], 0
      %s73 = sshll.u32 %s19, 4
      %s74 = int_to_ptr.hbm [resolvable:$true] %s73
      %s75 = sshll.u32 [#allocation2], 4
      %s76 = int_to_ptr.vmem [resolvable:$true] %s75
      %81 = dma.hbm_to_vmem [thread:$0]  %s74, 4096, %s76, [#allocation3], 128, 128, 8
    $region81: #{mnist_forward.1} parent=1 // pred_fallthru
      _
    // Predicated region
    $region82: #{mnist_forward.1} parent=1 // pred_check
      _
    $region83: #{mnist_forward.1} parent=1 // pred_check_branch
      %83 = sbr.rel (0) target = $region85
    $region84: #{mnist_forward.1} parent=1 // pred_region
      %85 = vsyncadd [#allocation6], 0
      %s86 = sshll.u32 %s20, 4
      %s87 = int_to_ptr.hbm [resolvable:$true] %s86
      %s88 = sshll.u32 [#allocation5], 4
      %s89 = int_to_ptr.vmem [resolvable:$true] %s88
      %94 = dma.hbm_to_vmem [thread:$0]  %s87, 4096, %s89, [#allocation6], 128, 128, 8
    $region85: #{mnist_forward.1} parent=1 // pred_fallthru
      _
    // Predicated region
    $region86: #{mnist_forward.1} parent=1 // pred_check
      _
    $region87: #{mnist_forward.1} parent=1 // pred_check_branch
      %96 = sbr.rel (0) target = $region89
    $region88: #{mnist_forward.1} parent=1 // pred_region
      %98 = vsyncadd [#allocation6], 0
      %s99 = sshll.u32 %s21, 4
      %s100 = int_to_ptr.hbm [resolvable:$true] %s99
      %s101 = sshll.u32 [#allocation7], 4
      %s102 = int_to_ptr.vmem [resolvable:$true] %s101
      %107 = dma.hbm_to_vmem [thread:$0]  %s100, 2048, %s102, [#allocation6], 128, 128, 8
    $region89: #{mnist_forward.1} parent=1 // pred_fallthru
      _
    // Predicated region
    $region90: #{mnist_forward.1} parent=1 // pred_check
      _
    $region91: #{mnist_forward.1} parent=1 // pred_check_branch
      %109 = sbr.rel (0) target = $region93
    $region92: #{mnist_forward.1} parent=1 // pred_region
      _
    $region93: #{mnist_forward.1} parent=1 // pred_fallthru
      _
    // Predicated region
    $region94: #{mnist_forward.1} parent=1 // pred_check
      _
    $region95: #{mnist_forward.1} parent=1 // pred_check_branch
      %111 = sbr.rel (0) target = $region97
    $region96: #{mnist_forward.1} parent=1 // pred_region
      %113 = dma.done [#allocation3], 4096
    $region97: #{mnist_forward.1} parent=1 // pred_fallthru
      _
    // Predicated region
    $region98: #{mnist_forward.1} parent=1 // pred_check
      _
    $region99: #{mnist_forward.1} parent=1 // pred_check_branch
      %115 = sbr.rel (0) target = $region101
    $region100: #{mnist_forward.1} parent=1 // pred_region
      %117 = dma.done [#allocation6], 4096
    $region101: #{mnist_forward.1} parent=1 // pred_fallthru
      _
    // Predicated region
    $region102: #{mnist_forward.1} parent=1 // pred_check
      _
    $region103: #{mnist_forward.1} parent=1 // pred_check_branch
      %119 = sbr.rel (0) target = $region105
    $region104: #{mnist_forward.1} parent=1 // pred_region
      %121 = dma.done [#allocation6], 2048
    $region105: #{mnist_forward.1} parent=1 // pred_fallthru
      _
    %v122 = vld [vmem:[%s0] sm:$0xff]
    %v123 = vld [vmem:[%s0 + $0x8] sm:$0x3f]
    %v124 = vld [vmem:[%s3] sm:$0xff]
    %v125 = vld [vmem:[%s4] sm:$0x1]
    %v127 = vperm.slane %v125, 0
    %vm129 = vcmask 64512
    %v131 = vsel %vm129, %v122, 0
    %v134 = vsel %vm129, %v123, 0
    %136 = vmatpush.msra.mxu0 0.0
    %137 = vmatpush.msra.mxu0 0.0
    %138 = vmatpush.msra.mxu0 0.0
    %139 = vmatpush.msra.mxu0 0.0
    %140 = vmatpush.msra.mxu0 0.0
    %141 = vmatpush.msra.mxu0 0.0
    %142 = vmatpush.msra.mxu0 0.0
    %143 = vmatpush.msra.mxu0 0.0
    %144 = vmatpush.msra.mxu0 0.0
    %145 = vmatpush.msra.mxu0 0.0
    %146 = vmatpush.msra.mxu0 0.0
    %147 = vmatpush.msra.mxu0 0.0
    %148 = vmatpush.msra.mxu0 0.0
    %149 = vmatpush.msra.mxu0 0.0
    %150 = vmatpush.msra.mxu0 0.0
    %151 = vmatpush.msra.mxu0 %v124
    %152 = vmatmul.f32.gmra.mxu0 %v131
    %v153 = vpop.f32.mrf.mxu0
    %v154 = vadd.f32 %v127, %v153
    %155 = vmatmul.f32.gmra.mxu0 %v134
    %v156 = vpop.f32.mrf.mxu0
    %v157 = vadd.f32 %v127, %v156
    %158 = vdwg.mxu0
    %v159 = vld [vmem:[%s5] sm:$0xff]
    %v160 = vld [vmem:[%s6] sm:$0x1]
    %v162 = vperm.slane %v160, 0
    %164 = vmatpush.msra.mxu0 0.0
    %165 = vmatpush.msra.mxu0 0.0
    %166 = vmatpush.msra.mxu0 0.0
    %167 = vmatpush.msra.mxu0 0.0
    %168 = vmatpush.msra.mxu0 0.0
    %169 = vmatpush.msra.mxu0 0.0
    %170 = vmatpush.msra.mxu0 0.0
    %171 = vmatpush.msra.mxu0 0.0
    %172 = vmatpush.msra.mxu0 0.0
    %173 = vmatpush.msra.mxu0 0.0
    %174 = vmatpush.msra.mxu0 0.0
    %175 = vmatpush.msra.mxu0 0.0
    %176 = vmatpush.msra.mxu0 0.0
    %177 = vmatpush.msra.mxu0 0.0
    %178 = vmatpush.msra.mxu0 0.0
    %179 = vmatpush.msra.mxu0 %v159
    %180 = vmatmul.f32.gmra.mxu0 %v131
    %v181 = vpop.f32.mrf.mxu0
    %v182 = vadd.f32 %v162, %v181
    %183 = vmatmul.f32.gmra.mxu0 %v134
    %v184 = vpop.f32.mrf.mxu0
    %v185 = vadd.f32 %v162, %v184
    %186 = vdwg.mxu0
    %v187 = vld [vmem:[%s7] sm:$0xff]
    %v188 = vld [vmem:[%s8] sm:$0x1]
    %v190 = vperm.slane %v188, 0
    %192 = vmatpush.msra.mxu0 0.0
    %193 = vmatpush.msra.mxu0 0.0
    %194 = vmatpush.msra.mxu0 0.0
    %195 = vmatpush.msra.mxu0 0.0
    %196 = vmatpush.msra.mxu0 0.0
    %197 = vmatpush.msra.mxu0 0.0
    %198 = vmatpush.msra.mxu0 0.0
    %199 = vmatpush.msra.mxu0 0.0
    %200 = vmatpush.msra.mxu0 0.0
    %201 = vmatpush.msra.mxu0 0.0
    %202 = vmatpush.msra.mxu0 0.0
    %203 = vmatpush.msra.mxu0 0.0
    %204 = vmatpush.msra.mxu0 0.0
    %205 = vmatpush.msra.mxu0 0.0
    %206 = vmatpush.msra.mxu0 0.0
    %207 = vmatpush.msra.mxu0 %v187
    %208 = vmatmul.f32.gmra.mxu0 %v131
    %v209 = vpop.f32.mrf.mxu0
    %v210 = vadd.f32 %v190, %v209
    %211 = vmatmul.f32.gmra.mxu0 %v134
    %v212 = vpop.f32.mrf.mxu0
    %v213 = vadd.f32 %v190, %v212
    %214 = vdwg.mxu0
    %v215 = vld [vmem:[%s9] sm:$0xff]
    %v216 = vld [vmem:[%s9 + $0x8] sm:$0xff]
    %v217 = vld [vmem:[%s9 + $0x10] sm:$0xff]
    %v218 = vld [vmem:[%s9 + $0x18] sm:$0xff]
    %v219 = vld [vmem:[%s9 + $0x20] sm:$0xff]
    %v220 = vld [vmem:[%s9 + $0x28] sm:$0xff]
    %v221 = vld [vmem:[%s9 + $0x30] sm:$0xff]
    %v222 = vld [vmem:[%s9 + $0x38] sm:$0xff]
    %v223 = vld [vmem:[%s9 + $0x40] sm:$0xff]
    %v224 = vld [vmem:[%s9 + $0x48] sm:$0xff]
    %v225 = vld [vmem:[%s9 + $0x50] sm:$0xff]
    %v226 = vld [vmem:[%s9 + $0x58] sm:$0xff]
    %v227 = vld [vmem:[%s9 + $0x60] sm:$0xff]
    %v228 = vld [vmem:[%s9 + $0x68] sm:$0xff]
    %v229 = vld [vmem:[%s9 + $0x70] sm:$0xff]
    %v230 = vld [vmem:[%s9 + $0x78] sm:$0xff]
    %v231 = vld [vmem:[%s10] sm:$0x1]
    %v232 = vld [vmem:[%s11] sm:$0xff]
    %v233 = vld [vmem:[%s11 + $0x8] sm:$0xff]
    %v234 = vld [vmem:[%s11 + $0x10] sm:$0xff]
    %v235 = vld [vmem:[%s11 + $0x18] sm:$0xff]
    %v236 = vld [vmem:[%s11 + $0x20] sm:$0xff]
    %v237 = vld [vmem:[%s11 + $0x28] sm:$0xff]
    %v238 = vld [vmem:[%s11 + $0x30] sm:$0xff]
    %v239 = vld [vmem:[%s11 + $0x38] sm:$0xff]
    %v240 = vld [vmem:[%s11 + $0x40] sm:$0xff]
    %v241 = vld [vmem:[%s11 + $0x48] sm:$0xff]
    %v242 = vld [vmem:[%s11 + $0x50] sm:$0xff]
    %v243 = vld [vmem:[%s11 + $0x58] sm:$0xff]
    %v244 = vld [vmem:[%s11 + $0x60] sm:$0xff]
    %v245 = vld [vmem:[%s11 + $0x68] sm:$0xff]
    %v246 = vld [vmem:[%s11 + $0x70] sm:$0xff]
    %v247 = vld [vmem:[%s11 + $0x78] sm:$0xff]
    %v248 = vld [vmem:[%s12] sm:$0xf]
    %v249 = vld [vmem:[%s13] sm:$0xf]
    %v250 = vld [vmem:[%s14] sm:$0xf]
    %v251 = vld [vmem:[%s15] sm:$0xff]
    %v252 = vld [vmem:[%s15 + $0x8] sm:$0xff]
    %v253 = vld [vmem:[%s15 + $0x10] sm:$0xff]
    %v254 = vld [vmem:[%s15 + $0x18] sm:$0xff]
    %v255 = vld [vmem:[%s15 + $0x20] sm:$0xff]
    %v256 = vld [vmem:[%s15 + $0x28] sm:$0xff]
    %v257 = vld [vmem:[%s15 + $0x30] sm:$0xff]
    %v258 = vld [vmem:[%s15 + $0x38] sm:$0xff]
    %v259 = vld [vmem:[%s15 + $0x40] sm:$0xff]
    %v260 = vld [vmem:[%s15 + $0x48] sm:$0xff]
    %v261 = vld [vmem:[%s15 + $0x50] sm:$0xff]
    %v262 = vld [vmem:[%s15 + $0x58] sm:$0xff]
    %v263 = vld [vmem:[%s15 + $0x60] sm:$0xff]
    %v264 = vld [vmem:[%s15 + $0x68] sm:$0xff]
    %v265 = vld [vmem:[%s15 + $0x70] sm:$0xff]
    %v266 = vld [vmem:[%s15 + $0x78] sm:$0xff]
    %v267 = vld [vmem:[%s15 + $0x80] sm:$0xff]
    %v268 = vld [vmem:[%s15 + $0x88] sm:$0xff]
    %v269 = vld [vmem:[%s15 + $0x90] sm:$0xff]
    %v270 = vld [vmem:[%s15 + $0x98] sm:$0xff]
    %v271 = vld [vmem:[%s15 + $0xa0] sm:$0xff]
    %v272 = vld [vmem:[%s15 + $0xa8] sm:$0xff]
    %v273 = vld [vmem:[%s15 + $0xb0] sm:$0xff]
    %v274 = vld [vmem:[%s15 + $0xb8] sm:$0xff]
    %v275 = vld [vmem:[%s15 + $0xc0] sm:$0xff]
    %v276 = vld [vmem:[%s15 + $0xc8] sm:$0xff]
    %v277 = vld [vmem:[%s15 + $0xd0] sm:$0xff]
    %v278 = vld [vmem:[%s15 + $0xd8] sm:$0xff]
    %v279 = vld [vmem:[%s15 + $0xe0] sm:$0xff]
    %v280 = vld [vmem:[%s15 + $0xe8] sm:$0xff]
    %v281 = vld [vmem:[%s15 + $0xf0] sm:$0xff]
    %v282 = vld [vmem:[%s15 + $0xf8] sm:$0xff]
    %v283 = vld [vmem:[%s16] sm:$0xff]
    %v284 = vld [vmem:[%s16 + $0x8] sm:$0xff]
    %v285 = vld [vmem:[%s16 + $0x10] sm:$0xff]
    %v286 = vld [vmem:[%s16 + $0x18] sm:$0xff]
    %v287 = vld [vmem:[%s16 + $0x20] sm:$0xff]
    %v288 = vld [vmem:[%s16 + $0x28] sm:$0xff]
    %v289 = vld [vmem:[%s16 + $0x30] sm:$0xff]
    %v290 = vld [vmem:[%s16 + $0x38] sm:$0xff]
    %v291 = vld [vmem:[%s16 + $0x40] sm:$0xff]
    %v292 = vld [vmem:[%s16 + $0x48] sm:$0xff]
    %v293 = vld [vmem:[%s16 + $0x50] sm:$0xff]
    %v294 = vld [vmem:[%s16 + $0x58] sm:$0xff]
    %v295 = vld [vmem:[%s16 + $0x60] sm:$0xff]
    %v296 = vld [vmem:[%s16 + $0x68] sm:$0xff]
    %v297 = vld [vmem:[%s16 + $0x70] sm:$0xff]
    %v298 = vld [vmem:[%s16 + $0x78] sm:$0xff]
    %v299 = vld [vmem:[%s16 + $0x80] sm:$0xff]
    %v300 = vld [vmem:[%s16 + $0x88] sm:$0xff]
    %v301 = vld [vmem:[%s16 + $0x90] sm:$0xff]
    %v302 = vld [vmem:[%s16 + $0x98] sm:$0xff]
    %v303 = vld [vmem:[%s16 + $0xa0] sm:$0xff]
    %v304 = vld [vmem:[%s16 + $0xa8] sm:$0xff]
    %v305 = vld [vmem:[%s16 + $0xb0] sm:$0xff]
    %v306 = vld [vmem:[%s16 + $0xb8] sm:$0xff]
    %v307 = vld [vmem:[%s16 + $0xc0] sm:$0xff]
    %v308 = vld [vmem:[%s16 + $0xc8] sm:$0xff]
    %v309 = vld [vmem:[%s16 + $0xd0] sm:$0xff]
    %v310 = vld [vmem:[%s16 + $0xd8] sm:$0xff]
    %v311 = vld [vmem:[%s16 + $0xe0] sm:$0xff]
    %v312 = vld [vmem:[%s16 + $0xe8] sm:$0xff]
    %v313 = vld [vmem:[%s16 + $0xf0] sm:$0xff]
    %v314 = vld [vmem:[%s16 + $0xf8] sm:$0xff]
    %v315 = vld [vmem:[%s16 + $0x100] sm:$0xff]
    %v316 = vld [vmem:[%s16 + $0x108] sm:$0xff]
    %v317 = vld [vmem:[%s16 + $0x110] sm:$0xff]
    %v318 = vld [vmem:[%s16 + $0x118] sm:$0xff]
    %v319 = vld [vmem:[%s16 + $0x120] sm:$0xff]
    %v320 = vld [vmem:[%s16 + $0x128] sm:$0xff]
    %v321 = vld [vmem:[%s16 + $0x130] sm:$0xff]
    %v322 = vld [vmem:[%s16 + $0x138] sm:$0xff]
    %v323 = vld [vmem:[%s16 + $0x140] sm:$0xff]
    %v324 = vld [vmem:[%s16 + $0x148] sm:$0xff]
    %v325 = vld [vmem:[%s16 + $0x150] sm:$0xff]
    %v326 = vld [vmem:[%s16 + $0x158] sm:$0xff]
    %v327 = vld [vmem:[%s16 + $0x160] sm:$0xff]
    %v328 = vld [vmem:[%s16 + $0x168] sm:$0xff]
    %v329 = vld [vmem:[%s16 + $0x170] sm:$0xff]
    %v330 = vld [vmem:[%s16 + $0x178] sm:$0xff]
    %v331 = vld [vmem:[%s16 + $0x180] sm:$0xff]
    %v332 = vld [vmem:[%s16 + $0x188] sm:$0xff]
    %v333 = vld [vmem:[%s16 + $0x190] sm:$0xff]
    %v334 = vld [vmem:[%s16 + $0x198] sm:$0xff]
    %v335 = vld [vmem:[%s16 + $0x1a0] sm:$0xff]
    %v336 = vld [vmem:[%s16 + $0x1a8] sm:$0xff]
    %v337 = vld [vmem:[%s16 + $0x1b0] sm:$0xff]
    %v338 = vld [vmem:[%s16 + $0x1b8] sm:$0xff]
    %v339 = vld [vmem:[%s16 + $0x1c0] sm:$0xff]
    %v340 = vld [vmem:[%s16 + $0x1c8] sm:$0xff]
    %v341 = vld [vmem:[%s16 + $0x1d0] sm:$0xff]
    %v342 = vld [vmem:[%s16 + $0x1d8] sm:$0xff]
    %v343 = vld [vmem:[%s16 + $0x1e0] sm:$0xff]
    %v344 = vld [vmem:[%s16 + $0x1e8] sm:$0xff]
    %v345 = vld [vmem:[%s16 + $0x1f0] sm:$0xff]
    %v346 = vld [vmem:[%s16 + $0x1f8] sm:$0xff]
    %v347 = vld [vmem:[%s17] sm:$0xff]
    %v348 = vld [vmem:[%s17 + $0x8] sm:$0xff]
    %v349 = vld [vmem:[%s17 + $0x10] sm:$0xff]
    %v350 = vld [vmem:[%s17 + $0x18] sm:$0xff]
    %v351 = vld [vmem:[%s17 + $0x20] sm:$0xff]
    %v352 = vld [vmem:[%s17 + $0x28] sm:$0xff]
    %v353 = vld [vmem:[%s17 + $0x30] sm:$0xff]
    %v354 = vld [vmem:[%s17 + $0x38] sm:$0xff]
    %v355 = vld [vmem:[%s17 + $0x40] sm:$0xff]
    %v356 = vld [vmem:[%s17 + $0x48] sm:$0xff]
    %v357 = vld [vmem:[%s17 + $0x50] sm:$0xff]
    %v358 = vld [vmem:[%s17 + $0x58] sm:$0xff]
    %v359 = vld [vmem:[%s17 + $0x60] sm:$0xff]
    %v360 = vld [vmem:[%s17 + $0x68] sm:$0xff]
    %v361 = vld [vmem:[%s17 + $0x70] sm:$0xff]
    %v362 = vld [vmem:[%s17 + $0x78] sm:$0xff]
    %v363 = vld [vmem:[%s17 + $0x80] sm:$0xff]
    %v364 = vld [vmem:[%s17 + $0x88] sm:$0xff]
    %v365 = vld [vmem:[%s17 + $0x90] sm:$0xff]
    %v366 = vld [vmem:[%s17 + $0x98] sm:$0xff]
    %v367 = vld [vmem:[%s17 + $0xa0] sm:$0xff]
    %v368 = vld [vmem:[%s17 + $0xa8] sm:$0xff]
    %v369 = vld [vmem:[%s17 + $0xb0] sm:$0xff]
    %v370 = vld [vmem:[%s17 + $0xb8] sm:$0xff]
    %v371 = vld [vmem:[%s17 + $0xc0] sm:$0xff]
    %v372 = vld [vmem:[%s17 + $0xc8] sm:$0xff]
    %v373 = vld [vmem:[%s17 + $0xd0] sm:$0xff]
    %v374 = vld [vmem:[%s17 + $0xd8] sm:$0xff]
    %v375 = vld [vmem:[%s17 + $0xe0] sm:$0xff]
    %v376 = vld [vmem:[%s17 + $0xe8] sm:$0xff]
    %v377 = vld [vmem:[%s17 + $0xf0] sm:$0xff]
    %v378 = vld [vmem:[%s17 + $0xf8] sm:$0xff]
    %v379 = vld [vmem:[%s18] sm:$0xff]
    %v380 = vld [vmem:[%s18 + $0x8] sm:$0xff]
    %v381 = vld [vmem:[%s18 + $0x10] sm:$0xff]
    %v382 = vld [vmem:[%s18 + $0x18] sm:$0xff]
    %v383 = vld [vmem:[%s18 + $0x20] sm:$0xff]
    %v384 = vld [vmem:[%s18 + $0x28] sm:$0xff]
    %v385 = vld [vmem:[%s18 + $0x30] sm:$0xff]
    %v386 = vld [vmem:[%s18 + $0x38] sm:$0xff]
    %v387 = vld [vmem:[%s18 + $0x40] sm:$0xff]
    %v388 = vld [vmem:[%s18 + $0x48] sm:$0xff]
    %v389 = vld [vmem:[%s18 + $0x50] sm:$0xff]
    %v390 = vld [vmem:[%s18 + $0x58] sm:$0xff]
    %v391 = vld [vmem:[%s18 + $0x60] sm:$0xff]
    %v392 = vld [vmem:[%s18 + $0x68] sm:$0xff]
    %v393 = vld [vmem:[%s18 + $0x70] sm:$0xff]
    %v394 = vld [vmem:[%s18 + $0x78] sm:$0xff]
    %v395 = vld [vmem:[%s18 + $0x80] sm:$0xff]
    %v396 = vld [vmem:[%s18 + $0x88] sm:$0xff]
    %v397 = vld [vmem:[%s18 + $0x90] sm:$0xff]
    %v398 = vld [vmem:[%s18 + $0x98] sm:$0xff]
    %v399 = vld [vmem:[%s18 + $0xa0] sm:$0xff]
    %v400 = vld [vmem:[%s18 + $0xa8] sm:$0xff]
    %v401 = vld [vmem:[%s18 + $0xb0] sm:$0xff]
    %v402 = vld [vmem:[%s18 + $0xb8] sm:$0xff]
    %v403 = vld [vmem:[%s18 + $0xc0] sm:$0xff]
    %v404 = vld [vmem:[%s18 + $0xc8] sm:$0xff]
    %v405 = vld [vmem:[%s18 + $0xd0] sm:$0xff]
    %v406 = vld [vmem:[%s18 + $0xd8] sm:$0xff]
    %v407 = vld [vmem:[%s18 + $0xe0] sm:$0xff]
    %v408 = vld [vmem:[%s18 + $0xe8] sm:$0xff]
    %v409 = vld [vmem:[%s18 + $0xf0] sm:$0xff]
    %v410 = vld [vmem:[%s18 + $0xf8] sm:$0xff]
    %v411 = vld [vmem:[#allocation2] sm:$0xff]
    %v412 = vld [vmem:[#allocation2 + $0x8] sm:$0xff]
    %v413 = vld [vmem:[#allocation2 + $0x10] sm:$0xff]
    %v414 = vld [vmem:[#allocation2 + $0x18] sm:$0xff]
    %v415 = vld [vmem:[#allocation2 + $0x20] sm:$0xff]
    %v416 = vld [vmem:[#allocation2 + $0x28] sm:$0xff]
    %v417 = vld [vmem:[#allocation2 + $0x30] sm:$0xff]
    %v418 = vld [vmem:[#allocation2 + $0x38] sm:$0xff]
    %v419 = vld [vmem:[#allocation2 + $0x40] sm:$0xff]
    %v420 = vld [vmem:[#allocation2 + $0x48] sm:$0xff]
    %v421 = vld [vmem:[#allocation2 + $0x50] sm:$0xff]
    %v422 = vld [vmem:[#allocation2 + $0x58] sm:$0xff]
    %v423 = vld [vmem:[#allocation2 + $0x60] sm:$0xff]
    %v424 = vld [vmem:[#allocation2 + $0x68] sm:$0xff]
    %v425 = vld [vmem:[#allocation2 + $0x70] sm:$0xff]
    %v426 = vld [vmem:[#allocation2 + $0x78] sm:$0xff]
    %v427 = vld [vmem:[#allocation2 + $0x80] sm:$0xff]
    %v428 = vld [vmem:[#allocation2 + $0x88] sm:$0xff]
    %v429 = vld [vmem:[#allocation2 + $0x90] sm:$0xff]
    %v430 = vld [vmem:[#allocation2 + $0x98] sm:$0xff]
    %v431 = vld [vmem:[#allocation2 + $0xa0] sm:$0xff]
    %v432 = vld [vmem:[#allocation2 + $0xa8] sm:$0xff]
    %v433 = vld [vmem:[#allocation2 + $0xb0] sm:$0xff]
    %v434 = vld [vmem:[#allocation2 + $0xb8] sm:$0xff]
    %v435 = vld [vmem:[#allocation2 + $0xc0] sm:$0xff]
    %v436 = vld [vmem:[#allocation2 + $0xc8] sm:$0xff]
    %v437 = vld [vmem:[#allocation2 + $0xd0] sm:$0xff]
    %v438 = vld [vmem:[#allocation2 + $0xd8] sm:$0xff]
    %v439 = vld [vmem:[#allocation2 + $0xe0] sm:$0xff]
    %v440 = vld [vmem:[#allocation2 + $0xe8] sm:$0xff]
    %v441 = vld [vmem:[#allocation2 + $0xf0] sm:$0xff]
    %v442 = vld [vmem:[#allocation2 + $0xf8] sm:$0xff]
    %v443 = vld [vmem:[#allocation5] sm:$0xff]
    %v444 = vld [vmem:[#allocation5 + $0x8] sm:$0xff]
    %v445 = vld [vmem:[#allocation5 + $0x10] sm:$0xff]
    %v446 = vld [vmem:[#allocation5 + $0x18] sm:$0xff]
    %v447 = vld [vmem:[#allocation5 + $0x20] sm:$0xff]
    %v448 = vld [vmem:[#allocation5 + $0x28] sm:$0xff]
    %v449 = vld [vmem:[#allocation5 + $0x30] sm:$0xff]
    %v450 = vld [vmem:[#allocation5 + $0x38] sm:$0xff]
    %v451 = vld [vmem:[#allocation5 + $0x40] sm:$0xff]
    %v452 = vld [vmem:[#allocation5 + $0x48] sm:$0xff]
    %v453 = vld [vmem:[#allocation5 + $0x50] sm:$0xff]
    %v454 = vld [vmem:[#allocation5 + $0x58] sm:$0xff]
    %v455 = vld [vmem:[#allocation5 + $0x60] sm:$0xff]
    %v456 = vld [vmem:[#allocation5 + $0x68] sm:$0xff]
    %v457 = vld [vmem:[#allocation5 + $0x70] sm:$0xff]
    %v458 = vld [vmem:[#allocation5 + $0x78] sm:$0xff]
    %v459 = vld [vmem:[#allocation5 + $0x80] sm:$0xff]
    %v460 = vld [vmem:[#allocation5 + $0x88] sm:$0xff]
    %v461 = vld [vmem:[#allocation5 + $0x90] sm:$0xff]
    %v462 = vld [vmem:[#allocation5 + $0x98] sm:$0xff]
    %v463 = vld [vmem:[#allocation5 + $0xa0] sm:$0xff]
    %v464 = vld [vmem:[#allocation5 + $0xa8] sm:$0xff]
    %v465 = vld [vmem:[#allocation5 + $0xb0] sm:$0xff]
    %v466 = vld [vmem:[#allocation5 + $0xb8] sm:$0xff]
    %v467 = vld [vmem:[#allocation5 + $0xc0] sm:$0xff]
    %v468 = vld [vmem:[#allocation5 + $0xc8] sm:$0xff]
    %v469 = vld [vmem:[#allocation5 + $0xd0] sm:$0xff]
    %v470 = vld [vmem:[#allocation5 + $0xd8] sm:$0xff]
    %v471 = vld [vmem:[#allocation5 + $0xe0] sm:$0xff]
    %v472 = vld [vmem:[#allocation5 + $0xe8] sm:$0xff]
    %v473 = vld [vmem:[#allocation5 + $0xf0] sm:$0xff]
    %v474 = vld [vmem:[#allocation5 + $0xf8] sm:$0xff]
    %v475 = vld [vmem:[%s1] sm:$0x3]
    %v476 = vld [vmem:[%s2] sm:$0x3]
    %v477 = vmul.f32 %v475, %v154
    %478 = vmatpush.msra.mxu0 %v247
    %479 = vmatpush.msra.mxu0 %v246
    %480 = vmatpush.msra.mxu0 %v245
    %481 = vmatpush.msra.mxu0 %v244
    %482 = vmatpush.msra.mxu0 %v243
    %483 = vmatpush.msra.mxu0 %v242
    %484 = vmatpush.msra.mxu0 %v241
    %485 = vmatpush.msra.mxu0 %v240
    %486 = vmatpush.msra.mxu0 %v239
    %487 = vmatpush.msra.mxu0 %v238
    %488 = vmatpush.msra.mxu0 %v237
    %489 = vmatpush.msra.mxu0 %v236
    %490 = vmatpush.msra.mxu0 %v235
    %491 = vmatpush.msra.mxu0 %v234
    %492 = vmatpush.msra.mxu0 %v233
    %493 = vmatpush.msra.mxu0 %v232
    %494 = vmatmul.f32.gmra.mxu0 %v477
    %v495 = vpop.f32.mrf.mxu0
    %v496 = vadd.f32 %v182, %v495
    %497 = vdwg.mxu0
    %v499 = vperm.slane %v231, 0
    %501 = vmatpush.msra.mxu0 %v230
    %502 = vmatpush.msra.mxu0 %v229
    %503 = vmatpush.msra.mxu0 %v228
    %504 = vmatpush.msra.mxu0 %v227
    %505 = vmatpush.msra.mxu0 %v226
    %506 = vmatpush.msra.mxu0 %v225
    %507 = vmatpush.msra.mxu0 %v224
    %508 = vmatpush.msra.mxu0 %v223
    %509 = vmatpush.msra.mxu0 %v222
    %510 = vmatpush.msra.mxu0 %v221
    %511 = vmatpush.msra.mxu0 %v220
    %512 = vmatpush.msra.mxu0 %v219
    %513 = vmatpush.msra.mxu0 %v218
    %514 = vmatpush.msra.mxu0 %v217
    %515 = vmatpush.msra.mxu0 %v216
    %516 = vmatpush.msra.mxu0 %v215
    %517 = vmatmul.f32.gmra.mxu0 %v475
    %v518 = vpop.f32.mrf.mxu0
    %v519 = vadd.f32 %v499, %v518
    %520 = vdwg.mxu0
    %v521 = vperm.slane %v496, 0
    %v522 = vlaneseq
    %v523 = vshrl.u32 %v522, 7
    %525 = vset.pattern.permute.xlu0 %v523
    %526 = vperm.xlu0 %525, %v521
    %v527 = vpop.permute.xlu0 %526
    %v528 = vperm.slane %v496, 1
    %v529 = vlaneseq
    %v530 = vshrl.u32 %v529, 7
    %532 = vset.pattern.permute.xlu0 %v530
    %533 = vperm.xlu0 %532, %v528
    %v534 = vpop.permute.xlu0 %533
    %v536 = vrot.slane %v496, 1
    %v537 = vlaneseq
    %v538 = vshrl.u32 %v537, 7
    %v539 = vlaneseq
    %v540 = vand.u32 %v539, 127
    %v541 = vperm.slane %v496, 0
    %v542 = vperm.slane %v536, 0
    %vm545 = vcmp.gt.f32.partialorder %v541, %v527
    %vm546 = vcmp.gt.f32.partialorder %v542, %v534
    %vm547 = vcmp.eq.f32.partialorder %v541, %v527
    %vm548 = vcmp.eq.f32.partialorder %v542, %v534
    %vm549 = vcmp.lt.s32.totalorder %v540, %v538
    %vm550 = vmand %vm547, %vm549
    %vm551 = vmand %vm548, %vm549
    %vm552 = vmor %vm545, %vm550
    %vm553 = vmor %vm546, %vm551
    %v554 = vsel %vm552, 1, 0
    %v555 = vsel %vm553, 1, 0
    %vm556 = vcmask 27648
    %v557 = vsel %vm556, %v554, 0
    %v558 = vand.u32 %v557, 65535
    %v559 = vshrl.u32 %v557, 16
    %v560 = vcvt.s32.f32 %v558
    %v561 = vcvt.s32.f32 %v559
    %562 = vadd.xlane.f32.xlu0 %v560
    %v563 = vpop.xlane.xlu0 %562
    %564 = vadd.xlane.f32.xlu0 %v561
    %v565 = vpop.xlane.xlu0 %564
    %v566 = vcvt.f32.s32 %v563
    %v567 = vcvt.f32.s32 %v565
    %v568 = vshll.u32 %v567, 16
    %v569 = vadd.s32 %v568, %v566
    %v570 = vsel %vm556, %v555, 0
    %v571 = vand.u32 %v570, 65535
    %v572 = vshrl.u32 %v570, 16
    %v573 = vcvt.s32.f32 %v571
    %v574 = vcvt.s32.f32 %v572
    %575 = vadd.xlane.f32.xlu0 %v573
    %v576 = vpop.xlane.xlu0 %575
    %577 = vadd.xlane.f32.xlu0 %v574
    %v578 = vpop.xlane.xlu0 %577
    %v579 = vcvt.f32.s32 %v576
    %v580 = vcvt.f32.s32 %v578
    %v581 = vshll.u32 %v580, 16
    %v582 = vadd.s32 %v581, %v579
    %vm583 = vcmp.lt.s32.totalorder %v569, 2
    %vm584 = vcmp.lt.s32.totalorder %v582, 2
    %v585 = vsel %vm583, 1, 0
    %v586 = vsel %vm584, 1, 0
    %v587 = vcvt.s32.f32 %v585
    %v588 = vcvt.s32.f32 %v586
    %v589 = vsub.f32 %v496, %v519
    %v590 = vxor.u32 %v589, 2147483648
    %v591 = vmul.f32 %v590, 1.442695
    %v592 = vpow.pop %v591
    %v593 = vadd.f32 %v592, 1.0
    %v594 = vrcp.pop %v593
    %v595 = vmul.f32 %v593, %v594
    %v596 = vsub.f32 1.0, %v595
    %v597 = vmul.f32 %v594, %v596
    %v598 = vadd.f32 %v594, %v597
    %vm599 = vweird.f32 %v593
    %vm600 = vweird.f32 %v594
    %vm601 = vmor %vm599, %vm600
    %v602 = vsel %vm601, %v594, %v598
    %v603 = vand.u32 2147483647, %v593
    %vm604 = vcmp.eq.f32.partialorder %v603, 8.507059e+37
    %v605 = vand.u32 %v593, 2147483648
    %v606 = vor.u32 1.1754944e-38, %v605
    %v607 = vsel %vm604, %v606, %v602
    %v608 = vmul.f32 1.0, %v607
    %v610 = vperm.slane %v608, 0
    %v611 = vlaneseq
    %v612 = vshrl.u32 %v611, 7
    %614 = vset.pattern.permute.xlu0 %v612
    %615 = vperm.xlu0 %614, %v610
    %v616 = vpop.permute.xlu0 %615
    %v617 = vperm.slane %v608, 1
    %v618 = vlaneseq
    %v619 = vshrl.u32 %v618, 7
    %621 = vset.pattern.permute.xlu0 %v619
    %622 = vperm.xlu0 %621, %v617
    %v623 = vpop.permute.xlu0 %622
    %v626 = vmul.f32 %v587, %v616
    %v627 = vmul.f32 %v588, %v623
    %v628 = vsub.f32 1.0, %v608
    %v630 = vperm.slane %v628, 0
    %v631 = vlaneseq
    %v632 = vshrl.u32 %v631, 7
    %634 = vset.pattern.permute.xlu0 %v632
    %635 = vperm.xlu0 %634, %v630
    %v636 = vpop.permute.xlu0 %635
    %v637 = vperm.slane %v628, 1
    %v638 = vlaneseq
    %v639 = vshrl.u32 %v638, 7
    %641 = vset.pattern.permute.xlu0 %v639
    %642 = vperm.xlu0 %641, %v637
    %v643 = vpop.permute.xlu0 %642
    %v646 = vmul.f32 %v587, %v636
    %v647 = vmul.f32 %v588, %v643
    %650 = vset.pattern.permute.xlu0 0
    %651 = vperm.xlu0 %650, %v626
    %v652 = vpop.permute.xlu0 %651
    %653 = vset.pattern.permute.xlu0 0
    %654 = vperm.xlu0 %653, %v627
    %v655 = vpop.permute.xlu0 %654
    %v656 = vperm.slane %v652, %v540
    %v657 = vperm.slane %v655, %v540
    %vm658 = vcmask 1041409
    %v659 = vsel %vm658, %v657, %v656
    %vm660 = vcmask 31744
    %v661 = vsel %vm660, %v659, 0
    %vm663 = vcmask 1043456
    %v665 = vsel %vm663, %v248, 0
    %667 = vmatpush.msra.mxu0 0.0
    %668 = vmatpush.msra.mxu0 0.0
    %669 = vmatpush.msra.mxu0 0.0
    %670 = vmatpush.msra.mxu0 0.0
    %671 = vmatpush.msra.mxu0 0.0
    %672 = vmatpush.msra.mxu0 0.0
    %673 = vmatpush.msra.mxu0 0.0
    %674 = vmatpush.msra.mxu0 0.0
    %675 = vmatpush.msra.mxu0 0.0
    %676 = vmatpush.msra.mxu0 0.0
    %677 = vmatpush.msra.mxu0 0.0
    %678 = vmatpush.msra.mxu0 0.0
    %679 = vmatpush.msra.mxu0 0.0
    %680 = vmatpush.msra.mxu0 0.0
    %681 = vmatpush.msra.mxu0 0.0
    %682 = vmatpush.msra.mxu0 %v665
    %683 = vmatmul.f32.gmra.mxu0 %v661
    %v684 = vpop.f32.mrf.mxu0
    %v685 = vadd.f32 0.0, %v684
    %686 = vdwg.mxu0
    %v687 = vmul.f32 %v685, %v210
    %690 = vset.pattern.permute.xlu0 0
    %691 = vperm.xlu0 %690, %v646
    %v692 = vpop.permute.xlu0 %691
    %693 = vset.pattern.permute.xlu0 0
    %694 = vperm.xlu0 %693, %v647
    %v695 = vpop.permute.xlu0 %694
    %v696 = vperm.slane %v692, %v540
    %v697 = vperm.slane %v695, %v540
    %v698 = vsel %vm658, %v697, %v696
    %v699 = vsel %vm660, %v698, 0
    %v702 = vsel %vm663, %v249, 0
    %704 = vmatpush.msra.mxu0 0.0
    %705 = vmatpush.msra.mxu0 0.0
    %706 = vmatpush.msra.mxu0 0.0
    %707 = vmatpush.msra.mxu0 0.0
    %708 = vmatpush.msra.mxu0 0.0
    %709 = vmatpush.msra.mxu0 0.0
    %710 = vmatpush.msra.mxu0 0.0
    %711 = vmatpush.msra.mxu0 0.0
    %712 = vmatpush.msra.mxu0 0.0
    %713 = vmatpush.msra.mxu0 0.0
    %714 = vmatpush.msra.mxu0 0.0
    %715 = vmatpush.msra.mxu0 0.0
    %716 = vmatpush.msra.mxu0 0.0
    %717 = vmatpush.msra.mxu0 0.0
    %718 = vmatpush.msra.mxu0 0.0
    %719 = vmatpush.msra.mxu0 %v702
    %720 = vmatmul.f32.gmra.mxu0 %v699
    %v721 = vpop.f32.mrf.mxu0
    %v722 = vadd.f32 0.0, %v721
    %723 = vdwg.mxu0
    %v724 = vadd.f32 %v687, %v722
    %725 = vmatpush.msra.mxu0 %v343
    %726 = vmatpush.msra.mxu0 %v339
    %727 = vmatpush.msra.mxu0 %v335
    %728 = vmatpush.msra.mxu0 %v331
    %729 = vmatpush.msra.mxu0 %v327
    %730 = vmatpush.msra.mxu0 %v323
    %731 = vmatpush.msra.mxu0 %v319
    %732 = vmatpush.msra.mxu0 %v315
    %733 = vmatpush.msra.mxu0 %v311
    %734 = vmatpush.msra.mxu0 %v307
    %735 = vmatpush.msra.mxu0 %v303
    %736 = vmatpush.msra.mxu0 %v299
    %737 = vmatpush.msra.mxu0 %v295
    %738 = vmatpush.msra.mxu0 %v291
    %739 = vmatpush.msra.mxu0 %v287
    %740 = vmatpush.msra.mxu0 %v283
    %741 = vmatmul.f32.gmra.mxu0 %v475
    %v742 = vpop.f32.mrf.mxu0
    %v743 = vadd.f32 0.0, %v742
    %744 = vdwg.mxu0
    %745 = vmatpush.msra.mxu0 %v344
    %746 = vmatpush.msra.mxu0 %v340
    %747 = vmatpush.msra.mxu0 %v336
    %748 = vmatpush.msra.mxu0 %v332
    %749 = vmatpush.msra.mxu0 %v328
    %750 = vmatpush.msra.mxu0 %v324
    %751 = vmatpush.msra.mxu0 %v320
    %752 = vmatpush.msra.mxu0 %v316
    %753 = vmatpush.msra.mxu0 %v312
    %754 = vmatpush.msra.mxu0 %v308
    %755 = vmatpush.msra.mxu0 %v304
    %756 = vmatpush.msra.mxu0 %v300
    %757 = vmatpush.msra.mxu0 %v296
    %758 = vmatpush.msra.mxu0 %v292
    %759 = vmatpush.msra.mxu0 %v288
    %760 = vmatpush.msra.mxu0 %v284
    %761 = vmatmul.f32.gmra.mxu0 %v475
    %v762 = vpop.f32.mrf.mxu0
    %v763 = vadd.f32 0.0, %v762
    %764 = vdwg.mxu0
    %765 = vmatpush.msra.mxu0 %v345
    %766 = vmatpush.msra.mxu0 %v341
    %767 = vmatpush.msra.mxu0 %v337
    %768 = vmatpush.msra.mxu0 %v333
    %769 = vmatpush.msra.mxu0 %v329
    %770 = vmatpush.msra.mxu0 %v325
    %771 = vmatpush.msra.mxu0 %v321
    %772 = vmatpush.msra.mxu0 %v317
    %773 = vmatpush.msra.mxu0 %v313
    %774 = vmatpush.msra.mxu0 %v309
    %775 = vmatpush.msra.mxu0 %v305
    %776 = vmatpush.msra.mxu0 %v301
    %777 = vmatpush.msra.mxu0 %v297
    %778 = vmatpush.msra.mxu0 %v293
    %779 = vmatpush.msra.mxu0 %v289
    %780 = vmatpush.msra.mxu0 %v285
    %781 = vmatmul.f32.gmra.mxu0 %v475
    %v782 = vpop.f32.mrf.mxu0
    %v783 = vadd.f32 0.0, %v782
    %784 = vdwg.mxu0
    %785 = vmatpush.msra.mxu0 %v346
    %786 = vmatpush.msra.mxu0 %v342
    %787 = vmatpush.msra.mxu0 %v338
    %788 = vmatpush.msra.mxu0 %v334
    %789 = vmatpush.msra.mxu0 %v330
    %790 = vmatpush.msra.mxu0 %v326
    %791 = vmatpush.msra.mxu0 %v322
    %792 = vmatpush.msra.mxu0 %v318
    %793 = vmatpush.msra.mxu0 %v314
    %794 = vmatpush.msra.mxu0 %v310
    %795 = vmatpush.msra.mxu0 %v306
    %796 = vmatpush.msra.mxu0 %v302
    %797 = vmatpush.msra.mxu0 %v298
    %798 = vmatpush.msra.mxu0 %v294
    %799 = vmatpush.msra.mxu0 %v290
    %800 = vmatpush.msra.mxu0 %v286
    %801 = vmatmul.f32.gmra.mxu0 %v475
    %v802 = vpop.f32.mrf.mxu0
    %v803 = vadd.f32 0.0, %v802
    %804 = vdwg.mxu0
    %vm805 = vcmask 523264
    %v807 = vsel %vm805, %v724, 0
    %809 = vmatpush.msra.mxu0 0.0
    %810 = vmatpush.msra.mxu0 0.0
    %811 = vmatpush.msra.mxu0 0.0
    %812 = vmatpush.msra.mxu0 0.0
    %813 = vmatpush.msra.mxu0 0.0
    %814 = vmatpush.msra.mxu0 0.0
    %815 = vmatpush.msra.mxu0 0.0
    %816 = vmatpush.msra.mxu0 0.0
    %817 = vmatpush.msra.mxu0 %v279
    %818 = vmatpush.msra.mxu0 %v275
    %819 = vmatpush.msra.mxu0 %v271
    %820 = vmatpush.msra.mxu0 %v267
    %821 = vmatpush.msra.mxu0 %v263
    %822 = vmatpush.msra.mxu0 %v259
    %823 = vmatpush.msra.mxu0 %v255
    %824 = vmatpush.msra.mxu0 %v251
    %825 = vmatmul.f32.gmra.mxu0 %v807
    %v826 = vpop.f32.mrf.mxu0
    %v827 = vadd.f32 %v743, %v826
    %828 = vdwg.mxu0
    %829 = vmatpush.msra.mxu0 0.0
    %830 = vmatpush.msra.mxu0 0.0
    %831 = vmatpush.msra.mxu0 0.0
    %832 = vmatpush.msra.mxu0 0.0
    %833 = vmatpush.msra.mxu0 0.0
    %834 = vmatpush.msra.mxu0 0.0
    %835 = vmatpush.msra.mxu0 0.0
    %836 = vmatpush.msra.mxu0 0.0
    %837 = vmatpush.msra.mxu0 %v280
    %838 = vmatpush.msra.mxu0 %v276
    %839 = vmatpush.msra.mxu0 %v272
    %840 = vmatpush.msra.mxu0 %v268
    %841 = vmatpush.msra.mxu0 %v264
    %842 = vmatpush.msra.mxu0 %v260
    %843 = vmatpush.msra.mxu0 %v256
    %844 = vmatpush.msra.mxu0 %v252
    %845 = vmatmul.f32.gmra.mxu0 %v807
    %v846 = vpop.f32.mrf.mxu0
    %v847 = vadd.f32 %v763, %v846
    %848 = vdwg.mxu0
    %849 = vmatpush.msra.mxu0 0.0
    %850 = vmatpush.msra.mxu0 0.0
    %851 = vmatpush.msra.mxu0 0.0
    %852 = vmatpush.msra.mxu0 0.0
    %853 = vmatpush.msra.mxu0 0.0
    %854 = vmatpush.msra.mxu0 0.0
    %855 = vmatpush.msra.mxu0 0.0
    %856 = vmatpush.msra.mxu0 0.0
    %857 = vmatpush.msra.mxu0 %v281
    %858 = vmatpush.msra.mxu0 %v277
    %859 = vmatpush.msra.mxu0 %v273
    %860 = vmatpush.msra.mxu0 %v269
    %861 = vmatpush.msra.mxu0 %v265
    %862 = vmatpush.msra.mxu0 %v261
    %863 = vmatpush.msra.mxu0 %v257
    %864 = vmatpush.msra.mxu0 %v253
    %865 = vmatmul.f32.gmra.mxu0 %v807
    %v866 = vpop.f32.mrf.mxu0
    %v867 = vadd.f32 %v783, %v866
    %868 = vdwg.mxu0
    %869 = vmatpush.msra.mxu0 0.0
    %870 = vmatpush.msra.mxu0 0.0
    %871 = vmatpush.msra.mxu0 0.0
    %872 = vmatpush.msra.mxu0 0.0
    %873 = vmatpush.msra.mxu0 0.0
    %874 = vmatpush.msra.mxu0 0.0
    %875 = vmatpush.msra.mxu0 0.0
    %876 = vmatpush.msra.mxu0 0.0
    %877 = vmatpush.msra.mxu0 %v282
    %878 = vmatpush.msra.mxu0 %v278
    %879 = vmatpush.msra.mxu0 %v274
    %880 = vmatpush.msra.mxu0 %v270
    %881 = vmatpush.msra.mxu0 %v266
    %882 = vmatpush.msra.mxu0 %v262
    %883 = vmatpush.msra.mxu0 %v258
    %884 = vmatpush.msra.mxu0 %v254
    %885 = vmatmul.f32.gmra.mxu0 %v807
    %v886 = vpop.f32.mrf.mxu0
    %v887 = vadd.f32 %v803, %v886
    %888 = vdwg.mxu0
    %v889 = vxor.u32 %v827, 2147483648
    %v890 = vmul.f32 %v889, 1.442695
    %v891 = vpow.pop %v890
    %v892 = vadd.f32 %v891, 1.0
    %v893 = vrcp.pop %v892
    %v894 = vmul.f32 %v892, %v893
    %v895 = vsub.f32 1.0, %v894
    %v896 = vmul.f32 %v893, %v895
    %v897 = vadd.f32 %v893, %v896
    %vm898 = vweird.f32 %v892
    %vm899 = vweird.f32 %v893
    %vm900 = vmor %vm898, %vm899
    %v901 = vsel %vm900, %v893, %v897
    %v902 = vand.u32 2147483647, %v892
    %vm903 = vcmp.eq.f32.partialorder %v902, 8.507059e+37
    %v904 = vand.u32 %v892, 2147483648
    %v905 = vor.u32 1.1754944e-38, %v904
    %v906 = vsel %vm903, %v905, %v901
    %v907 = vmul.f32 1.0, %v906
    %v908 = vxor.u32 %v847, 2147483648
    %v909 = vmul.f32 %v908, 1.442695
    %v910 = vpow.pop %v909
    %v911 = vadd.f32 %v910, 1.0
    %v912 = vrcp.pop %v911
    %v913 = vmul.f32 %v911, %v912
    %v914 = vsub.f32 1.0, %v913
    %v915 = vmul.f32 %v912, %v914
    %v916 = vadd.f32 %v912, %v915
    %vm917 = vweird.f32 %v911
    %vm918 = vweird.f32 %v912
    %vm919 = vmor %vm917, %vm918
    %v920 = vsel %vm919, %v912, %v916
    %v921 = vand.u32 2147483647, %v911
    %vm922 = vcmp.eq.f32.partialorder %v921, 8.507059e+37
    %v923 = vand.u32 %v911, 2147483648
    %v924 = vor.u32 1.1754944e-38, %v923
    %v925 = vsel %vm922, %v924, %v920
    %v926 = vmul.f32 1.0, %v925
    %v927 = vxor.u32 %v867, 2147483648
    %v928 = vmul.f32 %v927, 1.442695
    %v929 = vpow.pop %v928
    %v930 = vadd.f32 %v929, 1.0
    %v931 = vrcp.pop %v930
    %v932 = vmul.f32 %v930, %v931
    %v933 = vsub.f32 1.0, %v932
    %v934 = vmul.f32 %v931, %v933
    %v935 = vadd.f32 %v931, %v934
    %vm936 = vweird.f32 %v930
    %vm937 = vweird.f32 %v931
    %vm938 = vmor %vm936, %vm937
    %v939 = vsel %vm938, %v931, %v935
    %v940 = vand.u32 2147483647, %v930
    %vm941 = vcmp.eq.f32.partialorder %v940, 8.507059e+37
    %v942 = vand.u32 %v930, 2147483648
    %v943 = vor.u32 1.1754944e-38, %v942
    %v944 = vsel %vm941, %v943, %v939
    %v945 = vmul.f32 1.0, %v944
    %v946 = vtanh.pop %v887
    %v947 = vmul.f32 %v476, %v926
    %v948 = vmul.f32 %v907, %v946
    %v949 = vadd.f32 %v947, %v948
    %v950 = vtanh.pop %v949
    %v951 = vmul.f32 %v945, %v950
    %952 = vmatpush.msra.mxu0 %v362
    %953 = vmatpush.msra.mxu0 %v361
    %954 = vmatpush.msra.mxu0 %v360
    %955 = vmatpush.msra.mxu0 %v359
    %956 = vmatpush.msra.mxu0 %v358
    %957 = vmatpush.msra.mxu0 %v357
    %958 = vmatpush.msra.mxu0 %v356
    %959 = vmatpush.msra.mxu0 %v355
    %960 = vmatpush.msra.mxu0 %v354
    %961 = vmatpush.msra.mxu0 %v353
    %962 = vmatpush.msra.mxu0 %v352
    %963 = vmatpush.msra.mxu0 %v351
    %964 = vmatpush.msra.mxu0 %v350
    %965 = vmatpush.msra.mxu0 %v349
    %966 = vmatpush.msra.mxu0 %v348
    %967 = vmatpush.msra.mxu0 %v347
    %968 = vmatmul.f32.gmra.mxu0 %v951
    %v969 = vpop.f32.mrf.mxu0
    %v970 = vadd.f32 0.0, %v969
    %971 = vdwg.mxu0
    %973 = vrot.lane.b32.xlu0 %v970, 112
    %v974 = vpop.permute.xlu0 %973
    %976 = vrot.lane.b32.xlu0 %v970, 96
    %v977 = vpop.permute.xlu0 %976
    %979 = vrot.lane.b32.xlu0 %v970, 80
    %v980 = vpop.permute.xlu0 %979
    %v982 = vrot.slane %v977, 4
    %vm983 = vcmask 1047556
    %v984 = vsel %vm983, %v982, %v970
    %v986 = vunpack.c.l.s4 1983009808
    %v987 = vunpack.c.0.s8 %v986
    %v988 = vperm.slane %v984, %v987
    %v989 = vrot.slane %v980, 4
    %v990 = vsel %vm983, %v989, %v974
    %v992 = vunpack.c.l.s4 1983009808
    %v993 = vunpack.c.0.s8 %v992
    %v994 = vperm.slane %v990, %v993
    %v995 = vrot.slane %v994, 4
    %v996 = vsel %vm983, %v995, %v988
    %v998 = vunpack.c.l.s4 1934713408
    %v999 = vunpack.c.0.s8 %v998
    %v1000 = vperm.slane %v996, %v999
    %v1001 = vrot.slane %v1000, 4
    %v1002 = vsel %vm983, 0.0, %v1001
    %1003 = vmatpush.msra.mxu0 %v394
    %1004 = vmatpush.msra.mxu0 %v393
    %1005 = vmatpush.msra.mxu0 %v392
    %1006 = vmatpush.msra.mxu0 %v391
    %1007 = vmatpush.msra.mxu0 %v390
    %1008 = vmatpush.msra.mxu0 %v389
    %1009 = vmatpush.msra.mxu0 %v388
    %1010 = vmatpush.msra.mxu0 %v387
    %1011 = vmatpush.msra.mxu0 %v386
    %1012 = vmatpush.msra.mxu0 %v385
    %1013 = vmatpush.msra.mxu0 %v384
    %1014 = vmatpush.msra.mxu0 %v383
    %1015 = vmatpush.msra.mxu0 %v382
    %1016 = vmatpush.msra.mxu0 %v381
    %1017 = vmatpush.msra.mxu0 %v380
    %1018 = vmatpush.msra.mxu0 %v379
    %1019 = vmatmul.f32.gmra.mxu0 %v951
    %v1020 = vpop.f32.mrf.mxu0
    %v1021 = vadd.f32 0.0, %v1020
    %1022 = vdwg.mxu0
    %1024 = vrot.lane.b32.xlu0 %v1021, 112
    %v1025 = vpop.permute.xlu0 %1024
    %1027 = vrot.lane.b32.xlu0 %v1021, 96
    %v1028 = vpop.permute.xlu0 %1027
    %1030 = vrot.lane.b32.xlu0 %v1021, 80
    %v1031 = vpop.permute.xlu0 %1030
    %v1033 = vrot.slane %v1028, 4
    %v1034 = vsel %vm983, %v1033, %v1021
    %v1036 = vunpack.c.l.s4 1983009808
    %v1037 = vunpack.c.0.s8 %v1036
    %v1038 = vperm.slane %v1034, %v1037
    %v1039 = vrot.slane %v1031, 4
    %v1040 = vsel %vm983, %v1039, %v1025
    %v1042 = vunpack.c.l.s4 1983009808
    %v1043 = vunpack.c.0.s8 %v1042
    %v1044 = vperm.slane %v1040, %v1043
    %v1045 = vrot.slane %v1044, 4
    %v1046 = vsel %vm983, %v1045, %v1038
    %v1048 = vunpack.c.l.s4 1934713408
    %v1049 = vunpack.c.0.s8 %v1048
    %v1050 = vperm.slane %v1046, %v1049
    %v1051 = vrot.slane %v1050, 4
    %v1052 = vsel %vm983, 0.0, %v1051
    %1053 = vmatpush.msra.mxu0 %v426
    %1054 = vmatpush.msra.mxu0 %v425
    %1055 = vmatpush.msra.mxu0 %v424
    %1056 = vmatpush.msra.mxu0 %v423
    %1057 = vmatpush.msra.mxu0 %v422
    %1058 = vmatpush.msra.mxu0 %v421
    %1059 = vmatpush.msra.mxu0 %v420
    %1060 = vmatpush.msra.mxu0 %v419
    %1061 = vmatpush.msra.mxu0 %v418
    %1062 = vmatpush.msra.mxu0 %v417
    %1063 = vmatpush.msra.mxu0 %v416
    %1064 = vmatpush.msra.mxu0 %v415
    %1065 = vmatpush.msra.mxu0 %v414
    %1066 = vmatpush.msra.mxu0 %v413
    %1067 = vmatpush.msra.mxu0 %v412
    %1068 = vmatpush.msra.mxu0 %v411
    %1069 = vmatmul.f32.gmra.mxu0 %v951
    %v1070 = vpop.f32.mrf.mxu0
    %v1071 = vadd.f32 0.0, %v1070
    %1072 = vdwg.mxu0
    %1074 = vrot.lane.b32.xlu0 %v1071, 96
    %v1075 = vpop.permute.xlu0 %1074
    %1077 = vrot.lane.b32.xlu0 %v1071, 64
    %v1078 = vpop.permute.xlu0 %1077
    %1080 = vrot.lane.b32.xlu0 %v1071, 32
    %v1081 = vpop.permute.xlu0 %1080
    %v1083 = vrot.slane %v1078, 4
    %v1084 = vsel %vm983, %v1083, %v1071
    %v1086 = vunpack.c.l.s4 1983009808
    %v1087 = vunpack.c.0.s8 %v1086
    %v1088 = vperm.slane %v1084, %v1087
    %v1089 = vrot.slane %v1081, 4
    %v1090 = vsel %vm983, %v1089, %v1075
    %v1092 = vunpack.c.l.s4 1983009808
    %v1093 = vunpack.c.0.s8 %v1092
    %v1094 = vperm.slane %v1090, %v1093
    %v1095 = vrot.slane %v1094, 4
    %v1096 = vsel %vm983, %v1095, %v1088
    %v1098 = vunpack.c.l.s4 1934713408
    %v1099 = vunpack.c.0.s8 %v1098
    %v1100 = vperm.slane %v1096, %v1099
    %v1101 = vrot.slane %v1100, 4
    %v1102 = vsel %vm983, 0.0, %v1101
    %vm1103 = vcmask 130048
    %v1105 = vsel %vm1103, %v1000, 0
    %v1108 = vsel %vm1103, %v1050, 0
    %1110 = vmatpush.xpose.msra.mxu0 0.0
    %1111 = vmatpush.xpose.msra.mxu0 0.0
    %1112 = vmatpush.xpose.msra.mxu0 0.0
    %1113 = vmatpush.xpose.msra.mxu0 0.0
    %1114 = vmatpush.xpose.msra.mxu0 0.0
    %1115 = vmatpush.xpose.msra.mxu0 0.0
    %1116 = vmatpush.xpose.msra.mxu0 0.0
    %1117 = vmatpush.xpose.msra.mxu0 0.0
    %1118 = vmatpush.xpose.msra.mxu0 0.0
    %1119 = vmatpush.xpose.msra.mxu0 0.0
    %1120 = vmatpush.xpose.msra.mxu0 0.0
    %1121 = vmatpush.xpose.msra.mxu0 0.0
    %1122 = vmatpush.xpose.msra.mxu0 0.0
    %1123 = vmatpush.xpose.msra.mxu0 0.0
    %1124 = vmatpush.xpose.msra.mxu0 0.0
    %1125 = vmatpush.xpose.msra.mxu0 %v1108
    %1126 = vmatmul.f32.gmra.mxu0 %v1105
    %v1127 = vpop.f32.mrf.mxu0
    %v1128 = vadd.f32 0.0, %v1127
    %1129 = vdwg.mxu0
    %v1131 = vsel %vm1103, %v1002, 0
    %v1134 = vsel %vm1103, %v1052, 0
    %1136 = vmatpush.xpose.msra.mxu0 0.0
    %1137 = vmatpush.xpose.msra.mxu0 0.0
    %1138 = vmatpush.xpose.msra.mxu0 0.0
    %1139 = vmatpush.xpose.msra.mxu0 0.0
    %1140 = vmatpush.xpose.msra.mxu0 0.0
    %1141 = vmatpush.xpose.msra.mxu0 0.0
    %1142 = vmatpush.xpose.msra.mxu0 0.0
    %1143 = vmatpush.xpose.msra.mxu0 0.0
    %1144 = vmatpush.xpose.msra.mxu0 0.0
    %1145 = vmatpush.xpose.msra.mxu0 0.0
    %1146 = vmatpush.xpose.msra.mxu0 0.0
    %1147 = vmatpush.xpose.msra.mxu0 0.0
    %1148 = vmatpush.xpose.msra.mxu0 0.0
    %1149 = vmatpush.xpose.msra.mxu0 0.0
    %1150 = vmatpush.xpose.msra.mxu0 0.0
    %1151 = vmatpush.xpose.msra.mxu0 %v1134
    %1152 = vmatmul.f32.gmra.mxu0 %v1131
    %v1153 = vpop.f32.mrf.mxu0
    %v1154 = vadd.f32 0.0, %v1153
    %1155 = vdwg.mxu0
    %v1156 = vmul.f32 %v1128, 0.25
    %v1157 = vmul.f32 %v1154, 0.25
    %v1158 = vsel %vm556, %v1156, -inf
    %1159 = vmax.xlane.f32.xlu0 %v1158
    %v1160 = vpop.xlane.xlu0 %1159
    %v1161 = vsel %vm556, %v1157, -inf
    %1162 = vmax.xlane.f32.xlu0 %v1161
    %v1163 = vpop.xlane.xlu0 %1162
    %v1164 = vsub.f32 %v1156, %v1160
    %v1165 = vsub.f32 %v1157, %v1163
    %v1166 = vmul.f32 %v1164, 1.442695
    %v1167 = vpow.pop %v1166
    %v1168 = vmul.f32 %v1165, 1.442695
    %v1169 = vpow.pop %v1168
    %v1170 = vsel %vm556, %v1167, 0.0
    %1171 = vadd.xlane.f32.xlu0 %v1170
    %v1172 = vpop.xlane.xlu0 %1171
    %v1173 = vsel %vm556, %v1169, 0.0
    %1174 = vadd.xlane.f32.xlu0 %v1173
    %v1175 = vpop.xlane.xlu0 %1174
    %v1176 = vrcp.pop %v1172
    %v1177 = vmul.f32 %v1172, %v1176
    %v1178 = vsub.f32 1.0, %v1177
    %v1179 = vmul.f32 %v1176, %v1178
    %v1180 = vadd.f32 %v1176, %v1179
    %vm1181 = vweird.f32 %v1172
    %vm1182 = vweird.f32 %v1176
    %vm1183 = vmor %vm1181, %vm1182
    %v1184 = vsel %vm1183, %v1176, %v1180
    %v1185 = vand.u32 2147483647, %v1172
    %vm1186 = vcmp.eq.f32.partialorder %v1185, 8.507059e+37
    %v1187 = vand.u32 %v1172, 2147483648
    %v1188 = vor.u32 1.1754944e-38, %v1187
    %v1189 = vsel %vm1186, %v1188, %v1184
    %v1190 = vmul.f32 %v1167, %v1189
    %v1191 = vrcp.pop %v1175
    %v1192 = vmul.f32 %v1175, %v1191
    %v1193 = vsub.f32 1.0, %v1192
    %v1194 = vmul.f32 %v1191, %v1193
    %v1195 = vadd.f32 %v1191, %v1194
    %vm1196 = vweird.f32 %v1175
    %vm1197 = vweird.f32 %v1191
    %vm1198 = vmor %vm1196, %vm1197
    %v1199 = vsel %vm1198, %v1191, %v1195
    %v1200 = vand.u32 2147483647, %v1175
    %vm1201 = vcmp.eq.f32.partialorder %v1200, 8.507059e+37
    %v1202 = vand.u32 %v1175, 2147483648
    %v1203 = vor.u32 1.1754944e-38, %v1202
    %v1204 = vsel %vm1201, %v1203, %v1199
    %v1205 = vmul.f32 %v1169, %v1204
    %v1207 = vsel %vm660, %v1190, 0
    %v1210 = vsel %vm663, %v1100, 0
    %1212 = vmatpush.msra.mxu0 0.0
    %1213 = vmatpush.msra.mxu0 0.0
    %1214 = vmatpush.msra.mxu0 0.0
    %1215 = vmatpush.msra.mxu0 0.0
    %1216 = vmatpush.msra.mxu0 0.0
    %1217 = vmatpush.msra.mxu0 0.0
    %1218 = vmatpush.msra.mxu0 0.0
    %1219 = vmatpush.msra.mxu0 0.0
    %1220 = vmatpush.msra.mxu0 0.0
    %1221 = vmatpush.msra.mxu0 0.0
    %1222 = vmatpush.msra.mxu0 0.0
    %1223 = vmatpush.msra.mxu0 0.0
    %1224 = vmatpush.msra.mxu0 0.0
    %1225 = vmatpush.msra.mxu0 0.0
    %1226 = vmatpush.msra.mxu0 0.0
    %1227 = vmatpush.msra.mxu0 %v1210
    %1228 = vmatmul.f32.gmra.mxu0 %v1207
    %v1229 = vpop.f32.mrf.mxu0
    %v1230 = vadd.f32 0.0, %v1229
    %1231 = vdwg.mxu0
    %v1233 = vsel %vm660, %v1205, 0
    %v1236 = vsel %vm663, %v1102, 0
    %1238 = vmatpush.msra.mxu0 0.0
    %1239 = vmatpush.msra.mxu0 0.0
    %1240 = vmatpush.msra.mxu0 0.0
    %1241 = vmatpush.msra.mxu0 0.0
    %1242 = vmatpush.msra.mxu0 0.0
    %1243 = vmatpush.msra.mxu0 0.0
    %1244 = vmatpush.msra.mxu0 0.0
    %1245 = vmatpush.msra.mxu0 0.0
    %1246 = vmatpush.msra.mxu0 0.0
    %1247 = vmatpush.msra.mxu0 0.0
    %1248 = vmatpush.msra.mxu0 0.0
    %1249 = vmatpush.msra.mxu0 0.0
    %1250 = vmatpush.msra.mxu0 0.0
    %1251 = vmatpush.msra.mxu0 0.0
    %1252 = vmatpush.msra.mxu0 0.0
    %1253 = vmatpush.msra.mxu0 %v1236
    %1254 = vmatmul.f32.gmra.mxu0 %v1233
    %v1255 = vpop.f32.mrf.mxu0
    %v1256 = vadd.f32 0.0, %v1255
    %1257 = vdwg.mxu0
    %v1259 = vunpack.c.l.s4 1983009808
    %v1260 = vunpack.c.0.s8 %v1259
    %v1261 = vperm.slane %v1230, %v1260
    %v1263 = vunpack.c.l.s4 1983009808
    %v1264 = vunpack.c.0.s8 %v1263
    %v1265 = vperm.slane %v1256, %v1264
    %v1266 = vrot.slane %v1265, 4
    %v1267 = vsel %vm983, %v1266, %v1261
    %v1268 = vrot.slane %v1261, 4
    %v1269 = vsel %vm983, %v1265, %v1268
    %v1271 = vunpack.c.l.s4 1934713408
    %v1272 = vunpack.c.0.s8 %v1271
    %v1273 = vperm.slane %v1267, %v1272
    %v1275 = vunpack.c.l.s4 1934713408
    %v1276 = vunpack.c.0.s8 %v1275
    %v1277 = vperm.slane %v1269, %v1276
    %v1278 = vrot.slane %v1273, 4
    %v1279 = vsel %vm983, 0.0, %v1278
    %v1280 = vrot.slane %v1277, 4
    %v1281 = vsel %vm983, 0.0, %v1280
    %1283 = vrot.lane.b32.xlu0 %v1279, 32
    %v1284 = vpop.permute.xlu0 %1283
    %1287 = vrot.lane.b32.xlu0 %v1277, 64
    %v1288 = vpop.permute.xlu0 %1287
    %1291 = vrot.lane.b32.xlu0 %v1281, 96
    %v1292 = vpop.permute.xlu0 %1291
    %vm1294 = vcmask 261120
    %v1295 = vsel %vm1294, %v1273, %v1284
    %v1296 = vsel %vm805, %v1295, %v1288
    %vm1297 = vcmask 785408
    %v1298 = vsel %vm1297, %v1296, %v1292
    %1299 = vmatpush.msra.mxu0 %v378
    %1300 = vmatpush.msra.mxu0 %v377
    %1301 = vmatpush.msra.mxu0 %v376
    %1302 = vmatpush.msra.mxu0 %v375
    %1303 = vmatpush.msra.mxu0 %v374
    %1304 = vmatpush.msra.mxu0 %v373
    %1305 = vmatpush.msra.mxu0 %v372
    %1306 = vmatpush.msra.mxu0 %v371
    %1307 = vmatpush.msra.mxu0 %v370
    %1308 = vmatpush.msra.mxu0 %v369
    %1309 = vmatpush.msra.mxu0 %v368
    %1310 = vmatpush.msra.mxu0 %v367
    %1311 = vmatpush.msra.mxu0 %v366
    %1312 = vmatpush.msra.mxu0 %v365
    %1313 = vmatpush.msra.mxu0 %v364
    %1314 = vmatpush.msra.mxu0 %v363
    %1315 = vmatmul.f32.gmra.mxu0 %v951
    %v1316 = vpop.f32.mrf.mxu0
    %v1317 = vadd.f32 0.0, %v1316
    %1318 = vdwg.mxu0
    %1320 = vrot.lane.b32.xlu0 %v1317, 112
    %v1321 = vpop.permute.xlu0 %1320
    %1323 = vrot.lane.b32.xlu0 %v1317, 96
    %v1324 = vpop.permute.xlu0 %1323
    %1326 = vrot.lane.b32.xlu0 %v1317, 80
    %v1327 = vpop.permute.xlu0 %1326
    %v1329 = vrot.slane %v1324, 4
    %v1330 = vsel %vm983, %v1329, %v1317
    %v1332 = vunpack.c.l.s4 1983009808
    %v1333 = vunpack.c.0.s8 %v1332
    %v1334 = vperm.slane %v1330, %v1333
    %v1335 = vrot.slane %v1327, 4
    %v1336 = vsel %vm983, %v1335, %v1321
    %v1338 = vunpack.c.l.s4 1983009808
    %v1339 = vunpack.c.0.s8 %v1338
    %v1340 = vperm.slane %v1336, %v1339
    %v1341 = vrot.slane %v1340, 4
    %v1342 = vsel %vm983, %v1341, %v1334
    %v1344 = vunpack.c.l.s4 1934713408
    %v1345 = vunpack.c.0.s8 %v1344
    %v1346 = vperm.slane %v1342, %v1345
    %v1347 = vrot.slane %v1346, 4
    %v1348 = vsel %vm983, 0.0, %v1347
    %1349 = vmatpush.msra.mxu0 %v410
    %1350 = vmatpush.msra.mxu0 %v409
    %1351 = vmatpush.msra.mxu0 %v408
    %1352 = vmatpush.msra.mxu0 %v407
    %1353 = vmatpush.msra.mxu0 %v406
    %1354 = vmatpush.msra.mxu0 %v405
    %1355 = vmatpush.msra.mxu0 %v404
    %1356 = vmatpush.msra.mxu0 %v403
    %1357 = vmatpush.msra.mxu0 %v402
    %1358 = vmatpush.msra.mxu0 %v401
    %1359 = vmatpush.msra.mxu0 %v400
    %1360 = vmatpush.msra.mxu0 %v399
    %1361 = vmatpush.msra.mxu0 %v398
    %1362 = vmatpush.msra.mxu0 %v397
    %1363 = vmatpush.msra.mxu0 %v396
    %1364 = vmatpush.msra.mxu0 %v395
    %1365 = vmatmul.f32.gmra.mxu0 %v951
    %v1366 = vpop.f32.mrf.mxu0
    %v1367 = vadd.f32 0.0, %v1366
    %1368 = vdwg.mxu0
    %1370 = vrot.lane.b32.xlu0 %v1367, 112
    %v1371 = vpop.permute.xlu0 %1370
    %1373 = vrot.lane.b32.xlu0 %v1367, 96
    %v1374 = vpop.permute.xlu0 %1373
    %1376 = vrot.lane.b32.xlu0 %v1367, 80
    %v1377 = vpop.permute.xlu0 %1376
    %v1379 = vrot.slane %v1374, 4
    %v1380 = vsel %vm983, %v1379, %v1367
    %v1382 = vunpack.c.l.s4 1983009808
    %v1383 = vunpack.c.0.s8 %v1382
    %v1384 = vperm.slane %v1380, %v1383
    %v1385 = vrot.slane %v1377, 4
    %v1386 = vsel %vm983, %v1385, %v1371
    %v1388 = vunpack.c.l.s4 1983009808
    %v1389 = vunpack.c.0.s8 %v1388
    %v1390 = vperm.slane %v1386, %v1389
    %v1391 = vrot.slane %v1390, 4
    %v1392 = vsel %vm983, %v1391, %v1384
    %v1394 = vunpack.c.l.s4 1934713408
    %v1395 = vunpack.c.0.s8 %v1394
    %v1396 = vperm.slane %v1392, %v1395
    %v1397 = vrot.slane %v1396, 4
    %v1398 = vsel %vm983, 0.0, %v1397
    %1399 = vmatpush.msra.mxu0 %v442
    %1400 = vmatpush.msra.mxu0 %v441
    %1401 = vmatpush.msra.mxu0 %v440
    %1402 = vmatpush.msra.mxu0 %v439
    %1403 = vmatpush.msra.mxu0 %v438
    %1404 = vmatpush.msra.mxu0 %v437
    %1405 = vmatpush.msra.mxu0 %v436
    %1406 = vmatpush.msra.mxu0 %v435
    %1407 = vmatpush.msra.mxu0 %v434
    %1408 = vmatpush.msra.mxu0 %v433
    %1409 = vmatpush.msra.mxu0 %v432
    %1410 = vmatpush.msra.mxu0 %v431
    %1411 = vmatpush.msra.mxu0 %v430
    %1412 = vmatpush.msra.mxu0 %v429
    %1413 = vmatpush.msra.mxu0 %v428
    %1414 = vmatpush.msra.mxu0 %v427
    %1415 = vmatmul.f32.gmra.mxu0 %v951
    %v1416 = vpop.f32.mrf.mxu0
    %v1417 = vadd.f32 0.0, %v1416
    %1418 = vdwg.mxu0
    %1420 = vrot.lane.b32.xlu0 %v1417, 96
    %v1421 = vpop.permute.xlu0 %1420
    %1423 = vrot.lane.b32.xlu0 %v1417, 64
    %v1424 = vpop.permute.xlu0 %1423
    %1426 = vrot.lane.b32.xlu0 %v1417, 32
    %v1427 = vpop.permute.xlu0 %1426
    %v1429 = vrot.slane %v1424, 4
    %v1430 = vsel %vm983, %v1429, %v1417
    %v1432 = vunpack.c.l.s4 1983009808
    %v1433 = vunpack.c.0.s8 %v1432
    %v1434 = vperm.slane %v1430, %v1433
    %v1435 = vrot.slane %v1427, 4
    %v1436 = vsel %vm983, %v1435, %v1421
    %v1438 = vunpack.c.l.s4 1983009808
    %v1439 = vunpack.c.0.s8 %v1438
    %v1440 = vperm.slane %v1436, %v1439
    %v1441 = vrot.slane %v1440, 4
    %v1442 = vsel %vm983, %v1441, %v1434
    %v1444 = vunpack.c.l.s4 1934713408
    %v1445 = vunpack.c.0.s8 %v1444
    %v1446 = vperm.slane %v1442, %v1445
    %v1447 = vrot.slane %v1446, 4
    %v1448 = vsel %vm983, 0.0, %v1447
    %v1450 = vsel %vm1103, %v1346, 0
    %v1453 = vsel %vm1103, %v1396, 0
    %1455 = vmatpush.xpose.msra.mxu0 0.0
    %1456 = vmatpush.xpose.msra.mxu0 0.0
    %1457 = vmatpush.xpose.msra.mxu0 0.0
    %1458 = vmatpush.xpose.msra.mxu0 0.0
    %1459 = vmatpush.xpose.msra.mxu0 0.0
    %1460 = vmatpush.xpose.msra.mxu0 0.0
    %1461 = vmatpush.xpose.msra.mxu0 0.0
    %1462 = vmatpush.xpose.msra.mxu0 0.0
    %1463 = vmatpush.xpose.msra.mxu0 0.0
    %1464 = vmatpush.xpose.msra.mxu0 0.0
    %1465 = vmatpush.xpose.msra.mxu0 0.0
    %1466 = vmatpush.xpose.msra.mxu0 0.0
    %1467 = vmatpush.xpose.msra.mxu0 0.0
    %1468 = vmatpush.xpose.msra.mxu0 0.0
    %1469 = vmatpush.xpose.msra.mxu0 0.0
    %1470 = vmatpush.xpose.msra.mxu0 %v1453
    %1471 = vmatmul.f32.gmra.mxu0 %v1450
    %v1472 = vpop.f32.mrf.mxu0
    %v1473 = vadd.f32 0.0, %v1472
    %1474 = vdwg.mxu0
    %v1476 = vsel %vm1103, %v1348, 0
    %v1479 = vsel %vm1103, %v1398, 0
    %1481 = vmatpush.xpose.msra.mxu0 0.0
    %1482 = vmatpush.xpose.msra.mxu0 0.0
    %1483 = vmatpush.xpose.msra.mxu0 0.0
    %1484 = vmatpush.xpose.msra.mxu0 0.0
    %1485 = vmatpush.xpose.msra.mxu0 0.0
    %1486 = vmatpush.xpose.msra.mxu0 0.0
    %1487 = vmatpush.xpose.msra.mxu0 0.0
    %1488 = vmatpush.xpose.msra.mxu0 0.0
    %1489 = vmatpush.xpose.msra.mxu0 0.0
    %1490 = vmatpush.xpose.msra.mxu0 0.0
    %1491 = vmatpush.xpose.msra.mxu0 0.0
    %1492 = vmatpush.xpose.msra.mxu0 0.0
    %1493 = vmatpush.xpose.msra.mxu0 0.0
    %1494 = vmatpush.xpose.msra.mxu0 0.0
    %1495 = vmatpush.xpose.msra.mxu0 0.0
    %1496 = vmatpush.xpose.msra.mxu0 %v1479
    %1497 = vmatmul.f32.gmra.mxu0 %v1476
    %v1498 = vpop.f32.mrf.mxu0
    %v1499 = vadd.f32 0.0, %v1498
    %1500 = vdwg.mxu0
    %v1501 = vmul.f32 %v1473, 0.25
    %v1502 = vmul.f32 %v1499, 0.25
    %v1503 = vsel %vm556, %v1501, -inf
    %1504 = vmax.xlane.f32.xlu0 %v1503
    %v1505 = vpop.xlane.xlu0 %1504
    %v1506 = vsel %vm556, %v1502, -inf
    %1507 = vmax.xlane.f32.xlu0 %v1506
    %v1508 = vpop.xlane.xlu0 %1507
    %v1509 = vsub.f32 %v1501, %v1505
    %v1510 = vsub.f32 %v1502, %v1508
    %v1511 = vmul.f32 %v1509, 1.442695
    %v1512 = vpow.pop %v1511
    %v1513 = vmul.f32 %v1510, 1.442695
    %v1514 = vpow.pop %v1513
    %v1515 = vsel %vm556, %v1512, 0.0
    %1516 = vadd.xlane.f32.xlu0 %v1515
    %v1517 = vpop.xlane.xlu0 %1516
    %v1518 = vsel %vm556, %v1514, 0.0
    %1519 = vadd.xlane.f32.xlu0 %v1518
    %v1520 = vpop.xlane.xlu0 %1519
    %v1521 = vrcp.pop %v1517
    %v1522 = vmul.f32 %v1517, %v1521
    %v1523 = vsub.f32 1.0, %v1522
    %v1524 = vmul.f32 %v1521, %v1523
    %v1525 = vadd.f32 %v1521, %v1524
    %vm1526 = vweird.f32 %v1517
    %vm1527 = vweird.f32 %v1521
    %vm1528 = vmor %vm1526, %vm1527
    %v1529 = vsel %vm1528, %v1521, %v1525
    %v1530 = vand.u32 2147483647, %v1517
    %vm1531 = vcmp.eq.f32.partialorder %v1530, 8.507059e+37
    %v1532 = vand.u32 %v1517, 2147483648
    %v1533 = vor.u32 1.1754944e-38, %v1532
    %v1534 = vsel %vm1531, %v1533, %v1529
    %v1535 = vmul.f32 %v1512, %v1534
    %v1536 = vrcp.pop %v1520
    %v1537 = vmul.f32 %v1520, %v1536
    %v1538 = vsub.f32 1.0, %v1537
    %v1539 = vmul.f32 %v1536, %v1538
    %v1540 = vadd.f32 %v1536, %v1539
    %vm1541 = vweird.f32 %v1520
    %vm1542 = vweird.f32 %v1536
    %vm1543 = vmor %vm1541, %vm1542
    %v1544 = vsel %vm1543, %v1536, %v1540
    %v1545 = vand.u32 2147483647, %v1520
    %vm1546 = vcmp.eq.f32.partialorder %v1545, 8.507059e+37
    %v1547 = vand.u32 %v1520, 2147483648
    %v1548 = vor.u32 1.1754944e-38, %v1547
    %v1549 = vsel %vm1546, %v1548, %v1544
    %v1550 = vmul.f32 %v1514, %v1549
    %v1552 = vsel %vm660, %v1535, 0
    %v1555 = vsel %vm663, %v1446, 0
    %1557 = vmatpush.msra.mxu0 0.0
    %1558 = vmatpush.msra.mxu0 0.0
    %1559 = vmatpush.msra.mxu0 0.0
    %1560 = vmatpush.msra.mxu0 0.0
    %1561 = vmatpush.msra.mxu0 0.0
    %1562 = vmatpush.msra.mxu0 0.0
    %1563 = vmatpush.msra.mxu0 0.0
    %1564 = vmatpush.msra.mxu0 0.0
    %1565 = vmatpush.msra.mxu0 0.0
    %1566 = vmatpush.msra.mxu0 0.0
    %1567 = vmatpush.msra.mxu0 0.0
    %1568 = vmatpush.msra.mxu0 0.0
    %1569 = vmatpush.msra.mxu0 0.0
    %1570 = vmatpush.msra.mxu0 0.0
    %1571 = vmatpush.msra.mxu0 0.0
    %1572 = vmatpush.msra.mxu0 %v1555
    %1573 = vmatmul.f32.gmra.mxu0 %v1552
    %v1574 = vpop.f32.mrf.mxu0
    %v1575 = vadd.f32 0.0, %v1574
    %1576 = vdwg.mxu0
    %v1578 = vsel %vm660, %v1550, 0
    %v1581 = vsel %vm663, %v1448, 0
    %1583 = vmatpush.msra.mxu0 0.0
    %1584 = vmatpush.msra.mxu0 0.0
    %1585 = vmatpush.msra.mxu0 0.0
    %1586 = vmatpush.msra.mxu0 0.0
    %1587 = vmatpush.msra.mxu0 0.0
    %1588 = vmatpush.msra.mxu0 0.0
    %1589 = vmatpush.msra.mxu0 0.0
    %1590 = vmatpush.msra.mxu0 0.0
    %1591 = vmatpush.msra.mxu0 0.0
    %1592 = vmatpush.msra.mxu0 0.0
    %1593 = vmatpush.msra.mxu0 0.0
    %1594 = vmatpush.msra.mxu0 0.0
    %1595 = vmatpush.msra.mxu0 0.0
    %1596 = vmatpush.msra.mxu0 0.0
    %1597 = vmatpush.msra.mxu0 0.0
    %1598 = vmatpush.msra.mxu0 %v1581
    %1599 = vmatmul.f32.gmra.mxu0 %v1578
    %v1600 = vpop.f32.mrf.mxu0
    %v1601 = vadd.f32 0.0, %v1600
    %1602 = vdwg.mxu0
    %v1604 = vunpack.c.l.s4 1983009808
    %v1605 = vunpack.c.0.s8 %v1604
    %v1606 = vperm.slane %v1575, %v1605
    %v1608 = vunpack.c.l.s4 1983009808
    %v1609 = vunpack.c.0.s8 %v1608
    %v1610 = vperm.slane %v1601, %v1609
    %v1611 = vrot.slane %v1610, 4
    %v1612 = vsel %vm983, %v1611, %v1606
    %v1613 = vrot.slane %v1606, 4
    %v1614 = vsel %vm983, %v1610, %v1613
    %v1616 = vunpack.c.l.s4 1934713408
    %v1617 = vunpack.c.0.s8 %v1616
    %v1618 = vperm.slane %v1612, %v1617
    %v1620 = vunpack.c.l.s4 1934713408
    %v1621 = vunpack.c.0.s8 %v1620
    %v1622 = vperm.slane %v1614, %v1621
    %v1623 = vrot.slane %v1618, 4
    %v1624 = vsel %vm983, 0.0, %v1623
    %v1625 = vrot.slane %v1622, 4
    %v1626 = vsel %vm983, 0.0, %v1625
    %1628 = vrot.lane.b32.xlu0 %v1624, 32
    %v1629 = vpop.permute.xlu0 %1628
    %1632 = vrot.lane.b32.xlu0 %v1622, 64
    %v1633 = vpop.permute.xlu0 %1632
    %1636 = vrot.lane.b32.xlu0 %v1626, 96
    %v1637 = vpop.permute.xlu0 %1636
    %v1639 = vsel %vm1294, %v1618, %v1629
    %v1640 = vsel %vm805, %v1639, %v1633
    %v1641 = vsel %vm1297, %v1640, %v1637
    %1642 = vmatpush.msra.mxu0 %v474
    %1643 = vmatpush.msra.mxu0 %v473
    %1644 = vmatpush.msra.mxu0 %v472
    %1645 = vmatpush.msra.mxu0 %v471
    %1646 = vmatpush.msra.mxu0 %v470
    %1647 = vmatpush.msra.mxu0 %v469
    %1648 = vmatpush.msra.mxu0 %v468
    %1649 = vmatpush.msra.mxu0 %v467
    %1650 = vmatpush.msra.mxu0 %v466
    %1651 = vmatpush.msra.mxu0 %v465
    %1652 = vmatpush.msra.mxu0 %v464
    %1653 = vmatpush.msra.mxu0 %v463
    %1654 = vmatpush.msra.mxu0 %v462
    %1655 = vmatpush.msra.mxu0 %v461
    %1656 = vmatpush.msra.mxu0 %v460
    %1657 = vmatpush.msra.mxu0 %v459
    %1658 = vmatmul.f32.gmra.mxu0 %v1641
    %v1659 = vpop.f32.mrf.mxu0
    %v1660 = vadd.f32 0.0, %v1659
    %1661 = vdwg.mxu0
    %1662 = vmatpush.msra.mxu0 %v458
    %1663 = vmatpush.msra.mxu0 %v457
    %1664 = vmatpush.msra.mxu0 %v456
    %1665 = vmatpush.msra.mxu0 %v455
    %1666 = vmatpush.msra.mxu0 %v454
    %1667 = vmatpush.msra.mxu0 %v453
    %1668 = vmatpush.msra.mxu0 %v452
    %1669 = vmatpush.msra.mxu0 %v451
    %1670 = vmatpush.msra.mxu0 %v450
    %1671 = vmatpush.msra.mxu0 %v449
    %1672 = vmatpush.msra.mxu0 %v448
    %1673 = vmatpush.msra.mxu0 %v447
    %1674 = vmatpush.msra.mxu0 %v446
    %1675 = vmatpush.msra.mxu0 %v445
    %1676 = vmatpush.msra.mxu0 %v444
    %1677 = vmatpush.msra.mxu0 %v443
    %1678 = vmatmul.f32.gmra.mxu0 %v1298
    %v1679 = vpop.f32.mrf.mxu0
    %v1680 = vadd.f32 %v1660, %v1679
    %1681 = vdwg.mxu0
    %v1682 = vadd.f32 %v1680, %v951
    %v1685 = vperm.slane %v587, %v540
    %v1686 = vperm.slane %v588, %v540
    %v1687 = vsel %vm658, %v1686, %v1685
    %v1688 = vsel %vm660, %v1687, 0
    %v1691 = vsel %vm663, %v250, 0
    %1693 = vmatpush.msra.mxu0 0.0
    %1694 = vmatpush.msra.mxu0 0.0
    %1695 = vmatpush.msra.mxu0 0.0
    %1696 = vmatpush.msra.mxu0 0.0
    %1697 = vmatpush.msra.mxu0 0.0
    %1698 = vmatpush.msra.mxu0 0.0
    %1699 = vmatpush.msra.mxu0 0.0
    %1700 = vmatpush.msra.mxu0 0.0
    %1701 = vmatpush.msra.mxu0 0.0
    %1702 = vmatpush.msra.mxu0 0.0
    %1703 = vmatpush.msra.mxu0 0.0
    %1704 = vmatpush.msra.mxu0 0.0
    %1705 = vmatpush.msra.mxu0 0.0
    %1706 = vmatpush.msra.mxu0 0.0
    %1707 = vmatpush.msra.mxu0 0.0
    %1708 = vmatpush.msra.mxu0 %v1691
    %1709 = vmatmul.f32.gmra.mxu0 %v1688
    %v1710 = vpop.f32.mrf.mxu0
    %v1711 = vadd.f32 0.0, %v1710
    %1712 = vdwg.mxu0
    %v1713 = vmul.f32 %v1711, %v1682
    %v1714 = vsub.f32 1.0, %v1711
    %v1715 = vmul.f32 %v1714, %v475
    %v1716 = vadd.f32 %v1713, %v1715
    %v1717 = vmul.f32 %v1711, %v949
    %v1718 = vmul.f32 %v1714, %v476
    %v1719 = vadd.f32 %v1717, %v1718
    %v1721 = vrot.slane %v154, 2
    %v1723 = vmul.f32 %v1716, %v1721
    %v1725 = vrot.slane %v182, 2
    %1727 = vmatpush.msra.mxu0 %v247
    %1728 = vmatpush.msra.mxu0 %v246
    %1729 = vmatpush.msra.mxu0 %v245
    %1730 = vmatpush.msra.mxu0 %v244
    %1731 = vmatpush.msra.mxu0 %v243
    %1732 = vmatpush.msra.mxu0 %v242
    %1733 = vmatpush.msra.mxu0 %v241
    %1734 = vmatpush.msra.mxu0 %v240
    %1735 = vmatpush.msra.mxu0 %v239
    %1736 = vmatpush.msra.mxu0 %v238
    %1737 = vmatpush.msra.mxu0 %v237
    %1738 = vmatpush.msra.mxu0 %v236
    %1739 = vmatpush.msra.mxu0 %v235
    %1740 = vmatpush.msra.mxu0 %v234
    %1741 = vmatpush.msra.mxu0 %v233
    %1742 = vmatpush.msra.mxu0 %v232
    %1743 = vmatmul.f32.gmra.mxu0 %v1723
    %v1744 = vpop.f32.mrf.mxu0
    %v1745 = vadd.f32 %v1725, %v1744
    %1746 = vdwg.mxu0
    %1747 = vmatpush.msra.mxu0 %v230
    %1748 = vmatpush.msra.mxu0 %v229
    %1749 = vmatpush.msra.mxu0 %v228
    %1750 = vmatpush.msra.mxu0 %v227
    %1751 = vmatpush.msra.mxu0 %v226
    %1752 = vmatpush.msra.mxu0 %v225
    %1753 = vmatpush.msra.mxu0 %v224
    %1754 = vmatpush.msra.mxu0 %v223
    %1755 = vmatpush.msra.mxu0 %v222
    %1756 = vmatpush.msra.mxu0 %v221
    %1757 = vmatpush.msra.mxu0 %v220
    %1758 = vmatpush.msra.mxu0 %v219
    %1759 = vmatpush.msra.mxu0 %v218
    %1760 = vmatpush.msra.mxu0 %v217
    %1761 = vmatpush.msra.mxu0 %v216
    %1762 = vmatpush.msra.mxu0 %v215
    %1763 = vmatmul.f32.gmra.mxu0 %v1716
    %v1764 = vpop.f32.mrf.mxu0
    %v1765 = vadd.f32 %v499, %v1764
    %1766 = vdwg.mxu0
    %v1767 = vperm.slane %v1745, 0
    %v1768 = vlaneseq
    %v1769 = vshrl.u32 %v1768, 7
    %1771 = vset.pattern.permute.xlu0 %v1769
    %1772 = vperm.xlu0 %1771, %v1767
    %v1773 = vpop.permute.xlu0 %1772
    %v1774 = vperm.slane %v1745, 1
    %v1775 = vlaneseq
    %v1776 = vshrl.u32 %v1775, 7
    %1778 = vset.pattern.permute.xlu0 %v1776
    %1779 = vperm.xlu0 %1778, %v1774
    %v1780 = vpop.permute.xlu0 %1779
    %v1782 = vrot.slane %v1745, 1
    %v1783 = vperm.slane %v1745, 0
    %v1784 = vperm.slane %v1782, 0
    %vm1787 = vcmp.gt.f32.partialorder %v1783, %v1773
    %vm1788 = vcmp.gt.f32.partialorder %v1784, %v1780
    %vm1789 = vcmp.eq.f32.partialorder %v1783, %v1773
    %vm1790 = vcmp.eq.f32.partialorder %v1784, %v1780
    %vm1791 = vmand %vm1789, %vm549
    %vm1792 = vmand %vm1790, %vm549
    %vm1793 = vmor %vm1787, %vm1791
    %vm1794 = vmor %vm1788, %vm1792
    %v1795 = vsel %vm1793, 1, 0
    %v1796 = vsel %vm1794, 1, 0
    %v1797 = vsel %vm556, %v1795, 0
    %v1798 = vand.u32 %v1797, 65535
    %v1799 = vshrl.u32 %v1797, 16
    %v1800 = vcvt.s32.f32 %v1798
    %v1801 = vcvt.s32.f32 %v1799
    %1802 = vadd.xlane.f32.xlu0 %v1800
    %v1803 = vpop.xlane.xlu0 %1802
    %1804 = vadd.xlane.f32.xlu0 %v1801
    %v1805 = vpop.xlane.xlu0 %1804
    %v1806 = vcvt.f32.s32 %v1803
    %v1807 = vcvt.f32.s32 %v1805
    %v1808 = vshll.u32 %v1807, 16
    %v1809 = vadd.s32 %v1808, %v1806
    %v1810 = vsel %vm556, %v1796, 0
    %v1811 = vand.u32 %v1810, 65535
    %v1812 = vshrl.u32 %v1810, 16
    %v1813 = vcvt.s32.f32 %v1811
    %v1814 = vcvt.s32.f32 %v1812
    %1815 = vadd.xlane.f32.xlu0 %v1813
    %v1816 = vpop.xlane.xlu0 %1815
    %1817 = vadd.xlane.f32.xlu0 %v1814
    %v1818 = vpop.xlane.xlu0 %1817
    %v1819 = vcvt.f32.s32 %v1816
    %v1820 = vcvt.f32.s32 %v1818
    %v1821 = vshll.u32 %v1820, 16
    %v1822 = vadd.s32 %v1821, %v1819
    %vm1823 = vcmp.lt.s32.totalorder %v1809, 2
    %vm1824 = vcmp.lt.s32.totalorder %v1822, 2
    %v1825 = vsel %vm1823, 1, 0
    %v1826 = vsel %vm1824, 1, 0
    %v1827 = vcvt.s32.f32 %v1825
    %v1828 = vcvt.s32.f32 %v1826
    %v1829 = vsub.f32 %v1745, %v1765
    %v1830 = vxor.u32 %v1829, 2147483648
    %v1831 = vmul.f32 %v1830, 1.442695
    %v1832 = vpow.pop %v1831
    %v1833 = vadd.f32 %v1832, 1.0
    %v1834 = vrcp.pop %v1833
    %v1835 = vmul.f32 %v1833, %v1834
    %v1836 = vsub.f32 1.0, %v1835
    %v1837 = vmul.f32 %v1834, %v1836
    %v1838 = vadd.f32 %v1834, %v1837
    %vm1839 = vweird.f32 %v1833
    %vm1840 = vweird.f32 %v1834
    %vm1841 = vmor %vm1839, %vm1840
    %v1842 = vsel %vm1841, %v1834, %v1838
    %v1843 = vand.u32 2147483647, %v1833
    %vm1844 = vcmp.eq.f32.partialorder %v1843, 8.507059e+37
    %v1845 = vand.u32 %v1833, 2147483648
    %v1846 = vor.u32 1.1754944e-38, %v1845
    %v1847 = vsel %vm1844, %v1846, %v1842
    %v1848 = vmul.f32 1.0, %v1847
    %v1850 = vperm.slane %v1848, 0
    %v1851 = vlaneseq
    %v1852 = vshrl.u32 %v1851, 7
    %1854 = vset.pattern.permute.xlu0 %v1852
    %1855 = vperm.xlu0 %1854, %v1850
    %v1856 = vpop.permute.xlu0 %1855
    %v1857 = vperm.slane %v1848, 1
    %v1858 = vlaneseq
    %v1859 = vshrl.u32 %v1858, 7
    %1861 = vset.pattern.permute.xlu0 %v1859
    %1862 = vperm.xlu0 %1861, %v1857
    %v1863 = vpop.permute.xlu0 %1862
    %v1866 = vmul.f32 %v1827, %v1856
    %v1867 = vmul.f32 %v1828, %v1863
    %v1868 = vsub.f32 1.0, %v1848
    %v1870 = vperm.slane %v1868, 0
    %v1871 = vlaneseq
    %v1872 = vshrl.u32 %v1871, 7
    %1874 = vset.pattern.permute.xlu0 %v1872
    %1875 = vperm.xlu0 %1874, %v1870
    %v1876 = vpop.permute.xlu0 %1875
    %v1877 = vperm.slane %v1868, 1
    %v1878 = vlaneseq
    %v1879 = vshrl.u32 %v1878, 7
    %1881 = vset.pattern.permute.xlu0 %v1879
    %1882 = vperm.xlu0 %1881, %v1877
    %v1883 = vpop.permute.xlu0 %1882
    %v1886 = vmul.f32 %v1827, %v1876
    %v1887 = vmul.f32 %v1828, %v1883
    %1890 = vset.pattern.permute.xlu0 0
    %1891 = vperm.xlu0 %1890, %v1866
    %v1892 = vpop.permute.xlu0 %1891
    %1893 = vset.pattern.permute.xlu0 0
    %1894 = vperm.xlu0 %1893, %v1867
    %v1895 = vpop.permute.xlu0 %1894
    %v1896 = vperm.slane %v1892, %v540
    %v1897 = vperm.slane %v1895, %v540
    %v1898 = vsel %vm658, %v1897, %v1896
    %v1899 = vsel %vm660, %v1898, 0
    %1901 = vmatpush.msra.mxu0 0.0
    %1902 = vmatpush.msra.mxu0 0.0
    %1903 = vmatpush.msra.mxu0 0.0
    %1904 = vmatpush.msra.mxu0 0.0
    %1905 = vmatpush.msra.mxu0 0.0
    %1906 = vmatpush.msra.mxu0 0.0
    %1907 = vmatpush.msra.mxu0 0.0
    %1908 = vmatpush.msra.mxu0 0.0
    %1909 = vmatpush.msra.mxu0 0.0
    %1910 = vmatpush.msra.mxu0 0.0
    %1911 = vmatpush.msra.mxu0 0.0
    %1912 = vmatpush.msra.mxu0 0.0
    %1913 = vmatpush.msra.mxu0 0.0
    %1914 = vmatpush.msra.mxu0 0.0
    %1915 = vmatpush.msra.mxu0 0.0
    %1916 = vmatpush.msra.mxu0 %v665
    %1917 = vmatmul.f32.gmra.mxu0 %v1899
    %v1918 = vpop.f32.mrf.mxu0
    %v1919 = vadd.f32 0.0, %v1918
    %1920 = vdwg.mxu0
    %v1922 = vrot.slane %v210, 2
    %v1924 = vmul.f32 %v1919, %v1922
    %1927 = vset.pattern.permute.xlu0 0
    %1928 = vperm.xlu0 %1927, %v1886
    %v1929 = vpop.permute.xlu0 %1928
    %1930 = vset.pattern.permute.xlu0 0
    %1931 = vperm.xlu0 %1930, %v1887
    %v1932 = vpop.permute.xlu0 %1931
    %v1933 = vperm.slane %v1929, %v540
    %v1934 = vperm.slane %v1932, %v540
    %v1935 = vsel %vm658, %v1934, %v1933
    %v1936 = vsel %vm660, %v1935, 0
    %1938 = vmatpush.msra.mxu0 0.0
    %1939 = vmatpush.msra.mxu0 0.0
    %1940 = vmatpush.msra.mxu0 0.0
    %1941 = vmatpush.msra.mxu0 0.0
    %1942 = vmatpush.msra.mxu0 0.0
    %1943 = vmatpush.msra.mxu0 0.0
    %1944 = vmatpush.msra.mxu0 0.0
    %1945 = vmatpush.msra.mxu0 0.0
    %1946 = vmatpush.msra.mxu0 0.0
    %1947 = vmatpush.msra.mxu0 0.0
    %1948 = vmatpush.msra.mxu0 0.0
    %1949 = vmatpush.msra.mxu0 0.0
    %1950 = vmatpush.msra.mxu0 0.0
    %1951 = vmatpush.msra.mxu0 0.0
    %1952 = vmatpush.msra.mxu0 0.0
    %1953 = vmatpush.msra.mxu0 %v702
    %1954 = vmatmul.f32.gmra.mxu0 %v1936
    %v1955 = vpop.f32.mrf.mxu0
    %v1956 = vadd.f32 0.0, %v1955
    %1957 = vdwg.mxu0
    %v1958 = vadd.f32 %v1924, %v1956
    %1959 = vmatpush.msra.mxu0 %v343
    %1960 = vmatpush.msra.mxu0 %v339
    %1961 = vmatpush.msra.mxu0 %v335
    %1962 = vmatpush.msra.mxu0 %v331
    %1963 = vmatpush.msra.mxu0 %v327
    %1964 = vmatpush.msra.mxu0 %v323
    %1965 = vmatpush.msra.mxu0 %v319
    %1966 = vmatpush.msra.mxu0 %v315
    %1967 = vmatpush.msra.mxu0 %v311
    %1968 = vmatpush.msra.mxu0 %v307
    %1969 = vmatpush.msra.mxu0 %v303
    %1970 = vmatpush.msra.mxu0 %v299
    %1971 = vmatpush.msra.mxu0 %v295
    %1972 = vmatpush.msra.mxu0 %v291
    %1973 = vmatpush.msra.mxu0 %v287
    %1974 = vmatpush.msra.mxu0 %v283
    %1975 = vmatmul.f32.gmra.mxu0 %v1716
    %v1976 = vpop.f32.mrf.mxu0
    %v1977 = vadd.f32 0.0, %v1976
    %1978 = vdwg.mxu0
    %1979 = vmatpush.msra.mxu0 %v344
    %1980 = vmatpush.msra.mxu0 %v340
    %1981 = vmatpush.msra.mxu0 %v336
    %1982 = vmatpush.msra.mxu0 %v332
    %1983 = vmatpush.msra.mxu0 %v328
    %1984 = vmatpush.msra.mxu0 %v324
    %1985 = vmatpush.msra.mxu0 %v320
    %1986 = vmatpush.msra.mxu0 %v316
    %1987 = vmatpush.msra.mxu0 %v312
    %1988 = vmatpush.msra.mxu0 %v308
    %1989 = vmatpush.msra.mxu0 %v304
    %1990 = vmatpush.msra.mxu0 %v300
    %1991 = vmatpush.msra.mxu0 %v296
    %1992 = vmatpush.msra.mxu0 %v292
    %1993 = vmatpush.msra.mxu0 %v288
    %1994 = vmatpush.msra.mxu0 %v284
    %1995 = vmatmul.f32.gmra.mxu0 %v1716
    %v1996 = vpop.f32.mrf.mxu0
    %v1997 = vadd.f32 0.0, %v1996
    %1998 = vdwg.mxu0
    %1999 = vmatpush.msra.mxu0 %v345
    %2000 = vmatpush.msra.mxu0 %v341
    %2001 = vmatpush.msra.mxu0 %v337
    %2002 = vmatpush.msra.mxu0 %v333
    %2003 = vmatpush.msra.mxu0 %v329
    %2004 = vmatpush.msra.mxu0 %v325
    %2005 = vmatpush.msra.mxu0 %v321
    %2006 = vmatpush.msra.mxu0 %v317
    %2007 = vmatpush.msra.mxu0 %v313
    %2008 = vmatpush.msra.mxu0 %v309
    %2009 = vmatpush.msra.mxu0 %v305
    %2010 = vmatpush.msra.mxu0 %v301
    %2011 = vmatpush.msra.mxu0 %v297
    %2012 = vmatpush.msra.mxu0 %v293
    %2013 = vmatpush.msra.mxu0 %v289
    %2014 = vmatpush.msra.mxu0 %v285
    %2015 = vmatmul.f32.gmra.mxu0 %v1716
    %v2016 = vpop.f32.mrf.mxu0
    %v2017 = vadd.f32 0.0, %v2016
    %2018 = vdwg.mxu0
    %2019 = vmatpush.msra.mxu0 %v346
    %2020 = vmatpush.msra.mxu0 %v342
    %2021 = vmatpush.msra.mxu0 %v338
    %2022 = vmatpush.msra.mxu0 %v334
    %2023 = vmatpush.msra.mxu0 %v330
    %2024 = vmatpush.msra.mxu0 %v326
    %2025 = vmatpush.msra.mxu0 %v322
    %2026 = vmatpush.msra.mxu0 %v318
    %2027 = vmatpush.msra.mxu0 %v314
    %2028 = vmatpush.msra.mxu0 %v310
    %2029 = vmatpush.msra.mxu0 %v306
    %2030 = vmatpush.msra.mxu0 %v302
    %2031 = vmatpush.msra.mxu0 %v298
    %2032 = vmatpush.msra.mxu0 %v294
    %2033 = vmatpush.msra.mxu0 %v290
    %2034 = vmatpush.msra.mxu0 %v286
    %2035 = vmatmul.f32.gmra.mxu0 %v1716
    %v2036 = vpop.f32.mrf.mxu0
    %v2037 = vadd.f32 0.0, %v2036
    %2038 = vdwg.mxu0
    %v2040 = vsel %vm805, %v1958, 0
    %2042 = vmatpush.msra.mxu0 0.0
    %2043 = vmatpush.msra.mxu0 0.0
    %2044 = vmatpush.msra.mxu0 0.0
    %2045 = vmatpush.msra.mxu0 0.0
    %2046 = vmatpush.msra.mxu0 0.0
    %2047 = vmatpush.msra.mxu0 0.0
    %2048 = vmatpush.msra.mxu0 0.0
    %2049 = vmatpush.msra.mxu0 0.0
    %2050 = vmatpush.msra.mxu0 %v279
    %2051 = vmatpush.msra.mxu0 %v275
    %2052 = vmatpush.msra.mxu0 %v271
    %2053 = vmatpush.msra.mxu0 %v267
    %2054 = vmatpush.msra.mxu0 %v263
    %2055 = vmatpush.msra.mxu0 %v259
    %2056 = vmatpush.msra.mxu0 %v255
    %2057 = vmatpush.msra.mxu0 %v251
    %2058 = vmatmul.f32.gmra.mxu0 %v2040
    %v2059 = vpop.f32.mrf.mxu0
    %v2060 = vadd.f32 %v1977, %v2059
    %2061 = vdwg.mxu0
    %2062 = vmatpush.msra.mxu0 0.0
    %2063 = vmatpush.msra.mxu0 0.0
    %2064 = vmatpush.msra.mxu0 0.0
    %2065 = vmatpush.msra.mxu0 0.0
    %2066 = vmatpush.msra.mxu0 0.0
    %2067 = vmatpush.msra.mxu0 0.0
    %2068 = vmatpush.msra.mxu0 0.0
    %2069 = vmatpush.msra.mxu0 0.0
    %2070 = vmatpush.msra.mxu0 %v280
    %2071 = vmatpush.msra.mxu0 %v276
    %2072 = vmatpush.msra.mxu0 %v272
    %2073 = vmatpush.msra.mxu0 %v268
    %2074 = vmatpush.msra.mxu0 %v264
    %2075 = vmatpush.msra.mxu0 %v260
    %2076 = vmatpush.msra.mxu0 %v256
    %2077 = vmatpush.msra.mxu0 %v252
    %2078 = vmatmul.f32.gmra.mxu0 %v2040
    %v2079 = vpop.f32.mrf.mxu0
    %v2080 = vadd.f32 %v1997, %v2079
    %2081 = vdwg.mxu0
    %2082 = vmatpush.msra.mxu0 0.0
    %2083 = vmatpush.msra.mxu0 0.0
    %2084 = vmatpush.msra.mxu0 0.0
    %2085 = vmatpush.msra.mxu0 0.0
    %2086 = vmatpush.msra.mxu0 0.0
    %2087 = vmatpush.msra.mxu0 0.0
    %2088 = vmatpush.msra.mxu0 0.0
    %2089 = vmatpush.msra.mxu0 0.0
    %2090 = vmatpush.msra.mxu0 %v281
    %2091 = vmatpush.msra.mxu0 %v277
    %2092 = vmatpush.msra.mxu0 %v273
    %2093 = vmatpush.msra.mxu0 %v269
    %2094 = vmatpush.msra.mxu0 %v265
    %2095 = vmatpush.msra.mxu0 %v261
    %2096 = vmatpush.msra.mxu0 %v257
    %2097 = vmatpush.msra.mxu0 %v253
    %2098 = vmatmul.f32.gmra.mxu0 %v2040
    %v2099 = vpop.f32.mrf.mxu0
    %v2100 = vadd.f32 %v2017, %v2099
    %2101 = vdwg.mxu0
    %2102 = vmatpush.msra.mxu0 0.0
    %2103 = vmatpush.msra.mxu0 0.0
    %2104 = vmatpush.msra.mxu0 0.0
    %2105 = vmatpush.msra.mxu0 0.0
    %2106 = vmatpush.msra.mxu0 0.0
    %2107 = vmatpush.msra.mxu0 0.0
    %2108 = vmatpush.msra.mxu0 0.0
    %2109 = vmatpush.msra.mxu0 0.0
    %2110 = vmatpush.msra.mxu0 %v282
    %2111 = vmatpush.msra.mxu0 %v278
    %2112 = vmatpush.msra.mxu0 %v274
    %2113 = vmatpush.msra.mxu0 %v270
    %2114 = vmatpush.msra.mxu0 %v266
    %2115 = vmatpush.msra.mxu0 %v262
    %2116 = vmatpush.msra.mxu0 %v258
    %2117 = vmatpush.msra.mxu0 %v254
    %2118 = vmatmul.f32.gmra.mxu0 %v2040
    %v2119 = vpop.f32.mrf.mxu0
    %v2120 = vadd.f32 %v2037, %v2119
    %2121 = vdwg.mxu0
    %v2122 = vxor.u32 %v2060, 2147483648
    %v2123 = vmul.f32 %v2122, 1.442695
    %v2124 = vpow.pop %v2123
    %v2125 = vadd.f32 %v2124, 1.0
    %v2126 = vrcp.pop %v2125
    %v2127 = vmul.f32 %v2125, %v2126
    %v2128 = vsub.f32 1.0, %v2127
    %v2129 = vmul.f32 %v2126, %v2128
    %v2130 = vadd.f32 %v2126, %v2129
    %vm2131 = vweird.f32 %v2125
    %vm2132 = vweird.f32 %v2126
    %vm2133 = vmor %vm2131, %vm2132
    %v2134 = vsel %vm2133, %v2126, %v2130
    %v2135 = vand.u32 2147483647, %v2125
    %vm2136 = vcmp.eq.f32.partialorder %v2135, 8.507059e+37
    %v2137 = vand.u32 %v2125, 2147483648
    %v2138 = vor.u32 1.1754944e-38, %v2137
    %v2139 = vsel %vm2136, %v2138, %v2134
    %v2140 = vmul.f32 1.0, %v2139
    %v2141 = vxor.u32 %v2080, 2147483648
    %v2142 = vmul.f32 %v2141, 1.442695
    %v2143 = vpow.pop %v2142
    %v2144 = vadd.f32 %v2143, 1.0
    %v2145 = vrcp.pop %v2144
    %v2146 = vmul.f32 %v2144, %v2145
    %v2147 = vsub.f32 1.0, %v2146
    %v2148 = vmul.f32 %v2145, %v2147
    %v2149 = vadd.f32 %v2145, %v2148
    %vm2150 = vweird.f32 %v2144
    %vm2151 = vweird.f32 %v2145
    %vm2152 = vmor %vm2150, %vm2151
    %v2153 = vsel %vm2152, %v2145, %v2149
    %v2154 = vand.u32 2147483647, %v2144
    %vm2155 = vcmp.eq.f32.partialorder %v2154, 8.507059e+37
    %v2156 = vand.u32 %v2144, 2147483648
    %v2157 = vor.u32 1.1754944e-38, %v2156
    %v2158 = vsel %vm2155, %v2157, %v2153
    %v2159 = vmul.f32 1.0, %v2158
    %v2160 = vxor.u32 %v2100, 2147483648
    %v2161 = vmul.f32 %v2160, 1.442695
    %v2162 = vpow.pop %v2161
    %v2163 = vadd.f32 %v2162, 1.0
    %v2164 = vrcp.pop %v2163
    %v2165 = vmul.f32 %v2163, %v2164
    %v2166 = vsub.f32 1.0, %v2165
    %v2167 = vmul.f32 %v2164, %v2166
    %v2168 = vadd.f32 %v2164, %v2167
    %vm2169 = vweird.f32 %v2163
    %vm2170 = vweird.f32 %v2164
    %vm2171 = vmor %vm2169, %vm2170
    %v2172 = vsel %vm2171, %v2164, %v2168
    %v2173 = vand.u32 2147483647, %v2163
    %vm2174 = vcmp.eq.f32.partialorder %v2173, 8.507059e+37
    %v2175 = vand.u32 %v2163, 2147483648
    %v2176 = vor.u32 1.1754944e-38, %v2175
    %v2177 = vsel %vm2174, %v2176, %v2172
    %v2178 = vmul.f32 1.0, %v2177
    %v2179 = vtanh.pop %v2120
    %v2180 = vmul.f32 %v1719, %v2159
    %v2181 = vmul.f32 %v2140, %v2179
    %v2182 = vadd.f32 %v2180, %v2181
    %v2183 = vtanh.pop %v2182
    %v2184 = vmul.f32 %v2178, %v2183
    %2185 = vmatpush.msra.mxu0 %v362
    %2186 = vmatpush.msra.mxu0 %v361
    %2187 = vmatpush.msra.mxu0 %v360
    %2188 = vmatpush.msra.mxu0 %v359
    %2189 = vmatpush.msra.mxu0 %v358
    %2190 = vmatpush.msra.mxu0 %v357
    %2191 = vmatpush.msra.mxu0 %v356
    %2192 = vmatpush.msra.mxu0 %v355
    %2193 = vmatpush.msra.mxu0 %v354
    %2194 = vmatpush.msra.mxu0 %v353
    %2195 = vmatpush.msra.mxu0 %v352
    %2196 = vmatpush.msra.mxu0 %v351
    %2197 = vmatpush.msra.mxu0 %v350
    %2198 = vmatpush.msra.mxu0 %v349
    %2199 = vmatpush.msra.mxu0 %v348
    %2200 = vmatpush.msra.mxu0 %v347
    %2201 = vmatmul.f32.gmra.mxu0 %v2184
    %v2202 = vpop.f32.mrf.mxu0
    %v2203 = vadd.f32 0.0, %v2202
    %2204 = vdwg.mxu0
    %2206 = vrot.lane.b32.xlu0 %v2203, 112
    %v2207 = vpop.permute.xlu0 %2206
    %2209 = vrot.lane.b32.xlu0 %v2203, 96
    %v2210 = vpop.permute.xlu0 %2209
    %2212 = vrot.lane.b32.xlu0 %v2203, 80
    %v2213 = vpop.permute.xlu0 %2212
    %v2215 = vrot.slane %v2210, 4
    %v2216 = vsel %vm983, %v2215, %v2203
    %v2218 = vunpack.c.l.s4 1983009808
    %v2219 = vunpack.c.0.s8 %v2218
    %v2220 = vperm.slane %v2216, %v2219
    %v2221 = vrot.slane %v2213, 4
    %v2222 = vsel %vm983, %v2221, %v2207
    %v2224 = vunpack.c.l.s4 1983009808
    %v2225 = vunpack.c.0.s8 %v2224
    %v2226 = vperm.slane %v2222, %v2225
    %v2227 = vrot.slane %v2226, 4
    %v2228 = vsel %vm983, %v2227, %v2220
    %v2230 = vunpack.c.l.s4 1934713408
    %v2231 = vunpack.c.0.s8 %v2230
    %v2232 = vperm.slane %v2228, %v2231
    %v2233 = vrot.slane %v2232, 4
    %v2234 = vsel %vm983, 0.0, %v2233
    %2235 = vmatpush.msra.mxu0 %v394
    %2236 = vmatpush.msra.mxu0 %v393
    %2237 = vmatpush.msra.mxu0 %v392
    %2238 = vmatpush.msra.mxu0 %v391
    %2239 = vmatpush.msra.mxu0 %v390
    %2240 = vmatpush.msra.mxu0 %v389
    %2241 = vmatpush.msra.mxu0 %v388
    %2242 = vmatpush.msra.mxu0 %v387
    %2243 = vmatpush.msra.mxu0 %v386
    %2244 = vmatpush.msra.mxu0 %v385
    %2245 = vmatpush.msra.mxu0 %v384
    %2246 = vmatpush.msra.mxu0 %v383
    %2247 = vmatpush.msra.mxu0 %v382
    %2248 = vmatpush.msra.mxu0 %v381
    %2249 = vmatpush.msra.mxu0 %v380
    %2250 = vmatpush.msra.mxu0 %v379
    %2251 = vmatmul.f32.gmra.mxu0 %v2184
    %v2252 = vpop.f32.mrf.mxu0
    %v2253 = vadd.f32 0.0, %v2252
    %2254 = vdwg.mxu0
    %2256 = vrot.lane.b32.xlu0 %v2253, 112
    %v2257 = vpop.permute.xlu0 %2256
    %2259 = vrot.lane.b32.xlu0 %v2253, 96
    %v2260 = vpop.permute.xlu0 %2259
    %2262 = vrot.lane.b32.xlu0 %v2253, 80
    %v2263 = vpop.permute.xlu0 %2262
    %v2265 = vrot.slane %v2260, 4
    %v2266 = vsel %vm983, %v2265, %v2253
    %v2268 = vunpack.c.l.s4 1983009808
    %v2269 = vunpack.c.0.s8 %v2268
    %v2270 = vperm.slane %v2266, %v2269
    %v2271 = vrot.slane %v2263, 4
    %v2272 = vsel %vm983, %v2271, %v2257
    %v2274 = vunpack.c.l.s4 1983009808
    %v2275 = vunpack.c.0.s8 %v2274
    %v2276 = vperm.slane %v2272, %v2275
    %v2277 = vrot.slane %v2276, 4
    %v2278 = vsel %vm983, %v2277, %v2270
    %v2280 = vunpack.c.l.s4 1934713408
    %v2281 = vunpack.c.0.s8 %v2280
    %v2282 = vperm.slane %v2278, %v2281
    %v2283 = vrot.slane %v2282, 4
    %v2284 = vsel %vm983, 0.0, %v2283
    %2285 = vmatpush.msra.mxu0 %v426
    %2286 = vmatpush.msra.mxu0 %v425
    %2287 = vmatpush.msra.mxu0 %v424
    %2288 = vmatpush.msra.mxu0 %v423
    %2289 = vmatpush.msra.mxu0 %v422
    %2290 = vmatpush.msra.mxu0 %v421
    %2291 = vmatpush.msra.mxu0 %v420
    %2292 = vmatpush.msra.mxu0 %v419
    %2293 = vmatpush.msra.mxu0 %v418
    %2294 = vmatpush.msra.mxu0 %v417
    %2295 = vmatpush.msra.mxu0 %v416
    %2296 = vmatpush.msra.mxu0 %v415
    %2297 = vmatpush.msra.mxu0 %v414
    %2298 = vmatpush.msra.mxu0 %v413
    %2299 = vmatpush.msra.mxu0 %v412
    %2300 = vmatpush.msra.mxu0 %v411
    %2301 = vmatmul.f32.gmra.mxu0 %v2184
    %v2302 = vpop.f32.mrf.mxu0
    %v2303 = vadd.f32 0.0, %v2302
    %2304 = vdwg.mxu0
    %2306 = vrot.lane.b32.xlu0 %v2303, 96
    %v2307 = vpop.permute.xlu0 %2306
    %2309 = vrot.lane.b32.xlu0 %v2303, 64
    %v2310 = vpop.permute.xlu0 %2309
    %2312 = vrot.lane.b32.xlu0 %v2303, 32
    %v2313 = vpop.permute.xlu0 %2312
    %v2315 = vrot.slane %v2310, 4
    %v2316 = vsel %vm983, %v2315, %v2303
    %v2318 = vunpack.c.l.s4 1983009808
    %v2319 = vunpack.c.0.s8 %v2318
    %v2320 = vperm.slane %v2316, %v2319
    %v2321 = vrot.slane %v2313, 4
    %v2322 = vsel %vm983, %v2321, %v2307
    %v2324 = vunpack.c.l.s4 1983009808
    %v2325 = vunpack.c.0.s8 %v2324
    %v2326 = vperm.slane %v2322, %v2325
    %v2327 = vrot.slane %v2326, 4
    %v2328 = vsel %vm983, %v2327, %v2320
    %v2330 = vunpack.c.l.s4 1934713408
    %v2331 = vunpack.c.0.s8 %v2330
    %v2332 = vperm.slane %v2328, %v2331
    %v2333 = vrot.slane %v2332, 4
    %v2334 = vsel %vm983, 0.0, %v2333
    %v2336 = vsel %vm1103, %v2232, 0
    %v2339 = vsel %vm1103, %v2282, 0
    %2341 = vmatpush.xpose.msra.mxu0 0.0
    %2342 = vmatpush.xpose.msra.mxu0 0.0
    %2343 = vmatpush.xpose.msra.mxu0 0.0
    %2344 = vmatpush.xpose.msra.mxu0 0.0
    %2345 = vmatpush.xpose.msra.mxu0 0.0
    %2346 = vmatpush.xpose.msra.mxu0 0.0
    %2347 = vmatpush.xpose.msra.mxu0 0.0
    %2348 = vmatpush.xpose.msra.mxu0 0.0
    %2349 = vmatpush.xpose.msra.mxu0 0.0
    %2350 = vmatpush.xpose.msra.mxu0 0.0
    %2351 = vmatpush.xpose.msra.mxu0 0.0
    %2352 = vmatpush.xpose.msra.mxu0 0.0
    %2353 = vmatpush.xpose.msra.mxu0 0.0
    %2354 = vmatpush.xpose.msra.mxu0 0.0
    %2355 = vmatpush.xpose.msra.mxu0 0.0
    %2356 = vmatpush.xpose.msra.mxu0 %v2339
    %2357 = vmatmul.f32.gmra.mxu0 %v2336
    %v2358 = vpop.f32.mrf.mxu0
    %v2359 = vadd.f32 0.0, %v2358
    %2360 = vdwg.mxu0
    %v2362 = vsel %vm1103, %v2234, 0
    %v2365 = vsel %vm1103, %v2284, 0
    %2367 = vmatpush.xpose.msra.mxu0 0.0
    %2368 = vmatpush.xpose.msra.mxu0 0.0
    %2369 = vmatpush.xpose.msra.mxu0 0.0
    %2370 = vmatpush.xpose.msra.mxu0 0.0
    %2371 = vmatpush.xpose.msra.mxu0 0.0
    %2372 = vmatpush.xpose.msra.mxu0 0.0
    %2373 = vmatpush.xpose.msra.mxu0 0.0
    %2374 = vmatpush.xpose.msra.mxu0 0.0
    %2375 = vmatpush.xpose.msra.mxu0 0.0
    %2376 = vmatpush.xpose.msra.mxu0 0.0
    %2377 = vmatpush.xpose.msra.mxu0 0.0
    %2378 = vmatpush.xpose.msra.mxu0 0.0
    %2379 = vmatpush.xpose.msra.mxu0 0.0
    %2380 = vmatpush.xpose.msra.mxu0 0.0
    %2381 = vmatpush.xpose.msra.mxu0 0.0
    %2382 = vmatpush.xpose.msra.mxu0 %v2365
    %2383 = vmatmul.f32.gmra.mxu0 %v2362
    %v2384 = vpop.f32.mrf.mxu0
    %v2385 = vadd.f32 0.0, %v2384
    %2386 = vdwg.mxu0
    %v2387 = vmul.f32 %v2359, 0.25
    %v2388 = vmul.f32 %v2385, 0.25
    %v2389 = vsel %vm556, %v2387, -inf
    %2390 = vmax.xlane.f32.xlu0 %v2389
    %v2391 = vpop.xlane.xlu0 %2390
    %v2392 = vsel %vm556, %v2388, -inf
    %2393 = vmax.xlane.f32.xlu0 %v2392
    %v2394 = vpop.xlane.xlu0 %2393
    %v2395 = vsub.f32 %v2387, %v2391
    %v2396 = vsub.f32 %v2388, %v2394
    %v2397 = vmul.f32 %v2395, 1.442695
    %v2398 = vpow.pop %v2397
    %v2399 = vmul.f32 %v2396, 1.442695
    %v2400 = vpow.pop %v2399
    %v2401 = vsel %vm556, %v2398, 0.0
    %2402 = vadd.xlane.f32.xlu0 %v2401
    %v2403 = vpop.xlane.xlu0 %2402
    %v2404 = vsel %vm556, %v2400, 0.0
    %2405 = vadd.xlane.f32.xlu0 %v2404
    %v2406 = vpop.xlane.xlu0 %2405
    %v2407 = vrcp.pop %v2403
    %v2408 = vmul.f32 %v2403, %v2407
    %v2409 = vsub.f32 1.0, %v2408
    %v2410 = vmul.f32 %v2407, %v2409
    %v2411 = vadd.f32 %v2407, %v2410
    %vm2412 = vweird.f32 %v2403
    %vm2413 = vweird.f32 %v2407
    %vm2414 = vmor %vm2412, %vm2413
    %v2415 = vsel %vm2414, %v2407, %v2411
    %v2416 = vand.u32 2147483647, %v2403
    %vm2417 = vcmp.eq.f32.partialorder %v2416, 8.507059e+37
    %v2418 = vand.u32 %v2403, 2147483648
    %v2419 = vor.u32 1.1754944e-38, %v2418
    %v2420 = vsel %vm2417, %v2419, %v2415
    %v2421 = vmul.f32 %v2398, %v2420
    %v2422 = vrcp.pop %v2406
    %v2423 = vmul.f32 %v2406, %v2422
    %v2424 = vsub.f32 1.0, %v2423
    %v2425 = vmul.f32 %v2422, %v2424
    %v2426 = vadd.f32 %v2422, %v2425
    %vm2427 = vweird.f32 %v2406
    %vm2428 = vweird.f32 %v2422
    %vm2429 = vmor %vm2427, %vm2428
    %v2430 = vsel %vm2429, %v2422, %v2426
    %v2431 = vand.u32 2147483647, %v2406
    %vm2432 = vcmp.eq.f32.partialorder %v2431, 8.507059e+37
    %v2433 = vand.u32 %v2406, 2147483648
    %v2434 = vor.u32 1.1754944e-38, %v2433
    %v2435 = vsel %vm2432, %v2434, %v2430
    %v2436 = vmul.f32 %v2400, %v2435
    %v2438 = vsel %vm660, %v2421, 0
    %v2441 = vsel %vm663, %v2332, 0
    %2443 = vmatpush.msra.mxu0 0.0
    %2444 = vmatpush.msra.mxu0 0.0
    %2445 = vmatpush.msra.mxu0 0.0
    %2446 = vmatpush.msra.mxu0 0.0
    %2447 = vmatpush.msra.mxu0 0.0
    %2448 = vmatpush.msra.mxu0 0.0
    %2449 = vmatpush.msra.mxu0 0.0
    %2450 = vmatpush.msra.mxu0 0.0
    %2451 = vmatpush.msra.mxu0 0.0
    %2452 = vmatpush.msra.mxu0 0.0
    %2453 = vmatpush.msra.mxu0 0.0
    %2454 = vmatpush.msra.mxu0 0.0
    %2455 = vmatpush.msra.mxu0 0.0
    %2456 = vmatpush.msra.mxu0 0.0
    %2457 = vmatpush.msra.mxu0 0.0
    %2458 = vmatpush.msra.mxu0 %v2441
    %2459 = vmatmul.f32.gmra.mxu0 %v2438
    %v2460 = vpop.f32.mrf.mxu0
    %v2461 = vadd.f32 0.0, %v2460
    %2462 = vdwg.mxu0
    %v2464 = vsel %vm660, %v2436, 0
    %v2467 = vsel %vm663, %v2334, 0
    %2469 = vmatpush.msra.mxu0 0.0
    %2470 = vmatpush.msra.mxu0 0.0
    %2471 = vmatpush.msra.mxu0 0.0
    %2472 = vmatpush.msra.mxu0 0.0
    %2473 = vmatpush.msra.mxu0 0.0
    %2474 = vmatpush.msra.mxu0 0.0
    %2475 = vmatpush.msra.mxu0 0.0
    %2476 = vmatpush.msra.mxu0 0.0
    %2477 = vmatpush.msra.mxu0 0.0
    %2478 = vmatpush.msra.mxu0 0.0
    %2479 = vmatpush.msra.mxu0 0.0
    %2480 = vmatpush.msra.mxu0 0.0
    %2481 = vmatpush.msra.mxu0 0.0
    %2482 = vmatpush.msra.mxu0 0.0
    %2483 = vmatpush.msra.mxu0 0.0
    %2484 = vmatpush.msra.mxu0 %v2467
    %2485 = vmatmul.f32.gmra.mxu0 %v2464
    %v2486 = vpop.f32.mrf.mxu0
    %v2487 = vadd.f32 0.0, %v2486
    %2488 = vdwg.mxu0
    %v2490 = vunpack.c.l.s4 1983009808
    %v2491 = vunpack.c.0.s8 %v2490
    %v2492 = vperm.slane %v2461, %v2491
    %v2494 = vunpack.c.l.s4 1983009808
    %v2495 = vunpack.c.0.s8 %v2494
    %v2496 = vperm.slane %v2487, %v2495
    %v2497 = vrot.slane %v2496, 4
    %v2498 = vsel %vm983, %v2497, %v2492
    %v2499 = vrot.slane %v2492, 4
    %v2500 = vsel %vm983, %v2496, %v2499
    %v2502 = vunpack.c.l.s4 1934713408
    %v2503 = vunpack.c.0.s8 %v2502
    %v2504 = vperm.slane %v2498, %v2503
    %v2506 = vunpack.c.l.s4 1934713408
    %v2507 = vunpack.c.0.s8 %v2506
    %v2508 = vperm.slane %v2500, %v2507
    %v2509 = vrot.slane %v2504, 4
    %v2510 = vsel %vm983, 0.0, %v2509
    %v2511 = vrot.slane %v2508, 4
    %v2512 = vsel %vm983, 0.0, %v2511
    %2514 = vrot.lane.b32.xlu0 %v2510, 32
    %v2515 = vpop.permute.xlu0 %2514
    %2518 = vrot.lane.b32.xlu0 %v2508, 64
    %v2519 = vpop.permute.xlu0 %2518
    %2522 = vrot.lane.b32.xlu0 %v2512, 96
    %v2523 = vpop.permute.xlu0 %2522
    %v2525 = vsel %vm1294, %v2504, %v2515
    %v2526 = vsel %vm805, %v2525, %v2519
    %v2527 = vsel %vm1297, %v2526, %v2523
    %2528 = vmatpush.msra.mxu0 %v378
    %2529 = vmatpush.msra.mxu0 %v377
    %2530 = vmatpush.msra.mxu0 %v376
    %2531 = vmatpush.msra.mxu0 %v375
    %2532 = vmatpush.msra.mxu0 %v374
    %2533 = vmatpush.msra.mxu0 %v373
    %2534 = vmatpush.msra.mxu0 %v372
    %2535 = vmatpush.msra.mxu0 %v371
    %2536 = vmatpush.msra.mxu0 %v370
    %2537 = vmatpush.msra.mxu0 %v369
    %2538 = vmatpush.msra.mxu0 %v368
    %2539 = vmatpush.msra.mxu0 %v367
    %2540 = vmatpush.msra.mxu0 %v366
    %2541 = vmatpush.msra.mxu0 %v365
    %2542 = vmatpush.msra.mxu0 %v364
    %2543 = vmatpush.msra.mxu0 %v363
    %2544 = vmatmul.f32.gmra.mxu0 %v2184
    %v2545 = vpop.f32.mrf.mxu0
    %v2546 = vadd.f32 0.0, %v2545
    %2547 = vdwg.mxu0
    %2549 = vrot.lane.b32.xlu0 %v2546, 112
    %v2550 = vpop.permute.xlu0 %2549
    %2552 = vrot.lane.b32.xlu0 %v2546, 96
    %v2553 = vpop.permute.xlu0 %2552
    %2555 = vrot.lane.b32.xlu0 %v2546, 80
    %v2556 = vpop.permute.xlu0 %2555
    %v2558 = vrot.slane %v2553, 4
    %v2559 = vsel %vm983, %v2558, %v2546
    %v2561 = vunpack.c.l.s4 1983009808
    %v2562 = vunpack.c.0.s8 %v2561
    %v2563 = vperm.slane %v2559, %v2562
    %v2564 = vrot.slane %v2556, 4
    %v2565 = vsel %vm983, %v2564, %v2550
    %v2567 = vunpack.c.l.s4 1983009808
    %v2568 = vunpack.c.0.s8 %v2567
    %v2569 = vperm.slane %v2565, %v2568
    %v2570 = vrot.slane %v2569, 4
    %v2571 = vsel %vm983, %v2570, %v2563
    %v2573 = vunpack.c.l.s4 1934713408
    %v2574 = vunpack.c.0.s8 %v2573
    %v2575 = vperm.slane %v2571, %v2574
    %v2576 = vrot.slane %v2575, 4
    %v2577 = vsel %vm983, 0.0, %v2576
    %2578 = vmatpush.msra.mxu0 %v410
    %2579 = vmatpush.msra.mxu0 %v409
    %2580 = vmatpush.msra.mxu0 %v408
    %2581 = vmatpush.msra.mxu0 %v407
    %2582 = vmatpush.msra.mxu0 %v406
    %2583 = vmatpush.msra.mxu0 %v405
    %2584 = vmatpush.msra.mxu0 %v404
    %2585 = vmatpush.msra.mxu0 %v403
    %2586 = vmatpush.msra.mxu0 %v402
    %2587 = vmatpush.msra.mxu0 %v401
    %2588 = vmatpush.msra.mxu0 %v400
    %2589 = vmatpush.msra.mxu0 %v399
    %2590 = vmatpush.msra.mxu0 %v398
    %2591 = vmatpush.msra.mxu0 %v397
    %2592 = vmatpush.msra.mxu0 %v396
    %2593 = vmatpush.msra.mxu0 %v395
    %2594 = vmatmul.f32.gmra.mxu0 %v2184
    %v2595 = vpop.f32.mrf.mxu0
    %v2596 = vadd.f32 0.0, %v2595
    %2597 = vdwg.mxu0
    %2599 = vrot.lane.b32.xlu0 %v2596, 112
    %v2600 = vpop.permute.xlu0 %2599
    %2602 = vrot.lane.b32.xlu0 %v2596, 96
    %v2603 = vpop.permute.xlu0 %2602
    %2605 = vrot.lane.b32.xlu0 %v2596, 80
    %v2606 = vpop.permute.xlu0 %2605
    %v2608 = vrot.slane %v2603, 4
    %v2609 = vsel %vm983, %v2608, %v2596
    %v2611 = vunpack.c.l.s4 1983009808
    %v2612 = vunpack.c.0.s8 %v2611
    %v2613 = vperm.slane %v2609, %v2612
    %v2614 = vrot.slane %v2606, 4
    %v2615 = vsel %vm983, %v2614, %v2600
    %v2617 = vunpack.c.l.s4 1983009808
    %v2618 = vunpack.c.0.s8 %v2617
    %v2619 = vperm.slane %v2615, %v2618
    %v2620 = vrot.slane %v2619, 4
    %v2621 = vsel %vm983, %v2620, %v2613
    %v2623 = vunpack.c.l.s4 1934713408
    %v2624 = vunpack.c.0.s8 %v2623
    %v2625 = vperm.slane %v2621, %v2624
    %v2626 = vrot.slane %v2625, 4
    %v2627 = vsel %vm983, 0.0, %v2626
    %2628 = vmatpush.msra.mxu0 %v442
    %2629 = vmatpush.msra.mxu0 %v441
    %2630 = vmatpush.msra.mxu0 %v440
    %2631 = vmatpush.msra.mxu0 %v439
    %2632 = vmatpush.msra.mxu0 %v438
    %2633 = vmatpush.msra.mxu0 %v437
    %2634 = vmatpush.msra.mxu0 %v436
    %2635 = vmatpush.msra.mxu0 %v435
    %2636 = vmatpush.msra.mxu0 %v434
    %2637 = vmatpush.msra.mxu0 %v433
    %2638 = vmatpush.msra.mxu0 %v432
    %2639 = vmatpush.msra.mxu0 %v431
    %2640 = vmatpush.msra.mxu0 %v430
    %2641 = vmatpush.msra.mxu0 %v429
    %2642 = vmatpush.msra.mxu0 %v428
    %2643 = vmatpush.msra.mxu0 %v427
    %2644 = vmatmul.f32.gmra.mxu0 %v2184
    %v2645 = vpop.f32.mrf.mxu0
    %v2646 = vadd.f32 0.0, %v2645
    %2647 = vdwg.mxu0
    %2649 = vrot.lane.b32.xlu0 %v2646, 96
    %v2650 = vpop.permute.xlu0 %2649
    %2652 = vrot.lane.b32.xlu0 %v2646, 64
    %v2653 = vpop.permute.xlu0 %2652
    %2655 = vrot.lane.b32.xlu0 %v2646, 32
    %v2656 = vpop.permute.xlu0 %2655
    %v2658 = vrot.slane %v2653, 4
    %v2659 = vsel %vm983, %v2658, %v2646
    %v2661 = vunpack.c.l.s4 1983009808
    %v2662 = vunpack.c.0.s8 %v2661
    %v2663 = vperm.slane %v2659, %v2662
    %v2664 = vrot.slane %v2656, 4
    %v2665 = vsel %vm983, %v2664, %v2650
    %v2667 = vunpack.c.l.s4 1983009808
    %v2668 = vunpack.c.0.s8 %v2667
    %v2669 = vperm.slane %v2665, %v2668
    %v2670 = vrot.slane %v2669, 4
    %v2671 = vsel %vm983, %v2670, %v2663
    %v2673 = vunpack.c.l.s4 1934713408
    %v2674 = vunpack.c.0.s8 %v2673
    %v2675 = vperm.slane %v2671, %v2674
    %v2676 = vrot.slane %v2675, 4
    %v2677 = vsel %vm983, 0.0, %v2676
    %v2679 = vsel %vm1103, %v2575, 0
    %v2682 = vsel %vm1103, %v2625, 0
    %2684 = vmatpush.xpose.msra.mxu0 0.0
    %2685 = vmatpush.xpose.msra.mxu0 0.0
    %2686 = vmatpush.xpose.msra.mxu0 0.0
    %2687 = vmatpush.xpose.msra.mxu0 0.0
    %2688 = vmatpush.xpose.msra.mxu0 0.0
    %2689 = vmatpush.xpose.msra.mxu0 0.0
    %2690 = vmatpush.xpose.msra.mxu0 0.0
    %2691 = vmatpush.xpose.msra.mxu0 0.0
    %2692 = vmatpush.xpose.msra.mxu0 0.0
    %2693 = vmatpush.xpose.msra.mxu0 0.0
    %2694 = vmatpush.xpose.msra.mxu0 0.0
    %2695 = vmatpush.xpose.msra.mxu0 0.0
    %2696 = vmatpush.xpose.msra.mxu0 0.0
    %2697 = vmatpush.xpose.msra.mxu0 0.0
    %2698 = vmatpush.xpose.msra.mxu0 0.0
    %2699 = vmatpush.xpose.msra.mxu0 %v2682
    %2700 = vmatmul.f32.gmra.mxu0 %v2679
    %v2701 = vpop.f32.mrf.mxu0
    %v2702 = vadd.f32 0.0, %v2701
    %2703 = vdwg.mxu0
    %v2705 = vsel %vm1103, %v2577, 0
    %v2708 = vsel %vm1103, %v2627, 0
    %2710 = vmatpush.xpose.msra.mxu0 0.0
    %2711 = vmatpush.xpose.msra.mxu0 0.0
    %2712 = vmatpush.xpose.msra.mxu0 0.0
    %2713 = vmatpush.xpose.msra.mxu0 0.0
    %2714 = vmatpush.xpose.msra.mxu0 0.0
    %2715 = vmatpush.xpose.msra.mxu0 0.0
    %2716 = vmatpush.xpose.msra.mxu0 0.0
    %2717 = vmatpush.xpose.msra.mxu0 0.0
    %2718 = vmatpush.xpose.msra.mxu0 0.0
    %2719 = vmatpush.xpose.msra.mxu0 0.0
    %2720 = vmatpush.xpose.msra.mxu0 0.0
    %2721 = vmatpush.xpose.msra.mxu0 0.0
    %2722 = vmatpush.xpose.msra.mxu0 0.0
    %2723 = vmatpush.xpose.msra.mxu0 0.0
    %2724 = vmatpush.xpose.msra.mxu0 0.0
    %2725 = vmatpush.xpose.msra.mxu0 %v2708
    %2726 = vmatmul.f32.gmra.mxu0 %v2705
    %v2727 = vpop.f32.mrf.mxu0
    %v2728 = vadd.f32 0.0, %v2727
    %2729 = vdwg.mxu0
    %v2730 = vmul.f32 %v2702, 0.25
    %v2731 = vmul.f32 %v2728, 0.25
    %v2732 = vsel %vm556, %v2730, -inf
    %2733 = vmax.xlane.f32.xlu0 %v2732
    %v2734 = vpop.xlane.xlu0 %2733
    %v2735 = vsel %vm556, %v2731, -inf
    %2736 = vmax.xlane.f32.xlu0 %v2735
    %v2737 = vpop.xlane.xlu0 %2736
    %v2738 = vsub.f32 %v2730, %v2734
    %v2739 = vsub.f32 %v2731, %v2737
    %v2740 = vmul.f32 %v2738, 1.442695
    %v2741 = vpow.pop %v2740
    %v2742 = vmul.f32 %v2739, 1.442695
    %v2743 = vpow.pop %v2742
    %v2744 = vsel %vm556, %v2741, 0.0
    %2745 = vadd.xlane.f32.xlu0 %v2744
    %v2746 = vpop.xlane.xlu0 %2745
    %v2747 = vsel %vm556, %v2743, 0.0
    %2748 = vadd.xlane.f32.xlu0 %v2747
    %v2749 = vpop.xlane.xlu0 %2748
    %v2750 = vrcp.pop %v2746
    %v2751 = vmul.f32 %v2746, %v2750
    %v2752 = vsub.f32 1.0, %v2751
    %v2753 = vmul.f32 %v2750, %v2752
    %v2754 = vadd.f32 %v2750, %v2753
    %vm2755 = vweird.f32 %v2746
    %vm2756 = vweird.f32 %v2750
    %vm2757 = vmor %vm2755, %vm2756
    %v2758 = vsel %vm2757, %v2750, %v2754
    %v2759 = vand.u32 2147483647, %v2746
    %vm2760 = vcmp.eq.f32.partialorder %v2759, 8.507059e+37
    %v2761 = vand.u32 %v2746, 2147483648
    %v2762 = vor.u32 1.1754944e-38, %v2761
    %v2763 = vsel %vm2760, %v2762, %v2758
    %v2764 = vmul.f32 %v2741, %v2763
    %v2765 = vrcp.pop %v2749
    %v2766 = vmul.f32 %v2749, %v2765
    %v2767 = vsub.f32 1.0, %v2766
    %v2768 = vmul.f32 %v2765, %v2767
    %v2769 = vadd.f32 %v2765, %v2768
    %vm2770 = vweird.f32 %v2749
    %vm2771 = vweird.f32 %v2765
    %vm2772 = vmor %vm2770, %vm2771
    %v2773 = vsel %vm2772, %v2765, %v2769
    %v2774 = vand.u32 2147483647, %v2749
    %vm2775 = vcmp.eq.f32.partialorder %v2774, 8.507059e+37
    %v2776 = vand.u32 %v2749, 2147483648
    %v2777 = vor.u32 1.1754944e-38, %v2776
    %v2778 = vsel %vm2775, %v2777, %v2773
    %v2779 = vmul.f32 %v2743, %v2778
    %v2781 = vsel %vm660, %v2764, 0
    %v2784 = vsel %vm663, %v2675, 0
    %2786 = vmatpush.msra.mxu0 0.0
    %2787 = vmatpush.msra.mxu0 0.0
    %2788 = vmatpush.msra.mxu0 0.0
    %2789 = vmatpush.msra.mxu0 0.0
    %2790 = vmatpush.msra.mxu0 0.0
    %2791 = vmatpush.msra.mxu0 0.0
    %2792 = vmatpush.msra.mxu0 0.0
    %2793 = vmatpush.msra.mxu0 0.0
    %2794 = vmatpush.msra.mxu0 0.0
    %2795 = vmatpush.msra.mxu0 0.0
    %2796 = vmatpush.msra.mxu0 0.0
    %2797 = vmatpush.msra.mxu0 0.0
    %2798 = vmatpush.msra.mxu0 0.0
    %2799 = vmatpush.msra.mxu0 0.0
    %2800 = vmatpush.msra.mxu0 0.0
    %2801 = vmatpush.msra.mxu0 %v2784
    %2802 = vmatmul.f32.gmra.mxu0 %v2781
    %v2803 = vpop.f32.mrf.mxu0
    %v2804 = vadd.f32 0.0, %v2803
    %2805 = vdwg.mxu0
    %v2807 = vsel %vm660, %v2779, 0
    %v2810 = vsel %vm663, %v2677, 0
    %2812 = vmatpush.msra.mxu0 0.0
    %2813 = vmatpush.msra.mxu0 0.0
    %2814 = vmatpush.msra.mxu0 0.0
    %2815 = vmatpush.msra.mxu0 0.0
    %2816 = vmatpush.msra.mxu0 0.0
    %2817 = vmatpush.msra.mxu0 0.0
    %2818 = vmatpush.msra.mxu0 0.0
    %2819 = vmatpush.msra.mxu0 0.0
    %2820 = vmatpush.msra.mxu0 0.0
    %2821 = vmatpush.msra.mxu0 0.0
    %2822 = vmatpush.msra.mxu0 0.0
    %2823 = vmatpush.msra.mxu0 0.0
    %2824 = vmatpush.msra.mxu0 0.0
    %2825 = vmatpush.msra.mxu0 0.0
    %2826 = vmatpush.msra.mxu0 0.0
    %2827 = vmatpush.msra.mxu0 %v2810
    %2828 = vmatmul.f32.gmra.mxu0 %v2807
    %v2829 = vpop.f32.mrf.mxu0
    %v2830 = vadd.f32 0.0, %v2829
    %2831 = vdwg.mxu0
    %v2833 = vunpack.c.l.s4 1983009808
    %v2834 = vunpack.c.0.s8 %v2833
    %v2835 = vperm.slane %v2804, %v2834
    %v2837 = vunpack.c.l.s4 1983009808
    %v2838 = vunpack.c.0.s8 %v2837
    %v2839 = vperm.slane %v2830, %v2838
    %v2840 = vrot.slane %v2839, 4
    %v2841 = vsel %vm983, %v2840, %v2835
    %v2842 = vrot.slane %v2835, 4
    %v2843 = vsel %vm983, %v2839, %v2842
    %v2845 = vunpack.c.l.s4 1934713408
    %v2846 = vunpack.c.0.s8 %v2845
    %v2847 = vperm.slane %v2841, %v2846
    %v2849 = vunpack.c.l.s4 1934713408
    %v2850 = vunpack.c.0.s8 %v2849
    %v2851 = vperm.slane %v2843, %v2850
    %v2852 = vrot.slane %v2847, 4
    %v2853 = vsel %vm983, 0.0, %v2852
    %v2854 = vrot.slane %v2851, 4
    %v2855 = vsel %vm983, 0.0, %v2854
    %2857 = vrot.lane.b32.xlu0 %v2853, 32
    %v2858 = vpop.permute.xlu0 %2857
    %2861 = vrot.lane.b32.xlu0 %v2851, 64
    %v2862 = vpop.permute.xlu0 %2861
    %2865 = vrot.lane.b32.xlu0 %v2855, 96
    %v2866 = vpop.permute.xlu0 %2865
    %v2868 = vsel %vm1294, %v2847, %v2858
    %v2869 = vsel %vm805, %v2868, %v2862
    %v2870 = vsel %vm1297, %v2869, %v2866
    %2871 = vmatpush.msra.mxu0 %v474
    %2872 = vmatpush.msra.mxu0 %v473
    %2873 = vmatpush.msra.mxu0 %v472
    %2874 = vmatpush.msra.mxu0 %v471
    %2875 = vmatpush.msra.mxu0 %v470
    %2876 = vmatpush.msra.mxu0 %v469
    %2877 = vmatpush.msra.mxu0 %v468
    %2878 = vmatpush.msra.mxu0 %v467
    %2879 = vmatpush.msra.mxu0 %v466
    %2880 = vmatpush.msra.mxu0 %v465
    %2881 = vmatpush.msra.mxu0 %v464
    %2882 = vmatpush.msra.mxu0 %v463
    %2883 = vmatpush.msra.mxu0 %v462
    %2884 = vmatpush.msra.mxu0 %v461
    %2885 = vmatpush.msra.mxu0 %v460
    %2886 = vmatpush.msra.mxu0 %v459
    %2887 = vmatmul.f32.gmra.mxu0 %v2870
    %v2888 = vpop.f32.mrf.mxu0
    %v2889 = vadd.f32 0.0, %v2888
    %2890 = vdwg.mxu0
    %2891 = vmatpush.msra.mxu0 %v458
    %2892 = vmatpush.msra.mxu0 %v457
    %2893 = vmatpush.msra.mxu0 %v456
    %2894 = vmatpush.msra.mxu0 %v455
    %2895 = vmatpush.msra.mxu0 %v454
    %2896 = vmatpush.msra.mxu0 %v453
    %2897 = vmatpush.msra.mxu0 %v452
    %2898 = vmatpush.msra.mxu0 %v451
    %2899 = vmatpush.msra.mxu0 %v450
    %2900 = vmatpush.msra.mxu0 %v449
    %2901 = vmatpush.msra.mxu0 %v448
    %2902 = vmatpush.msra.mxu0 %v447
    %2903 = vmatpush.msra.mxu0 %v446
    %2904 = vmatpush.msra.mxu0 %v445
    %2905 = vmatpush.msra.mxu0 %v444
    %2906 = vmatpush.msra.mxu0 %v443
    %2907 = vmatmul.f32.gmra.mxu0 %v2527
    %v2908 = vpop.f32.mrf.mxu0
    %v2909 = vadd.f32 %v2889, %v2908
    %2910 = vdwg.mxu0
    %v2911 = vadd.f32 %v2909, %v2184
    %v2914 = vperm.slane %v1827, %v540
    %v2915 = vperm.slane %v1828, %v540
    %v2916 = vsel %vm658, %v2915, %v2914
    %v2917 = vsel %vm660, %v2916, 0
    %2919 = vmatpush.msra.mxu0 0.0
    %2920 = vmatpush.msra.mxu0 0.0
    %2921 = vmatpush.msra.mxu0 0.0
    %2922 = vmatpush.msra.mxu0 0.0
    %2923 = vmatpush.msra.mxu0 0.0
    %2924 = vmatpush.msra.mxu0 0.0
    %2925 = vmatpush.msra.mxu0 0.0
    %2926 = vmatpush.msra.mxu0 0.0
    %2927 = vmatpush.msra.mxu0 0.0
    %2928 = vmatpush.msra.mxu0 0.0
    %2929 = vmatpush.msra.mxu0 0.0
    %2930 = vmatpush.msra.mxu0 0.0
    %2931 = vmatpush.msra.mxu0 0.0
    %2932 = vmatpush.msra.mxu0 0.0
    %2933 = vmatpush.msra.mxu0 0.0
    %2934 = vmatpush.msra.mxu0 %v1691
    %2935 = vmatmul.f32.gmra.mxu0 %v2917
    %v2936 = vpop.f32.mrf.mxu0
    %v2937 = vadd.f32 0.0, %v2936
    %2938 = vdwg.mxu0
    %v2939 = vmul.f32 %v2937, %v2911
    %v2940 = vsub.f32 1.0, %v2937
    %v2941 = vmul.f32 %v2940, %v1716
    %v2942 = vadd.f32 %v2939, %v2941
    %v2943 = vmul.f32 %v2937, %v2182
    %v2944 = vmul.f32 %v2940, %v1719
    %v2945 = vadd.f32 %v2943, %v2944
    %v2946 = vrot.slane %v154, 4
    %v2948 = vmul.f32 %v2942, %v2946
    %v2949 = vrot.slane %v182, 4
    %2951 = vmatpush.msra.mxu0 %v247
    %2952 = vmatpush.msra.mxu0 %v246
    %2953 = vmatpush.msra.mxu0 %v245
    %2954 = vmatpush.msra.mxu0 %v244
    %2955 = vmatpush.msra.mxu0 %v243
    %2956 = vmatpush.msra.mxu0 %v242
    %2957 = vmatpush.msra.mxu0 %v241
    %2958 = vmatpush.msra.mxu0 %v240
    %2959 = vmatpush.msra.mxu0 %v239
    %2960 = vmatpush.msra.mxu0 %v238
    %2961 = vmatpush.msra.mxu0 %v237
    %2962 = vmatpush.msra.mxu0 %v236
    %2963 = vmatpush.msra.mxu0 %v235
    %2964 = vmatpush.msra.mxu0 %v234
    %2965 = vmatpush.msra.mxu0 %v233
    %2966 = vmatpush.msra.mxu0 %v232
    %2967 = vmatmul.f32.gmra.mxu0 %v2948
    %v2968 = vpop.f32.mrf.mxu0
    %v2969 = vadd.f32 %v2949, %v2968
    %2970 = vdwg.mxu0
    %2971 = vmatpush.msra.mxu0 %v230
    %2972 = vmatpush.msra.mxu0 %v229
    %2973 = vmatpush.msra.mxu0 %v228
    %2974 = vmatpush.msra.mxu0 %v227
    %2975 = vmatpush.msra.mxu0 %v226
    %2976 = vmatpush.msra.mxu0 %v225
    %2977 = vmatpush.msra.mxu0 %v224
    %2978 = vmatpush.msra.mxu0 %v223
    %2979 = vmatpush.msra.mxu0 %v222
    %2980 = vmatpush.msra.mxu0 %v221
    %2981 = vmatpush.msra.mxu0 %v220
    %2982 = vmatpush.msra.mxu0 %v219
    %2983 = vmatpush.msra.mxu0 %v218
    %2984 = vmatpush.msra.mxu0 %v217
    %2985 = vmatpush.msra.mxu0 %v216
    %2986 = vmatpush.msra.mxu0 %v215
    %2987 = vmatmul.f32.gmra.mxu0 %v2942
    %v2988 = vpop.f32.mrf.mxu0
    %v2989 = vadd.f32 %v499, %v2988
    %2990 = vdwg.mxu0
    %v2991 = vperm.slane %v2969, 0
    %v2992 = vlaneseq
    %v2993 = vshrl.u32 %v2992, 7
    %2995 = vset.pattern.permute.xlu0 %v2993
    %2996 = vperm.xlu0 %2995, %v2991
    %v2997 = vpop.permute.xlu0 %2996
    %v2998 = vperm.slane %v2969, 1
    %v2999 = vlaneseq
    %v3000 = vshrl.u32 %v2999, 7
    %3002 = vset.pattern.permute.xlu0 %v3000
    %3003 = vperm.xlu0 %3002, %v2998
    %v3004 = vpop.permute.xlu0 %3003
    %v3006 = vrot.slane %v2969, 1
    %v3007 = vperm.slane %v2969, 0
    %v3008 = vperm.slane %v3006, 0
    %vm3011 = vcmp.gt.f32.partialorder %v3007, %v2997
    %vm3012 = vcmp.gt.f32.partialorder %v3008, %v3004
    %vm3013 = vcmp.eq.f32.partialorder %v3007, %v2997
    %vm3014 = vcmp.eq.f32.partialorder %v3008, %v3004
    %vm3015 = vmand %vm3013, %vm549
    %vm3016 = vmand %vm3014, %vm549
    %vm3017 = vmor %vm3011, %vm3015
    %vm3018 = vmor %vm3012, %vm3016
    %v3019 = vsel %vm3017, 1, 0
    %v3020 = vsel %vm3018, 1, 0
    %v3021 = vsel %vm556, %v3019, 0
    %v3022 = vand.u32 %v3021, 65535
    %v3023 = vshrl.u32 %v3021, 16
    %v3024 = vcvt.s32.f32 %v3022
    %v3025 = vcvt.s32.f32 %v3023
    %3026 = vadd.xlane.f32.xlu0 %v3024
    %v3027 = vpop.xlane.xlu0 %3026
    %3028 = vadd.xlane.f32.xlu0 %v3025
    %v3029 = vpop.xlane.xlu0 %3028
    %v3030 = vcvt.f32.s32 %v3027
    %v3031 = vcvt.f32.s32 %v3029
    %v3032 = vshll.u32 %v3031, 16
    %v3033 = vadd.s32 %v3032, %v3030
    %v3034 = vsel %vm556, %v3020, 0
    %v3035 = vand.u32 %v3034, 65535
    %v3036 = vshrl.u32 %v3034, 16
    %v3037 = vcvt.s32.f32 %v3035
    %v3038 = vcvt.s32.f32 %v3036
    %3039 = vadd.xlane.f32.xlu0 %v3037
    %v3040 = vpop.xlane.xlu0 %3039
    %3041 = vadd.xlane.f32.xlu0 %v3038
    %v3042 = vpop.xlane.xlu0 %3041
    %v3043 = vcvt.f32.s32 %v3040
    %v3044 = vcvt.f32.s32 %v3042
    %v3045 = vshll.u32 %v3044, 16
    %v3046 = vadd.s32 %v3045, %v3043
    %vm3047 = vcmp.lt.s32.totalorder %v3033, 2
    %vm3048 = vcmp.lt.s32.totalorder %v3046, 2
    %v3049 = vsel %vm3047, 1, 0
    %v3050 = vsel %vm3048, 1, 0
    %v3051 = vcvt.s32.f32 %v3049
    %v3052 = vcvt.s32.f32 %v3050
    %v3053 = vsub.f32 %v2969, %v2989
    %v3054 = vxor.u32 %v3053, 2147483648
    %v3055 = vmul.f32 %v3054, 1.442695
    %v3056 = vpow.pop %v3055
    %v3057 = vadd.f32 %v3056, 1.0
    %v3058 = vrcp.pop %v3057
    %v3059 = vmul.f32 %v3057, %v3058
    %v3060 = vsub.f32 1.0, %v3059
    %v3061 = vmul.f32 %v3058, %v3060
    %v3062 = vadd.f32 %v3058, %v3061
    %vm3063 = vweird.f32 %v3057
    %vm3064 = vweird.f32 %v3058
    %vm3065 = vmor %vm3063, %vm3064
    %v3066 = vsel %vm3065, %v3058, %v3062
    %v3067 = vand.u32 2147483647, %v3057
    %vm3068 = vcmp.eq.f32.partialorder %v3067, 8.507059e+37
    %v3069 = vand.u32 %v3057, 2147483648
    %v3070 = vor.u32 1.1754944e-38, %v3069
    %v3071 = vsel %vm3068, %v3070, %v3066
    %v3072 = vmul.f32 1.0, %v3071
    %v3074 = vperm.slane %v3072, 0
    %v3075 = vlaneseq
    %v3076 = vshrl.u32 %v3075, 7
    %3078 = vset.pattern.permute.xlu0 %v3076
    %3079 = vperm.xlu0 %3078, %v3074
    %v3080 = vpop.permute.xlu0 %3079
    %v3081 = vperm.slane %v3072, 1
    %v3082 = vlaneseq
    %v3083 = vshrl.u32 %v3082, 7
    %3085 = vset.pattern.permute.xlu0 %v3083
    %3086 = vperm.xlu0 %3085, %v3081
    %v3087 = vpop.permute.xlu0 %3086
    %v3090 = vmul.f32 %v3051, %v3080
    %v3091 = vmul.f32 %v3052, %v3087
    %v3092 = vsub.f32 1.0, %v3072
    %v3094 = vperm.slane %v3092, 0
    %v3095 = vlaneseq
    %v3096 = vshrl.u32 %v3095, 7
    %3098 = vset.pattern.permute.xlu0 %v3096
    %3099 = vperm.xlu0 %3098, %v3094
    %v3100 = vpop.permute.xlu0 %3099
    %v3101 = vperm.slane %v3092, 1
    %v3102 = vlaneseq
    %v3103 = vshrl.u32 %v3102, 7
    %3105 = vset.pattern.permute.xlu0 %v3103
    %3106 = vperm.xlu0 %3105, %v3101
    %v3107 = vpop.permute.xlu0 %3106
    %v3110 = vmul.f32 %v3051, %v3100
    %v3111 = vmul.f32 %v3052, %v3107
    %3114 = vset.pattern.permute.xlu0 0
    %3115 = vperm.xlu0 %3114, %v3090
    %v3116 = vpop.permute.xlu0 %3115
    %3117 = vset.pattern.permute.xlu0 0
    %3118 = vperm.xlu0 %3117, %v3091
    %v3119 = vpop.permute.xlu0 %3118
    %v3120 = vperm.slane %v3116, %v540
    %v3121 = vperm.slane %v3119, %v540
    %v3122 = vsel %vm658, %v3121, %v3120
    %v3123 = vsel %vm660, %v3122, 0
    %3125 = vmatpush.msra.mxu0 0.0
    %3126 = vmatpush.msra.mxu0 0.0
    %3127 = vmatpush.msra.mxu0 0.0
    %3128 = vmatpush.msra.mxu0 0.0
    %3129 = vmatpush.msra.mxu0 0.0
    %3130 = vmatpush.msra.mxu0 0.0
    %3131 = vmatpush.msra.mxu0 0.0
    %3132 = vmatpush.msra.mxu0 0.0
    %3133 = vmatpush.msra.mxu0 0.0
    %3134 = vmatpush.msra.mxu0 0.0
    %3135 = vmatpush.msra.mxu0 0.0
    %3136 = vmatpush.msra.mxu0 0.0
    %3137 = vmatpush.msra.mxu0 0.0
    %3138 = vmatpush.msra.mxu0 0.0
    %3139 = vmatpush.msra.mxu0 0.0
    %3140 = vmatpush.msra.mxu0 %v665
    %3141 = vmatmul.f32.gmra.mxu0 %v3123
    %v3142 = vpop.f32.mrf.mxu0
    %v3143 = vadd.f32 0.0, %v3142
    %3144 = vdwg.mxu0
    %v3145 = vrot.slane %v210, 4
    %v3147 = vmul.f32 %v3143, %v3145
    %3150 = vset.pattern.permute.xlu0 0
    %3151 = vperm.xlu0 %3150, %v3110
    %v3152 = vpop.permute.xlu0 %3151
    %3153 = vset.pattern.permute.xlu0 0
    %3154 = vperm.xlu0 %3153, %v3111
    %v3155 = vpop.permute.xlu0 %3154
    %v3156 = vperm.slane %v3152, %v540
    %v3157 = vperm.slane %v3155, %v540
    %v3158 = vsel %vm658, %v3157, %v3156
    %v3159 = vsel %vm660, %v3158, 0
    %3161 = vmatpush.msra.mxu0 0.0
    %3162 = vmatpush.msra.mxu0 0.0
    %3163 = vmatpush.msra.mxu0 0.0
    %3164 = vmatpush.msra.mxu0 0.0
    %3165 = vmatpush.msra.mxu0 0.0
    %3166 = vmatpush.msra.mxu0 0.0
    %3167 = vmatpush.msra.mxu0 0.0
    %3168 = vmatpush.msra.mxu0 0.0
    %3169 = vmatpush.msra.mxu0 0.0
    %3170 = vmatpush.msra.mxu0 0.0
    %3171 = vmatpush.msra.mxu0 0.0
    %3172 = vmatpush.msra.mxu0 0.0
    %3173 = vmatpush.msra.mxu0 0.0
    %3174 = vmatpush.msra.mxu0 0.0
    %3175 = vmatpush.msra.mxu0 0.0
    %3176 = vmatpush.msra.mxu0 %v702
    %3177 = vmatmul.f32.gmra.mxu0 %v3159
    %v3178 = vpop.f32.mrf.mxu0
    %v3179 = vadd.f32 0.0, %v3178
    %3180 = vdwg.mxu0
    %v3181 = vadd.f32 %v3147, %v3179
    %3182 = vmatpush.msra.mxu0 %v343
    %3183 = vmatpush.msra.mxu0 %v339
    %3184 = vmatpush.msra.mxu0 %v335
    %3185 = vmatpush.msra.mxu0 %v331
    %3186 = vmatpush.msra.mxu0 %v327
    %3187 = vmatpush.msra.mxu0 %v323
    %3188 = vmatpush.msra.mxu0 %v319
    %3189 = vmatpush.msra.mxu0 %v315
    %3190 = vmatpush.msra.mxu0 %v311
    %3191 = vmatpush.msra.mxu0 %v307
    %3192 = vmatpush.msra.mxu0 %v303
    %3193 = vmatpush.msra.mxu0 %v299
    %3194 = vmatpush.msra.mxu0 %v295
    %3195 = vmatpush.msra.mxu0 %v291
    %3196 = vmatpush.msra.mxu0 %v287
    %3197 = vmatpush.msra.mxu0 %v283
    %3198 = vmatmul.f32.gmra.mxu0 %v2942
    %v3199 = vpop.f32.mrf.mxu0
    %v3200 = vadd.f32 0.0, %v3199
    %3201 = vdwg.mxu0
    %3202 = vmatpush.msra.mxu0 %v344
    %3203 = vmatpush.msra.mxu0 %v340
    %3204 = vmatpush.msra.mxu0 %v336
    %3205 = vmatpush.msra.mxu0 %v332
    %3206 = vmatpush.msra.mxu0 %v328
    %3207 = vmatpush.msra.mxu0 %v324
    %3208 = vmatpush.msra.mxu0 %v320
    %3209 = vmatpush.msra.mxu0 %v316
    %3210 = vmatpush.msra.mxu0 %v312
    %3211 = vmatpush.msra.mxu0 %v308
    %3212 = vmatpush.msra.mxu0 %v304
    %3213 = vmatpush.msra.mxu0 %v300
    %3214 = vmatpush.msra.mxu0 %v296
    %3215 = vmatpush.msra.mxu0 %v292
    %3216 = vmatpush.msra.mxu0 %v288
    %3217 = vmatpush.msra.mxu0 %v284
    %3218 = vmatmul.f32.gmra.mxu0 %v2942
    %v3219 = vpop.f32.mrf.mxu0
    %v3220 = vadd.f32 0.0, %v3219
    %3221 = vdwg.mxu0
    %3222 = vmatpush.msra.mxu0 %v345
    %3223 = vmatpush.msra.mxu0 %v341
    %3224 = vmatpush.msra.mxu0 %v337
    %3225 = vmatpush.msra.mxu0 %v333
    %3226 = vmatpush.msra.mxu0 %v329
    %3227 = vmatpush.msra.mxu0 %v325
    %3228 = vmatpush.msra.mxu0 %v321
    %3229 = vmatpush.msra.mxu0 %v317
    %3230 = vmatpush.msra.mxu0 %v313
    %3231 = vmatpush.msra.mxu0 %v309
    %3232 = vmatpush.msra.mxu0 %v305
    %3233 = vmatpush.msra.mxu0 %v301
    %3234 = vmatpush.msra.mxu0 %v297
    %3235 = vmatpush.msra.mxu0 %v293
    %3236 = vmatpush.msra.mxu0 %v289
    %3237 = vmatpush.msra.mxu0 %v285
    %3238 = vmatmul.f32.gmra.mxu0 %v2942
    %v3239 = vpop.f32.mrf.mxu0
    %v3240 = vadd.f32 0.0, %v3239
    %3241 = vdwg.mxu0
    %3242 = vmatpush.msra.mxu0 %v346
    %3243 = vmatpush.msra.mxu0 %v342
    %3244 = vmatpush.msra.mxu0 %v338
    %3245 = vmatpush.msra.mxu0 %v334
    %3246 = vmatpush.msra.mxu0 %v330
    %3247 = vmatpush.msra.mxu0 %v326
    %3248 = vmatpush.msra.mxu0 %v322
    %3249 = vmatpush.msra.mxu0 %v318
    %3250 = vmatpush.msra.mxu0 %v314
    %3251 = vmatpush.msra.mxu0 %v310
    %3252 = vmatpush.msra.mxu0 %v306
    %3253 = vmatpush.msra.mxu0 %v302
    %3254 = vmatpush.msra.mxu0 %v298
    %3255 = vmatpush.msra.mxu0 %v294
    %3256 = vmatpush.msra.mxu0 %v290
    %3257 = vmatpush.msra.mxu0 %v286
    %3258 = vmatmul.f32.gmra.mxu0 %v2942
    %v3259 = vpop.f32.mrf.mxu0
    %v3260 = vadd.f32 0.0, %v3259
    %3261 = vdwg.mxu0
    %v3263 = vsel %vm805, %v3181, 0
    %3265 = vmatpush.msra.mxu0 0.0
    %3266 = vmatpush.msra.mxu0 0.0
    %3267 = vmatpush.msra.mxu0 0.0
    %3268 = vmatpush.msra.mxu0 0.0
    %3269 = vmatpush.msra.mxu0 0.0
    %3270 = vmatpush.msra.mxu0 0.0
    %3271 = vmatpush.msra.mxu0 0.0
    %3272 = vmatpush.msra.mxu0 0.0
    %3273 = vmatpush.msra.mxu0 %v279
    %3274 = vmatpush.msra.mxu0 %v275
    %3275 = vmatpush.msra.mxu0 %v271
    %3276 = vmatpush.msra.mxu0 %v267
    %3277 = vmatpush.msra.mxu0 %v263
    %3278 = vmatpush.msra.mxu0 %v259
    %3279 = vmatpush.msra.mxu0 %v255
    %3280 = vmatpush.msra.mxu0 %v251
    %3281 = vmatmul.f32.gmra.mxu0 %v3263
    %v3282 = vpop.f32.mrf.mxu0
    %v3283 = vadd.f32 %v3200, %v3282
    %3284 = vdwg.mxu0
    %3285 = vmatpush.msra.mxu0 0.0
    %3286 = vmatpush.msra.mxu0 0.0
    %3287 = vmatpush.msra.mxu0 0.0
    %3288 = vmatpush.msra.mxu0 0.0
    %3289 = vmatpush.msra.mxu0 0.0
    %3290 = vmatpush.msra.mxu0 0.0
    %3291 = vmatpush.msra.mxu0 0.0
    %3292 = vmatpush.msra.mxu0 0.0
    %3293 = vmatpush.msra.mxu0 %v280
    %3294 = vmatpush.msra.mxu0 %v276
    %3295 = vmatpush.msra.mxu0 %v272
    %3296 = vmatpush.msra.mxu0 %v268
    %3297 = vmatpush.msra.mxu0 %v264
    %3298 = vmatpush.msra.mxu0 %v260
    %3299 = vmatpush.msra.mxu0 %v256
    %3300 = vmatpush.msra.mxu0 %v252
    %3301 = vmatmul.f32.gmra.mxu0 %v3263
    %v3302 = vpop.f32.mrf.mxu0
    %v3303 = vadd.f32 %v3220, %v3302
    %3304 = vdwg.mxu0
    %3305 = vmatpush.msra.mxu0 0.0
    %3306 = vmatpush.msra.mxu0 0.0
    %3307 = vmatpush.msra.mxu0 0.0
    %3308 = vmatpush.msra.mxu0 0.0
    %3309 = vmatpush.msra.mxu0 0.0
    %3310 = vmatpush.msra.mxu0 0.0
    %3311 = vmatpush.msra.mxu0 0.0
    %3312 = vmatpush.msra.mxu0 0.0
    %3313 = vmatpush.msra.mxu0 %v281
    %3314 = vmatpush.msra.mxu0 %v277
    %3315 = vmatpush.msra.mxu0 %v273
    %3316 = vmatpush.msra.mxu0 %v269
    %3317 = vmatpush.msra.mxu0 %v265
    %3318 = vmatpush.msra.mxu0 %v261
    %3319 = vmatpush.msra.mxu0 %v257
    %3320 = vmatpush.msra.mxu0 %v253
    %3321 = vmatmul.f32.gmra.mxu0 %v3263
    %v3322 = vpop.f32.mrf.mxu0
    %v3323 = vadd.f32 %v3240, %v3322
    %3324 = vdwg.mxu0
    %3325 = vmatpush.msra.mxu0 0.0
    %3326 = vmatpush.msra.mxu0 0.0
    %3327 = vmatpush.msra.mxu0 0.0
    %3328 = vmatpush.msra.mxu0 0.0
    %3329 = vmatpush.msra.mxu0 0.0
    %3330 = vmatpush.msra.mxu0 0.0
    %3331 = vmatpush.msra.mxu0 0.0
    %3332 = vmatpush.msra.mxu0 0.0
    %3333 = vmatpush.msra.mxu0 %v282
    %3334 = vmatpush.msra.mxu0 %v278
    %3335 = vmatpush.msra.mxu0 %v274
    %3336 = vmatpush.msra.mxu0 %v270
    %3337 = vmatpush.msra.mxu0 %v266
    %3338 = vmatpush.msra.mxu0 %v262
    %3339 = vmatpush.msra.mxu0 %v258
    %3340 = vmatpush.msra.mxu0 %v254
    %3341 = vmatmul.f32.gmra.mxu0 %v3263
    %v3342 = vpop.f32.mrf.mxu0
    %v3343 = vadd.f32 %v3260, %v3342
    %3344 = vdwg.mxu0
    %v3345 = vxor.u32 %v3283, 2147483648
    %v3346 = vmul.f32 %v3345, 1.442695
    %v3347 = vpow.pop %v3346
    %v3348 = vadd.f32 %v3347, 1.0
    %v3349 = vrcp.pop %v3348
    %v3350 = vmul.f32 %v3348, %v3349
    %v3351 = vsub.f32 1.0, %v3350
    %v3352 = vmul.f32 %v3349, %v3351
    %v3353 = vadd.f32 %v3349, %v3352
    %vm3354 = vweird.f32 %v3348
    %vm3355 = vweird.f32 %v3349
    %vm3356 = vmor %vm3354, %vm3355
    %v3357 = vsel %vm3356, %v3349, %v3353
    %v3358 = vand.u32 2147483647, %v3348
    %vm3359 = vcmp.eq.f32.partialorder %v3358, 8.507059e+37
    %v3360 = vand.u32 %v3348, 2147483648
    %v3361 = vor.u32 1.1754944e-38, %v3360
    %v3362 = vsel %vm3359, %v3361, %v3357
    %v3363 = vmul.f32 1.0, %v3362
    %v3364 = vxor.u32 %v3303, 2147483648
    %v3365 = vmul.f32 %v3364, 1.442695
    %v3366 = vpow.pop %v3365
    %v3367 = vadd.f32 %v3366, 1.0
    %v3368 = vrcp.pop %v3367
    %v3369 = vmul.f32 %v3367, %v3368
    %v3370 = vsub.f32 1.0, %v3369
    %v3371 = vmul.f32 %v3368, %v3370
    %v3372 = vadd.f32 %v3368, %v3371
    %vm3373 = vweird.f32 %v3367
    %vm3374 = vweird.f32 %v3368
    %vm3375 = vmor %vm3373, %vm3374
    %v3376 = vsel %vm3375, %v3368, %v3372
    %v3377 = vand.u32 2147483647, %v3367
    %vm3378 = vcmp.eq.f32.partialorder %v3377, 8.507059e+37
    %v3379 = vand.u32 %v3367, 2147483648
    %v3380 = vor.u32 1.1754944e-38, %v3379
    %v3381 = vsel %vm3378, %v3380, %v3376
    %v3382 = vmul.f32 1.0, %v3381
    %v3383 = vxor.u32 %v3323, 2147483648
    %v3384 = vmul.f32 %v3383, 1.442695
    %v3385 = vpow.pop %v3384
    %v3386 = vadd.f32 %v3385, 1.0
    %v3387 = vrcp.pop %v3386
    %v3388 = vmul.f32 %v3386, %v3387
    %v3389 = vsub.f32 1.0, %v3388
    %v3390 = vmul.f32 %v3387, %v3389
    %v3391 = vadd.f32 %v3387, %v3390
    %vm3392 = vweird.f32 %v3386
    %vm3393 = vweird.f32 %v3387
    %vm3394 = vmor %vm3392, %vm3393
    %v3395 = vsel %vm3394, %v3387, %v3391
    %v3396 = vand.u32 2147483647, %v3386
    %vm3397 = vcmp.eq.f32.partialorder %v3396, 8.507059e+37
    %v3398 = vand.u32 %v3386, 2147483648
    %v3399 = vor.u32 1.1754944e-38, %v3398
    %v3400 = vsel %vm3397, %v3399, %v3395
    %v3401 = vmul.f32 1.0, %v3400
    %v3402 = vtanh.pop %v3343
    %v3403 = vmul.f32 %v2945, %v3382
    %v3404 = vmul.f32 %v3363, %v3402
    %v3405 = vadd.f32 %v3403, %v3404
    %v3406 = vtanh.pop %v3405
    %v3407 = vmul.f32 %v3401, %v3406
    %3408 = vmatpush.msra.mxu0 %v362
    %3409 = vmatpush.msra.mxu0 %v361
    %3410 = vmatpush.msra.mxu0 %v360
    %3411 = vmatpush.msra.mxu0 %v359
    %3412 = vmatpush.msra.mxu0 %v358
    %3413 = vmatpush.msra.mxu0 %v357
    %3414 = vmatpush.msra.mxu0 %v356
    %3415 = vmatpush.msra.mxu0 %v355
    %3416 = vmatpush.msra.mxu0 %v354
    %3417 = vmatpush.msra.mxu0 %v353
    %3418 = vmatpush.msra.mxu0 %v352
    %3419 = vmatpush.msra.mxu0 %v351
    %3420 = vmatpush.msra.mxu0 %v350
    %3421 = vmatpush.msra.mxu0 %v349
    %3422 = vmatpush.msra.mxu0 %v348
    %3423 = vmatpush.msra.mxu0 %v347
    %3424 = vmatmul.f32.gmra.mxu0 %v3407
    %v3425 = vpop.f32.mrf.mxu0
    %v3426 = vadd.f32 0.0, %v3425
    %3427 = vdwg.mxu0
    %3429 = vrot.lane.b32.xlu0 %v3426, 112
    %v3430 = vpop.permute.xlu0 %3429
    %3432 = vrot.lane.b32.xlu0 %v3426, 96
    %v3433 = vpop.permute.xlu0 %3432
    %3435 = vrot.lane.b32.xlu0 %v3426, 80
    %v3436 = vpop.permute.xlu0 %3435
    %v3438 = vrot.slane %v3433, 4
    %v3439 = vsel %vm983, %v3438, %v3426
    %v3441 = vunpack.c.l.s4 1983009808
    %v3442 = vunpack.c.0.s8 %v3441
    %v3443 = vperm.slane %v3439, %v3442
    %v3444 = vrot.slane %v3436, 4
    %v3445 = vsel %vm983, %v3444, %v3430
    %v3447 = vunpack.c.l.s4 1983009808
    %v3448 = vunpack.c.0.s8 %v3447
    %v3449 = vperm.slane %v3445, %v3448
    %v3450 = vrot.slane %v3449, 4
    %v3451 = vsel %vm983, %v3450, %v3443
    %v3453 = vunpack.c.l.s4 1934713408
    %v3454 = vunpack.c.0.s8 %v3453
    %v3455 = vperm.slane %v3451, %v3454
    %v3456 = vrot.slane %v3455, 4
    %v3457 = vsel %vm983, 0.0, %v3456
    %3458 = vmatpush.msra.mxu0 %v394
    %3459 = vmatpush.msra.mxu0 %v393
    %3460 = vmatpush.msra.mxu0 %v392
    %3461 = vmatpush.msra.mxu0 %v391
    %3462 = vmatpush.msra.mxu0 %v390
    %3463 = vmatpush.msra.mxu0 %v389
    %3464 = vmatpush.msra.mxu0 %v388
    %3465 = vmatpush.msra.mxu0 %v387
    %3466 = vmatpush.msra.mxu0 %v386
    %3467 = vmatpush.msra.mxu0 %v385
    %3468 = vmatpush.msra.mxu0 %v384
    %3469 = vmatpush.msra.mxu0 %v383
    %3470 = vmatpush.msra.mxu0 %v382
    %3471 = vmatpush.msra.mxu0 %v381
    %3472 = vmatpush.msra.mxu0 %v380
    %3473 = vmatpush.msra.mxu0 %v379
    %3474 = vmatmul.f32.gmra.mxu0 %v3407
    %v3475 = vpop.f32.mrf.mxu0
    %v3476 = vadd.f32 0.0, %v3475
    %3477 = vdwg.mxu0
    %3479 = vrot.lane.b32.xlu0 %v3476, 112
    %v3480 = vpop.permute.xlu0 %3479
    %3482 = vrot.lane.b32.xlu0 %v3476, 96
    %v3483 = vpop.permute.xlu0 %3482
    %3485 = vrot.lane.b32.xlu0 %v3476, 80
    %v3486 = vpop.permute.xlu0 %3485
    %v3488 = vrot.slane %v3483, 4
    %v3489 = vsel %vm983, %v3488, %v3476
    %v3491 = vunpack.c.l.s4 1983009808
    %v3492 = vunpack.c.0.s8 %v3491
    %v3493 = vperm.slane %v3489, %v3492
    %v3494 = vrot.slane %v3486, 4
    %v3495 = vsel %vm983, %v3494, %v3480
    %v3497 = vunpack.c.l.s4 1983009808
    %v3498 = vunpack.c.0.s8 %v3497
    %v3499 = vperm.slane %v3495, %v3498
    %v3500 = vrot.slane %v3499, 4
    %v3501 = vsel %vm983, %v3500, %v3493
    %v3503 = vunpack.c.l.s4 1934713408
    %v3504 = vunpack.c.0.s8 %v3503
    %v3505 = vperm.slane %v3501, %v3504
    %v3506 = vrot.slane %v3505, 4
    %v3507 = vsel %vm983, 0.0, %v3506
    %3508 = vmatpush.msra.mxu0 %v426
    %3509 = vmatpush.msra.mxu0 %v425
    %3510 = vmatpush.msra.mxu0 %v424
    %3511 = vmatpush.msra.mxu0 %v423
    %3512 = vmatpush.msra.mxu0 %v422
    %3513 = vmatpush.msra.mxu0 %v421
    %3514 = vmatpush.msra.mxu0 %v420
    %3515 = vmatpush.msra.mxu0 %v419
    %3516 = vmatpush.msra.mxu0 %v418
    %3517 = vmatpush.msra.mxu0 %v417
    %3518 = vmatpush.msra.mxu0 %v416
    %3519 = vmatpush.msra.mxu0 %v415
    %3520 = vmatpush.msra.mxu0 %v414
    %3521 = vmatpush.msra.mxu0 %v413
    %3522 = vmatpush.msra.mxu0 %v412
    %3523 = vmatpush.msra.mxu0 %v411
    %3524 = vmatmul.f32.gmra.mxu0 %v3407
    %v3525 = vpop.f32.mrf.mxu0
    %v3526 = vadd.f32 0.0, %v3525
    %3527 = vdwg.mxu0
    %3529 = vrot.lane.b32.xlu0 %v3526, 96
    %v3530 = vpop.permute.xlu0 %3529
    %3532 = vrot.lane.b32.xlu0 %v3526, 64
    %v3533 = vpop.permute.xlu0 %3532
    %3535 = vrot.lane.b32.xlu0 %v3526, 32
    %v3536 = vpop.permute.xlu0 %3535
    %v3538 = vrot.slane %v3533, 4
    %v3539 = vsel %vm983, %v3538, %v3526
    %v3541 = vunpack.c.l.s4 1983009808
    %v3542 = vunpack.c.0.s8 %v3541
    %v3543 = vperm.slane %v3539, %v3542
    %v3544 = vrot.slane %v3536, 4
    %v3545 = vsel %vm983, %v3544, %v3530
    %v3547 = vunpack.c.l.s4 1983009808
    %v3548 = vunpack.c.0.s8 %v3547
    %v3549 = vperm.slane %v3545, %v3548
    %v3550 = vrot.slane %v3549, 4
    %v3551 = vsel %vm983, %v3550, %v3543
    %v3553 = vunpack.c.l.s4 1934713408
    %v3554 = vunpack.c.0.s8 %v3553
    %v3555 = vperm.slane %v3551, %v3554
    %v3556 = vrot.slane %v3555, 4
    %v3557 = vsel %vm983, 0.0, %v3556
    %v3559 = vsel %vm1103, %v3455, 0
    %v3562 = vsel %vm1103, %v3505, 0
    %3564 = vmatpush.xpose.msra.mxu0 0.0
    %3565 = vmatpush.xpose.msra.mxu0 0.0
    %3566 = vmatpush.xpose.msra.mxu0 0.0
    %3567 = vmatpush.xpose.msra.mxu0 0.0
    %3568 = vmatpush.xpose.msra.mxu0 0.0
    %3569 = vmatpush.xpose.msra.mxu0 0.0
    %3570 = vmatpush.xpose.msra.mxu0 0.0
    %3571 = vmatpush.xpose.msra.mxu0 0.0
    %3572 = vmatpush.xpose.msra.mxu0 0.0
    %3573 = vmatpush.xpose.msra.mxu0 0.0
    %3574 = vmatpush.xpose.msra.mxu0 0.0
    %3575 = vmatpush.xpose.msra.mxu0 0.0
    %3576 = vmatpush.xpose.msra.mxu0 0.0
    %3577 = vmatpush.xpose.msra.mxu0 0.0
    %3578 = vmatpush.xpose.msra.mxu0 0.0
    %3579 = vmatpush.xpose.msra.mxu0 %v3562
    %3580 = vmatmul.f32.gmra.mxu0 %v3559
    %v3581 = vpop.f32.mrf.mxu0
    %v3582 = vadd.f32 0.0, %v3581
    %3583 = vdwg.mxu0
    %v3585 = vsel %vm1103, %v3457, 0
    %v3588 = vsel %vm1103, %v3507, 0
    %3590 = vmatpush.xpose.msra.mxu0 0.0
    %3591 = vmatpush.xpose.msra.mxu0 0.0
    %3592 = vmatpush.xpose.msra.mxu0 0.0
    %3593 = vmatpush.xpose.msra.mxu0 0.0
    %3594 = vmatpush.xpose.msra.mxu0 0.0
    %3595 = vmatpush.xpose.msra.mxu0 0.0
    %3596 = vmatpush.xpose.msra.mxu0 0.0
    %3597 = vmatpush.xpose.msra.mxu0 0.0
    %3598 = vmatpush.xpose.msra.mxu0 0.0
    %3599 = vmatpush.xpose.msra.mxu0 0.0
    %3600 = vmatpush.xpose.msra.mxu0 0.0
    %3601 = vmatpush.xpose.msra.mxu0 0.0
    %3602 = vmatpush.xpose.msra.mxu0 0.0
    %3603 = vmatpush.xpose.msra.mxu0 0.0
    %3604 = vmatpush.xpose.msra.mxu0 0.0
    %3605 = vmatpush.xpose.msra.mxu0 %v3588
    %3606 = vmatmul.f32.gmra.mxu0 %v3585
    %v3607 = vpop.f32.mrf.mxu0
    %v3608 = vadd.f32 0.0, %v3607
    %3609 = vdwg.mxu0
    %v3610 = vmul.f32 %v3582, 0.25
    %v3611 = vmul.f32 %v3608, 0.25
    %v3612 = vsel %vm556, %v3610, -inf
    %3613 = vmax.xlane.f32.xlu0 %v3612
    %v3614 = vpop.xlane.xlu0 %3613
    %v3615 = vsel %vm556, %v3611, -inf
    %3616 = vmax.xlane.f32.xlu0 %v3615
    %v3617 = vpop.xlane.xlu0 %3616
    %v3618 = vsub.f32 %v3610, %v3614
    %v3619 = vsub.f32 %v3611, %v3617
    %v3620 = vmul.f32 %v3618, 1.442695
    %v3621 = vpow.pop %v3620
    %v3622 = vmul.f32 %v3619, 1.442695
    %v3623 = vpow.pop %v3622
    %v3624 = vsel %vm556, %v3621, 0.0
    %3625 = vadd.xlane.f32.xlu0 %v3624
    %v3626 = vpop.xlane.xlu0 %3625
    %v3627 = vsel %vm556, %v3623, 0.0
    %3628 = vadd.xlane.f32.xlu0 %v3627
    %v3629 = vpop.xlane.xlu0 %3628
    %v3630 = vrcp.pop %v3626
    %v3631 = vmul.f32 %v3626, %v3630
    %v3632 = vsub.f32 1.0, %v3631
    %v3633 = vmul.f32 %v3630, %v3632
    %v3634 = vadd.f32 %v3630, %v3633
    %vm3635 = vweird.f32 %v3626
    %vm3636 = vweird.f32 %v3630
    %vm3637 = vmor %vm3635, %vm3636
    %v3638 = vsel %vm3637, %v3630, %v3634
    %v3639 = vand.u32 2147483647, %v3626
    %vm3640 = vcmp.eq.f32.partialorder %v3639, 8.507059e+37
    %v3641 = vand.u32 %v3626, 2147483648
    %v3642 = vor.u32 1.1754944e-38, %v3641
    %v3643 = vsel %vm3640, %v3642, %v3638
    %v3644 = vmul.f32 %v3621, %v3643
    %v3645 = vrcp.pop %v3629
    %v3646 = vmul.f32 %v3629, %v3645
    %v3647 = vsub.f32 1.0, %v3646
    %v3648 = vmul.f32 %v3645, %v3647
    %v3649 = vadd.f32 %v3645, %v3648
    %vm3650 = vweird.f32 %v3629
    %vm3651 = vweird.f32 %v3645
    %vm3652 = vmor %vm3650, %vm3651
    %v3653 = vsel %vm3652, %v3645, %v3649
    %v3654 = vand.u32 2147483647, %v3629
    %vm3655 = vcmp.eq.f32.partialorder %v3654, 8.507059e+37
    %v3656 = vand.u32 %v3629, 2147483648
    %v3657 = vor.u32 1.1754944e-38, %v3656
    %v3658 = vsel %vm3655, %v3657, %v3653
    %v3659 = vmul.f32 %v3623, %v3658
    %v3661 = vsel %vm660, %v3644, 0
    %v3664 = vsel %vm663, %v3555, 0
    %3666 = vmatpush.msra.mxu0 0.0
    %3667 = vmatpush.msra.mxu0 0.0
    %3668 = vmatpush.msra.mxu0 0.0
    %3669 = vmatpush.msra.mxu0 0.0
    %3670 = vmatpush.msra.mxu0 0.0
    %3671 = vmatpush.msra.mxu0 0.0
    %3672 = vmatpush.msra.mxu0 0.0
    %3673 = vmatpush.msra.mxu0 0.0
    %3674 = vmatpush.msra.mxu0 0.0
    %3675 = vmatpush.msra.mxu0 0.0
    %3676 = vmatpush.msra.mxu0 0.0
    %3677 = vmatpush.msra.mxu0 0.0
    %3678 = vmatpush.msra.mxu0 0.0
    %3679 = vmatpush.msra.mxu0 0.0
    %3680 = vmatpush.msra.mxu0 0.0
    %3681 = vmatpush.msra.mxu0 %v3664
    %3682 = vmatmul.f32.gmra.mxu0 %v3661
    %v3683 = vpop.f32.mrf.mxu0
    %v3684 = vadd.f32 0.0, %v3683
    %3685 = vdwg.mxu0
    %v3687 = vsel %vm660, %v3659, 0
    %v3690 = vsel %vm663, %v3557, 0
    %3692 = vmatpush.msra.mxu0 0.0
    %3693 = vmatpush.msra.mxu0 0.0
    %3694 = vmatpush.msra.mxu0 0.0
    %3695 = vmatpush.msra.mxu0 0.0
    %3696 = vmatpush.msra.mxu0 0.0
    %3697 = vmatpush.msra.mxu0 0.0
    %3698 = vmatpush.msra.mxu0 0.0
    %3699 = vmatpush.msra.mxu0 0.0
    %3700 = vmatpush.msra.mxu0 0.0
    %3701 = vmatpush.msra.mxu0 0.0
    %3702 = vmatpush.msra.mxu0 0.0
    %3703 = vmatpush.msra.mxu0 0.0
    %3704 = vmatpush.msra.mxu0 0.0
    %3705 = vmatpush.msra.mxu0 0.0
    %3706 = vmatpush.msra.mxu0 0.0
    %3707 = vmatpush.msra.mxu0 %v3690
    %3708 = vmatmul.f32.gmra.mxu0 %v3687
    %v3709 = vpop.f32.mrf.mxu0
    %v3710 = vadd.f32 0.0, %v3709
    %3711 = vdwg.mxu0
    %v3713 = vunpack.c.l.s4 1983009808
    %v3714 = vunpack.c.0.s8 %v3713
    %v3715 = vperm.slane %v3684, %v3714
    %v3717 = vunpack.c.l.s4 1983009808
    %v3718 = vunpack.c.0.s8 %v3717
    %v3719 = vperm.slane %v3710, %v3718
    %v3720 = vrot.slane %v3719, 4
    %v3721 = vsel %vm983, %v3720, %v3715
    %v3722 = vrot.slane %v3715, 4
    %v3723 = vsel %vm983, %v3719, %v3722
    %v3725 = vunpack.c.l.s4 1934713408
    %v3726 = vunpack.c.0.s8 %v3725
    %v3727 = vperm.slane %v3721, %v3726
    %v3729 = vunpack.c.l.s4 1934713408
    %v3730 = vunpack.c.0.s8 %v3729
    %v3731 = vperm.slane %v3723, %v3730
    %v3732 = vrot.slane %v3727, 4
    %v3733 = vsel %vm983, 0.0, %v3732
    %v3734 = vrot.slane %v3731, 4
    %v3735 = vsel %vm983, 0.0, %v3734
    %3737 = vrot.lane.b32.xlu0 %v3733, 32
    %v3738 = vpop.permute.xlu0 %3737
    %3741 = vrot.lane.b32.xlu0 %v3731, 64
    %v3742 = vpop.permute.xlu0 %3741
    %3745 = vrot.lane.b32.xlu0 %v3735, 96
    %v3746 = vpop.permute.xlu0 %3745
    %v3748 = vsel %vm1294, %v3727, %v3738
    %v3749 = vsel %vm805, %v3748, %v3742
    %v3750 = vsel %vm1297, %v3749, %v3746
    %3751 = vmatpush.msra.mxu0 %v378
    %3752 = vmatpush.msra.mxu0 %v377
    %3753 = vmatpush.msra.mxu0 %v376
    %3754 = vmatpush.msra.mxu0 %v375
    %3755 = vmatpush.msra.mxu0 %v374
    %3756 = vmatpush.msra.mxu0 %v373
    %3757 = vmatpush.msra.mxu0 %v372
    %3758 = vmatpush.msra.mxu0 %v371
    %3759 = vmatpush.msra.mxu0 %v370
    %3760 = vmatpush.msra.mxu0 %v369
    %3761 = vmatpush.msra.mxu0 %v368
    %3762 = vmatpush.msra.mxu0 %v367
    %3763 = vmatpush.msra.mxu0 %v366
    %3764 = vmatpush.msra.mxu0 %v365
    %3765 = vmatpush.msra.mxu0 %v364
    %3766 = vmatpush.msra.mxu0 %v363
    %3767 = vmatmul.f32.gmra.mxu0 %v3407
    %v3768 = vpop.f32.mrf.mxu0
    %v3769 = vadd.f32 0.0, %v3768
    %3770 = vdwg.mxu0
    %3772 = vrot.lane.b32.xlu0 %v3769, 112
    %v3773 = vpop.permute.xlu0 %3772
    %3775 = vrot.lane.b32.xlu0 %v3769, 96
    %v3776 = vpop.permute.xlu0 %3775
    %3778 = vrot.lane.b32.xlu0 %v3769, 80
    %v3779 = vpop.permute.xlu0 %3778
    %v3781 = vrot.slane %v3776, 4
    %v3782 = vsel %vm983, %v3781, %v3769
    %v3784 = vunpack.c.l.s4 1983009808
    %v3785 = vunpack.c.0.s8 %v3784
    %v3786 = vperm.slane %v3782, %v3785
    %v3787 = vrot.slane %v3779, 4
    %v3788 = vsel %vm983, %v3787, %v3773
    %v3790 = vunpack.c.l.s4 1983009808
    %v3791 = vunpack.c.0.s8 %v3790
    %v3792 = vperm.slane %v3788, %v3791
    %v3793 = vrot.slane %v3792, 4
    %v3794 = vsel %vm983, %v3793, %v3786
    %v3796 = vunpack.c.l.s4 1934713408
    %v3797 = vunpack.c.0.s8 %v3796
    %v3798 = vperm.slane %v3794, %v3797
    %v3799 = vrot.slane %v3798, 4
    %v3800 = vsel %vm983, 0.0, %v3799
    %3801 = vmatpush.msra.mxu0 %v410
    %3802 = vmatpush.msra.mxu0 %v409
    %3803 = vmatpush.msra.mxu0 %v408
    %3804 = vmatpush.msra.mxu0 %v407
    %3805 = vmatpush.msra.mxu0 %v406
    %3806 = vmatpush.msra.mxu0 %v405
    %3807 = vmatpush.msra.mxu0 %v404
    %3808 = vmatpush.msra.mxu0 %v403
    %3809 = vmatpush.msra.mxu0 %v402
    %3810 = vmatpush.msra.mxu0 %v401
    %3811 = vmatpush.msra.mxu0 %v400
    %3812 = vmatpush.msra.mxu0 %v399
    %3813 = vmatpush.msra.mxu0 %v398
    %3814 = vmatpush.msra.mxu0 %v397
    %3815 = vmatpush.msra.mxu0 %v396
    %3816 = vmatpush.msra.mxu0 %v395
    %3817 = vmatmul.f32.gmra.mxu0 %v3407
    %v3818 = vpop.f32.mrf.mxu0
    %v3819 = vadd.f32 0.0, %v3818
    %3820 = vdwg.mxu0
    %3822 = vrot.lane.b32.xlu0 %v3819, 112
    %v3823 = vpop.permute.xlu0 %3822
    %3825 = vrot.lane.b32.xlu0 %v3819, 96
    %v3826 = vpop.permute.xlu0 %3825
    %3828 = vrot.lane.b32.xlu0 %v3819, 80
    %v3829 = vpop.permute.xlu0 %3828
    %v3831 = vrot.slane %v3826, 4
    %v3832 = vsel %vm983, %v3831, %v3819
    %v3834 = vunpack.c.l.s4 1983009808
    %v3835 = vunpack.c.0.s8 %v3834
    %v3836 = vperm.slane %v3832, %v3835
    %v3837 = vrot.slane %v3829, 4
    %v3838 = vsel %vm983, %v3837, %v3823
    %v3840 = vunpack.c.l.s4 1983009808
    %v3841 = vunpack.c.0.s8 %v3840
    %v3842 = vperm.slane %v3838, %v3841
    %v3843 = vrot.slane %v3842, 4
    %v3844 = vsel %vm983, %v3843, %v3836
    %v3846 = vunpack.c.l.s4 1934713408
    %v3847 = vunpack.c.0.s8 %v3846
    %v3848 = vperm.slane %v3844, %v3847
    %v3849 = vrot.slane %v3848, 4
    %v3850 = vsel %vm983, 0.0, %v3849
    %3851 = vmatpush.msra.mxu0 %v442
    %3852 = vmatpush.msra.mxu0 %v441
    %3853 = vmatpush.msra.mxu0 %v440
    %3854 = vmatpush.msra.mxu0 %v439
    %3855 = vmatpush.msra.mxu0 %v438
    %3856 = vmatpush.msra.mxu0 %v437
    %3857 = vmatpush.msra.mxu0 %v436
    %3858 = vmatpush.msra.mxu0 %v435
    %3859 = vmatpush.msra.mxu0 %v434
    %3860 = vmatpush.msra.mxu0 %v433
    %3861 = vmatpush.msra.mxu0 %v432
    %3862 = vmatpush.msra.mxu0 %v431
    %3863 = vmatpush.msra.mxu0 %v430
    %3864 = vmatpush.msra.mxu0 %v429
    %3865 = vmatpush.msra.mxu0 %v428
    %3866 = vmatpush.msra.mxu0 %v427
    %3867 = vmatmul.f32.gmra.mxu0 %v3407
    %v3868 = vpop.f32.mrf.mxu0
    %v3869 = vadd.f32 0.0, %v3868
    %3870 = vdwg.mxu0
    %3872 = vrot.lane.b32.xlu0 %v3869, 96
    %v3873 = vpop.permute.xlu0 %3872
    %3875 = vrot.lane.b32.xlu0 %v3869, 64
    %v3876 = vpop.permute.xlu0 %3875
    %3878 = vrot.lane.b32.xlu0 %v3869, 32
    %v3879 = vpop.permute.xlu0 %3878
    %v3881 = vrot.slane %v3876, 4
    %v3882 = vsel %vm983, %v3881, %v3869
    %v3884 = vunpack.c.l.s4 1983009808
    %v3885 = vunpack.c.0.s8 %v3884
    %v3886 = vperm.slane %v3882, %v3885
    %v3887 = vrot.slane %v3879, 4
    %v3888 = vsel %vm983, %v3887, %v3873
    %v3890 = vunpack.c.l.s4 1983009808
    %v3891 = vunpack.c.0.s8 %v3890
    %v3892 = vperm.slane %v3888, %v3891
    %v3893 = vrot.slane %v3892, 4
    %v3894 = vsel %vm983, %v3893, %v3886
    %v3896 = vunpack.c.l.s4 1934713408
    %v3897 = vunpack.c.0.s8 %v3896
    %v3898 = vperm.slane %v3894, %v3897
    %v3899 = vrot.slane %v3898, 4
    %v3900 = vsel %vm983, 0.0, %v3899
    %v3902 = vsel %vm1103, %v3798, 0
    %v3905 = vsel %vm1103, %v3848, 0
    %3907 = vmatpush.xpose.msra.mxu0 0.0
    %3908 = vmatpush.xpose.msra.mxu0 0.0
    %3909 = vmatpush.xpose.msra.mxu0 0.0
    %3910 = vmatpush.xpose.msra.mxu0 0.0
    %3911 = vmatpush.xpose.msra.mxu0 0.0
    %3912 = vmatpush.xpose.msra.mxu0 0.0
    %3913 = vmatpush.xpose.msra.mxu0 0.0
    %3914 = vmatpush.xpose.msra.mxu0 0.0
    %3915 = vmatpush.xpose.msra.mxu0 0.0
    %3916 = vmatpush.xpose.msra.mxu0 0.0
    %3917 = vmatpush.xpose.msra.mxu0 0.0
    %3918 = vmatpush.xpose.msra.mxu0 0.0
    %3919 = vmatpush.xpose.msra.mxu0 0.0
    %3920 = vmatpush.xpose.msra.mxu0 0.0
    %3921 = vmatpush.xpose.msra.mxu0 0.0
    %3922 = vmatpush.xpose.msra.mxu0 %v3905
    %3923 = vmatmul.f32.gmra.mxu0 %v3902
    %v3924 = vpop.f32.mrf.mxu0
    %v3925 = vadd.f32 0.0, %v3924
    %3926 = vdwg.mxu0
    %v3928 = vsel %vm1103, %v3800, 0
    %v3931 = vsel %vm1103, %v3850, 0
    %3933 = vmatpush.xpose.msra.mxu0 0.0
    %3934 = vmatpush.xpose.msra.mxu0 0.0
    %3935 = vmatpush.xpose.msra.mxu0 0.0
    %3936 = vmatpush.xpose.msra.mxu0 0.0
    %3937 = vmatpush.xpose.msra.mxu0 0.0
    %3938 = vmatpush.xpose.msra.mxu0 0.0
    %3939 = vmatpush.xpose.msra.mxu0 0.0
    %3940 = vmatpush.xpose.msra.mxu0 0.0
    %3941 = vmatpush.xpose.msra.mxu0 0.0
    %3942 = vmatpush.xpose.msra.mxu0 0.0
    %3943 = vmatpush.xpose.msra.mxu0 0.0
    %3944 = vmatpush.xpose.msra.mxu0 0.0
    %3945 = vmatpush.xpose.msra.mxu0 0.0
    %3946 = vmatpush.xpose.msra.mxu0 0.0
    %3947 = vmatpush.xpose.msra.mxu0 0.0
    %3948 = vmatpush.xpose.msra.mxu0 %v3931
    %3949 = vmatmul.f32.gmra.mxu0 %v3928
    %v3950 = vpop.f32.mrf.mxu0
    %v3951 = vadd.f32 0.0, %v3950
    %3952 = vdwg.mxu0
    %v3953 = vmul.f32 %v3925, 0.25
    %v3954 = vmul.f32 %v3951, 0.25
    %v3955 = vsel %vm556, %v3953, -inf
    %3956 = vmax.xlane.f32.xlu0 %v3955
    %v3957 = vpop.xlane.xlu0 %3956
    %v3958 = vsel %vm556, %v3954, -inf
    %3959 = vmax.xlane.f32.xlu0 %v3958
    %v3960 = vpop.xlane.xlu0 %3959
    %v3961 = vsub.f32 %v3953, %v3957
    %v3962 = vsub.f32 %v3954, %v3960
    %v3963 = vmul.f32 %v3961, 1.442695
    %v3964 = vpow.pop %v3963
    %v3965 = vmul.f32 %v3962, 1.442695
    %v3966 = vpow.pop %v3965
    %v3967 = vsel %vm556, %v3964, 0.0
    %3968 = vadd.xlane.f32.xlu0 %v3967
    %v3969 = vpop.xlane.xlu0 %3968
    %v3970 = vsel %vm556, %v3966, 0.0
    %3971 = vadd.xlane.f32.xlu0 %v3970
    %v3972 = vpop.xlane.xlu0 %3971
    %v3973 = vrcp.pop %v3969
    %v3974 = vmul.f32 %v3969, %v3973
    %v3975 = vsub.f32 1.0, %v3974
    %v3976 = vmul.f32 %v3973, %v3975
    %v3977 = vadd.f32 %v3973, %v3976
    %vm3978 = vweird.f32 %v3969
    %vm3979 = vweird.f32 %v3973
    %vm3980 = vmor %vm3978, %vm3979
    %v3981 = vsel %vm3980, %v3973, %v3977
    %v3982 = vand.u32 2147483647, %v3969
    %vm3983 = vcmp.eq.f32.partialorder %v3982, 8.507059e+37
    %v3984 = vand.u32 %v3969, 2147483648
    %v3985 = vor.u32 1.1754944e-38, %v3984
    %v3986 = vsel %vm3983, %v3985, %v3981
    %v3987 = vmul.f32 %v3964, %v3986
    %v3988 = vrcp.pop %v3972
    %v3989 = vmul.f32 %v3972, %v3988
    %v3990 = vsub.f32 1.0, %v3989
    %v3991 = vmul.f32 %v3988, %v3990
    %v3992 = vadd.f32 %v3988, %v3991
    %vm3993 = vweird.f32 %v3972
    %vm3994 = vweird.f32 %v3988
    %vm3995 = vmor %vm3993, %vm3994
    %v3996 = vsel %vm3995, %v3988, %v3992
    %v3997 = vand.u32 2147483647, %v3972
    %vm3998 = vcmp.eq.f32.partialorder %v3997, 8.507059e+37
    %v3999 = vand.u32 %v3972, 2147483648
    %v4000 = vor.u32 1.1754944e-38, %v3999
    %v4001 = vsel %vm3998, %v4000, %v3996
    %v4002 = vmul.f32 %v3966, %v4001
    %v4004 = vsel %vm660, %v3987, 0
    %v4007 = vsel %vm663, %v3898, 0
    %4009 = vmatpush.msra.mxu0 0.0
    %4010 = vmatpush.msra.mxu0 0.0
    %4011 = vmatpush.msra.mxu0 0.0
    %4012 = vmatpush.msra.mxu0 0.0
    %4013 = vmatpush.msra.mxu0 0.0
    %4014 = vmatpush.msra.mxu0 0.0
    %4015 = vmatpush.msra.mxu0 0.0
    %4016 = vmatpush.msra.mxu0 0.0
    %4017 = vmatpush.msra.mxu0 0.0
    %4018 = vmatpush.msra.mxu0 0.0
    %4019 = vmatpush.msra.mxu0 0.0
    %4020 = vmatpush.msra.mxu0 0.0
    %4021 = vmatpush.msra.mxu0 0.0
    %4022 = vmatpush.msra.mxu0 0.0
    %4023 = vmatpush.msra.mxu0 0.0
    %4024 = vmatpush.msra.mxu0 %v4007
    %4025 = vmatmul.f32.gmra.mxu0 %v4004
    %v4026 = vpop.f32.mrf.mxu0
    %v4027 = vadd.f32 0.0, %v4026
    %4028 = vdwg.mxu0
    %v4030 = vsel %vm660, %v4002, 0
    %v4033 = vsel %vm663, %v3900, 0
    %4035 = vmatpush.msra.mxu0 0.0
    %4036 = vmatpush.msra.mxu0 0.0
    %4037 = vmatpush.msra.mxu0 0.0
    %4038 = vmatpush.msra.mxu0 0.0
    %4039 = vmatpush.msra.mxu0 0.0
    %4040 = vmatpush.msra.mxu0 0.0
    %4041 = vmatpush.msra.mxu0 0.0
    %4042 = vmatpush.msra.mxu0 0.0
    %4043 = vmatpush.msra.mxu0 0.0
    %4044 = vmatpush.msra.mxu0 0.0
    %4045 = vmatpush.msra.mxu0 0.0
    %4046 = vmatpush.msra.mxu0 0.0
    %4047 = vmatpush.msra.mxu0 0.0
    %4048 = vmatpush.msra.mxu0 0.0
    %4049 = vmatpush.msra.mxu0 0.0
    %4050 = vmatpush.msra.mxu0 %v4033
    %4051 = vmatmul.f32.gmra.mxu0 %v4030
    %v4052 = vpop.f32.mrf.mxu0
    %v4053 = vadd.f32 0.0, %v4052
    %4054 = vdwg.mxu0
    %v4056 = vunpack.c.l.s4 1983009808
    %v4057 = vunpack.c.0.s8 %v4056
    %v4058 = vperm.slane %v4027, %v4057
    %v4060 = vunpack.c.l.s4 1983009808
    %v4061 = vunpack.c.0.s8 %v4060
    %v4062 = vperm.slane %v4053, %v4061
    %v4063 = vrot.slane %v4062, 4
    %v4064 = vsel %vm983, %v4063, %v4058
    %v4065 = vrot.slane %v4058, 4
    %v4066 = vsel %vm983, %v4062, %v4065
    %v4068 = vunpack.c.l.s4 1934713408
    %v4069 = vunpack.c.0.s8 %v4068
    %v4070 = vperm.slane %v4064, %v4069
    %v4072 = vunpack.c.l.s4 1934713408
    %v4073 = vunpack.c.0.s8 %v4072
    %v4074 = vperm.slane %v4066, %v4073
    %v4075 = vrot.slane %v4070, 4
    %v4076 = vsel %vm983, 0.0, %v4075
    %v4077 = vrot.slane %v4074, 4
    %v4078 = vsel %vm983, 0.0, %v4077
    %4080 = vrot.lane.b32.xlu0 %v4076, 32
    %v4081 = vpop.permute.xlu0 %4080
    %4084 = vrot.lane.b32.xlu0 %v4074, 64
    %v4085 = vpop.permute.xlu0 %4084
    %4088 = vrot.lane.b32.xlu0 %v4078, 96
    %v4089 = vpop.permute.xlu0 %4088
    %v4091 = vsel %vm1294, %v4070, %v4081
    %v4092 = vsel %vm805, %v4091, %v4085
    %v4093 = vsel %vm1297, %v4092, %v4089
    %4094 = vmatpush.msra.mxu0 %v474
    %4095 = vmatpush.msra.mxu0 %v473
    %4096 = vmatpush.msra.mxu0 %v472
    %4097 = vmatpush.msra.mxu0 %v471
    %4098 = vmatpush.msra.mxu0 %v470
    %4099 = vmatpush.msra.mxu0 %v469
    %4100 = vmatpush.msra.mxu0 %v468
    %4101 = vmatpush.msra.mxu0 %v467
    %4102 = vmatpush.msra.mxu0 %v466
    %4103 = vmatpush.msra.mxu0 %v465
    %4104 = vmatpush.msra.mxu0 %v464
    %4105 = vmatpush.msra.mxu0 %v463
    %4106 = vmatpush.msra.mxu0 %v462
    %4107 = vmatpush.msra.mxu0 %v461
    %4108 = vmatpush.msra.mxu0 %v460
    %4109 = vmatpush.msra.mxu0 %v459
    %4110 = vmatmul.f32.gmra.mxu0 %v4093
    %v4111 = vpop.f32.mrf.mxu0
    %v4112 = vadd.f32 0.0, %v4111
    %4113 = vdwg.mxu0
    %4114 = vmatpush.msra.mxu0 %v458
    %4115 = vmatpush.msra.mxu0 %v457
    %4116 = vmatpush.msra.mxu0 %v456
    %4117 = vmatpush.msra.mxu0 %v455
    %4118 = vmatpush.msra.mxu0 %v454
    %4119 = vmatpush.msra.mxu0 %v453
    %4120 = vmatpush.msra.mxu0 %v452
    %4121 = vmatpush.msra.mxu0 %v451
    %4122 = vmatpush.msra.mxu0 %v450
    %4123 = vmatpush.msra.mxu0 %v449
    %4124 = vmatpush.msra.mxu0 %v448
    %4125 = vmatpush.msra.mxu0 %v447
    %4126 = vmatpush.msra.mxu0 %v446
    %4127 = vmatpush.msra.mxu0 %v445
    %4128 = vmatpush.msra.mxu0 %v444
    %4129 = vmatpush.msra.mxu0 %v443
    %4130 = vmatmul.f32.gmra.mxu0 %v3750
    %v4131 = vpop.f32.mrf.mxu0
    %v4132 = vadd.f32 %v4112, %v4131
    %4133 = vdwg.mxu0
    %v4134 = vadd.f32 %v4132, %v3407
    %v4137 = vperm.slane %v3051, %v540
    %v4138 = vperm.slane %v3052, %v540
    %v4139 = vsel %vm658, %v4138, %v4137
    %v4140 = vsel %vm660, %v4139, 0
    %4142 = vmatpush.msra.mxu0 0.0
    %4143 = vmatpush.msra.mxu0 0.0
    %4144 = vmatpush.msra.mxu0 0.0
    %4145 = vmatpush.msra.mxu0 0.0
    %4146 = vmatpush.msra.mxu0 0.0
    %4147 = vmatpush.msra.mxu0 0.0
    %4148 = vmatpush.msra.mxu0 0.0
    %4149 = vmatpush.msra.mxu0 0.0
    %4150 = vmatpush.msra.mxu0 0.0
    %4151 = vmatpush.msra.mxu0 0.0
    %4152 = vmatpush.msra.mxu0 0.0
    %4153 = vmatpush.msra.mxu0 0.0
    %4154 = vmatpush.msra.mxu0 0.0
    %4155 = vmatpush.msra.mxu0 0.0
    %4156 = vmatpush.msra.mxu0 0.0
    %4157 = vmatpush.msra.mxu0 %v1691
    %4158 = vmatmul.f32.gmra.mxu0 %v4140
    %v4159 = vpop.f32.mrf.mxu0
    %v4160 = vadd.f32 0.0, %v4159
    %4161 = vdwg.mxu0
    %v4162 = vmul.f32 %v4160, %v4134
    %v4163 = vsub.f32 1.0, %v4160
    %v4164 = vmul.f32 %v4163, %v2942
    %v4165 = vadd.f32 %v4162, %v4164
    %v4166 = vmul.f32 %v4160, %v3405
    %v4167 = vmul.f32 %v4163, %v2945
    %v4168 = vadd.f32 %v4166, %v4167
    %v4169 = vrot.slane %v154, 6
    %v4171 = vmul.f32 %v4165, %v4169
    %v4172 = vrot.slane %v182, 6
    %4174 = vmatpush.msra.mxu0 %v247
    %4175 = vmatpush.msra.mxu0 %v246
    %4176 = vmatpush.msra.mxu0 %v245
    %4177 = vmatpush.msra.mxu0 %v244
    %4178 = vmatpush.msra.mxu0 %v243
    %4179 = vmatpush.msra.mxu0 %v242
    %4180 = vmatpush.msra.mxu0 %v241
    %4181 = vmatpush.msra.mxu0 %v240
    %4182 = vmatpush.msra.mxu0 %v239
    %4183 = vmatpush.msra.mxu0 %v238
    %4184 = vmatpush.msra.mxu0 %v237
    %4185 = vmatpush.msra.mxu0 %v236
    %4186 = vmatpush.msra.mxu0 %v235
    %4187 = vmatpush.msra.mxu0 %v234
    %4188 = vmatpush.msra.mxu0 %v233
    %4189 = vmatpush.msra.mxu0 %v232
    %4190 = vmatmul.f32.gmra.mxu0 %v4171
    %v4191 = vpop.f32.mrf.mxu0
    %v4192 = vadd.f32 %v4172, %v4191
    %4193 = vdwg.mxu0
    %4194 = vmatpush.msra.mxu0 %v230
    %4195 = vmatpush.msra.mxu0 %v229
    %4196 = vmatpush.msra.mxu0 %v228
    %4197 = vmatpush.msra.mxu0 %v227
    %4198 = vmatpush.msra.mxu0 %v226
    %4199 = vmatpush.msra.mxu0 %v225
    %4200 = vmatpush.msra.mxu0 %v224
    %4201 = vmatpush.msra.mxu0 %v223
    %4202 = vmatpush.msra.mxu0 %v222
    %4203 = vmatpush.msra.mxu0 %v221
    %4204 = vmatpush.msra.mxu0 %v220
    %4205 = vmatpush.msra.mxu0 %v219
    %4206 = vmatpush.msra.mxu0 %v218
    %4207 = vmatpush.msra.mxu0 %v217
    %4208 = vmatpush.msra.mxu0 %v216
    %4209 = vmatpush.msra.mxu0 %v215
    %4210 = vmatmul.f32.gmra.mxu0 %v4165
    %v4211 = vpop.f32.mrf.mxu0
    %v4212 = vadd.f32 %v499, %v4211
    %4213 = vdwg.mxu0
    %v4214 = vperm.slane %v4192, 0
    %v4215 = vlaneseq
    %v4216 = vshrl.u32 %v4215, 7
    %4218 = vset.pattern.permute.xlu0 %v4216
    %4219 = vperm.xlu0 %4218, %v4214
    %v4220 = vpop.permute.xlu0 %4219
    %v4221 = vperm.slane %v4192, 1
    %v4222 = vlaneseq
    %v4223 = vshrl.u32 %v4222, 7
    %4225 = vset.pattern.permute.xlu0 %v4223
    %4226 = vperm.xlu0 %4225, %v4221
    %v4227 = vpop.permute.xlu0 %4226
    %v4229 = vrot.slane %v4192, 1
    %v4230 = vperm.slane %v4192, 0
    %v4231 = vperm.slane %v4229, 0
    %vm4234 = vcmp.gt.f32.partialorder %v4230, %v4220
    %vm4235 = vcmp.gt.f32.partialorder %v4231, %v4227
    %vm4236 = vcmp.eq.f32.partialorder %v4230, %v4220
    %vm4237 = vcmp.eq.f32.partialorder %v4231, %v4227
    %vm4238 = vmand %vm4236, %vm549
    %vm4239 = vmand %vm4237, %vm549
    %vm4240 = vmor %vm4234, %vm4238
    %vm4241 = vmor %vm4235, %vm4239
    %v4242 = vsel %vm4240, 1, 0
    %v4243 = vsel %vm4241, 1, 0
    %v4244 = vsel %vm556, %v4242, 0
    %v4245 = vand.u32 %v4244, 65535
    %v4246 = vshrl.u32 %v4244, 16
    %v4247 = vcvt.s32.f32 %v4245
    %v4248 = vcvt.s32.f32 %v4246
    %4249 = vadd.xlane.f32.xlu0 %v4247
    %v4250 = vpop.xlane.xlu0 %4249
    %4251 = vadd.xlane.f32.xlu0 %v4248
    %v4252 = vpop.xlane.xlu0 %4251
    %v4253 = vcvt.f32.s32 %v4250
    %v4254 = vcvt.f32.s32 %v4252
    %v4255 = vshll.u32 %v4254, 16
    %v4256 = vadd.s32 %v4255, %v4253
    %v4257 = vsel %vm556, %v4243, 0
    %v4258 = vand.u32 %v4257, 65535
    %v4259 = vshrl.u32 %v4257, 16
    %v4260 = vcvt.s32.f32 %v4258
    %v4261 = vcvt.s32.f32 %v4259
    %4262 = vadd.xlane.f32.xlu0 %v4260
    %v4263 = vpop.xlane.xlu0 %4262
    %4264 = vadd.xlane.f32.xlu0 %v4261
    %v4265 = vpop.xlane.xlu0 %4264
    %v4266 = vcvt.f32.s32 %v4263
    %v4267 = vcvt.f32.s32 %v4265
    %v4268 = vshll.u32 %v4267, 16
    %v4269 = vadd.s32 %v4268, %v4266
    %vm4270 = vcmp.lt.s32.totalorder %v4256, 2
    %vm4271 = vcmp.lt.s32.totalorder %v4269, 2
    %v4272 = vsel %vm4270, 1, 0
    %v4273 = vsel %vm4271, 1, 0
    %v4274 = vcvt.s32.f32 %v4272
    %v4275 = vcvt.s32.f32 %v4273
    %v4276 = vsub.f32 %v4192, %v4212
    %v4277 = vxor.u32 %v4276, 2147483648
    %v4278 = vmul.f32 %v4277, 1.442695
    %v4279 = vpow.pop %v4278
    %v4280 = vadd.f32 %v4279, 1.0
    %v4281 = vrcp.pop %v4280
    %v4282 = vmul.f32 %v4280, %v4281
    %v4283 = vsub.f32 1.0, %v4282
    %v4284 = vmul.f32 %v4281, %v4283
    %v4285 = vadd.f32 %v4281, %v4284
    %vm4286 = vweird.f32 %v4280
    %vm4287 = vweird.f32 %v4281
    %vm4288 = vmor %vm4286, %vm4287
    %v4289 = vsel %vm4288, %v4281, %v4285
    %v4290 = vand.u32 2147483647, %v4280
    %vm4291 = vcmp.eq.f32.partialorder %v4290, 8.507059e+37
    %v4292 = vand.u32 %v4280, 2147483648
    %v4293 = vor.u32 1.1754944e-38, %v4292
    %v4294 = vsel %vm4291, %v4293, %v4289
    %v4295 = vmul.f32 1.0, %v4294
    %v4297 = vperm.slane %v4295, 0
    %v4298 = vlaneseq
    %v4299 = vshrl.u32 %v4298, 7
    %4301 = vset.pattern.permute.xlu0 %v4299
    %4302 = vperm.xlu0 %4301, %v4297
    %v4303 = vpop.permute.xlu0 %4302
    %v4304 = vperm.slane %v4295, 1
    %v4305 = vlaneseq
    %v4306 = vshrl.u32 %v4305, 7
    %4308 = vset.pattern.permute.xlu0 %v4306
    %4309 = vperm.xlu0 %4308, %v4304
    %v4310 = vpop.permute.xlu0 %4309
    %v4313 = vmul.f32 %v4274, %v4303
    %v4314 = vmul.f32 %v4275, %v4310
    %v4315 = vsub.f32 1.0, %v4295
    %v4317 = vperm.slane %v4315, 0
    %v4318 = vlaneseq
    %v4319 = vshrl.u32 %v4318, 7
    %4321 = vset.pattern.permute.xlu0 %v4319
    %4322 = vperm.xlu0 %4321, %v4317
    %v4323 = vpop.permute.xlu0 %4322
    %v4324 = vperm.slane %v4315, 1
    %v4325 = vlaneseq
    %v4326 = vshrl.u32 %v4325, 7
    %4328 = vset.pattern.permute.xlu0 %v4326
    %4329 = vperm.xlu0 %4328, %v4324
    %v4330 = vpop.permute.xlu0 %4329
    %v4333 = vmul.f32 %v4274, %v4323
    %v4334 = vmul.f32 %v4275, %v4330
    %4337 = vset.pattern.permute.xlu0 0
    %4338 = vperm.xlu0 %4337, %v4313
    %v4339 = vpop.permute.xlu0 %4338
    %4340 = vset.pattern.permute.xlu0 0
    %4341 = vperm.xlu0 %4340, %v4314
    %v4342 = vpop.permute.xlu0 %4341
    %v4343 = vperm.slane %v4339, %v540
    %v4344 = vperm.slane %v4342, %v540
    %v4345 = vsel %vm658, %v4344, %v4343
    %v4346 = vsel %vm660, %v4345, 0
    %4348 = vmatpush.msra.mxu0 0.0
    %4349 = vmatpush.msra.mxu0 0.0
    %4350 = vmatpush.msra.mxu0 0.0
    %4351 = vmatpush.msra.mxu0 0.0
    %4352 = vmatpush.msra.mxu0 0.0
    %4353 = vmatpush.msra.mxu0 0.0
    %4354 = vmatpush.msra.mxu0 0.0
    %4355 = vmatpush.msra.mxu0 0.0
    %4356 = vmatpush.msra.mxu0 0.0
    %4357 = vmatpush.msra.mxu0 0.0
    %4358 = vmatpush.msra.mxu0 0.0
    %4359 = vmatpush.msra.mxu0 0.0
    %4360 = vmatpush.msra.mxu0 0.0
    %4361 = vmatpush.msra.mxu0 0.0
    %4362 = vmatpush.msra.mxu0 0.0
    %4363 = vmatpush.msra.mxu0 %v665
    %4364 = vmatmul.f32.gmra.mxu0 %v4346
    %v4365 = vpop.f32.mrf.mxu0
    %v4366 = vadd.f32 0.0, %v4365
    %4367 = vdwg.mxu0
    %v4368 = vrot.slane %v210, 6
    %v4370 = vmul.f32 %v4366, %v4368
    %4373 = vset.pattern.permute.xlu0 0
    %4374 = vperm.xlu0 %4373, %v4333
    %v4375 = vpop.permute.xlu0 %4374
    %4376 = vset.pattern.permute.xlu0 0
    %4377 = vperm.xlu0 %4376, %v4334
    %v4378 = vpop.permute.xlu0 %4377
    %v4379 = vperm.slane %v4375, %v540
    %v4380 = vperm.slane %v4378, %v540
    %v4381 = vsel %vm658, %v4380, %v4379
    %v4382 = vsel %vm660, %v4381, 0
    %4384 = vmatpush.msra.mxu0 0.0
    %4385 = vmatpush.msra.mxu0 0.0
    %4386 = vmatpush.msra.mxu0 0.0
    %4387 = vmatpush.msra.mxu0 0.0
    %4388 = vmatpush.msra.mxu0 0.0
    %4389 = vmatpush.msra.mxu0 0.0
    %4390 = vmatpush.msra.mxu0 0.0
    %4391 = vmatpush.msra.mxu0 0.0
    %4392 = vmatpush.msra.mxu0 0.0
    %4393 = vmatpush.msra.mxu0 0.0
    %4394 = vmatpush.msra.mxu0 0.0
    %4395 = vmatpush.msra.mxu0 0.0
    %4396 = vmatpush.msra.mxu0 0.0
    %4397 = vmatpush.msra.mxu0 0.0
    %4398 = vmatpush.msra.mxu0 0.0
    %4399 = vmatpush.msra.mxu0 %v702
    %4400 = vmatmul.f32.gmra.mxu0 %v4382
    %v4401 = vpop.f32.mrf.mxu0
    %v4402 = vadd.f32 0.0, %v4401
    %4403 = vdwg.mxu0
    %v4404 = vadd.f32 %v4370, %v4402
    %4405 = vmatpush.msra.mxu0 %v343
    %4406 = vmatpush.msra.mxu0 %v339
    %4407 = vmatpush.msra.mxu0 %v335
    %4408 = vmatpush.msra.mxu0 %v331
    %4409 = vmatpush.msra.mxu0 %v327
    %4410 = vmatpush.msra.mxu0 %v323
    %4411 = vmatpush.msra.mxu0 %v319
    %4412 = vmatpush.msra.mxu0 %v315
    %4413 = vmatpush.msra.mxu0 %v311
    %4414 = vmatpush.msra.mxu0 %v307
    %4415 = vmatpush.msra.mxu0 %v303
    %4416 = vmatpush.msra.mxu0 %v299
    %4417 = vmatpush.msra.mxu0 %v295
    %4418 = vmatpush.msra.mxu0 %v291
    %4419 = vmatpush.msra.mxu0 %v287
    %4420 = vmatpush.msra.mxu0 %v283
    %4421 = vmatmul.f32.gmra.mxu0 %v4165
    %v4422 = vpop.f32.mrf.mxu0
    %v4423 = vadd.f32 0.0, %v4422
    %4424 = vdwg.mxu0
    %4425 = vmatpush.msra.mxu0 %v344
    %4426 = vmatpush.msra.mxu0 %v340
    %4427 = vmatpush.msra.mxu0 %v336
    %4428 = vmatpush.msra.mxu0 %v332
    %4429 = vmatpush.msra.mxu0 %v328
    %4430 = vmatpush.msra.mxu0 %v324
    %4431 = vmatpush.msra.mxu0 %v320
    %4432 = vmatpush.msra.mxu0 %v316
    %4433 = vmatpush.msra.mxu0 %v312
    %4434 = vmatpush.msra.mxu0 %v308
    %4435 = vmatpush.msra.mxu0 %v304
    %4436 = vmatpush.msra.mxu0 %v300
    %4437 = vmatpush.msra.mxu0 %v296
    %4438 = vmatpush.msra.mxu0 %v292
    %4439 = vmatpush.msra.mxu0 %v288
    %4440 = vmatpush.msra.mxu0 %v284
    %4441 = vmatmul.f32.gmra.mxu0 %v4165
    %v4442 = vpop.f32.mrf.mxu0
    %v4443 = vadd.f32 0.0, %v4442
    %4444 = vdwg.mxu0
    %4445 = vmatpush.msra.mxu0 %v345
    %4446 = vmatpush.msra.mxu0 %v341
    %4447 = vmatpush.msra.mxu0 %v337
    %4448 = vmatpush.msra.mxu0 %v333
    %4449 = vmatpush.msra.mxu0 %v329
    %4450 = vmatpush.msra.mxu0 %v325
    %4451 = vmatpush.msra.mxu0 %v321
    %4452 = vmatpush.msra.mxu0 %v317
    %4453 = vmatpush.msra.mxu0 %v313
    %4454 = vmatpush.msra.mxu0 %v309
    %4455 = vmatpush.msra.mxu0 %v305
    %4456 = vmatpush.msra.mxu0 %v301
    %4457 = vmatpush.msra.mxu0 %v297
    %4458 = vmatpush.msra.mxu0 %v293
    %4459 = vmatpush.msra.mxu0 %v289
    %4460 = vmatpush.msra.mxu0 %v285
    %4461 = vmatmul.f32.gmra.mxu0 %v4165
    %v4462 = vpop.f32.mrf.mxu0
    %v4463 = vadd.f32 0.0, %v4462
    %4464 = vdwg.mxu0
    %4465 = vmatpush.msra.mxu0 %v346
    %4466 = vmatpush.msra.mxu0 %v342
    %4467 = vmatpush.msra.mxu0 %v338
    %4468 = vmatpush.msra.mxu0 %v334
    %4469 = vmatpush.msra.mxu0 %v330
    %4470 = vmatpush.msra.mxu0 %v326
    %4471 = vmatpush.msra.mxu0 %v322
    %4472 = vmatpush.msra.mxu0 %v318
    %4473 = vmatpush.msra.mxu0 %v314
    %4474 = vmatpush.msra.mxu0 %v310
    %4475 = vmatpush.msra.mxu0 %v306
    %4476 = vmatpush.msra.mxu0 %v302
    %4477 = vmatpush.msra.mxu0 %v298
    %4478 = vmatpush.msra.mxu0 %v294
    %4479 = vmatpush.msra.mxu0 %v290
    %4480 = vmatpush.msra.mxu0 %v286
    %4481 = vmatmul.f32.gmra.mxu0 %v4165
    %v4482 = vpop.f32.mrf.mxu0
    %v4483 = vadd.f32 0.0, %v4482
    %4484 = vdwg.mxu0
    %v4486 = vsel %vm805, %v4404, 0
    %4488 = vmatpush.msra.mxu0 0.0
    %4489 = vmatpush.msra.mxu0 0.0
    %4490 = vmatpush.msra.mxu0 0.0
    %4491 = vmatpush.msra.mxu0 0.0
    %4492 = vmatpush.msra.mxu0 0.0
    %4493 = vmatpush.msra.mxu0 0.0
    %4494 = vmatpush.msra.mxu0 0.0
    %4495 = vmatpush.msra.mxu0 0.0
    %4496 = vmatpush.msra.mxu0 %v279
    %4497 = vmatpush.msra.mxu0 %v275
    %4498 = vmatpush.msra.mxu0 %v271
    %4499 = vmatpush.msra.mxu0 %v267
    %4500 = vmatpush.msra.mxu0 %v263
    %4501 = vmatpush.msra.mxu0 %v259
    %4502 = vmatpush.msra.mxu0 %v255
    %4503 = vmatpush.msra.mxu0 %v251
    %4504 = vmatmul.f32.gmra.mxu0 %v4486
    %v4505 = vpop.f32.mrf.mxu0
    %v4506 = vadd.f32 %v4423, %v4505
    %4507 = vdwg.mxu0
    %4508 = vmatpush.msra.mxu0 0.0
    %4509 = vmatpush.msra.mxu0 0.0
    %4510 = vmatpush.msra.mxu0 0.0
    %4511 = vmatpush.msra.mxu0 0.0
    %4512 = vmatpush.msra.mxu0 0.0
    %4513 = vmatpush.msra.mxu0 0.0
    %4514 = vmatpush.msra.mxu0 0.0
    %4515 = vmatpush.msra.mxu0 0.0
    %4516 = vmatpush.msra.mxu0 %v280
    %4517 = vmatpush.msra.mxu0 %v276
    %4518 = vmatpush.msra.mxu0 %v272
    %4519 = vmatpush.msra.mxu0 %v268
    %4520 = vmatpush.msra.mxu0 %v264
    %4521 = vmatpush.msra.mxu0 %v260
    %4522 = vmatpush.msra.mxu0 %v256
    %4523 = vmatpush.msra.mxu0 %v252
    %4524 = vmatmul.f32.gmra.mxu0 %v4486
    %v4525 = vpop.f32.mrf.mxu0
    %v4526 = vadd.f32 %v4443, %v4525
    %4527 = vdwg.mxu0
    %4528 = vmatpush.msra.mxu0 0.0
    %4529 = vmatpush.msra.mxu0 0.0
    %4530 = vmatpush.msra.mxu0 0.0
    %4531 = vmatpush.msra.mxu0 0.0
    %4532 = vmatpush.msra.mxu0 0.0
    %4533 = vmatpush.msra.mxu0 0.0
    %4534 = vmatpush.msra.mxu0 0.0
    %4535 = vmatpush.msra.mxu0 0.0
    %4536 = vmatpush.msra.mxu0 %v281
    %4537 = vmatpush.msra.mxu0 %v277
    %4538 = vmatpush.msra.mxu0 %v273
    %4539 = vmatpush.msra.mxu0 %v269
    %4540 = vmatpush.msra.mxu0 %v265
    %4541 = vmatpush.msra.mxu0 %v261
    %4542 = vmatpush.msra.mxu0 %v257
    %4543 = vmatpush.msra.mxu0 %v253
    %4544 = vmatmul.f32.gmra.mxu0 %v4486
    %v4545 = vpop.f32.mrf.mxu0
    %v4546 = vadd.f32 %v4463, %v4545
    %4547 = vdwg.mxu0
    %4548 = vmatpush.msra.mxu0 0.0
    %4549 = vmatpush.msra.mxu0 0.0
    %4550 = vmatpush.msra.mxu0 0.0
    %4551 = vmatpush.msra.mxu0 0.0
    %4552 = vmatpush.msra.mxu0 0.0
    %4553 = vmatpush.msra.mxu0 0.0
    %4554 = vmatpush.msra.mxu0 0.0
    %4555 = vmatpush.msra.mxu0 0.0
    %4556 = vmatpush.msra.mxu0 %v282
    %4557 = vmatpush.msra.mxu0 %v278
    %4558 = vmatpush.msra.mxu0 %v274
    %4559 = vmatpush.msra.mxu0 %v270
    %4560 = vmatpush.msra.mxu0 %v266
    %4561 = vmatpush.msra.mxu0 %v262
    %4562 = vmatpush.msra.mxu0 %v258
    %4563 = vmatpush.msra.mxu0 %v254
    %4564 = vmatmul.f32.gmra.mxu0 %v4486
    %v4565 = vpop.f32.mrf.mxu0
    %v4566 = vadd.f32 %v4483, %v4565
    %4567 = vdwg.mxu0
    %v4568 = vxor.u32 %v4506, 2147483648
    %v4569 = vmul.f32 %v4568, 1.442695
    %v4570 = vpow.pop %v4569
    %v4571 = vadd.f32 %v4570, 1.0
    %v4572 = vrcp.pop %v4571
    %v4573 = vmul.f32 %v4571, %v4572
    %v4574 = vsub.f32 1.0, %v4573
    %v4575 = vmul.f32 %v4572, %v4574
    %v4576 = vadd.f32 %v4572, %v4575
    %vm4577 = vweird.f32 %v4571
    %vm4578 = vweird.f32 %v4572
    %vm4579 = vmor %vm4577, %vm4578
    %v4580 = vsel %vm4579, %v4572, %v4576
    %v4581 = vand.u32 2147483647, %v4571
    %vm4582 = vcmp.eq.f32.partialorder %v4581, 8.507059e+37
    %v4583 = vand.u32 %v4571, 2147483648
    %v4584 = vor.u32 1.1754944e-38, %v4583
    %v4585 = vsel %vm4582, %v4584, %v4580
    %v4586 = vmul.f32 1.0, %v4585
    %v4587 = vxor.u32 %v4526, 2147483648
    %v4588 = vmul.f32 %v4587, 1.442695
    %v4589 = vpow.pop %v4588
    %v4590 = vadd.f32 %v4589, 1.0
    %v4591 = vrcp.pop %v4590
    %v4592 = vmul.f32 %v4590, %v4591
    %v4593 = vsub.f32 1.0, %v4592
    %v4594 = vmul.f32 %v4591, %v4593
    %v4595 = vadd.f32 %v4591, %v4594
    %vm4596 = vweird.f32 %v4590
    %vm4597 = vweird.f32 %v4591
    %vm4598 = vmor %vm4596, %vm4597
    %v4599 = vsel %vm4598, %v4591, %v4595
    %v4600 = vand.u32 2147483647, %v4590
    %vm4601 = vcmp.eq.f32.partialorder %v4600, 8.507059e+37
    %v4602 = vand.u32 %v4590, 2147483648
    %v4603 = vor.u32 1.1754944e-38, %v4602
    %v4604 = vsel %vm4601, %v4603, %v4599
    %v4605 = vmul.f32 1.0, %v4604
    %v4606 = vxor.u32 %v4546, 2147483648
    %v4607 = vmul.f32 %v4606, 1.442695
    %v4608 = vpow.pop %v4607
    %v4609 = vadd.f32 %v4608, 1.0
    %v4610 = vrcp.pop %v4609
    %v4611 = vmul.f32 %v4609, %v4610
    %v4612 = vsub.f32 1.0, %v4611
    %v4613 = vmul.f32 %v4610, %v4612
    %v4614 = vadd.f32 %v4610, %v4613
    %vm4615 = vweird.f32 %v4609
    %vm4616 = vweird.f32 %v4610
    %vm4617 = vmor %vm4615, %vm4616
    %v4618 = vsel %vm4617, %v4610, %v4614
    %v4619 = vand.u32 2147483647, %v4609
    %vm4620 = vcmp.eq.f32.partialorder %v4619, 8.507059e+37
    %v4621 = vand.u32 %v4609, 2147483648
    %v4622 = vor.u32 1.1754944e-38, %v4621
    %v4623 = vsel %vm4620, %v4622, %v4618
    %v4624 = vmul.f32 1.0, %v4623
    %v4625 = vtanh.pop %v4566
    %v4626 = vmul.f32 %v4168, %v4605
    %v4627 = vmul.f32 %v4586, %v4625
    %v4628 = vadd.f32 %v4626, %v4627
    %v4629 = vtanh.pop %v4628
    %v4630 = vmul.f32 %v4624, %v4629
    %4631 = vmatpush.msra.mxu0 %v362
    %4632 = vmatpush.msra.mxu0 %v361
    %4633 = vmatpush.msra.mxu0 %v360
    %4634 = vmatpush.msra.mxu0 %v359
    %4635 = vmatpush.msra.mxu0 %v358
    %4636 = vmatpush.msra.mxu0 %v357
    %4637 = vmatpush.msra.mxu0 %v356
    %4638 = vmatpush.msra.mxu0 %v355
    %4639 = vmatpush.msra.mxu0 %v354
    %4640 = vmatpush.msra.mxu0 %v353
    %4641 = vmatpush.msra.mxu0 %v352
    %4642 = vmatpush.msra.mxu0 %v351
    %4643 = vmatpush.msra.mxu0 %v350
    %4644 = vmatpush.msra.mxu0 %v349
    %4645 = vmatpush.msra.mxu0 %v348
    %4646 = vmatpush.msra.mxu0 %v347
    %4647 = vmatmul.f32.gmra.mxu0 %v4630
    %v4648 = vpop.f32.mrf.mxu0
    %v4649 = vadd.f32 0.0, %v4648
    %4650 = vdwg.mxu0
    %4652 = vrot.lane.b32.xlu0 %v4649, 112
    %v4653 = vpop.permute.xlu0 %4652
    %4655 = vrot.lane.b32.xlu0 %v4649, 96
    %v4656 = vpop.permute.xlu0 %4655
    %4658 = vrot.lane.b32.xlu0 %v4649, 80
    %v4659 = vpop.permute.xlu0 %4658
    %v4661 = vrot.slane %v4656, 4
    %v4662 = vsel %vm983, %v4661, %v4649
    %v4664 = vunpack.c.l.s4 1983009808
    %v4665 = vunpack.c.0.s8 %v4664
    %v4666 = vperm.slane %v4662, %v4665
    %v4667 = vrot.slane %v4659, 4
    %v4668 = vsel %vm983, %v4667, %v4653
    %v4670 = vunpack.c.l.s4 1983009808
    %v4671 = vunpack.c.0.s8 %v4670
    %v4672 = vperm.slane %v4668, %v4671
    %v4673 = vrot.slane %v4672, 4
    %v4674 = vsel %vm983, %v4673, %v4666
    %v4676 = vunpack.c.l.s4 1934713408
    %v4677 = vunpack.c.0.s8 %v4676
    %v4678 = vperm.slane %v4674, %v4677
    %v4679 = vrot.slane %v4678, 4
    %v4680 = vsel %vm983, 0.0, %v4679
    %4681 = vmatpush.msra.mxu0 %v394
    %4682 = vmatpush.msra.mxu0 %v393
    %4683 = vmatpush.msra.mxu0 %v392
    %4684 = vmatpush.msra.mxu0 %v391
    %4685 = vmatpush.msra.mxu0 %v390
    %4686 = vmatpush.msra.mxu0 %v389
    %4687 = vmatpush.msra.mxu0 %v388
    %4688 = vmatpush.msra.mxu0 %v387
    %4689 = vmatpush.msra.mxu0 %v386
    %4690 = vmatpush.msra.mxu0 %v385
    %4691 = vmatpush.msra.mxu0 %v384
    %4692 = vmatpush.msra.mxu0 %v383
    %4693 = vmatpush.msra.mxu0 %v382
    %4694 = vmatpush.msra.mxu0 %v381
    %4695 = vmatpush.msra.mxu0 %v380
    %4696 = vmatpush.msra.mxu0 %v379
    %4697 = vmatmul.f32.gmra.mxu0 %v4630
    %v4698 = vpop.f32.mrf.mxu0
    %v4699 = vadd.f32 0.0, %v4698
    %4700 = vdwg.mxu0
    %4702 = vrot.lane.b32.xlu0 %v4699, 112
    %v4703 = vpop.permute.xlu0 %4702
    %4705 = vrot.lane.b32.xlu0 %v4699, 96
    %v4706 = vpop.permute.xlu0 %4705
    %4708 = vrot.lane.b32.xlu0 %v4699, 80
    %v4709 = vpop.permute.xlu0 %4708
    %v4711 = vrot.slane %v4706, 4
    %v4712 = vsel %vm983, %v4711, %v4699
    %v4714 = vunpack.c.l.s4 1983009808
    %v4715 = vunpack.c.0.s8 %v4714
    %v4716 = vperm.slane %v4712, %v4715
    %v4717 = vrot.slane %v4709, 4
    %v4718 = vsel %vm983, %v4717, %v4703
    %v4720 = vunpack.c.l.s4 1983009808
    %v4721 = vunpack.c.0.s8 %v4720
    %v4722 = vperm.slane %v4718, %v4721
    %v4723 = vrot.slane %v4722, 4
    %v4724 = vsel %vm983, %v4723, %v4716
    %v4726 = vunpack.c.l.s4 1934713408
    %v4727 = vunpack.c.0.s8 %v4726
    %v4728 = vperm.slane %v4724, %v4727
    %v4729 = vrot.slane %v4728, 4
    %v4730 = vsel %vm983, 0.0, %v4729
    %4731 = vmatpush.msra.mxu0 %v426
    %4732 = vmatpush.msra.mxu0 %v425
    %4733 = vmatpush.msra.mxu0 %v424
    %4734 = vmatpush.msra.mxu0 %v423
    %4735 = vmatpush.msra.mxu0 %v422
    %4736 = vmatpush.msra.mxu0 %v421
    %4737 = vmatpush.msra.mxu0 %v420
    %4738 = vmatpush.msra.mxu0 %v419
    %4739 = vmatpush.msra.mxu0 %v418
    %4740 = vmatpush.msra.mxu0 %v417
    %4741 = vmatpush.msra.mxu0 %v416
    %4742 = vmatpush.msra.mxu0 %v415
    %4743 = vmatpush.msra.mxu0 %v414
    %4744 = vmatpush.msra.mxu0 %v413
    %4745 = vmatpush.msra.mxu0 %v412
    %4746 = vmatpush.msra.mxu0 %v411
    %4747 = vmatmul.f32.gmra.mxu0 %v4630
    %v4748 = vpop.f32.mrf.mxu0
    %v4749 = vadd.f32 0.0, %v4748
    %4750 = vdwg.mxu0
    %4752 = vrot.lane.b32.xlu0 %v4749, 96
    %v4753 = vpop.permute.xlu0 %4752
    %4755 = vrot.lane.b32.xlu0 %v4749, 64
    %v4756 = vpop.permute.xlu0 %4755
    %4758 = vrot.lane.b32.xlu0 %v4749, 32
    %v4759 = vpop.permute.xlu0 %4758
    %v4761 = vrot.slane %v4756, 4
    %v4762 = vsel %vm983, %v4761, %v4749
    %v4764 = vunpack.c.l.s4 1983009808
    %v4765 = vunpack.c.0.s8 %v4764
    %v4766 = vperm.slane %v4762, %v4765
    %v4767 = vrot.slane %v4759, 4
    %v4768 = vsel %vm983, %v4767, %v4753
    %v4770 = vunpack.c.l.s4 1983009808
    %v4771 = vunpack.c.0.s8 %v4770
    %v4772 = vperm.slane %v4768, %v4771
    %v4773 = vrot.slane %v4772, 4
    %v4774 = vsel %vm983, %v4773, %v4766
    %v4776 = vunpack.c.l.s4 1934713408
    %v4777 = vunpack.c.0.s8 %v4776
    %v4778 = vperm.slane %v4774, %v4777
    %v4779 = vrot.slane %v4778, 4
    %v4780 = vsel %vm983, 0.0, %v4779
    %v4782 = vsel %vm1103, %v4678, 0
    %v4785 = vsel %vm1103, %v4728, 0
    %4787 = vmatpush.xpose.msra.mxu0 0.0
    %4788 = vmatpush.xpose.msra.mxu0 0.0
    %4789 = vmatpush.xpose.msra.mxu0 0.0
    %4790 = vmatpush.xpose.msra.mxu0 0.0
    %4791 = vmatpush.xpose.msra.mxu0 0.0
    %4792 = vmatpush.xpose.msra.mxu0 0.0
    %4793 = vmatpush.xpose.msra.mxu0 0.0
    %4794 = vmatpush.xpose.msra.mxu0 0.0
    %4795 = vmatpush.xpose.msra.mxu0 0.0
    %4796 = vmatpush.xpose.msra.mxu0 0.0
    %4797 = vmatpush.xpose.msra.mxu0 0.0
    %4798 = vmatpush.xpose.msra.mxu0 0.0
    %4799 = vmatpush.xpose.msra.mxu0 0.0
    %4800 = vmatpush.xpose.msra.mxu0 0.0
    %4801 = vmatpush.xpose.msra.mxu0 0.0
    %4802 = vmatpush.xpose.msra.mxu0 %v4785
    %4803 = vmatmul.f32.gmra.mxu0 %v4782
    %v4804 = vpop.f32.mrf.mxu0
    %v4805 = vadd.f32 0.0, %v4804
    %4806 = vdwg.mxu0
    %v4808 = vsel %vm1103, %v4680, 0
    %v4811 = vsel %vm1103, %v4730, 0
    %4813 = vmatpush.xpose.msra.mxu0 0.0
    %4814 = vmatpush.xpose.msra.mxu0 0.0
    %4815 = vmatpush.xpose.msra.mxu0 0.0
    %4816 = vmatpush.xpose.msra.mxu0 0.0
    %4817 = vmatpush.xpose.msra.mxu0 0.0
    %4818 = vmatpush.xpose.msra.mxu0 0.0
    %4819 = vmatpush.xpose.msra.mxu0 0.0
    %4820 = vmatpush.xpose.msra.mxu0 0.0
    %4821 = vmatpush.xpose.msra.mxu0 0.0
    %4822 = vmatpush.xpose.msra.mxu0 0.0
    %4823 = vmatpush.xpose.msra.mxu0 0.0
    %4824 = vmatpush.xpose.msra.mxu0 0.0
    %4825 = vmatpush.xpose.msra.mxu0 0.0
    %4826 = vmatpush.xpose.msra.mxu0 0.0
    %4827 = vmatpush.xpose.msra.mxu0 0.0
    %4828 = vmatpush.xpose.msra.mxu0 %v4811
    %4829 = vmatmul.f32.gmra.mxu0 %v4808
    %v4830 = vpop.f32.mrf.mxu0
    %v4831 = vadd.f32 0.0, %v4830
    %4832 = vdwg.mxu0
    %v4833 = vmul.f32 %v4805, 0.25
    %v4834 = vmul.f32 %v4831, 0.25
    %v4835 = vsel %vm556, %v4833, -inf
    %4836 = vmax.xlane.f32.xlu0 %v4835
    %v4837 = vpop.xlane.xlu0 %4836
    %v4838 = vsel %vm556, %v4834, -inf
    %4839 = vmax.xlane.f32.xlu0 %v4838
    %v4840 = vpop.xlane.xlu0 %4839
    %v4841 = vsub.f32 %v4833, %v4837
    %v4842 = vsub.f32 %v4834, %v4840
    %v4843 = vmul.f32 %v4841, 1.442695
    %v4844 = vpow.pop %v4843
    %v4845 = vmul.f32 %v4842, 1.442695
    %v4846 = vpow.pop %v4845
    %v4847 = vsel %vm556, %v4844, 0.0
    %4848 = vadd.xlane.f32.xlu0 %v4847
    %v4849 = vpop.xlane.xlu0 %4848
    %v4850 = vsel %vm556, %v4846, 0.0
    %4851 = vadd.xlane.f32.xlu0 %v4850
    %v4852 = vpop.xlane.xlu0 %4851
    %v4853 = vrcp.pop %v4849
    %v4854 = vmul.f32 %v4849, %v4853
    %v4855 = vsub.f32 1.0, %v4854
    %v4856 = vmul.f32 %v4853, %v4855
    %v4857 = vadd.f32 %v4853, %v4856
    %vm4858 = vweird.f32 %v4849
    %vm4859 = vweird.f32 %v4853
    %vm4860 = vmor %vm4858, %vm4859
    %v4861 = vsel %vm4860, %v4853, %v4857
    %v4862 = vand.u32 2147483647, %v4849
    %vm4863 = vcmp.eq.f32.partialorder %v4862, 8.507059e+37
    %v4864 = vand.u32 %v4849, 2147483648
    %v4865 = vor.u32 1.1754944e-38, %v4864
    %v4866 = vsel %vm4863, %v4865, %v4861
    %v4867 = vmul.f32 %v4844, %v4866
    %v4868 = vrcp.pop %v4852
    %v4869 = vmul.f32 %v4852, %v4868
    %v4870 = vsub.f32 1.0, %v4869
    %v4871 = vmul.f32 %v4868, %v4870
    %v4872 = vadd.f32 %v4868, %v4871
    %vm4873 = vweird.f32 %v4852
    %vm4874 = vweird.f32 %v4868
    %vm4875 = vmor %vm4873, %vm4874
    %v4876 = vsel %vm4875, %v4868, %v4872
    %v4877 = vand.u32 2147483647, %v4852
    %vm4878 = vcmp.eq.f32.partialorder %v4877, 8.507059e+37
    %v4879 = vand.u32 %v4852, 2147483648
    %v4880 = vor.u32 1.1754944e-38, %v4879
    %v4881 = vsel %vm4878, %v4880, %v4876
    %v4882 = vmul.f32 %v4846, %v4881
    %v4884 = vsel %vm660, %v4867, 0
    %v4887 = vsel %vm663, %v4778, 0
    %4889 = vmatpush.msra.mxu0 0.0
    %4890 = vmatpush.msra.mxu0 0.0
    %4891 = vmatpush.msra.mxu0 0.0
    %4892 = vmatpush.msra.mxu0 0.0
    %4893 = vmatpush.msra.mxu0 0.0
    %4894 = vmatpush.msra.mxu0 0.0
    %4895 = vmatpush.msra.mxu0 0.0
    %4896 = vmatpush.msra.mxu0 0.0
    %4897 = vmatpush.msra.mxu0 0.0
    %4898 = vmatpush.msra.mxu0 0.0
    %4899 = vmatpush.msra.mxu0 0.0
    %4900 = vmatpush.msra.mxu0 0.0
    %4901 = vmatpush.msra.mxu0 0.0
    %4902 = vmatpush.msra.mxu0 0.0
    %4903 = vmatpush.msra.mxu0 0.0
    %4904 = vmatpush.msra.mxu0 %v4887
    %4905 = vmatmul.f32.gmra.mxu0 %v4884
    %v4906 = vpop.f32.mrf.mxu0
    %v4907 = vadd.f32 0.0, %v4906
    %4908 = vdwg.mxu0
    %v4910 = vsel %vm660, %v4882, 0
    %v4913 = vsel %vm663, %v4780, 0
    %4915 = vmatpush.msra.mxu0 0.0
    %4916 = vmatpush.msra.mxu0 0.0
    %4917 = vmatpush.msra.mxu0 0.0
    %4918 = vmatpush.msra.mxu0 0.0
    %4919 = vmatpush.msra.mxu0 0.0
    %4920 = vmatpush.msra.mxu0 0.0
    %4921 = vmatpush.msra.mxu0 0.0
    %4922 = vmatpush.msra.mxu0 0.0
    %4923 = vmatpush.msra.mxu0 0.0
    %4924 = vmatpush.msra.mxu0 0.0
    %4925 = vmatpush.msra.mxu0 0.0
    %4926 = vmatpush.msra.mxu0 0.0
    %4927 = vmatpush.msra.mxu0 0.0
    %4928 = vmatpush.msra.mxu0 0.0
    %4929 = vmatpush.msra.mxu0 0.0
    %4930 = vmatpush.msra.mxu0 %v4913
    %4931 = vmatmul.f32.gmra.mxu0 %v4910
    %v4932 = vpop.f32.mrf.mxu0
    %v4933 = vadd.f32 0.0, %v4932
    %4934 = vdwg.mxu0
    %v4936 = vunpack.c.l.s4 1983009808
    %v4937 = vunpack.c.0.s8 %v4936
    %v4938 = vperm.slane %v4907, %v4937
    %v4940 = vunpack.c.l.s4 1983009808
    %v4941 = vunpack.c.0.s8 %v4940
    %v4942 = vperm.slane %v4933, %v4941
    %v4943 = vrot.slane %v4942, 4
    %v4944 = vsel %vm983, %v4943, %v4938
    %v4945 = vrot.slane %v4938, 4
    %v4946 = vsel %vm983, %v4942, %v4945
    %v4948 = vunpack.c.l.s4 1934713408
    %v4949 = vunpack.c.0.s8 %v4948
    %v4950 = vperm.slane %v4944, %v4949
    %v4952 = vunpack.c.l.s4 1934713408
    %v4953 = vunpack.c.0.s8 %v4952
    %v4954 = vperm.slane %v4946, %v4953
    %v4955 = vrot.slane %v4950, 4
    %v4956 = vsel %vm983, 0.0, %v4955
    %v4957 = vrot.slane %v4954, 4
    %v4958 = vsel %vm983, 0.0, %v4957
    %4960 = vrot.lane.b32.xlu0 %v4956, 32
    %v4961 = vpop.permute.xlu0 %4960
    %4964 = vrot.lane.b32.xlu0 %v4954, 64
    %v4965 = vpop.permute.xlu0 %4964
    %4968 = vrot.lane.b32.xlu0 %v4958, 96
    %v4969 = vpop.permute.xlu0 %4968
    %v4971 = vsel %vm1294, %v4950, %v4961
    %v4972 = vsel %vm805, %v4971, %v4965
    %v4973 = vsel %vm1297, %v4972, %v4969
    %4974 = vmatpush.msra.mxu0 %v378
    %4975 = vmatpush.msra.mxu0 %v377
    %4976 = vmatpush.msra.mxu0 %v376
    %4977 = vmatpush.msra.mxu0 %v375
    %4978 = vmatpush.msra.mxu0 %v374
    %4979 = vmatpush.msra.mxu0 %v373
    %4980 = vmatpush.msra.mxu0 %v372
    %4981 = vmatpush.msra.mxu0 %v371
    %4982 = vmatpush.msra.mxu0 %v370
    %4983 = vmatpush.msra.mxu0 %v369
    %4984 = vmatpush.msra.mxu0 %v368
    %4985 = vmatpush.msra.mxu0 %v367
    %4986 = vmatpush.msra.mxu0 %v366
    %4987 = vmatpush.msra.mxu0 %v365
    %4988 = vmatpush.msra.mxu0 %v364
    %4989 = vmatpush.msra.mxu0 %v363
    %4990 = vmatmul.f32.gmra.mxu0 %v4630
    %v4991 = vpop.f32.mrf.mxu0
    %v4992 = vadd.f32 0.0, %v4991
    %4993 = vdwg.mxu0
    %4995 = vrot.lane.b32.xlu0 %v4992, 112
    %v4996 = vpop.permute.xlu0 %4995
    %4998 = vrot.lane.b32.xlu0 %v4992, 96
    %v4999 = vpop.permute.xlu0 %4998
    %5001 = vrot.lane.b32.xlu0 %v4992, 80
    %v5002 = vpop.permute.xlu0 %5001
    %v5004 = vrot.slane %v4999, 4
    %v5005 = vsel %vm983, %v5004, %v4992
    %v5007 = vunpack.c.l.s4 1983009808
    %v5008 = vunpack.c.0.s8 %v5007
    %v5009 = vperm.slane %v5005, %v5008
    %v5010 = vrot.slane %v5002, 4
    %v5011 = vsel %vm983, %v5010, %v4996
    %v5013 = vunpack.c.l.s4 1983009808
    %v5014 = vunpack.c.0.s8 %v5013
    %v5015 = vperm.slane %v5011, %v5014
    %v5016 = vrot.slane %v5015, 4
    %v5017 = vsel %vm983, %v5016, %v5009
    %v5019 = vunpack.c.l.s4 1934713408
    %v5020 = vunpack.c.0.s8 %v5019
    %v5021 = vperm.slane %v5017, %v5020
    %v5022 = vrot.slane %v5021, 4
    %v5023 = vsel %vm983, 0.0, %v5022
    %5024 = vmatpush.msra.mxu0 %v410
    %5025 = vmatpush.msra.mxu0 %v409
    %5026 = vmatpush.msra.mxu0 %v408
    %5027 = vmatpush.msra.mxu0 %v407
    %5028 = vmatpush.msra.mxu0 %v406
    %5029 = vmatpush.msra.mxu0 %v405
    %5030 = vmatpush.msra.mxu0 %v404
    %5031 = vmatpush.msra.mxu0 %v403
    %5032 = vmatpush.msra.mxu0 %v402
    %5033 = vmatpush.msra.mxu0 %v401
    %5034 = vmatpush.msra.mxu0 %v400
    %5035 = vmatpush.msra.mxu0 %v399
    %5036 = vmatpush.msra.mxu0 %v398
    %5037 = vmatpush.msra.mxu0 %v397
    %5038 = vmatpush.msra.mxu0 %v396
    %5039 = vmatpush.msra.mxu0 %v395
    %5040 = vmatmul.f32.gmra.mxu0 %v4630
    %v5041 = vpop.f32.mrf.mxu0
    %v5042 = vadd.f32 0.0, %v5041
    %5043 = vdwg.mxu0
    %5045 = vrot.lane.b32.xlu0 %v5042, 112
    %v5046 = vpop.permute.xlu0 %5045
    %5048 = vrot.lane.b32.xlu0 %v5042, 96
    %v5049 = vpop.permute.xlu0 %5048
    %5051 = vrot.lane.b32.xlu0 %v5042, 80
    %v5052 = vpop.permute.xlu0 %5051
    %v5054 = vrot.slane %v5049, 4
    %v5055 = vsel %vm983, %v5054, %v5042
    %v5057 = vunpack.c.l.s4 1983009808
    %v5058 = vunpack.c.0.s8 %v5057
    %v5059 = vperm.slane %v5055, %v5058
    %v5060 = vrot.slane %v5052, 4
    %v5061 = vsel %vm983, %v5060, %v5046
    %v5063 = vunpack.c.l.s4 1983009808
    %v5064 = vunpack.c.0.s8 %v5063
    %v5065 = vperm.slane %v5061, %v5064
    %v5066 = vrot.slane %v5065, 4
    %v5067 = vsel %vm983, %v5066, %v5059
    %v5069 = vunpack.c.l.s4 1934713408
    %v5070 = vunpack.c.0.s8 %v5069
    %v5071 = vperm.slane %v5067, %v5070
    %v5072 = vrot.slane %v5071, 4
    %v5073 = vsel %vm983, 0.0, %v5072
    %5074 = vmatpush.msra.mxu0 %v442
    %5075 = vmatpush.msra.mxu0 %v441
    %5076 = vmatpush.msra.mxu0 %v440
    %5077 = vmatpush.msra.mxu0 %v439
    %5078 = vmatpush.msra.mxu0 %v438
    %5079 = vmatpush.msra.mxu0 %v437
    %5080 = vmatpush.msra.mxu0 %v436
    %5081 = vmatpush.msra.mxu0 %v435
    %5082 = vmatpush.msra.mxu0 %v434
    %5083 = vmatpush.msra.mxu0 %v433
    %5084 = vmatpush.msra.mxu0 %v432
    %5085 = vmatpush.msra.mxu0 %v431
    %5086 = vmatpush.msra.mxu0 %v430
    %5087 = vmatpush.msra.mxu0 %v429
    %5088 = vmatpush.msra.mxu0 %v428
    %5089 = vmatpush.msra.mxu0 %v427
    %5090 = vmatmul.f32.gmra.mxu0 %v4630
    %v5091 = vpop.f32.mrf.mxu0
    %v5092 = vadd.f32 0.0, %v5091
    %5093 = vdwg.mxu0
    %5095 = vrot.lane.b32.xlu0 %v5092, 96
    %v5096 = vpop.permute.xlu0 %5095
    %5098 = vrot.lane.b32.xlu0 %v5092, 64
    %v5099 = vpop.permute.xlu0 %5098
    %5101 = vrot.lane.b32.xlu0 %v5092, 32
    %v5102 = vpop.permute.xlu0 %5101
    %v5104 = vrot.slane %v5099, 4
    %v5105 = vsel %vm983, %v5104, %v5092
    %v5107 = vunpack.c.l.s4 1983009808
    %v5108 = vunpack.c.0.s8 %v5107
    %v5109 = vperm.slane %v5105, %v5108
    %v5110 = vrot.slane %v5102, 4
    %v5111 = vsel %vm983, %v5110, %v5096
    %v5113 = vunpack.c.l.s4 1983009808
    %v5114 = vunpack.c.0.s8 %v5113
    %v5115 = vperm.slane %v5111, %v5114
    %v5116 = vrot.slane %v5115, 4
    %v5117 = vsel %vm983, %v5116, %v5109
    %v5119 = vunpack.c.l.s4 1934713408
    %v5120 = vunpack.c.0.s8 %v5119
    %v5121 = vperm.slane %v5117, %v5120
    %v5122 = vrot.slane %v5121, 4
    %v5123 = vsel %vm983, 0.0, %v5122
    %v5125 = vsel %vm1103, %v5021, 0
    %v5128 = vsel %vm1103, %v5071, 0
    %5130 = vmatpush.xpose.msra.mxu0 0.0
    %5131 = vmatpush.xpose.msra.mxu0 0.0
    %5132 = vmatpush.xpose.msra.mxu0 0.0
    %5133 = vmatpush.xpose.msra.mxu0 0.0
    %5134 = vmatpush.xpose.msra.mxu0 0.0
    %5135 = vmatpush.xpose.msra.mxu0 0.0
    %5136 = vmatpush.xpose.msra.mxu0 0.0
    %5137 = vmatpush.xpose.msra.mxu0 0.0
    %5138 = vmatpush.xpose.msra.mxu0 0.0
    %5139 = vmatpush.xpose.msra.mxu0 0.0
    %5140 = vmatpush.xpose.msra.mxu0 0.0
    %5141 = vmatpush.xpose.msra.mxu0 0.0
    %5142 = vmatpush.xpose.msra.mxu0 0.0
    %5143 = vmatpush.xpose.msra.mxu0 0.0
    %5144 = vmatpush.xpose.msra.mxu0 0.0
    %5145 = vmatpush.xpose.msra.mxu0 %v5128
    %5146 = vmatmul.f32.gmra.mxu0 %v5125
    %v5147 = vpop.f32.mrf.mxu0
    %v5148 = vadd.f32 0.0, %v5147
    %5149 = vdwg.mxu0
    %v5151 = vsel %vm1103, %v5023, 0
    %v5154 = vsel %vm1103, %v5073, 0
    %5156 = vmatpush.xpose.msra.mxu0 0.0
    %5157 = vmatpush.xpose.msra.mxu0 0.0
    %5158 = vmatpush.xpose.msra.mxu0 0.0
    %5159 = vmatpush.xpose.msra.mxu0 0.0
    %5160 = vmatpush.xpose.msra.mxu0 0.0
    %5161 = vmatpush.xpose.msra.mxu0 0.0
    %5162 = vmatpush.xpose.msra.mxu0 0.0
    %5163 = vmatpush.xpose.msra.mxu0 0.0
    %5164 = vmatpush.xpose.msra.mxu0 0.0
    %5165 = vmatpush.xpose.msra.mxu0 0.0
    %5166 = vmatpush.xpose.msra.mxu0 0.0
    %5167 = vmatpush.xpose.msra.mxu0 0.0
    %5168 = vmatpush.xpose.msra.mxu0 0.0
    %5169 = vmatpush.xpose.msra.mxu0 0.0
    %5170 = vmatpush.xpose.msra.mxu0 0.0
    %5171 = vmatpush.xpose.msra.mxu0 %v5154
    %5172 = vmatmul.f32.gmra.mxu0 %v5151
    %v5173 = vpop.f32.mrf.mxu0
    %v5174 = vadd.f32 0.0, %v5173
    %5175 = vdwg.mxu0
    %v5176 = vmul.f32 %v5148, 0.25
    %v5177 = vmul.f32 %v5174, 0.25
    %v5178 = vsel %vm556, %v5176, -inf
    %5179 = vmax.xlane.f32.xlu0 %v5178
    %v5180 = vpop.xlane.xlu0 %5179
    %v5181 = vsel %vm556, %v5177, -inf
    %5182 = vmax.xlane.f32.xlu0 %v5181
    %v5183 = vpop.xlane.xlu0 %5182
    %v5184 = vsub.f32 %v5176, %v5180
    %v5185 = vsub.f32 %v5177, %v5183
    %v5186 = vmul.f32 %v5184, 1.442695
    %v5187 = vpow.pop %v5186
    %v5188 = vmul.f32 %v5185, 1.442695
    %v5189 = vpow.pop %v5188
    %v5190 = vsel %vm556, %v5187, 0.0
    %5191 = vadd.xlane.f32.xlu0 %v5190
    %v5192 = vpop.xlane.xlu0 %5191
    %v5193 = vsel %vm556, %v5189, 0.0
    %5194 = vadd.xlane.f32.xlu0 %v5193
    %v5195 = vpop.xlane.xlu0 %5194
    %v5196 = vrcp.pop %v5192
    %v5197 = vmul.f32 %v5192, %v5196
    %v5198 = vsub.f32 1.0, %v5197
    %v5199 = vmul.f32 %v5196, %v5198
    %v5200 = vadd.f32 %v5196, %v5199
    %vm5201 = vweird.f32 %v5192
    %vm5202 = vweird.f32 %v5196
    %vm5203 = vmor %vm5201, %vm5202
    %v5204 = vsel %vm5203, %v5196, %v5200
    %v5205 = vand.u32 2147483647, %v5192
    %vm5206 = vcmp.eq.f32.partialorder %v5205, 8.507059e+37
    %v5207 = vand.u32 %v5192, 2147483648
    %v5208 = vor.u32 1.1754944e-38, %v5207
    %v5209 = vsel %vm5206, %v5208, %v5204
    %v5210 = vmul.f32 %v5187, %v5209
    %v5211 = vrcp.pop %v5195
    %v5212 = vmul.f32 %v5195, %v5211
    %v5213 = vsub.f32 1.0, %v5212
    %v5214 = vmul.f32 %v5211, %v5213
    %v5215 = vadd.f32 %v5211, %v5214
    %vm5216 = vweird.f32 %v5195
    %vm5217 = vweird.f32 %v5211
    %vm5218 = vmor %vm5216, %vm5217
    %v5219 = vsel %vm5218, %v5211, %v5215
    %v5220 = vand.u32 2147483647, %v5195
    %vm5221 = vcmp.eq.f32.partialorder %v5220, 8.507059e+37
    %v5222 = vand.u32 %v5195, 2147483648
    %v5223 = vor.u32 1.1754944e-38, %v5222
    %v5224 = vsel %vm5221, %v5223, %v5219
    %v5225 = vmul.f32 %v5189, %v5224
    %v5227 = vsel %vm660, %v5210, 0
    %v5230 = vsel %vm663, %v5121, 0
    %5232 = vmatpush.msra.mxu0 0.0
    %5233 = vmatpush.msra.mxu0 0.0
    %5234 = vmatpush.msra.mxu0 0.0
    %5235 = vmatpush.msra.mxu0 0.0
    %5236 = vmatpush.msra.mxu0 0.0
    %5237 = vmatpush.msra.mxu0 0.0
    %5238 = vmatpush.msra.mxu0 0.0
    %5239 = vmatpush.msra.mxu0 0.0
    %5240 = vmatpush.msra.mxu0 0.0
    %5241 = vmatpush.msra.mxu0 0.0
    %5242 = vmatpush.msra.mxu0 0.0
    %5243 = vmatpush.msra.mxu0 0.0
    %5244 = vmatpush.msra.mxu0 0.0
    %5245 = vmatpush.msra.mxu0 0.0
    %5246 = vmatpush.msra.mxu0 0.0
    %5247 = vmatpush.msra.mxu0 %v5230
    %5248 = vmatmul.f32.gmra.mxu0 %v5227
    %v5249 = vpop.f32.mrf.mxu0
    %v5250 = vadd.f32 0.0, %v5249
    %5251 = vdwg.mxu0
    %v5253 = vsel %vm660, %v5225, 0
    %v5256 = vsel %vm663, %v5123, 0
    %5258 = vmatpush.msra.mxu0 0.0
    %5259 = vmatpush.msra.mxu0 0.0
    %5260 = vmatpush.msra.mxu0 0.0
    %5261 = vmatpush.msra.mxu0 0.0
    %5262 = vmatpush.msra.mxu0 0.0
    %5263 = vmatpush.msra.mxu0 0.0
    %5264 = vmatpush.msra.mxu0 0.0
    %5265 = vmatpush.msra.mxu0 0.0
    %5266 = vmatpush.msra.mxu0 0.0
    %5267 = vmatpush.msra.mxu0 0.0
    %5268 = vmatpush.msra.mxu0 0.0
    %5269 = vmatpush.msra.mxu0 0.0
    %5270 = vmatpush.msra.mxu0 0.0
    %5271 = vmatpush.msra.mxu0 0.0
    %5272 = vmatpush.msra.mxu0 0.0
    %5273 = vmatpush.msra.mxu0 %v5256
    %5274 = vmatmul.f32.gmra.mxu0 %v5253
    %v5275 = vpop.f32.mrf.mxu0
    %v5276 = vadd.f32 0.0, %v5275
    %5277 = vdwg.mxu0
    %v5279 = vunpack.c.l.s4 1983009808
    %v5280 = vunpack.c.0.s8 %v5279
    %v5281 = vperm.slane %v5250, %v5280
    %v5283 = vunpack.c.l.s4 1983009808
    %v5284 = vunpack.c.0.s8 %v5283
    %v5285 = vperm.slane %v5276, %v5284
    %v5286 = vrot.slane %v5285, 4
    %v5287 = vsel %vm983, %v5286, %v5281
    %v5288 = vrot.slane %v5281, 4
    %v5289 = vsel %vm983, %v5285, %v5288
    %v5291 = vunpack.c.l.s4 1934713408
    %v5292 = vunpack.c.0.s8 %v5291
    %v5293 = vperm.slane %v5287, %v5292
    %v5295 = vunpack.c.l.s4 1934713408
    %v5296 = vunpack.c.0.s8 %v5295
    %v5297 = vperm.slane %v5289, %v5296
    %v5298 = vrot.slane %v5293, 4
    %v5299 = vsel %vm983, 0.0, %v5298
    %v5300 = vrot.slane %v5297, 4
    %v5301 = vsel %vm983, 0.0, %v5300
    %5303 = vrot.lane.b32.xlu0 %v5299, 32
    %v5304 = vpop.permute.xlu0 %5303
    %5307 = vrot.lane.b32.xlu0 %v5297, 64
    %v5308 = vpop.permute.xlu0 %5307
    %5311 = vrot.lane.b32.xlu0 %v5301, 96
    %v5312 = vpop.permute.xlu0 %5311
    %v5314 = vsel %vm1294, %v5293, %v5304
    %v5315 = vsel %vm805, %v5314, %v5308
    %v5316 = vsel %vm1297, %v5315, %v5312
    %5317 = vmatpush.msra.mxu0 %v474
    %5318 = vmatpush.msra.mxu0 %v473
    %5319 = vmatpush.msra.mxu0 %v472
    %5320 = vmatpush.msra.mxu0 %v471
    %5321 = vmatpush.msra.mxu0 %v470
    %5322 = vmatpush.msra.mxu0 %v469
    %5323 = vmatpush.msra.mxu0 %v468
    %5324 = vmatpush.msra.mxu0 %v467
    %5325 = vmatpush.msra.mxu0 %v466
    %5326 = vmatpush.msra.mxu0 %v465
    %5327 = vmatpush.msra.mxu0 %v464
    %5328 = vmatpush.msra.mxu0 %v463
    %5329 = vmatpush.msra.mxu0 %v462
    %5330 = vmatpush.msra.mxu0 %v461
    %5331 = vmatpush.msra.mxu0 %v460
    %5332 = vmatpush.msra.mxu0 %v459
    %5333 = vmatmul.f32.gmra.mxu0 %v5316
    %v5334 = vpop.f32.mrf.mxu0
    %v5335 = vadd.f32 0.0, %v5334
    %5336 = vdwg.mxu0
    %5337 = vmatpush.msra.mxu0 %v458
    %5338 = vmatpush.msra.mxu0 %v457
    %5339 = vmatpush.msra.mxu0 %v456
    %5340 = vmatpush.msra.mxu0 %v455
    %5341 = vmatpush.msra.mxu0 %v454
    %5342 = vmatpush.msra.mxu0 %v453
    %5343 = vmatpush.msra.mxu0 %v452
    %5344 = vmatpush.msra.mxu0 %v451
    %5345 = vmatpush.msra.mxu0 %v450
    %5346 = vmatpush.msra.mxu0 %v449
    %5347 = vmatpush.msra.mxu0 %v448
    %5348 = vmatpush.msra.mxu0 %v447
    %5349 = vmatpush.msra.mxu0 %v446
    %5350 = vmatpush.msra.mxu0 %v445
    %5351 = vmatpush.msra.mxu0 %v444
    %5352 = vmatpush.msra.mxu0 %v443
    %5353 = vmatmul.f32.gmra.mxu0 %v4973
    %v5354 = vpop.f32.mrf.mxu0
    %v5355 = vadd.f32 %v5335, %v5354
    %5356 = vdwg.mxu0
    %v5357 = vadd.f32 %v5355, %v4630
    %v5360 = vperm.slane %v4274, %v540
    %v5361 = vperm.slane %v4275, %v540
    %v5362 = vsel %vm658, %v5361, %v5360
    %v5363 = vsel %vm660, %v5362, 0
    %5365 = vmatpush.msra.mxu0 0.0
    %5366 = vmatpush.msra.mxu0 0.0
    %5367 = vmatpush.msra.mxu0 0.0
    %5368 = vmatpush.msra.mxu0 0.0
    %5369 = vmatpush.msra.mxu0 0.0
    %5370 = vmatpush.msra.mxu0 0.0
    %5371 = vmatpush.msra.mxu0 0.0
    %5372 = vmatpush.msra.mxu0 0.0
    %5373 = vmatpush.msra.mxu0 0.0
    %5374 = vmatpush.msra.mxu0 0.0
    %5375 = vmatpush.msra.mxu0 0.0
    %5376 = vmatpush.msra.mxu0 0.0
    %5377 = vmatpush.msra.mxu0 0.0
    %5378 = vmatpush.msra.mxu0 0.0
    %5379 = vmatpush.msra.mxu0 0.0
    %5380 = vmatpush.msra.mxu0 %v1691
    %5381 = vmatmul.f32.gmra.mxu0 %v5363
    %v5382 = vpop.f32.mrf.mxu0
    %v5383 = vadd.f32 0.0, %v5382
    %5384 = vdwg.mxu0
    %v5385 = vmul.f32 %v5383, %v5357
    %v5386 = vsub.f32 1.0, %v5383
    %v5387 = vmul.f32 %v5386, %v4165
    %v5388 = vadd.f32 %v5385, %v5387
    %v5389 = vmul.f32 %v5383, %v4628
    %v5390 = vmul.f32 %v5386, %v4168
    %v5391 = vadd.f32 %v5389, %v5390
    %v5392 = vmul.f32 %v5388, %v157
    %5393 = vmatpush.msra.mxu0 %v247
    %5394 = vmatpush.msra.mxu0 %v246
    %5395 = vmatpush.msra.mxu0 %v245
    %5396 = vmatpush.msra.mxu0 %v244
    %5397 = vmatpush.msra.mxu0 %v243
    %5398 = vmatpush.msra.mxu0 %v242
    %5399 = vmatpush.msra.mxu0 %v241
    %5400 = vmatpush.msra.mxu0 %v240
    %5401 = vmatpush.msra.mxu0 %v239
    %5402 = vmatpush.msra.mxu0 %v238
    %5403 = vmatpush.msra.mxu0 %v237
    %5404 = vmatpush.msra.mxu0 %v236
    %5405 = vmatpush.msra.mxu0 %v235
    %5406 = vmatpush.msra.mxu0 %v234
    %5407 = vmatpush.msra.mxu0 %v233
    %5408 = vmatpush.msra.mxu0 %v232
    %5409 = vmatmul.f32.gmra.mxu0 %v5392
    %v5410 = vpop.f32.mrf.mxu0
    %v5411 = vadd.f32 %v185, %v5410
    %5412 = vdwg.mxu0
    %5413 = vmatpush.msra.mxu0 %v230
    %5414 = vmatpush.msra.mxu0 %v229
    %5415 = vmatpush.msra.mxu0 %v228
    %5416 = vmatpush.msra.mxu0 %v227
    %5417 = vmatpush.msra.mxu0 %v226
    %5418 = vmatpush.msra.mxu0 %v225
    %5419 = vmatpush.msra.mxu0 %v224
    %5420 = vmatpush.msra.mxu0 %v223
    %5421 = vmatpush.msra.mxu0 %v222
    %5422 = vmatpush.msra.mxu0 %v221
    %5423 = vmatpush.msra.mxu0 %v220
    %5424 = vmatpush.msra.mxu0 %v219
    %5425 = vmatpush.msra.mxu0 %v218
    %5426 = vmatpush.msra.mxu0 %v217
    %5427 = vmatpush.msra.mxu0 %v216
    %5428 = vmatpush.msra.mxu0 %v215
    %5429 = vmatmul.f32.gmra.mxu0 %v5388
    %v5430 = vpop.f32.mrf.mxu0
    %v5431 = vadd.f32 %v499, %v5430
    %5432 = vdwg.mxu0
    %v5433 = vperm.slane %v5411, 0
    %v5434 = vlaneseq
    %v5435 = vshrl.u32 %v5434, 7
    %5437 = vset.pattern.permute.xlu0 %v5435
    %5438 = vperm.xlu0 %5437, %v5433
    %v5439 = vpop.permute.xlu0 %5438
    %v5440 = vperm.slane %v5411, 1
    %v5441 = vlaneseq
    %v5442 = vshrl.u32 %v5441, 7
    %5444 = vset.pattern.permute.xlu0 %v5442
    %5445 = vperm.xlu0 %5444, %v5440
    %v5446 = vpop.permute.xlu0 %5445
    %v5448 = vrot.slane %v5411, 1
    %v5449 = vperm.slane %v5411, 0
    %v5450 = vperm.slane %v5448, 0
    %vm5453 = vcmp.gt.f32.partialorder %v5449, %v5439
    %vm5454 = vcmp.gt.f32.partialorder %v5450, %v5446
    %vm5455 = vcmp.eq.f32.partialorder %v5449, %v5439
    %vm5456 = vcmp.eq.f32.partialorder %v5450, %v5446
    %vm5457 = vmand %vm5455, %vm549
    %vm5458 = vmand %vm5456, %vm549
    %vm5459 = vmor %vm5453, %vm5457
    %vm5460 = vmor %vm5454, %vm5458
    %v5461 = vsel %vm5459, 1, 0
    %v5462 = vsel %vm5460, 1, 0
    %v5463 = vsel %vm556, %v5461, 0
    %v5464 = vand.u32 %v5463, 65535
    %v5465 = vshrl.u32 %v5463, 16
    %v5466 = vcvt.s32.f32 %v5464
    %v5467 = vcvt.s32.f32 %v5465
    %5468 = vadd.xlane.f32.xlu0 %v5466
    %v5469 = vpop.xlane.xlu0 %5468
    %5470 = vadd.xlane.f32.xlu0 %v5467
    %v5471 = vpop.xlane.xlu0 %5470
    %v5472 = vcvt.f32.s32 %v5469
    %v5473 = vcvt.f32.s32 %v5471
    %v5474 = vshll.u32 %v5473, 16
    %v5475 = vadd.s32 %v5474, %v5472
    %v5476 = vsel %vm556, %v5462, 0
    %v5477 = vand.u32 %v5476, 65535
    %v5478 = vshrl.u32 %v5476, 16
    %v5479 = vcvt.s32.f32 %v5477
    %v5480 = vcvt.s32.f32 %v5478
    %5481 = vadd.xlane.f32.xlu0 %v5479
    %v5482 = vpop.xlane.xlu0 %5481
    %5483 = vadd.xlane.f32.xlu0 %v5480
    %v5484 = vpop.xlane.xlu0 %5483
    %v5485 = vcvt.f32.s32 %v5482
    %v5486 = vcvt.f32.s32 %v5484
    %v5487 = vshll.u32 %v5486, 16
    %v5488 = vadd.s32 %v5487, %v5485
    %vm5489 = vcmp.lt.s32.totalorder %v5475, 2
    %vm5490 = vcmp.lt.s32.totalorder %v5488, 2
    %v5491 = vsel %vm5489, 1, 0
    %v5492 = vsel %vm5490, 1, 0
    %v5493 = vcvt.s32.f32 %v5491
    %v5494 = vcvt.s32.f32 %v5492
    %v5495 = vsub.f32 %v5411, %v5431
    %v5496 = vxor.u32 %v5495, 2147483648
    %v5497 = vmul.f32 %v5496, 1.442695
    %v5498 = vpow.pop %v5497
    %v5499 = vadd.f32 %v5498, 1.0
    %v5500 = vrcp.pop %v5499
    %v5501 = vmul.f32 %v5499, %v5500
    %v5502 = vsub.f32 1.0, %v5501
    %v5503 = vmul.f32 %v5500, %v5502
    %v5504 = vadd.f32 %v5500, %v5503
    %vm5505 = vweird.f32 %v5499
    %vm5506 = vweird.f32 %v5500
    %vm5507 = vmor %vm5505, %vm5506
    %v5508 = vsel %vm5507, %v5500, %v5504
    %v5509 = vand.u32 2147483647, %v5499
    %vm5510 = vcmp.eq.f32.partialorder %v5509, 8.507059e+37
    %v5511 = vand.u32 %v5499, 2147483648
    %v5512 = vor.u32 1.1754944e-38, %v5511
    %v5513 = vsel %vm5510, %v5512, %v5508
    %v5514 = vmul.f32 1.0, %v5513
    %v5516 = vperm.slane %v5514, 0
    %v5517 = vlaneseq
    %v5518 = vshrl.u32 %v5517, 7
    %5520 = vset.pattern.permute.xlu0 %v5518
    %5521 = vperm.xlu0 %5520, %v5516
    %v5522 = vpop.permute.xlu0 %5521
    %v5523 = vperm.slane %v5514, 1
    %v5524 = vlaneseq
    %v5525 = vshrl.u32 %v5524, 7
    %5527 = vset.pattern.permute.xlu0 %v5525
    %5528 = vperm.xlu0 %5527, %v5523
    %v5529 = vpop.permute.xlu0 %5528
    %v5532 = vmul.f32 %v5493, %v5522
    %v5533 = vmul.f32 %v5494, %v5529
    %v5534 = vsub.f32 1.0, %v5514
    %v5536 = vperm.slane %v5534, 0
    %v5537 = vlaneseq
    %v5538 = vshrl.u32 %v5537, 7
    %5540 = vset.pattern.permute.xlu0 %v5538
    %5541 = vperm.xlu0 %5540, %v5536
    %v5542 = vpop.permute.xlu0 %5541
    %v5543 = vperm.slane %v5534, 1
    %v5544 = vlaneseq
    %v5545 = vshrl.u32 %v5544, 7
    %5547 = vset.pattern.permute.xlu0 %v5545
    %5548 = vperm.xlu0 %5547, %v5543
    %v5549 = vpop.permute.xlu0 %5548
    %v5552 = vmul.f32 %v5493, %v5542
    %v5553 = vmul.f32 %v5494, %v5549
    %5556 = vset.pattern.permute.xlu0 0
    %5557 = vperm.xlu0 %5556, %v5532
    %v5558 = vpop.permute.xlu0 %5557
    %5559 = vset.pattern.permute.xlu0 0
    %5560 = vperm.xlu0 %5559, %v5533
    %v5561 = vpop.permute.xlu0 %5560
    %v5562 = vperm.slane %v5558, %v540
    %v5563 = vperm.slane %v5561, %v540
    %v5564 = vsel %vm658, %v5563, %v5562
    %v5565 = vsel %vm660, %v5564, 0
    %5567 = vmatpush.msra.mxu0 0.0
    %5568 = vmatpush.msra.mxu0 0.0
    %5569 = vmatpush.msra.mxu0 0.0
    %5570 = vmatpush.msra.mxu0 0.0
    %5571 = vmatpush.msra.mxu0 0.0
    %5572 = vmatpush.msra.mxu0 0.0
    %5573 = vmatpush.msra.mxu0 0.0
    %5574 = vmatpush.msra.mxu0 0.0
    %5575 = vmatpush.msra.mxu0 0.0
    %5576 = vmatpush.msra.mxu0 0.0
    %5577 = vmatpush.msra.mxu0 0.0
    %5578 = vmatpush.msra.mxu0 0.0
    %5579 = vmatpush.msra.mxu0 0.0
    %5580 = vmatpush.msra.mxu0 0.0
    %5581 = vmatpush.msra.mxu0 0.0
    %5582 = vmatpush.msra.mxu0 %v665
    %5583 = vmatmul.f32.gmra.mxu0 %v5565
    %v5584 = vpop.f32.mrf.mxu0
    %v5585 = vadd.f32 0.0, %v5584
    %5586 = vdwg.mxu0
    %v5587 = vmul.f32 %v5585, %v213
    %5590 = vset.pattern.permute.xlu0 0
    %5591 = vperm.xlu0 %5590, %v5552
    %v5592 = vpop.permute.xlu0 %5591
    %5593 = vset.pattern.permute.xlu0 0
    %5594 = vperm.xlu0 %5593, %v5553
    %v5595 = vpop.permute.xlu0 %5594
    %v5596 = vperm.slane %v5592, %v540
    %v5597 = vperm.slane %v5595, %v540
    %v5598 = vsel %vm658, %v5597, %v5596
    %v5599 = vsel %vm660, %v5598, 0
    %5601 = vmatpush.msra.mxu0 0.0
    %5602 = vmatpush.msra.mxu0 0.0
    %5603 = vmatpush.msra.mxu0 0.0
    %5604 = vmatpush.msra.mxu0 0.0
    %5605 = vmatpush.msra.mxu0 0.0
    %5606 = vmatpush.msra.mxu0 0.0
    %5607 = vmatpush.msra.mxu0 0.0
    %5608 = vmatpush.msra.mxu0 0.0
    %5609 = vmatpush.msra.mxu0 0.0
    %5610 = vmatpush.msra.mxu0 0.0
    %5611 = vmatpush.msra.mxu0 0.0
    %5612 = vmatpush.msra.mxu0 0.0
    %5613 = vmatpush.msra.mxu0 0.0
    %5614 = vmatpush.msra.mxu0 0.0
    %5615 = vmatpush.msra.mxu0 0.0
    %5616 = vmatpush.msra.mxu0 %v702
    %5617 = vmatmul.f32.gmra.mxu0 %v5599
    %v5618 = vpop.f32.mrf.mxu0
    %v5619 = vadd.f32 0.0, %v5618
    %5620 = vdwg.mxu0
    %v5621 = vadd.f32 %v5587, %v5619
    %5622 = vmatpush.msra.mxu0 %v343
    %5623 = vmatpush.msra.mxu0 %v339
    %5624 = vmatpush.msra.mxu0 %v335
    %5625 = vmatpush.msra.mxu0 %v331
    %5626 = vmatpush.msra.mxu0 %v327
    %5627 = vmatpush.msra.mxu0 %v323
    %5628 = vmatpush.msra.mxu0 %v319
    %5629 = vmatpush.msra.mxu0 %v315
    %5630 = vmatpush.msra.mxu0 %v311
    %5631 = vmatpush.msra.mxu0 %v307
    %5632 = vmatpush.msra.mxu0 %v303
    %5633 = vmatpush.msra.mxu0 %v299
    %5634 = vmatpush.msra.mxu0 %v295
    %5635 = vmatpush.msra.mxu0 %v291
    %5636 = vmatpush.msra.mxu0 %v287
    %5637 = vmatpush.msra.mxu0 %v283
    %5638 = vmatmul.f32.gmra.mxu0 %v5388
    %v5639 = vpop.f32.mrf.mxu0
    %v5640 = vadd.f32 0.0, %v5639
    %5641 = vdwg.mxu0
    %5642 = vmatpush.msra.mxu0 %v344
    %5643 = vmatpush.msra.mxu0 %v340
    %5644 = vmatpush.msra.mxu0 %v336
    %5645 = vmatpush.msra.mxu0 %v332
    %5646 = vmatpush.msra.mxu0 %v328
    %5647 = vmatpush.msra.mxu0 %v324
    %5648 = vmatpush.msra.mxu0 %v320
    %5649 = vmatpush.msra.mxu0 %v316
    %5650 = vmatpush.msra.mxu0 %v312
    %5651 = vmatpush.msra.mxu0 %v308
    %5652 = vmatpush.msra.mxu0 %v304
    %5653 = vmatpush.msra.mxu0 %v300
    %5654 = vmatpush.msra.mxu0 %v296
    %5655 = vmatpush.msra.mxu0 %v292
    %5656 = vmatpush.msra.mxu0 %v288
    %5657 = vmatpush.msra.mxu0 %v284
    %5658 = vmatmul.f32.gmra.mxu0 %v5388
    %v5659 = vpop.f32.mrf.mxu0
    %v5660 = vadd.f32 0.0, %v5659
    %5661 = vdwg.mxu0
    %5662 = vmatpush.msra.mxu0 %v345
    %5663 = vmatpush.msra.mxu0 %v341
    %5664 = vmatpush.msra.mxu0 %v337
    %5665 = vmatpush.msra.mxu0 %v333
    %5666 = vmatpush.msra.mxu0 %v329
    %5667 = vmatpush.msra.mxu0 %v325
    %5668 = vmatpush.msra.mxu0 %v321
    %5669 = vmatpush.msra.mxu0 %v317
    %5670 = vmatpush.msra.mxu0 %v313
    %5671 = vmatpush.msra.mxu0 %v309
    %5672 = vmatpush.msra.mxu0 %v305
    %5673 = vmatpush.msra.mxu0 %v301
    %5674 = vmatpush.msra.mxu0 %v297
    %5675 = vmatpush.msra.mxu0 %v293
    %5676 = vmatpush.msra.mxu0 %v289
    %5677 = vmatpush.msra.mxu0 %v285
    %5678 = vmatmul.f32.gmra.mxu0 %v5388
    %v5679 = vpop.f32.mrf.mxu0
    %v5680 = vadd.f32 0.0, %v5679
    %5681 = vdwg.mxu0
    %5682 = vmatpush.msra.mxu0 %v346
    %5683 = vmatpush.msra.mxu0 %v342
    %5684 = vmatpush.msra.mxu0 %v338
    %5685 = vmatpush.msra.mxu0 %v334
    %5686 = vmatpush.msra.mxu0 %v330
    %5687 = vmatpush.msra.mxu0 %v326
    %5688 = vmatpush.msra.mxu0 %v322
    %5689 = vmatpush.msra.mxu0 %v318
    %5690 = vmatpush.msra.mxu0 %v314
    %5691 = vmatpush.msra.mxu0 %v310
    %5692 = vmatpush.msra.mxu0 %v306
    %5693 = vmatpush.msra.mxu0 %v302
    %5694 = vmatpush.msra.mxu0 %v298
    %5695 = vmatpush.msra.mxu0 %v294
    %5696 = vmatpush.msra.mxu0 %v290
    %5697 = vmatpush.msra.mxu0 %v286
    %5698 = vmatmul.f32.gmra.mxu0 %v5388
    %v5699 = vpop.f32.mrf.mxu0
    %v5700 = vadd.f32 0.0, %v5699
    %5701 = vdwg.mxu0
    %v5703 = vsel %vm805, %v5621, 0
    %5705 = vmatpush.msra.mxu0 0.0
    %5706 = vmatpush.msra.mxu0 0.0
    %5707 = vmatpush.msra.mxu0 0.0
    %5708 = vmatpush.msra.mxu0 0.0
    %5709 = vmatpush.msra.mxu0 0.0
    %5710 = vmatpush.msra.mxu0 0.0
    %5711 = vmatpush.msra.mxu0 0.0
    %5712 = vmatpush.msra.mxu0 0.0
    %5713 = vmatpush.msra.mxu0 %v279
    %5714 = vmatpush.msra.mxu0 %v275
    %5715 = vmatpush.msra.mxu0 %v271
    %5716 = vmatpush.msra.mxu0 %v267
    %5717 = vmatpush.msra.mxu0 %v263
    %5718 = vmatpush.msra.mxu0 %v259
    %5719 = vmatpush.msra.mxu0 %v255
    %5720 = vmatpush.msra.mxu0 %v251
    %5721 = vmatmul.f32.gmra.mxu0 %v5703
    %v5722 = vpop.f32.mrf.mxu0
    %v5723 = vadd.f32 %v5640, %v5722
    %5724 = vdwg.mxu0
    %5725 = vmatpush.msra.mxu0 0.0
    %5726 = vmatpush.msra.mxu0 0.0
    %5727 = vmatpush.msra.mxu0 0.0
    %5728 = vmatpush.msra.mxu0 0.0
    %5729 = vmatpush.msra.mxu0 0.0
    %5730 = vmatpush.msra.mxu0 0.0
    %5731 = vmatpush.msra.mxu0 0.0
    %5732 = vmatpush.msra.mxu0 0.0
    %5733 = vmatpush.msra.mxu0 %v280
    %5734 = vmatpush.msra.mxu0 %v276
    %5735 = vmatpush.msra.mxu0 %v272
    %5736 = vmatpush.msra.mxu0 %v268
    %5737 = vmatpush.msra.mxu0 %v264
    %5738 = vmatpush.msra.mxu0 %v260
    %5739 = vmatpush.msra.mxu0 %v256
    %5740 = vmatpush.msra.mxu0 %v252
    %5741 = vmatmul.f32.gmra.mxu0 %v5703
    %v5742 = vpop.f32.mrf.mxu0
    %v5743 = vadd.f32 %v5660, %v5742
    %5744 = vdwg.mxu0
    %5745 = vmatpush.msra.mxu0 0.0
    %5746 = vmatpush.msra.mxu0 0.0
    %5747 = vmatpush.msra.mxu0 0.0
    %5748 = vmatpush.msra.mxu0 0.0
    %5749 = vmatpush.msra.mxu0 0.0
    %5750 = vmatpush.msra.mxu0 0.0
    %5751 = vmatpush.msra.mxu0 0.0
    %5752 = vmatpush.msra.mxu0 0.0
    %5753 = vmatpush.msra.mxu0 %v281
    %5754 = vmatpush.msra.mxu0 %v277
    %5755 = vmatpush.msra.mxu0 %v273
    %5756 = vmatpush.msra.mxu0 %v269
    %5757 = vmatpush.msra.mxu0 %v265
    %5758 = vmatpush.msra.mxu0 %v261
    %5759 = vmatpush.msra.mxu0 %v257
    %5760 = vmatpush.msra.mxu0 %v253
    %5761 = vmatmul.f32.gmra.mxu0 %v5703
    %v5762 = vpop.f32.mrf.mxu0
    %v5763 = vadd.f32 %v5680, %v5762
    %5764 = vdwg.mxu0
    %5765 = vmatpush.msra.mxu0 0.0
    %5766 = vmatpush.msra.mxu0 0.0
    %5767 = vmatpush.msra.mxu0 0.0
    %5768 = vmatpush.msra.mxu0 0.0
    %5769 = vmatpush.msra.mxu0 0.0
    %5770 = vmatpush.msra.mxu0 0.0
    %5771 = vmatpush.msra.mxu0 0.0
    %5772 = vmatpush.msra.mxu0 0.0
    %5773 = vmatpush.msra.mxu0 %v282
    %5774 = vmatpush.msra.mxu0 %v278
    %5775 = vmatpush.msra.mxu0 %v274
    %5776 = vmatpush.msra.mxu0 %v270
    %5777 = vmatpush.msra.mxu0 %v266
    %5778 = vmatpush.msra.mxu0 %v262
    %5779 = vmatpush.msra.mxu0 %v258
    %5780 = vmatpush.msra.mxu0 %v254
    %5781 = vmatmul.f32.gmra.mxu0 %v5703
    %v5782 = vpop.f32.mrf.mxu0
    %v5783 = vadd.f32 %v5700, %v5782
    %5784 = vdwg.mxu0
    %v5785 = vxor.u32 %v5723, 2147483648
    %v5786 = vmul.f32 %v5785, 1.442695
    %v5787 = vpow.pop %v5786
    %v5788 = vadd.f32 %v5787, 1.0
    %v5789 = vrcp.pop %v5788
    %v5790 = vmul.f32 %v5788, %v5789
    %v5791 = vsub.f32 1.0, %v5790
    %v5792 = vmul.f32 %v5789, %v5791
    %v5793 = vadd.f32 %v5789, %v5792
    %vm5794 = vweird.f32 %v5788
    %vm5795 = vweird.f32 %v5789
    %vm5796 = vmor %vm5794, %vm5795
    %v5797 = vsel %vm5796, %v5789, %v5793
    %v5798 = vand.u32 2147483647, %v5788
    %vm5799 = vcmp.eq.f32.partialorder %v5798, 8.507059e+37
    %v5800 = vand.u32 %v5788, 2147483648
    %v5801 = vor.u32 1.1754944e-38, %v5800
    %v5802 = vsel %vm5799, %v5801, %v5797
    %v5803 = vmul.f32 1.0, %v5802
    %v5804 = vxor.u32 %v5743, 2147483648
    %v5805 = vmul.f32 %v5804, 1.442695
    %v5806 = vpow.pop %v5805
    %v5807 = vadd.f32 %v5806, 1.0
    %v5808 = vrcp.pop %v5807
    %v5809 = vmul.f32 %v5807, %v5808
    %v5810 = vsub.f32 1.0, %v5809
    %v5811 = vmul.f32 %v5808, %v5810
    %v5812 = vadd.f32 %v5808, %v5811
    %vm5813 = vweird.f32 %v5807
    %vm5814 = vweird.f32 %v5808
    %vm5815 = vmor %vm5813, %vm5814
    %v5816 = vsel %vm5815, %v5808, %v5812
    %v5817 = vand.u32 2147483647, %v5807
    %vm5818 = vcmp.eq.f32.partialorder %v5817, 8.507059e+37
    %v5819 = vand.u32 %v5807, 2147483648
    %v5820 = vor.u32 1.1754944e-38, %v5819
    %v5821 = vsel %vm5818, %v5820, %v5816
    %v5822 = vmul.f32 1.0, %v5821
    %v5823 = vxor.u32 %v5763, 2147483648
    %v5824 = vmul.f32 %v5823, 1.442695
    %v5825 = vpow.pop %v5824
    %v5826 = vadd.f32 %v5825, 1.0
    %v5827 = vrcp.pop %v5826
    %v5828 = vmul.f32 %v5826, %v5827
    %v5829 = vsub.f32 1.0, %v5828
    %v5830 = vmul.f32 %v5827, %v5829
    %v5831 = vadd.f32 %v5827, %v5830
    %vm5832 = vweird.f32 %v5826
    %vm5833 = vweird.f32 %v5827
    %vm5834 = vmor %vm5832, %vm5833
    %v5835 = vsel %vm5834, %v5827, %v5831
    %v5836 = vand.u32 2147483647, %v5826
    %vm5837 = vcmp.eq.f32.partialorder %v5836, 8.507059e+37
    %v5838 = vand.u32 %v5826, 2147483648
    %v5839 = vor.u32 1.1754944e-38, %v5838
    %v5840 = vsel %vm5837, %v5839, %v5835
    %v5841 = vmul.f32 1.0, %v5840
    %v5842 = vtanh.pop %v5783
    %v5843 = vmul.f32 %v5391, %v5822
    %v5844 = vmul.f32 %v5803, %v5842
    %v5845 = vadd.f32 %v5843, %v5844
    %v5846 = vtanh.pop %v5845
    %v5847 = vmul.f32 %v5841, %v5846
    %5848 = vmatpush.msra.mxu0 %v362
    %5849 = vmatpush.msra.mxu0 %v361
    %5850 = vmatpush.msra.mxu0 %v360
    %5851 = vmatpush.msra.mxu0 %v359
    %5852 = vmatpush.msra.mxu0 %v358
    %5853 = vmatpush.msra.mxu0 %v357
    %5854 = vmatpush.msra.mxu0 %v356
    %5855 = vmatpush.msra.mxu0 %v355
    %5856 = vmatpush.msra.mxu0 %v354
    %5857 = vmatpush.msra.mxu0 %v353
    %5858 = vmatpush.msra.mxu0 %v352
    %5859 = vmatpush.msra.mxu0 %v351
    %5860 = vmatpush.msra.mxu0 %v350
    %5861 = vmatpush.msra.mxu0 %v349
    %5862 = vmatpush.msra.mxu0 %v348
    %5863 = vmatpush.msra.mxu0 %v347
    %5864 = vmatmul.f32.gmra.mxu0 %v5847
    %v5865 = vpop.f32.mrf.mxu0
    %v5866 = vadd.f32 0.0, %v5865
    %5867 = vdwg.mxu0
    %5869 = vrot.lane.b32.xlu0 %v5866, 112
    %v5870 = vpop.permute.xlu0 %5869
    %5872 = vrot.lane.b32.xlu0 %v5866, 96
    %v5873 = vpop.permute.xlu0 %5872
    %5875 = vrot.lane.b32.xlu0 %v5866, 80
    %v5876 = vpop.permute.xlu0 %5875
    %v5878 = vrot.slane %v5873, 4
    %v5879 = vsel %vm983, %v5878, %v5866
    %v5881 = vunpack.c.l.s4 1983009808
    %v5882 = vunpack.c.0.s8 %v5881
    %v5883 = vperm.slane %v5879, %v5882
    %v5884 = vrot.slane %v5876, 4
    %v5885 = vsel %vm983, %v5884, %v5870
    %v5887 = vunpack.c.l.s4 1983009808
    %v5888 = vunpack.c.0.s8 %v5887
    %v5889 = vperm.slane %v5885, %v5888
    %v5890 = vrot.slane %v5889, 4
    %v5891 = vsel %vm983, %v5890, %v5883
    %v5893 = vunpack.c.l.s4 1934713408
    %v5894 = vunpack.c.0.s8 %v5893
    %v5895 = vperm.slane %v5891, %v5894
    %v5896 = vrot.slane %v5895, 4
    %v5897 = vsel %vm983, 0.0, %v5896
    %5898 = vmatpush.msra.mxu0 %v394
    %5899 = vmatpush.msra.mxu0 %v393
    %5900 = vmatpush.msra.mxu0 %v392
    %5901 = vmatpush.msra.mxu0 %v391
    %5902 = vmatpush.msra.mxu0 %v390
    %5903 = vmatpush.msra.mxu0 %v389
    %5904 = vmatpush.msra.mxu0 %v388
    %5905 = vmatpush.msra.mxu0 %v387
    %5906 = vmatpush.msra.mxu0 %v386
    %5907 = vmatpush.msra.mxu0 %v385
    %5908 = vmatpush.msra.mxu0 %v384
    %5909 = vmatpush.msra.mxu0 %v383
    %5910 = vmatpush.msra.mxu0 %v382
    %5911 = vmatpush.msra.mxu0 %v381
    %5912 = vmatpush.msra.mxu0 %v380
    %5913 = vmatpush.msra.mxu0 %v379
    %5914 = vmatmul.f32.gmra.mxu0 %v5847
    %v5915 = vpop.f32.mrf.mxu0
    %v5916 = vadd.f32 0.0, %v5915
    %5917 = vdwg.mxu0
    %5919 = vrot.lane.b32.xlu0 %v5916, 112
    %v5920 = vpop.permute.xlu0 %5919
    %5922 = vrot.lane.b32.xlu0 %v5916, 96
    %v5923 = vpop.permute.xlu0 %5922
    %5925 = vrot.lane.b32.xlu0 %v5916, 80
    %v5926 = vpop.permute.xlu0 %5925
    %v5928 = vrot.slane %v5923, 4
    %v5929 = vsel %vm983, %v5928, %v5916
    %v5931 = vunpack.c.l.s4 1983009808
    %v5932 = vunpack.c.0.s8 %v5931
    %v5933 = vperm.slane %v5929, %v5932
    %v5934 = vrot.slane %v5926, 4
    %v5935 = vsel %vm983, %v5934, %v5920
    %v5937 = vunpack.c.l.s4 1983009808
    %v5938 = vunpack.c.0.s8 %v5937
    %v5939 = vperm.slane %v5935, %v5938
    %v5940 = vrot.slane %v5939, 4
    %v5941 = vsel %vm983, %v5940, %v5933
    %v5943 = vunpack.c.l.s4 1934713408
    %v5944 = vunpack.c.0.s8 %v5943
    %v5945 = vperm.slane %v5941, %v5944
    %v5946 = vrot.slane %v5945, 4
    %v5947 = vsel %vm983, 0.0, %v5946
    %5948 = vmatpush.msra.mxu0 %v426
    %5949 = vmatpush.msra.mxu0 %v425
    %5950 = vmatpush.msra.mxu0 %v424
    %5951 = vmatpush.msra.mxu0 %v423
    %5952 = vmatpush.msra.mxu0 %v422
    %5953 = vmatpush.msra.mxu0 %v421
    %5954 = vmatpush.msra.mxu0 %v420
    %5955 = vmatpush.msra.mxu0 %v419
    %5956 = vmatpush.msra.mxu0 %v418
    %5957 = vmatpush.msra.mxu0 %v417
    %5958 = vmatpush.msra.mxu0 %v416
    %5959 = vmatpush.msra.mxu0 %v415
    %5960 = vmatpush.msra.mxu0 %v414
    %5961 = vmatpush.msra.mxu0 %v413
    %5962 = vmatpush.msra.mxu0 %v412
    %5963 = vmatpush.msra.mxu0 %v411
    %5964 = vmatmul.f32.gmra.mxu0 %v5847
    %v5965 = vpop.f32.mrf.mxu0
    %v5966 = vadd.f32 0.0, %v5965
    %5967 = vdwg.mxu0
    %5969 = vrot.lane.b32.xlu0 %v5966, 96
    %v5970 = vpop.permute.xlu0 %5969
    %5972 = vrot.lane.b32.xlu0 %v5966, 64
    %v5973 = vpop.permute.xlu0 %5972
    %5975 = vrot.lane.b32.xlu0 %v5966, 32
    %v5976 = vpop.permute.xlu0 %5975
    %v5978 = vrot.slane %v5973, 4
    %v5979 = vsel %vm983, %v5978, %v5966
    %v5981 = vunpack.c.l.s4 1983009808
    %v5982 = vunpack.c.0.s8 %v5981
    %v5983 = vperm.slane %v5979, %v5982
    %v5984 = vrot.slane %v5976, 4
    %v5985 = vsel %vm983, %v5984, %v5970
    %v5987 = vunpack.c.l.s4 1983009808
    %v5988 = vunpack.c.0.s8 %v5987
    %v5989 = vperm.slane %v5985, %v5988
    %v5990 = vrot.slane %v5989, 4
    %v5991 = vsel %vm983, %v5990, %v5983
    %v5993 = vunpack.c.l.s4 1934713408
    %v5994 = vunpack.c.0.s8 %v5993
    %v5995 = vperm.slane %v5991, %v5994
    %v5996 = vrot.slane %v5995, 4
    %v5997 = vsel %vm983, 0.0, %v5996
    %v5999 = vsel %vm1103, %v5895, 0
    %v6002 = vsel %vm1103, %v5945, 0
    %6004 = vmatpush.xpose.msra.mxu0 0.0
    %6005 = vmatpush.xpose.msra.mxu0 0.0
    %6006 = vmatpush.xpose.msra.mxu0 0.0
    %6007 = vmatpush.xpose.msra.mxu0 0.0
    %6008 = vmatpush.xpose.msra.mxu0 0.0
    %6009 = vmatpush.xpose.msra.mxu0 0.0
    %6010 = vmatpush.xpose.msra.mxu0 0.0
    %6011 = vmatpush.xpose.msra.mxu0 0.0
    %6012 = vmatpush.xpose.msra.mxu0 0.0
    %6013 = vmatpush.xpose.msra.mxu0 0.0
    %6014 = vmatpush.xpose.msra.mxu0 0.0
    %6015 = vmatpush.xpose.msra.mxu0 0.0
    %6016 = vmatpush.xpose.msra.mxu0 0.0
    %6017 = vmatpush.xpose.msra.mxu0 0.0
    %6018 = vmatpush.xpose.msra.mxu0 0.0
    %6019 = vmatpush.xpose.msra.mxu0 %v6002
    %6020 = vmatmul.f32.gmra.mxu0 %v5999
    %v6021 = vpop.f32.mrf.mxu0
    %v6022 = vadd.f32 0.0, %v6021
    %6023 = vdwg.mxu0
    %v6025 = vsel %vm1103, %v5897, 0
    %v6028 = vsel %vm1103, %v5947, 0
    %6030 = vmatpush.xpose.msra.mxu0 0.0
    %6031 = vmatpush.xpose.msra.mxu0 0.0
    %6032 = vmatpush.xpose.msra.mxu0 0.0
    %6033 = vmatpush.xpose.msra.mxu0 0.0
    %6034 = vmatpush.xpose.msra.mxu0 0.0
    %6035 = vmatpush.xpose.msra.mxu0 0.0
    %6036 = vmatpush.xpose.msra.mxu0 0.0
    %6037 = vmatpush.xpose.msra.mxu0 0.0
    %6038 = vmatpush.xpose.msra.mxu0 0.0
    %6039 = vmatpush.xpose.msra.mxu0 0.0
    %6040 = vmatpush.xpose.msra.mxu0 0.0
    %6041 = vmatpush.xpose.msra.mxu0 0.0
    %6042 = vmatpush.xpose.msra.mxu0 0.0
    %6043 = vmatpush.xpose.msra.mxu0 0.0
    %6044 = vmatpush.xpose.msra.mxu0 0.0
    %6045 = vmatpush.xpose.msra.mxu0 %v6028
    %6046 = vmatmul.f32.gmra.mxu0 %v6025
    %v6047 = vpop.f32.mrf.mxu0
    %v6048 = vadd.f32 0.0, %v6047
    %6049 = vdwg.mxu0
    %v6050 = vmul.f32 %v6022, 0.25
    %v6051 = vmul.f32 %v6048, 0.25
    %v6052 = vsel %vm556, %v6050, -inf
    %6053 = vmax.xlane.f32.xlu0 %v6052
    %v6054 = vpop.xlane.xlu0 %6053
    %v6055 = vsel %vm556, %v6051, -inf
    %6056 = vmax.xlane.f32.xlu0 %v6055
    %v6057 = vpop.xlane.xlu0 %6056
    %v6058 = vsub.f32 %v6050, %v6054
    %v6059 = vsub.f32 %v6051, %v6057
    %v6060 = vmul.f32 %v6058, 1.442695
    %v6061 = vpow.pop %v6060
    %v6062 = vmul.f32 %v6059, 1.442695
    %v6063 = vpow.pop %v6062
    %v6064 = vsel %vm556, %v6061, 0.0
    %6065 = vadd.xlane.f32.xlu0 %v6064
    %v6066 = vpop.xlane.xlu0 %6065
    %v6067 = vsel %vm556, %v6063, 0.0
    %6068 = vadd.xlane.f32.xlu0 %v6067
    %v6069 = vpop.xlane.xlu0 %6068
    %v6070 = vrcp.pop %v6066
    %v6071 = vmul.f32 %v6066, %v6070
    %v6072 = vsub.f32 1.0, %v6071
    %v6073 = vmul.f32 %v6070, %v6072
    %v6074 = vadd.f32 %v6070, %v6073
    %vm6075 = vweird.f32 %v6066
    %vm6076 = vweird.f32 %v6070
    %vm6077 = vmor %vm6075, %vm6076
    %v6078 = vsel %vm6077, %v6070, %v6074
    %v6079 = vand.u32 2147483647, %v6066
    %vm6080 = vcmp.eq.f32.partialorder %v6079, 8.507059e+37
    %v6081 = vand.u32 %v6066, 2147483648
    %v6082 = vor.u32 1.1754944e-38, %v6081
    %v6083 = vsel %vm6080, %v6082, %v6078
    %v6084 = vmul.f32 %v6061, %v6083
    %v6085 = vrcp.pop %v6069
    %v6086 = vmul.f32 %v6069, %v6085
    %v6087 = vsub.f32 1.0, %v6086
    %v6088 = vmul.f32 %v6085, %v6087
    %v6089 = vadd.f32 %v6085, %v6088
    %vm6090 = vweird.f32 %v6069
    %vm6091 = vweird.f32 %v6085
    %vm6092 = vmor %vm6090, %vm6091
    %v6093 = vsel %vm6092, %v6085, %v6089
    %v6094 = vand.u32 2147483647, %v6069
    %vm6095 = vcmp.eq.f32.partialorder %v6094, 8.507059e+37
    %v6096 = vand.u32 %v6069, 2147483648
    %v6097 = vor.u32 1.1754944e-38, %v6096
    %v6098 = vsel %vm6095, %v6097, %v6093
    %v6099 = vmul.f32 %v6063, %v6098
    %v6101 = vsel %vm660, %v6084, 0
    %v6104 = vsel %vm663, %v5995, 0
    %6106 = vmatpush.msra.mxu0 0.0
    %6107 = vmatpush.msra.mxu0 0.0
    %6108 = vmatpush.msra.mxu0 0.0
    %6109 = vmatpush.msra.mxu0 0.0
    %6110 = vmatpush.msra.mxu0 0.0
    %6111 = vmatpush.msra.mxu0 0.0
    %6112 = vmatpush.msra.mxu0 0.0
    %6113 = vmatpush.msra.mxu0 0.0
    %6114 = vmatpush.msra.mxu0 0.0
    %6115 = vmatpush.msra.mxu0 0.0
    %6116 = vmatpush.msra.mxu0 0.0
    %6117 = vmatpush.msra.mxu0 0.0
    %6118 = vmatpush.msra.mxu0 0.0
    %6119 = vmatpush.msra.mxu0 0.0
    %6120 = vmatpush.msra.mxu0 0.0
    %6121 = vmatpush.msra.mxu0 %v6104
    %6122 = vmatmul.f32.gmra.mxu0 %v6101
    %v6123 = vpop.f32.mrf.mxu0
    %v6124 = vadd.f32 0.0, %v6123
    %6125 = vdwg.mxu0
    %v6127 = vsel %vm660, %v6099, 0
    %v6130 = vsel %vm663, %v5997, 0
    %6132 = vmatpush.msra.mxu0 0.0
    %6133 = vmatpush.msra.mxu0 0.0
    %6134 = vmatpush.msra.mxu0 0.0
    %6135 = vmatpush.msra.mxu0 0.0
    %6136 = vmatpush.msra.mxu0 0.0
    %6137 = vmatpush.msra.mxu0 0.0
    %6138 = vmatpush.msra.mxu0 0.0
    %6139 = vmatpush.msra.mxu0 0.0
    %6140 = vmatpush.msra.mxu0 0.0
    %6141 = vmatpush.msra.mxu0 0.0
    %6142 = vmatpush.msra.mxu0 0.0
    %6143 = vmatpush.msra.mxu0 0.0
    %6144 = vmatpush.msra.mxu0 0.0
    %6145 = vmatpush.msra.mxu0 0.0
    %6146 = vmatpush.msra.mxu0 0.0
    %6147 = vmatpush.msra.mxu0 %v6130
    %6148 = vmatmul.f32.gmra.mxu0 %v6127
    %v6149 = vpop.f32.mrf.mxu0
    %v6150 = vadd.f32 0.0, %v6149
    %6151 = vdwg.mxu0
    %v6153 = vunpack.c.l.s4 1983009808
    %v6154 = vunpack.c.0.s8 %v6153
    %v6155 = vperm.slane %v6124, %v6154
    %v6157 = vunpack.c.l.s4 1983009808
    %v6158 = vunpack.c.0.s8 %v6157
    %v6159 = vperm.slane %v6150, %v6158
    %v6160 = vrot.slane %v6159, 4
    %v6161 = vsel %vm983, %v6160, %v6155
    %v6162 = vrot.slane %v6155, 4
    %v6163 = vsel %vm983, %v6159, %v6162
    %v6165 = vunpack.c.l.s4 1934713408
    %v6166 = vunpack.c.0.s8 %v6165
    %v6167 = vperm.slane %v6161, %v6166
    %v6169 = vunpack.c.l.s4 1934713408
    %v6170 = vunpack.c.0.s8 %v6169
    %v6171 = vperm.slane %v6163, %v6170
    %v6172 = vrot.slane %v6167, 4
    %v6173 = vsel %vm983, 0.0, %v6172
    %v6174 = vrot.slane %v6171, 4
    %v6175 = vsel %vm983, 0.0, %v6174
    %6177 = vrot.lane.b32.xlu0 %v6173, 32
    %v6178 = vpop.permute.xlu0 %6177
    %6181 = vrot.lane.b32.xlu0 %v6171, 64
    %v6182 = vpop.permute.xlu0 %6181
    %6185 = vrot.lane.b32.xlu0 %v6175, 96
    %v6186 = vpop.permute.xlu0 %6185
    %v6188 = vsel %vm1294, %v6167, %v6178
    %v6189 = vsel %vm805, %v6188, %v6182
    %v6190 = vsel %vm1297, %v6189, %v6186
    %6191 = vmatpush.msra.mxu0 %v378
    %6192 = vmatpush.msra.mxu0 %v377
    %6193 = vmatpush.msra.mxu0 %v376
    %6194 = vmatpush.msra.mxu0 %v375
    %6195 = vmatpush.msra.mxu0 %v374
    %6196 = vmatpush.msra.mxu0 %v373
    %6197 = vmatpush.msra.mxu0 %v372
    %6198 = vmatpush.msra.mxu0 %v371
    %6199 = vmatpush.msra.mxu0 %v370
    %6200 = vmatpush.msra.mxu0 %v369
    %6201 = vmatpush.msra.mxu0 %v368
    %6202 = vmatpush.msra.mxu0 %v367
    %6203 = vmatpush.msra.mxu0 %v366
    %6204 = vmatpush.msra.mxu0 %v365
    %6205 = vmatpush.msra.mxu0 %v364
    %6206 = vmatpush.msra.mxu0 %v363
    %6207 = vmatmul.f32.gmra.mxu0 %v5847
    %v6208 = vpop.f32.mrf.mxu0
    %v6209 = vadd.f32 0.0, %v6208
    %6210 = vdwg.mxu0
    %6212 = vrot.lane.b32.xlu0 %v6209, 112
    %v6213 = vpop.permute.xlu0 %6212
    %6215 = vrot.lane.b32.xlu0 %v6209, 96
    %v6216 = vpop.permute.xlu0 %6215
    %6218 = vrot.lane.b32.xlu0 %v6209, 80
    %v6219 = vpop.permute.xlu0 %6218
    %v6221 = vrot.slane %v6216, 4
    %v6222 = vsel %vm983, %v6221, %v6209
    %v6224 = vunpack.c.l.s4 1983009808
    %v6225 = vunpack.c.0.s8 %v6224
    %v6226 = vperm.slane %v6222, %v6225
    %v6227 = vrot.slane %v6219, 4
    %v6228 = vsel %vm983, %v6227, %v6213
    %v6230 = vunpack.c.l.s4 1983009808
    %v6231 = vunpack.c.0.s8 %v6230
    %v6232 = vperm.slane %v6228, %v6231
    %v6233 = vrot.slane %v6232, 4
    %v6234 = vsel %vm983, %v6233, %v6226
    %v6236 = vunpack.c.l.s4 1934713408
    %v6237 = vunpack.c.0.s8 %v6236
    %v6238 = vperm.slane %v6234, %v6237
    %v6239 = vrot.slane %v6238, 4
    %v6240 = vsel %vm983, 0.0, %v6239
    %6241 = vmatpush.msra.mxu0 %v410
    %6242 = vmatpush.msra.mxu0 %v409
    %6243 = vmatpush.msra.mxu0 %v408
    %6244 = vmatpush.msra.mxu0 %v407
    %6245 = vmatpush.msra.mxu0 %v406
    %6246 = vmatpush.msra.mxu0 %v405
    %6247 = vmatpush.msra.mxu0 %v404
    %6248 = vmatpush.msra.mxu0 %v403
    %6249 = vmatpush.msra.mxu0 %v402
    %6250 = vmatpush.msra.mxu0 %v401
    %6251 = vmatpush.msra.mxu0 %v400
    %6252 = vmatpush.msra.mxu0 %v399
    %6253 = vmatpush.msra.mxu0 %v398
    %6254 = vmatpush.msra.mxu0 %v397
    %6255 = vmatpush.msra.mxu0 %v396
    %6256 = vmatpush.msra.mxu0 %v395
    %6257 = vmatmul.f32.gmra.mxu0 %v5847
    %v6258 = vpop.f32.mrf.mxu0
    %v6259 = vadd.f32 0.0, %v6258
    %6260 = vdwg.mxu0
    %6262 = vrot.lane.b32.xlu0 %v6259, 112
    %v6263 = vpop.permute.xlu0 %6262
    %6265 = vrot.lane.b32.xlu0 %v6259, 96
    %v6266 = vpop.permute.xlu0 %6265
    %6268 = vrot.lane.b32.xlu0 %v6259, 80
    %v6269 = vpop.permute.xlu0 %6268
    %v6271 = vrot.slane %v6266, 4
    %v6272 = vsel %vm983, %v6271, %v6259
    %v6274 = vunpack.c.l.s4 1983009808
    %v6275 = vunpack.c.0.s8 %v6274
    %v6276 = vperm.slane %v6272, %v6275
    %v6277 = vrot.slane %v6269, 4
    %v6278 = vsel %vm983, %v6277, %v6263
    %v6280 = vunpack.c.l.s4 1983009808
    %v6281 = vunpack.c.0.s8 %v6280
    %v6282 = vperm.slane %v6278, %v6281
    %v6283 = vrot.slane %v6282, 4
    %v6284 = vsel %vm983, %v6283, %v6276
    %v6286 = vunpack.c.l.s4 1934713408
    %v6287 = vunpack.c.0.s8 %v6286
    %v6288 = vperm.slane %v6284, %v6287
    %v6289 = vrot.slane %v6288, 4
    %v6290 = vsel %vm983, 0.0, %v6289
    %6291 = vmatpush.msra.mxu0 %v442
    %6292 = vmatpush.msra.mxu0 %v441
    %6293 = vmatpush.msra.mxu0 %v440
    %6294 = vmatpush.msra.mxu0 %v439
    %6295 = vmatpush.msra.mxu0 %v438
    %6296 = vmatpush.msra.mxu0 %v437
    %6297 = vmatpush.msra.mxu0 %v436
    %6298 = vmatpush.msra.mxu0 %v435
    %6299 = vmatpush.msra.mxu0 %v434
    %6300 = vmatpush.msra.mxu0 %v433
    %6301 = vmatpush.msra.mxu0 %v432
    %6302 = vmatpush.msra.mxu0 %v431
    %6303 = vmatpush.msra.mxu0 %v430
    %6304 = vmatpush.msra.mxu0 %v429
    %6305 = vmatpush.msra.mxu0 %v428
    %6306 = vmatpush.msra.mxu0 %v427
    %6307 = vmatmul.f32.gmra.mxu0 %v5847
    %v6308 = vpop.f32.mrf.mxu0
    %v6309 = vadd.f32 0.0, %v6308
    %6310 = vdwg.mxu0
    %6312 = vrot.lane.b32.xlu0 %v6309, 96
    %v6313 = vpop.permute.xlu0 %6312
    %6315 = vrot.lane.b32.xlu0 %v6309, 64
    %v6316 = vpop.permute.xlu0 %6315
    %6318 = vrot.lane.b32.xlu0 %v6309, 32
    %v6319 = vpop.permute.xlu0 %6318
    %v6321 = vrot.slane %v6316, 4
    %v6322 = vsel %vm983, %v6321, %v6309
    %v6324 = vunpack.c.l.s4 1983009808
    %v6325 = vunpack.c.0.s8 %v6324
    %v6326 = vperm.slane %v6322, %v6325
    %v6327 = vrot.slane %v6319, 4
    %v6328 = vsel %vm983, %v6327, %v6313
    %v6330 = vunpack.c.l.s4 1983009808
    %v6331 = vunpack.c.0.s8 %v6330
    %v6332 = vperm.slane %v6328, %v6331
    %v6333 = vrot.slane %v6332, 4
    %v6334 = vsel %vm983, %v6333, %v6326
    %v6336 = vunpack.c.l.s4 1934713408
    %v6337 = vunpack.c.0.s8 %v6336
    %v6338 = vperm.slane %v6334, %v6337
    %v6339 = vrot.slane %v6338, 4
    %v6340 = vsel %vm983, 0.0, %v6339
    %v6342 = vsel %vm1103, %v6238, 0
    %v6345 = vsel %vm1103, %v6288, 0
    %6347 = vmatpush.xpose.msra.mxu0 0.0
    %6348 = vmatpush.xpose.msra.mxu0 0.0
    %6349 = vmatpush.xpose.msra.mxu0 0.0
    %6350 = vmatpush.xpose.msra.mxu0 0.0
    %6351 = vmatpush.xpose.msra.mxu0 0.0
    %6352 = vmatpush.xpose.msra.mxu0 0.0
    %6353 = vmatpush.xpose.msra.mxu0 0.0
    %6354 = vmatpush.xpose.msra.mxu0 0.0
    %6355 = vmatpush.xpose.msra.mxu0 0.0
    %6356 = vmatpush.xpose.msra.mxu0 0.0
    %6357 = vmatpush.xpose.msra.mxu0 0.0
    %6358 = vmatpush.xpose.msra.mxu0 0.0
    %6359 = vmatpush.xpose.msra.mxu0 0.0
    %6360 = vmatpush.xpose.msra.mxu0 0.0
    %6361 = vmatpush.xpose.msra.mxu0 0.0
    %6362 = vmatpush.xpose.msra.mxu0 %v6345
    %6363 = vmatmul.f32.gmra.mxu0 %v6342
    %v6364 = vpop.f32.mrf.mxu0
    %v6365 = vadd.f32 0.0, %v6364
    %6366 = vdwg.mxu0
    %v6368 = vsel %vm1103, %v6240, 0
    %v6371 = vsel %vm1103, %v6290, 0
    %6373 = vmatpush.xpose.msra.mxu0 0.0
    %6374 = vmatpush.xpose.msra.mxu0 0.0
    %6375 = vmatpush.xpose.msra.mxu0 0.0
    %6376 = vmatpush.xpose.msra.mxu0 0.0
    %6377 = vmatpush.xpose.msra.mxu0 0.0
    %6378 = vmatpush.xpose.msra.mxu0 0.0
    %6379 = vmatpush.xpose.msra.mxu0 0.0
    %6380 = vmatpush.xpose.msra.mxu0 0.0
    %6381 = vmatpush.xpose.msra.mxu0 0.0
    %6382 = vmatpush.xpose.msra.mxu0 0.0
    %6383 = vmatpush.xpose.msra.mxu0 0.0
    %6384 = vmatpush.xpose.msra.mxu0 0.0
    %6385 = vmatpush.xpose.msra.mxu0 0.0
    %6386 = vmatpush.xpose.msra.mxu0 0.0
    %6387 = vmatpush.xpose.msra.mxu0 0.0
    %6388 = vmatpush.xpose.msra.mxu0 %v6371
    %6389 = vmatmul.f32.gmra.mxu0 %v6368
    %v6390 = vpop.f32.mrf.mxu0
    %v6391 = vadd.f32 0.0, %v6390
    %6392 = vdwg.mxu0
    %v6393 = vmul.f32 %v6365, 0.25
    %v6394 = vmul.f32 %v6391, 0.25
    %v6395 = vsel %vm556, %v6393, -inf
    %6396 = vmax.xlane.f32.xlu0 %v6395
    %v6397 = vpop.xlane.xlu0 %6396
    %v6398 = vsel %vm556, %v6394, -inf
    %6399 = vmax.xlane.f32.xlu0 %v6398
    %v6400 = vpop.xlane.xlu0 %6399
    %v6401 = vsub.f32 %v6393, %v6397
    %v6402 = vsub.f32 %v6394, %v6400
    %v6403 = vmul.f32 %v6401, 1.442695
    %v6404 = vpow.pop %v6403
    %v6405 = vmul.f32 %v6402, 1.442695
    %v6406 = vpow.pop %v6405
    %v6407 = vsel %vm556, %v6404, 0.0
    %6408 = vadd.xlane.f32.xlu0 %v6407
    %v6409 = vpop.xlane.xlu0 %6408
    %v6410 = vsel %vm556, %v6406, 0.0
    %6411 = vadd.xlane.f32.xlu0 %v6410
    %v6412 = vpop.xlane.xlu0 %6411
    %v6413 = vrcp.pop %v6409
    %v6414 = vmul.f32 %v6409, %v6413
    %v6415 = vsub.f32 1.0, %v6414
    %v6416 = vmul.f32 %v6413, %v6415
    %v6417 = vadd.f32 %v6413, %v6416
    %vm6418 = vweird.f32 %v6409
    %vm6419 = vweird.f32 %v6413
    %vm6420 = vmor %vm6418, %vm6419
    %v6421 = vsel %vm6420, %v6413, %v6417
    %v6422 = vand.u32 2147483647, %v6409
    %vm6423 = vcmp.eq.f32.partialorder %v6422, 8.507059e+37
    %v6424 = vand.u32 %v6409, 2147483648
    %v6425 = vor.u32 1.1754944e-38, %v6424
    %v6426 = vsel %vm6423, %v6425, %v6421
    %v6427 = vmul.f32 %v6404, %v6426
    %v6428 = vrcp.pop %v6412
    %v6429 = vmul.f32 %v6412, %v6428
    %v6430 = vsub.f32 1.0, %v6429
    %v6431 = vmul.f32 %v6428, %v6430
    %v6432 = vadd.f32 %v6428, %v6431
    %vm6433 = vweird.f32 %v6412
    %vm6434 = vweird.f32 %v6428
    %vm6435 = vmor %vm6433, %vm6434
    %v6436 = vsel %vm6435, %v6428, %v6432
    %v6437 = vand.u32 2147483647, %v6412
    %vm6438 = vcmp.eq.f32.partialorder %v6437, 8.507059e+37
    %v6439 = vand.u32 %v6412, 2147483648
    %v6440 = vor.u32 1.1754944e-38, %v6439
    %v6441 = vsel %vm6438, %v6440, %v6436
    %v6442 = vmul.f32 %v6406, %v6441
    %v6444 = vsel %vm660, %v6427, 0
    %v6447 = vsel %vm663, %v6338, 0
    %6449 = vmatpush.msra.mxu0 0.0
    %6450 = vmatpush.msra.mxu0 0.0
    %6451 = vmatpush.msra.mxu0 0.0
    %6452 = vmatpush.msra.mxu0 0.0
    %6453 = vmatpush.msra.mxu0 0.0
    %6454 = vmatpush.msra.mxu0 0.0
    %6455 = vmatpush.msra.mxu0 0.0
    %6456 = vmatpush.msra.mxu0 0.0
    %6457 = vmatpush.msra.mxu0 0.0
    %6458 = vmatpush.msra.mxu0 0.0
    %6459 = vmatpush.msra.mxu0 0.0
    %6460 = vmatpush.msra.mxu0 0.0
    %6461 = vmatpush.msra.mxu0 0.0
    %6462 = vmatpush.msra.mxu0 0.0
    %6463 = vmatpush.msra.mxu0 0.0
    %6464 = vmatpush.msra.mxu0 %v6447
    %6465 = vmatmul.f32.gmra.mxu0 %v6444
    %v6466 = vpop.f32.mrf.mxu0
    %v6467 = vadd.f32 0.0, %v6466
    %6468 = vdwg.mxu0
    %v6470 = vsel %vm660, %v6442, 0
    %v6473 = vsel %vm663, %v6340, 0
    %6475 = vmatpush.msra.mxu0 0.0
    %6476 = vmatpush.msra.mxu0 0.0
    %6477 = vmatpush.msra.mxu0 0.0
    %6478 = vmatpush.msra.mxu0 0.0
    %6479 = vmatpush.msra.mxu0 0.0
    %6480 = vmatpush.msra.mxu0 0.0
    %6481 = vmatpush.msra.mxu0 0.0
    %6482 = vmatpush.msra.mxu0 0.0
    %6483 = vmatpush.msra.mxu0 0.0
    %6484 = vmatpush.msra.mxu0 0.0
    %6485 = vmatpush.msra.mxu0 0.0
    %6486 = vmatpush.msra.mxu0 0.0
    %6487 = vmatpush.msra.mxu0 0.0
    %6488 = vmatpush.msra.mxu0 0.0
    %6489 = vmatpush.msra.mxu0 0.0
    %6490 = vmatpush.msra.mxu0 %v6473
    %6491 = vmatmul.f32.gmra.mxu0 %v6470
    %v6492 = vpop.f32.mrf.mxu0
    %v6493 = vadd.f32 0.0, %v6492
    %6494 = vdwg.mxu0
    %v6496 = vunpack.c.l.s4 1983009808
    %v6497 = vunpack.c.0.s8 %v6496
    %v6498 = vperm.slane %v6467, %v6497
    %v6500 = vunpack.c.l.s4 1983009808
    %v6501 = vunpack.c.0.s8 %v6500
    %v6502 = vperm.slane %v6493, %v6501
    %v6503 = vrot.slane %v6502, 4
    %v6504 = vsel %vm983, %v6503, %v6498
    %v6505 = vrot.slane %v6498, 4
    %v6506 = vsel %vm983, %v6502, %v6505
    %v6508 = vunpack.c.l.s4 1934713408
    %v6509 = vunpack.c.0.s8 %v6508
    %v6510 = vperm.slane %v6504, %v6509
    %v6512 = vunpack.c.l.s4 1934713408
    %v6513 = vunpack.c.0.s8 %v6512
    %v6514 = vperm.slane %v6506, %v6513
    %v6515 = vrot.slane %v6510, 4
    %v6516 = vsel %vm983, 0.0, %v6515
    %v6517 = vrot.slane %v6514, 4
    %v6518 = vsel %vm983, 0.0, %v6517
    %6520 = vrot.lane.b32.xlu0 %v6516, 32
    %v6521 = vpop.permute.xlu0 %6520
    %6524 = vrot.lane.b32.xlu0 %v6514, 64
    %v6525 = vpop.permute.xlu0 %6524
    %6528 = vrot.lane.b32.xlu0 %v6518, 96
    %v6529 = vpop.permute.xlu0 %6528
    %v6531 = vsel %vm1294, %v6510, %v6521
    %v6532 = vsel %vm805, %v6531, %v6525
    %v6533 = vsel %vm1297, %v6532, %v6529
    %6534 = vmatpush.msra.mxu0 %v474
    %6535 = vmatpush.msra.mxu0 %v473
    %6536 = vmatpush.msra.mxu0 %v472
    %6537 = vmatpush.msra.mxu0 %v471
    %6538 = vmatpush.msra.mxu0 %v470
    %6539 = vmatpush.msra.mxu0 %v469
    %6540 = vmatpush.msra.mxu0 %v468
    %6541 = vmatpush.msra.mxu0 %v467
    %6542 = vmatpush.msra.mxu0 %v466
    %6543 = vmatpush.msra.mxu0 %v465
    %6544 = vmatpush.msra.mxu0 %v464
    %6545 = vmatpush.msra.mxu0 %v463
    %6546 = vmatpush.msra.mxu0 %v462
    %6547 = vmatpush.msra.mxu0 %v461
    %6548 = vmatpush.msra.mxu0 %v460
    %6549 = vmatpush.msra.mxu0 %v459
    %6550 = vmatmul.f32.gmra.mxu0 %v6533
    %v6551 = vpop.f32.mrf.mxu0
    %v6552 = vadd.f32 0.0, %v6551
    %6553 = vdwg.mxu0
    %6554 = vmatpush.msra.mxu0 %v458
    %6555 = vmatpush.msra.mxu0 %v457
    %6556 = vmatpush.msra.mxu0 %v456
    %6557 = vmatpush.msra.mxu0 %v455
    %6558 = vmatpush.msra.mxu0 %v454
    %6559 = vmatpush.msra.mxu0 %v453
    %6560 = vmatpush.msra.mxu0 %v452
    %6561 = vmatpush.msra.mxu0 %v451
    %6562 = vmatpush.msra.mxu0 %v450
    %6563 = vmatpush.msra.mxu0 %v449
    %6564 = vmatpush.msra.mxu0 %v448
    %6565 = vmatpush.msra.mxu0 %v447
    %6566 = vmatpush.msra.mxu0 %v446
    %6567 = vmatpush.msra.mxu0 %v445
    %6568 = vmatpush.msra.mxu0 %v444
    %6569 = vmatpush.msra.mxu0 %v443
    %6570 = vmatmul.f32.gmra.mxu0 %v6190
    %v6571 = vpop.f32.mrf.mxu0
    %v6572 = vadd.f32 %v6552, %v6571
    %6573 = vdwg.mxu0
    %v6574 = vadd.f32 %v6572, %v5847
    %v6577 = vperm.slane %v5493, %v540
    %v6578 = vperm.slane %v5494, %v540
    %v6579 = vsel %vm658, %v6578, %v6577
    %v6580 = vsel %vm660, %v6579, 0
    %6582 = vmatpush.msra.mxu0 0.0
    %6583 = vmatpush.msra.mxu0 0.0
    %6584 = vmatpush.msra.mxu0 0.0
    %6585 = vmatpush.msra.mxu0 0.0
    %6586 = vmatpush.msra.mxu0 0.0
    %6587 = vmatpush.msra.mxu0 0.0
    %6588 = vmatpush.msra.mxu0 0.0
    %6589 = vmatpush.msra.mxu0 0.0
    %6590 = vmatpush.msra.mxu0 0.0
    %6591 = vmatpush.msra.mxu0 0.0
    %6592 = vmatpush.msra.mxu0 0.0
    %6593 = vmatpush.msra.mxu0 0.0
    %6594 = vmatpush.msra.mxu0 0.0
    %6595 = vmatpush.msra.mxu0 0.0
    %6596 = vmatpush.msra.mxu0 0.0
    %6597 = vmatpush.msra.mxu0 %v1691
    %6598 = vmatmul.f32.gmra.mxu0 %v6580
    %v6599 = vpop.f32.mrf.mxu0
    %v6600 = vadd.f32 0.0, %v6599
    %6601 = vdwg.mxu0
    %v6602 = vmul.f32 %v6600, %v6574
    %v6603 = vsub.f32 1.0, %v6600
    %v6604 = vmul.f32 %v6603, %v5388
    %v6605 = vadd.f32 %v6602, %v6604
    %v6606 = vmul.f32 %v6600, %v5845
    %v6607 = vmul.f32 %v6603, %v5391
    %v6608 = vadd.f32 %v6606, %v6607
    %v6610 = vrot.slane %v157, 2
    %v6612 = vmul.f32 %v6605, %v6610
    %v6614 = vrot.slane %v185, 2
    %6616 = vmatpush.msra.mxu0 %v247
    %6617 = vmatpush.msra.mxu0 %v246
    %6618 = vmatpush.msra.mxu0 %v245
    %6619 = vmatpush.msra.mxu0 %v244
    %6620 = vmatpush.msra.mxu0 %v243
    %6621 = vmatpush.msra.mxu0 %v242
    %6622 = vmatpush.msra.mxu0 %v241
    %6623 = vmatpush.msra.mxu0 %v240
    %6624 = vmatpush.msra.mxu0 %v239
    %6625 = vmatpush.msra.mxu0 %v238
    %6626 = vmatpush.msra.mxu0 %v237
    %6627 = vmatpush.msra.mxu0 %v236
    %6628 = vmatpush.msra.mxu0 %v235
    %6629 = vmatpush.msra.mxu0 %v234
    %6630 = vmatpush.msra.mxu0 %v233
    %6631 = vmatpush.msra.mxu0 %v232
    %6632 = vmatmul.f32.gmra.mxu0 %v6612
    %v6633 = vpop.f32.mrf.mxu0
    %v6634 = vadd.f32 %v6614, %v6633
    %6635 = vdwg.mxu0
    %6636 = vmatpush.msra.mxu0 %v230
    %6637 = vmatpush.msra.mxu0 %v229
    %6638 = vmatpush.msra.mxu0 %v228
    %6639 = vmatpush.msra.mxu0 %v227
    %6640 = vmatpush.msra.mxu0 %v226
    %6641 = vmatpush.msra.mxu0 %v225
    %6642 = vmatpush.msra.mxu0 %v224
    %6643 = vmatpush.msra.mxu0 %v223
    %6644 = vmatpush.msra.mxu0 %v222
    %6645 = vmatpush.msra.mxu0 %v221
    %6646 = vmatpush.msra.mxu0 %v220
    %6647 = vmatpush.msra.mxu0 %v219
    %6648 = vmatpush.msra.mxu0 %v218
    %6649 = vmatpush.msra.mxu0 %v217
    %6650 = vmatpush.msra.mxu0 %v216
    %6651 = vmatpush.msra.mxu0 %v215
    %6652 = vmatmul.f32.gmra.mxu0 %v6605
    %v6653 = vpop.f32.mrf.mxu0
    %v6654 = vadd.f32 %v499, %v6653
    %6655 = vdwg.mxu0
    %v6656 = vperm.slane %v6634, 0
    %v6657 = vlaneseq
    %v6658 = vshrl.u32 %v6657, 7
    %6660 = vset.pattern.permute.xlu0 %v6658
    %6661 = vperm.xlu0 %6660, %v6656
    %v6662 = vpop.permute.xlu0 %6661
    %v6663 = vperm.slane %v6634, 1
    %v6664 = vlaneseq
    %v6665 = vshrl.u32 %v6664, 7
    %6667 = vset.pattern.permute.xlu0 %v6665
    %6668 = vperm.xlu0 %6667, %v6663
    %v6669 = vpop.permute.xlu0 %6668
    %v6671 = vrot.slane %v6634, 1
    %v6672 = vperm.slane %v6634, 0
    %v6673 = vperm.slane %v6671, 0
    %vm6676 = vcmp.gt.f32.partialorder %v6672, %v6662
    %vm6677 = vcmp.gt.f32.partialorder %v6673, %v6669
    %vm6678 = vcmp.eq.f32.partialorder %v6672, %v6662
    %vm6679 = vcmp.eq.f32.partialorder %v6673, %v6669
    %vm6680 = vmand %vm6678, %vm549
    %vm6681 = vmand %vm6679, %vm549
    %vm6682 = vmor %vm6676, %vm6680
    %vm6683 = vmor %vm6677, %vm6681
    %v6684 = vsel %vm6682, 1, 0
    %v6685 = vsel %vm6683, 1, 0
    %v6686 = vsel %vm556, %v6684, 0
    %v6687 = vand.u32 %v6686, 65535
    %v6688 = vshrl.u32 %v6686, 16
    %v6689 = vcvt.s32.f32 %v6687
    %v6690 = vcvt.s32.f32 %v6688
    %6691 = vadd.xlane.f32.xlu0 %v6689
    %v6692 = vpop.xlane.xlu0 %6691
    %6693 = vadd.xlane.f32.xlu0 %v6690
    %v6694 = vpop.xlane.xlu0 %6693
    %v6695 = vcvt.f32.s32 %v6692
    %v6696 = vcvt.f32.s32 %v6694
    %v6697 = vshll.u32 %v6696, 16
    %v6698 = vadd.s32 %v6697, %v6695
    %v6699 = vsel %vm556, %v6685, 0
    %v6700 = vand.u32 %v6699, 65535
    %v6701 = vshrl.u32 %v6699, 16
    %v6702 = vcvt.s32.f32 %v6700
    %v6703 = vcvt.s32.f32 %v6701
    %6704 = vadd.xlane.f32.xlu0 %v6702
    %v6705 = vpop.xlane.xlu0 %6704
    %6706 = vadd.xlane.f32.xlu0 %v6703
    %v6707 = vpop.xlane.xlu0 %6706
    %v6708 = vcvt.f32.s32 %v6705
    %v6709 = vcvt.f32.s32 %v6707
    %v6710 = vshll.u32 %v6709, 16
    %v6711 = vadd.s32 %v6710, %v6708
    %vm6712 = vcmp.lt.s32.totalorder %v6698, 2
    %vm6713 = vcmp.lt.s32.totalorder %v6711, 2
    %v6714 = vsel %vm6712, 1, 0
    %v6715 = vsel %vm6713, 1, 0
    %v6716 = vcvt.s32.f32 %v6714
    %v6717 = vcvt.s32.f32 %v6715
    %v6718 = vsub.f32 %v6634, %v6654
    %v6719 = vxor.u32 %v6718, 2147483648
    %v6720 = vmul.f32 %v6719, 1.442695
    %v6721 = vpow.pop %v6720
    %v6722 = vadd.f32 %v6721, 1.0
    %v6723 = vrcp.pop %v6722
    %v6724 = vmul.f32 %v6722, %v6723
    %v6725 = vsub.f32 1.0, %v6724
    %v6726 = vmul.f32 %v6723, %v6725
    %v6727 = vadd.f32 %v6723, %v6726
    %vm6728 = vweird.f32 %v6722
    %vm6729 = vweird.f32 %v6723
    %vm6730 = vmor %vm6728, %vm6729
    %v6731 = vsel %vm6730, %v6723, %v6727
    %v6732 = vand.u32 2147483647, %v6722
    %vm6733 = vcmp.eq.f32.partialorder %v6732, 8.507059e+37
    %v6734 = vand.u32 %v6722, 2147483648
    %v6735 = vor.u32 1.1754944e-38, %v6734
    %v6736 = vsel %vm6733, %v6735, %v6731
    %v6737 = vmul.f32 1.0, %v6736
    %v6739 = vperm.slane %v6737, 0
    %v6740 = vlaneseq
    %v6741 = vshrl.u32 %v6740, 7
    %6743 = vset.pattern.permute.xlu0 %v6741
    %6744 = vperm.xlu0 %6743, %v6739
    %v6745 = vpop.permute.xlu0 %6744
    %v6746 = vperm.slane %v6737, 1
    %v6747 = vlaneseq
    %v6748 = vshrl.u32 %v6747, 7
    %6750 = vset.pattern.permute.xlu0 %v6748
    %6751 = vperm.xlu0 %6750, %v6746
    %v6752 = vpop.permute.xlu0 %6751
    %v6755 = vmul.f32 %v6716, %v6745
    %v6756 = vmul.f32 %v6717, %v6752
    %v6757 = vsub.f32 1.0, %v6737
    %v6759 = vperm.slane %v6757, 0
    %v6760 = vlaneseq
    %v6761 = vshrl.u32 %v6760, 7
    %6763 = vset.pattern.permute.xlu0 %v6761
    %6764 = vperm.xlu0 %6763, %v6759
    %v6765 = vpop.permute.xlu0 %6764
    %v6766 = vperm.slane %v6757, 1
    %v6767 = vlaneseq
    %v6768 = vshrl.u32 %v6767, 7
    %6770 = vset.pattern.permute.xlu0 %v6768
    %6771 = vperm.xlu0 %6770, %v6766
    %v6772 = vpop.permute.xlu0 %6771
    %v6775 = vmul.f32 %v6716, %v6765
    %v6776 = vmul.f32 %v6717, %v6772
    %6779 = vset.pattern.permute.xlu0 0
    %6780 = vperm.xlu0 %6779, %v6755
    %v6781 = vpop.permute.xlu0 %6780
    %6782 = vset.pattern.permute.xlu0 0
    %6783 = vperm.xlu0 %6782, %v6756
    %v6784 = vpop.permute.xlu0 %6783
    %v6785 = vperm.slane %v6781, %v540
    %v6786 = vperm.slane %v6784, %v540
    %v6787 = vsel %vm658, %v6786, %v6785
    %v6788 = vsel %vm660, %v6787, 0
    %6790 = vmatpush.msra.mxu0 0.0
    %6791 = vmatpush.msra.mxu0 0.0
    %6792 = vmatpush.msra.mxu0 0.0
    %6793 = vmatpush.msra.mxu0 0.0
    %6794 = vmatpush.msra.mxu0 0.0
    %6795 = vmatpush.msra.mxu0 0.0
    %6796 = vmatpush.msra.mxu0 0.0
    %6797 = vmatpush.msra.mxu0 0.0
    %6798 = vmatpush.msra.mxu0 0.0
    %6799 = vmatpush.msra.mxu0 0.0
    %6800 = vmatpush.msra.mxu0 0.0
    %6801 = vmatpush.msra.mxu0 0.0
    %6802 = vmatpush.msra.mxu0 0.0
    %6803 = vmatpush.msra.mxu0 0.0
    %6804 = vmatpush.msra.mxu0 0.0
    %6805 = vmatpush.msra.mxu0 %v665
    %6806 = vmatmul.f32.gmra.mxu0 %v6788
    %v6807 = vpop.f32.mrf.mxu0
    %v6808 = vadd.f32 0.0, %v6807
    %6809 = vdwg.mxu0
    %v6811 = vrot.slane %v213, 2
    %v6813 = vmul.f32 %v6808, %v6811
    %6816 = vset.pattern.permute.xlu0 0
    %6817 = vperm.xlu0 %6816, %v6775
    %v6818 = vpop.permute.xlu0 %6817
    %6819 = vset.pattern.permute.xlu0 0
    %6820 = vperm.xlu0 %6819, %v6776
    %v6821 = vpop.permute.xlu0 %6820
    %v6822 = vperm.slane %v6818, %v540
    %v6823 = vperm.slane %v6821, %v540
    %v6824 = vsel %vm658, %v6823, %v6822
    %v6825 = vsel %vm660, %v6824, 0
    %6827 = vmatpush.msra.mxu0 0.0
    %6828 = vmatpush.msra.mxu0 0.0
    %6829 = vmatpush.msra.mxu0 0.0
    %6830 = vmatpush.msra.mxu0 0.0
    %6831 = vmatpush.msra.mxu0 0.0
    %6832 = vmatpush.msra.mxu0 0.0
    %6833 = vmatpush.msra.mxu0 0.0
    %6834 = vmatpush.msra.mxu0 0.0
    %6835 = vmatpush.msra.mxu0 0.0
    %6836 = vmatpush.msra.mxu0 0.0
    %6837 = vmatpush.msra.mxu0 0.0
    %6838 = vmatpush.msra.mxu0 0.0
    %6839 = vmatpush.msra.mxu0 0.0
    %6840 = vmatpush.msra.mxu0 0.0
    %6841 = vmatpush.msra.mxu0 0.0
    %6842 = vmatpush.msra.mxu0 %v702
    %6843 = vmatmul.f32.gmra.mxu0 %v6825
    %v6844 = vpop.f32.mrf.mxu0
    %v6845 = vadd.f32 0.0, %v6844
    %6846 = vdwg.mxu0
    %v6847 = vadd.f32 %v6813, %v6845
    %6848 = vmatpush.msra.mxu0 %v343
    %6849 = vmatpush.msra.mxu0 %v339
    %6850 = vmatpush.msra.mxu0 %v335
    %6851 = vmatpush.msra.mxu0 %v331
    %6852 = vmatpush.msra.mxu0 %v327
    %6853 = vmatpush.msra.mxu0 %v323
    %6854 = vmatpush.msra.mxu0 %v319
    %6855 = vmatpush.msra.mxu0 %v315
    %6856 = vmatpush.msra.mxu0 %v311
    %6857 = vmatpush.msra.mxu0 %v307
    %6858 = vmatpush.msra.mxu0 %v303
    %6859 = vmatpush.msra.mxu0 %v299
    %6860 = vmatpush.msra.mxu0 %v295
    %6861 = vmatpush.msra.mxu0 %v291
    %6862 = vmatpush.msra.mxu0 %v287
    %6863 = vmatpush.msra.mxu0 %v283
    %6864 = vmatmul.f32.gmra.mxu0 %v6605
    %v6865 = vpop.f32.mrf.mxu0
    %v6866 = vadd.f32 0.0, %v6865
    %6867 = vdwg.mxu0
    %6868 = vmatpush.msra.mxu0 %v344
    %6869 = vmatpush.msra.mxu0 %v340
    %6870 = vmatpush.msra.mxu0 %v336
    %6871 = vmatpush.msra.mxu0 %v332
    %6872 = vmatpush.msra.mxu0 %v328
    %6873 = vmatpush.msra.mxu0 %v324
    %6874 = vmatpush.msra.mxu0 %v320
    %6875 = vmatpush.msra.mxu0 %v316
    %6876 = vmatpush.msra.mxu0 %v312
    %6877 = vmatpush.msra.mxu0 %v308
    %6878 = vmatpush.msra.mxu0 %v304
    %6879 = vmatpush.msra.mxu0 %v300
    %6880 = vmatpush.msra.mxu0 %v296
    %6881 = vmatpush.msra.mxu0 %v292
    %6882 = vmatpush.msra.mxu0 %v288
    %6883 = vmatpush.msra.mxu0 %v284
    %6884 = vmatmul.f32.gmra.mxu0 %v6605
    %v6885 = vpop.f32.mrf.mxu0
    %v6886 = vadd.f32 0.0, %v6885
    %6887 = vdwg.mxu0
    %6888 = vmatpush.msra.mxu0 %v345
    %6889 = vmatpush.msra.mxu0 %v341
    %6890 = vmatpush.msra.mxu0 %v337
    %6891 = vmatpush.msra.mxu0 %v333
    %6892 = vmatpush.msra.mxu0 %v329
    %6893 = vmatpush.msra.mxu0 %v325
    %6894 = vmatpush.msra.mxu0 %v321
    %6895 = vmatpush.msra.mxu0 %v317
    %6896 = vmatpush.msra.mxu0 %v313
    %6897 = vmatpush.msra.mxu0 %v309
    %6898 = vmatpush.msra.mxu0 %v305
    %6899 = vmatpush.msra.mxu0 %v301
    %6900 = vmatpush.msra.mxu0 %v297
    %6901 = vmatpush.msra.mxu0 %v293
    %6902 = vmatpush.msra.mxu0 %v289
    %6903 = vmatpush.msra.mxu0 %v285
    %6904 = vmatmul.f32.gmra.mxu0 %v6605
    %v6905 = vpop.f32.mrf.mxu0
    %v6906 = vadd.f32 0.0, %v6905
    %6907 = vdwg.mxu0
    %6908 = vmatpush.msra.mxu0 %v346
    %6909 = vmatpush.msra.mxu0 %v342
    %6910 = vmatpush.msra.mxu0 %v338
    %6911 = vmatpush.msra.mxu0 %v334
    %6912 = vmatpush.msra.mxu0 %v330
    %6913 = vmatpush.msra.mxu0 %v326
    %6914 = vmatpush.msra.mxu0 %v322
    %6915 = vmatpush.msra.mxu0 %v318
    %6916 = vmatpush.msra.mxu0 %v314
    %6917 = vmatpush.msra.mxu0 %v310
    %6918 = vmatpush.msra.mxu0 %v306
    %6919 = vmatpush.msra.mxu0 %v302
    %6920 = vmatpush.msra.mxu0 %v298
    %6921 = vmatpush.msra.mxu0 %v294
    %6922 = vmatpush.msra.mxu0 %v290
    %6923 = vmatpush.msra.mxu0 %v286
    %6924 = vmatmul.f32.gmra.mxu0 %v6605
    %v6925 = vpop.f32.mrf.mxu0
    %v6926 = vadd.f32 0.0, %v6925
    %6927 = vdwg.mxu0
    %v6929 = vsel %vm805, %v6847, 0
    %6931 = vmatpush.msra.mxu0 0.0
    %6932 = vmatpush.msra.mxu0 0.0
    %6933 = vmatpush.msra.mxu0 0.0
    %6934 = vmatpush.msra.mxu0 0.0
    %6935 = vmatpush.msra.mxu0 0.0
    %6936 = vmatpush.msra.mxu0 0.0
    %6937 = vmatpush.msra.mxu0 0.0
    %6938 = vmatpush.msra.mxu0 0.0
    %6939 = vmatpush.msra.mxu0 %v279
    %6940 = vmatpush.msra.mxu0 %v275
    %6941 = vmatpush.msra.mxu0 %v271
    %6942 = vmatpush.msra.mxu0 %v267
    %6943 = vmatpush.msra.mxu0 %v263
    %6944 = vmatpush.msra.mxu0 %v259
    %6945 = vmatpush.msra.mxu0 %v255
    %6946 = vmatpush.msra.mxu0 %v251
    %6947 = vmatmul.f32.gmra.mxu0 %v6929
    %v6948 = vpop.f32.mrf.mxu0
    %v6949 = vadd.f32 %v6866, %v6948
    %6950 = vdwg.mxu0
    %6951 = vmatpush.msra.mxu0 0.0
    %6952 = vmatpush.msra.mxu0 0.0
    %6953 = vmatpush.msra.mxu0 0.0
    %6954 = vmatpush.msra.mxu0 0.0
    %6955 = vmatpush.msra.mxu0 0.0
    %6956 = vmatpush.msra.mxu0 0.0
    %6957 = vmatpush.msra.mxu0 0.0
    %6958 = vmatpush.msra.mxu0 0.0
    %6959 = vmatpush.msra.mxu0 %v280
    %6960 = vmatpush.msra.mxu0 %v276
    %6961 = vmatpush.msra.mxu0 %v272
    %6962 = vmatpush.msra.mxu0 %v268
    %6963 = vmatpush.msra.mxu0 %v264
    %6964 = vmatpush.msra.mxu0 %v260
    %6965 = vmatpush.msra.mxu0 %v256
    %6966 = vmatpush.msra.mxu0 %v252
    %6967 = vmatmul.f32.gmra.mxu0 %v6929
    %v6968 = vpop.f32.mrf.mxu0
    %v6969 = vadd.f32 %v6886, %v6968
    %6970 = vdwg.mxu0
    %6971 = vmatpush.msra.mxu0 0.0
    %6972 = vmatpush.msra.mxu0 0.0
    %6973 = vmatpush.msra.mxu0 0.0
    %6974 = vmatpush.msra.mxu0 0.0
    %6975 = vmatpush.msra.mxu0 0.0
    %6976 = vmatpush.msra.mxu0 0.0
    %6977 = vmatpush.msra.mxu0 0.0
    %6978 = vmatpush.msra.mxu0 0.0
    %6979 = vmatpush.msra.mxu0 %v281
    %6980 = vmatpush.msra.mxu0 %v277
    %6981 = vmatpush.msra.mxu0 %v273
    %6982 = vmatpush.msra.mxu0 %v269
    %6983 = vmatpush.msra.mxu0 %v265
    %6984 = vmatpush.msra.mxu0 %v261
    %6985 = vmatpush.msra.mxu0 %v257
    %6986 = vmatpush.msra.mxu0 %v253
    %6987 = vmatmul.f32.gmra.mxu0 %v6929
    %v6988 = vpop.f32.mrf.mxu0
    %v6989 = vadd.f32 %v6906, %v6988
    %6990 = vdwg.mxu0
    %6991 = vmatpush.msra.mxu0 0.0
    %6992 = vmatpush.msra.mxu0 0.0
    %6993 = vmatpush.msra.mxu0 0.0
    %6994 = vmatpush.msra.mxu0 0.0
    %6995 = vmatpush.msra.mxu0 0.0
    %6996 = vmatpush.msra.mxu0 0.0
    %6997 = vmatpush.msra.mxu0 0.0
    %6998 = vmatpush.msra.mxu0 0.0
    %6999 = vmatpush.msra.mxu0 %v282
    %7000 = vmatpush.msra.mxu0 %v278
    %7001 = vmatpush.msra.mxu0 %v274
    %7002 = vmatpush.msra.mxu0 %v270
    %7003 = vmatpush.msra.mxu0 %v266
    %7004 = vmatpush.msra.mxu0 %v262
    %7005 = vmatpush.msra.mxu0 %v258
    %7006 = vmatpush.msra.mxu0 %v254
    %7007 = vmatmul.f32.gmra.mxu0 %v6929
    %v7008 = vpop.f32.mrf.mxu0
    %v7009 = vadd.f32 %v6926, %v7008
    %7010 = vdwg.mxu0
    %v7011 = vxor.u32 %v6949, 2147483648
    %v7012 = vmul.f32 %v7011, 1.442695
    %v7013 = vpow.pop %v7012
    %v7014 = vadd.f32 %v7013, 1.0
    %v7015 = vrcp.pop %v7014
    %v7016 = vmul.f32 %v7014, %v7015
    %v7017 = vsub.f32 1.0, %v7016
    %v7018 = vmul.f32 %v7015, %v7017
    %v7019 = vadd.f32 %v7015, %v7018
    %vm7020 = vweird.f32 %v7014
    %vm7021 = vweird.f32 %v7015
    %vm7022 = vmor %vm7020, %vm7021
    %v7023 = vsel %vm7022, %v7015, %v7019
    %v7024 = vand.u32 2147483647, %v7014
    %vm7025 = vcmp.eq.f32.partialorder %v7024, 8.507059e+37
    %v7026 = vand.u32 %v7014, 2147483648
    %v7027 = vor.u32 1.1754944e-38, %v7026
    %v7028 = vsel %vm7025, %v7027, %v7023
    %v7029 = vmul.f32 1.0, %v7028
    %v7030 = vxor.u32 %v6969, 2147483648
    %v7031 = vmul.f32 %v7030, 1.442695
    %v7032 = vpow.pop %v7031
    %v7033 = vadd.f32 %v7032, 1.0
    %v7034 = vrcp.pop %v7033
    %v7035 = vmul.f32 %v7033, %v7034
    %v7036 = vsub.f32 1.0, %v7035
    %v7037 = vmul.f32 %v7034, %v7036
    %v7038 = vadd.f32 %v7034, %v7037
    %vm7039 = vweird.f32 %v7033
    %vm7040 = vweird.f32 %v7034
    %vm7041 = vmor %vm7039, %vm7040
    %v7042 = vsel %vm7041, %v7034, %v7038
    %v7043 = vand.u32 2147483647, %v7033
    %vm7044 = vcmp.eq.f32.partialorder %v7043, 8.507059e+37
    %v7045 = vand.u32 %v7033, 2147483648
    %v7046 = vor.u32 1.1754944e-38, %v7045
    %v7047 = vsel %vm7044, %v7046, %v7042
    %v7048 = vmul.f32 1.0, %v7047
    %v7049 = vxor.u32 %v6989, 2147483648
    %v7050 = vmul.f32 %v7049, 1.442695
    %v7051 = vpow.pop %v7050
    %v7052 = vadd.f32 %v7051, 1.0
    %v7053 = vrcp.pop %v7052
    %v7054 = vmul.f32 %v7052, %v7053
    %v7055 = vsub.f32 1.0, %v7054
    %v7056 = vmul.f32 %v7053, %v7055
    %v7057 = vadd.f32 %v7053, %v7056
    %vm7058 = vweird.f32 %v7052
    %vm7059 = vweird.f32 %v7053
    %vm7060 = vmor %vm7058, %vm7059
    %v7061 = vsel %vm7060, %v7053, %v7057
    %v7062 = vand.u32 2147483647, %v7052
    %vm7063 = vcmp.eq.f32.partialorder %v7062, 8.507059e+37
    %v7064 = vand.u32 %v7052, 2147483648
    %v7065 = vor.u32 1.1754944e-38, %v7064
    %v7066 = vsel %vm7063, %v7065, %v7061
    %v7067 = vmul.f32 1.0, %v7066
    %v7068 = vtanh.pop %v7009
    %v7069 = vmul.f32 %v6608, %v7048
    %v7070 = vmul.f32 %v7029, %v7068
    %v7071 = vadd.f32 %v7069, %v7070
    %v7072 = vtanh.pop %v7071
    %v7073 = vmul.f32 %v7067, %v7072
    %7074 = vmatpush.msra.mxu0 %v362
    %7075 = vmatpush.msra.mxu0 %v361
    %7076 = vmatpush.msra.mxu0 %v360
    %7077 = vmatpush.msra.mxu0 %v359
    %7078 = vmatpush.msra.mxu0 %v358
    %7079 = vmatpush.msra.mxu0 %v357
    %7080 = vmatpush.msra.mxu0 %v356
    %7081 = vmatpush.msra.mxu0 %v355
    %7082 = vmatpush.msra.mxu0 %v354
    %7083 = vmatpush.msra.mxu0 %v353
    %7084 = vmatpush.msra.mxu0 %v352
    %7085 = vmatpush.msra.mxu0 %v351
    %7086 = vmatpush.msra.mxu0 %v350
    %7087 = vmatpush.msra.mxu0 %v349
    %7088 = vmatpush.msra.mxu0 %v348
    %7089 = vmatpush.msra.mxu0 %v347
    %7090 = vmatmul.f32.gmra.mxu0 %v7073
    %v7091 = vpop.f32.mrf.mxu0
    %v7092 = vadd.f32 0.0, %v7091
    %7093 = vdwg.mxu0
    %7095 = vrot.lane.b32.xlu0 %v7092, 112
    %v7096 = vpop.permute.xlu0 %7095
    %7098 = vrot.lane.b32.xlu0 %v7092, 96
    %v7099 = vpop.permute.xlu0 %7098
    %7101 = vrot.lane.b32.xlu0 %v7092, 80
    %v7102 = vpop.permute.xlu0 %7101
    %v7104 = vrot.slane %v7099, 4
    %v7105 = vsel %vm983, %v7104, %v7092
    %v7107 = vunpack.c.l.s4 1983009808
    %v7108 = vunpack.c.0.s8 %v7107
    %v7109 = vperm.slane %v7105, %v7108
    %v7110 = vrot.slane %v7102, 4
    %v7111 = vsel %vm983, %v7110, %v7096
    %v7113 = vunpack.c.l.s4 1983009808
    %v7114 = vunpack.c.0.s8 %v7113
    %v7115 = vperm.slane %v7111, %v7114
    %v7116 = vrot.slane %v7115, 4
    %v7117 = vsel %vm983, %v7116, %v7109
    %v7119 = vunpack.c.l.s4 1934713408
    %v7120 = vunpack.c.0.s8 %v7119
    %v7121 = vperm.slane %v7117, %v7120
    %v7122 = vrot.slane %v7121, 4
    %v7123 = vsel %vm983, 0.0, %v7122
    %7124 = vmatpush.msra.mxu0 %v394
    %7125 = vmatpush.msra.mxu0 %v393
    %7126 = vmatpush.msra.mxu0 %v392
    %7127 = vmatpush.msra.mxu0 %v391
    %7128 = vmatpush.msra.mxu0 %v390
    %7129 = vmatpush.msra.mxu0 %v389
    %7130 = vmatpush.msra.mxu0 %v388
    %7131 = vmatpush.msra.mxu0 %v387
    %7132 = vmatpush.msra.mxu0 %v386
    %7133 = vmatpush.msra.mxu0 %v385
    %7134 = vmatpush.msra.mxu0 %v384
    %7135 = vmatpush.msra.mxu0 %v383
    %7136 = vmatpush.msra.mxu0 %v382
    %7137 = vmatpush.msra.mxu0 %v381
    %7138 = vmatpush.msra.mxu0 %v380
    %7139 = vmatpush.msra.mxu0 %v379
    %7140 = vmatmul.f32.gmra.mxu0 %v7073
    %v7141 = vpop.f32.mrf.mxu0
    %v7142 = vadd.f32 0.0, %v7141
    %7143 = vdwg.mxu0
    %7145 = vrot.lane.b32.xlu0 %v7142, 112
    %v7146 = vpop.permute.xlu0 %7145
    %7148 = vrot.lane.b32.xlu0 %v7142, 96
    %v7149 = vpop.permute.xlu0 %7148
    %7151 = vrot.lane.b32.xlu0 %v7142, 80
    %v7152 = vpop.permute.xlu0 %7151
    %v7154 = vrot.slane %v7149, 4
    %v7155 = vsel %vm983, %v7154, %v7142
    %v7157 = vunpack.c.l.s4 1983009808
    %v7158 = vunpack.c.0.s8 %v7157
    %v7159 = vperm.slane %v7155, %v7158
    %v7160 = vrot.slane %v7152, 4
    %v7161 = vsel %vm983, %v7160, %v7146
    %v7163 = vunpack.c.l.s4 1983009808
    %v7164 = vunpack.c.0.s8 %v7163
    %v7165 = vperm.slane %v7161, %v7164
    %v7166 = vrot.slane %v7165, 4
    %v7167 = vsel %vm983, %v7166, %v7159
    %v7169 = vunpack.c.l.s4 1934713408
    %v7170 = vunpack.c.0.s8 %v7169
    %v7171 = vperm.slane %v7167, %v7170
    %v7172 = vrot.slane %v7171, 4
    %v7173 = vsel %vm983, 0.0, %v7172
    %7174 = vmatpush.msra.mxu0 %v426
    %7175 = vmatpush.msra.mxu0 %v425
    %7176 = vmatpush.msra.mxu0 %v424
    %7177 = vmatpush.msra.mxu0 %v423
    %7178 = vmatpush.msra.mxu0 %v422
    %7179 = vmatpush.msra.mxu0 %v421
    %7180 = vmatpush.msra.mxu0 %v420
    %7181 = vmatpush.msra.mxu0 %v419
    %7182 = vmatpush.msra.mxu0 %v418
    %7183 = vmatpush.msra.mxu0 %v417
    %7184 = vmatpush.msra.mxu0 %v416
    %7185 = vmatpush.msra.mxu0 %v415
    %7186 = vmatpush.msra.mxu0 %v414
    %7187 = vmatpush.msra.mxu0 %v413
    %7188 = vmatpush.msra.mxu0 %v412
    %7189 = vmatpush.msra.mxu0 %v411
    %7190 = vmatmul.f32.gmra.mxu0 %v7073
    %v7191 = vpop.f32.mrf.mxu0
    %v7192 = vadd.f32 0.0, %v7191
    %7193 = vdwg.mxu0
    %7195 = vrot.lane.b32.xlu0 %v7192, 96
    %v7196 = vpop.permute.xlu0 %7195
    %7198 = vrot.lane.b32.xlu0 %v7192, 64
    %v7199 = vpop.permute.xlu0 %7198
    %7201 = vrot.lane.b32.xlu0 %v7192, 32
    %v7202 = vpop.permute.xlu0 %7201
    %v7204 = vrot.slane %v7199, 4
    %v7205 = vsel %vm983, %v7204, %v7192
    %v7207 = vunpack.c.l.s4 1983009808
    %v7208 = vunpack.c.0.s8 %v7207
    %v7209 = vperm.slane %v7205, %v7208
    %v7210 = vrot.slane %v7202, 4
    %v7211 = vsel %vm983, %v7210, %v7196
    %v7213 = vunpack.c.l.s4 1983009808
    %v7214 = vunpack.c.0.s8 %v7213
    %v7215 = vperm.slane %v7211, %v7214
    %v7216 = vrot.slane %v7215, 4
    %v7217 = vsel %vm983, %v7216, %v7209
    %v7219 = vunpack.c.l.s4 1934713408
    %v7220 = vunpack.c.0.s8 %v7219
    %v7221 = vperm.slane %v7217, %v7220
    %v7222 = vrot.slane %v7221, 4
    %v7223 = vsel %vm983, 0.0, %v7222
    %v7225 = vsel %vm1103, %v7121, 0
    %v7228 = vsel %vm1103, %v7171, 0
    %7230 = vmatpush.xpose.msra.mxu0 0.0
    %7231 = vmatpush.xpose.msra.mxu0 0.0
    %7232 = vmatpush.xpose.msra.mxu0 0.0
    %7233 = vmatpush.xpose.msra.mxu0 0.0
    %7234 = vmatpush.xpose.msra.mxu0 0.0
    %7235 = vmatpush.xpose.msra.mxu0 0.0
    %7236 = vmatpush.xpose.msra.mxu0 0.0
    %7237 = vmatpush.xpose.msra.mxu0 0.0
    %7238 = vmatpush.xpose.msra.mxu0 0.0
    %7239 = vmatpush.xpose.msra.mxu0 0.0
    %7240 = vmatpush.xpose.msra.mxu0 0.0
    %7241 = vmatpush.xpose.msra.mxu0 0.0
    %7242 = vmatpush.xpose.msra.mxu0 0.0
    %7243 = vmatpush.xpose.msra.mxu0 0.0
    %7244 = vmatpush.xpose.msra.mxu0 0.0
    %7245 = vmatpush.xpose.msra.mxu0 %v7228
    %7246 = vmatmul.f32.gmra.mxu0 %v7225
    %v7247 = vpop.f32.mrf.mxu0
    %v7248 = vadd.f32 0.0, %v7247
    %7249 = vdwg.mxu0
    %v7251 = vsel %vm1103, %v7123, 0
    %v7254 = vsel %vm1103, %v7173, 0
    %7256 = vmatpush.xpose.msra.mxu0 0.0
    %7257 = vmatpush.xpose.msra.mxu0 0.0
    %7258 = vmatpush.xpose.msra.mxu0 0.0
    %7259 = vmatpush.xpose.msra.mxu0 0.0
    %7260 = vmatpush.xpose.msra.mxu0 0.0
    %7261 = vmatpush.xpose.msra.mxu0 0.0
    %7262 = vmatpush.xpose.msra.mxu0 0.0
    %7263 = vmatpush.xpose.msra.mxu0 0.0
    %7264 = vmatpush.xpose.msra.mxu0 0.0
    %7265 = vmatpush.xpose.msra.mxu0 0.0
    %7266 = vmatpush.xpose.msra.mxu0 0.0
    %7267 = vmatpush.xpose.msra.mxu0 0.0
    %7268 = vmatpush.xpose.msra.mxu0 0.0
    %7269 = vmatpush.xpose.msra.mxu0 0.0
    %7270 = vmatpush.xpose.msra.mxu0 0.0
    %7271 = vmatpush.xpose.msra.mxu0 %v7254
    %7272 = vmatmul.f32.gmra.mxu0 %v7251
    %v7273 = vpop.f32.mrf.mxu0
    %v7274 = vadd.f32 0.0, %v7273
    %7275 = vdwg.mxu0
    %v7276 = vmul.f32 %v7248, 0.25
    %v7277 = vmul.f32 %v7274, 0.25
    %v7278 = vsel %vm556, %v7276, -inf
    %7279 = vmax.xlane.f32.xlu0 %v7278
    %v7280 = vpop.xlane.xlu0 %7279
    %v7281 = vsel %vm556, %v7277, -inf
    %7282 = vmax.xlane.f32.xlu0 %v7281
    %v7283 = vpop.xlane.xlu0 %7282
    %v7284 = vsub.f32 %v7276, %v7280
    %v7285 = vsub.f32 %v7277, %v7283
    %v7286 = vmul.f32 %v7284, 1.442695
    %v7287 = vpow.pop %v7286
    %v7288 = vmul.f32 %v7285, 1.442695
    %v7289 = vpow.pop %v7288
    %v7290 = vsel %vm556, %v7287, 0.0
    %7291 = vadd.xlane.f32.xlu0 %v7290
    %v7292 = vpop.xlane.xlu0 %7291
    %v7293 = vsel %vm556, %v7289, 0.0
    %7294 = vadd.xlane.f32.xlu0 %v7293
    %v7295 = vpop.xlane.xlu0 %7294
    %v7296 = vrcp.pop %v7292
    %v7297 = vmul.f32 %v7292, %v7296
    %v7298 = vsub.f32 1.0, %v7297
    %v7299 = vmul.f32 %v7296, %v7298
    %v7300 = vadd.f32 %v7296, %v7299
    %vm7301 = vweird.f32 %v7292
    %vm7302 = vweird.f32 %v7296
    %vm7303 = vmor %vm7301, %vm7302
    %v7304 = vsel %vm7303, %v7296, %v7300
    %v7305 = vand.u32 2147483647, %v7292
    %vm7306 = vcmp.eq.f32.partialorder %v7305, 8.507059e+37
    %v7307 = vand.u32 %v7292, 2147483648
    %v7308 = vor.u32 1.1754944e-38, %v7307
    %v7309 = vsel %vm7306, %v7308, %v7304
    %v7310 = vmul.f32 %v7287, %v7309
    %v7311 = vrcp.pop %v7295
    %v7312 = vmul.f32 %v7295, %v7311
    %v7313 = vsub.f32 1.0, %v7312
    %v7314 = vmul.f32 %v7311, %v7313
    %v7315 = vadd.f32 %v7311, %v7314
    %vm7316 = vweird.f32 %v7295
    %vm7317 = vweird.f32 %v7311
    %vm7318 = vmor %vm7316, %vm7317
    %v7319 = vsel %vm7318, %v7311, %v7315
    %v7320 = vand.u32 2147483647, %v7295
    %vm7321 = vcmp.eq.f32.partialorder %v7320, 8.507059e+37
    %v7322 = vand.u32 %v7295, 2147483648
    %v7323 = vor.u32 1.1754944e-38, %v7322
    %v7324 = vsel %vm7321, %v7323, %v7319
    %v7325 = vmul.f32 %v7289, %v7324
    %v7327 = vsel %vm660, %v7310, 0
    %v7330 = vsel %vm663, %v7221, 0
    %7332 = vmatpush.msra.mxu0 0.0
    %7333 = vmatpush.msra.mxu0 0.0
    %7334 = vmatpush.msra.mxu0 0.0
    %7335 = vmatpush.msra.mxu0 0.0
    %7336 = vmatpush.msra.mxu0 0.0
    %7337 = vmatpush.msra.mxu0 0.0
    %7338 = vmatpush.msra.mxu0 0.0
    %7339 = vmatpush.msra.mxu0 0.0
    %7340 = vmatpush.msra.mxu0 0.0
    %7341 = vmatpush.msra.mxu0 0.0
    %7342 = vmatpush.msra.mxu0 0.0
    %7343 = vmatpush.msra.mxu0 0.0
    %7344 = vmatpush.msra.mxu0 0.0
    %7345 = vmatpush.msra.mxu0 0.0
    %7346 = vmatpush.msra.mxu0 0.0
    %7347 = vmatpush.msra.mxu0 %v7330
    %7348 = vmatmul.f32.gmra.mxu0 %v7327
    %v7349 = vpop.f32.mrf.mxu0
    %v7350 = vadd.f32 0.0, %v7349
    %7351 = vdwg.mxu0
    %v7353 = vsel %vm660, %v7325, 0
    %v7356 = vsel %vm663, %v7223, 0
    %7358 = vmatpush.msra.mxu0 0.0
    %7359 = vmatpush.msra.mxu0 0.0
    %7360 = vmatpush.msra.mxu0 0.0
    %7361 = vmatpush.msra.mxu0 0.0
    %7362 = vmatpush.msra.mxu0 0.0
    %7363 = vmatpush.msra.mxu0 0.0
    %7364 = vmatpush.msra.mxu0 0.0
    %7365 = vmatpush.msra.mxu0 0.0
    %7366 = vmatpush.msra.mxu0 0.0
    %7367 = vmatpush.msra.mxu0 0.0
    %7368 = vmatpush.msra.mxu0 0.0
    %7369 = vmatpush.msra.mxu0 0.0
    %7370 = vmatpush.msra.mxu0 0.0
    %7371 = vmatpush.msra.mxu0 0.0
    %7372 = vmatpush.msra.mxu0 0.0
    %7373 = vmatpush.msra.mxu0 %v7356
    %7374 = vmatmul.f32.gmra.mxu0 %v7353
    %v7375 = vpop.f32.mrf.mxu0
    %v7376 = vadd.f32 0.0, %v7375
    %7377 = vdwg.mxu0
    %v7379 = vunpack.c.l.s4 1983009808
    %v7380 = vunpack.c.0.s8 %v7379
    %v7381 = vperm.slane %v7350, %v7380
    %v7383 = vunpack.c.l.s4 1983009808
    %v7384 = vunpack.c.0.s8 %v7383
    %v7385 = vperm.slane %v7376, %v7384
    %v7386 = vrot.slane %v7385, 4
    %v7387 = vsel %vm983, %v7386, %v7381
    %v7388 = vrot.slane %v7381, 4
    %v7389 = vsel %vm983, %v7385, %v7388
    %v7391 = vunpack.c.l.s4 1934713408
    %v7392 = vunpack.c.0.s8 %v7391
    %v7393 = vperm.slane %v7387, %v7392
    %v7395 = vunpack.c.l.s4 1934713408
    %v7396 = vunpack.c.0.s8 %v7395
    %v7397 = vperm.slane %v7389, %v7396
    %v7398 = vrot.slane %v7393, 4
    %v7399 = vsel %vm983, 0.0, %v7398
    %v7400 = vrot.slane %v7397, 4
    %v7401 = vsel %vm983, 0.0, %v7400
    %7403 = vrot.lane.b32.xlu0 %v7399, 32
    %v7404 = vpop.permute.xlu0 %7403
    %7407 = vrot.lane.b32.xlu0 %v7397, 64
    %v7408 = vpop.permute.xlu0 %7407
    %7411 = vrot.lane.b32.xlu0 %v7401, 96
    %v7412 = vpop.permute.xlu0 %7411
    %v7414 = vsel %vm1294, %v7393, %v7404
    %v7415 = vsel %vm805, %v7414, %v7408
    %v7416 = vsel %vm1297, %v7415, %v7412
    %7417 = vmatpush.msra.mxu0 %v378
    %7418 = vmatpush.msra.mxu0 %v377
    %7419 = vmatpush.msra.mxu0 %v376
    %7420 = vmatpush.msra.mxu0 %v375
    %7421 = vmatpush.msra.mxu0 %v374
    %7422 = vmatpush.msra.mxu0 %v373
    %7423 = vmatpush.msra.mxu0 %v372
    %7424 = vmatpush.msra.mxu0 %v371
    %7425 = vmatpush.msra.mxu0 %v370
    %7426 = vmatpush.msra.mxu0 %v369
    %7427 = vmatpush.msra.mxu0 %v368
    %7428 = vmatpush.msra.mxu0 %v367
    %7429 = vmatpush.msra.mxu0 %v366
    %7430 = vmatpush.msra.mxu0 %v365
    %7431 = vmatpush.msra.mxu0 %v364
    %7432 = vmatpush.msra.mxu0 %v363
    %7433 = vmatmul.f32.gmra.mxu0 %v7073
    %v7434 = vpop.f32.mrf.mxu0
    %v7435 = vadd.f32 0.0, %v7434
    %7436 = vdwg.mxu0
    %7438 = vrot.lane.b32.xlu0 %v7435, 112
    %v7439 = vpop.permute.xlu0 %7438
    %7441 = vrot.lane.b32.xlu0 %v7435, 96
    %v7442 = vpop.permute.xlu0 %7441
    %7444 = vrot.lane.b32.xlu0 %v7435, 80
    %v7445 = vpop.permute.xlu0 %7444
    %v7447 = vrot.slane %v7442, 4
    %v7448 = vsel %vm983, %v7447, %v7435
    %v7450 = vunpack.c.l.s4 1983009808
    %v7451 = vunpack.c.0.s8 %v7450
    %v7452 = vperm.slane %v7448, %v7451
    %v7453 = vrot.slane %v7445, 4
    %v7454 = vsel %vm983, %v7453, %v7439
    %v7456 = vunpack.c.l.s4 1983009808
    %v7457 = vunpack.c.0.s8 %v7456
    %v7458 = vperm.slane %v7454, %v7457
    %v7459 = vrot.slane %v7458, 4
    %v7460 = vsel %vm983, %v7459, %v7452
    %v7462 = vunpack.c.l.s4 1934713408
    %v7463 = vunpack.c.0.s8 %v7462
    %v7464 = vperm.slane %v7460, %v7463
    %v7465 = vrot.slane %v7464, 4
    %v7466 = vsel %vm983, 0.0, %v7465
    %7467 = vmatpush.msra.mxu0 %v410
    %7468 = vmatpush.msra.mxu0 %v409
    %7469 = vmatpush.msra.mxu0 %v408
    %7470 = vmatpush.msra.mxu0 %v407
    %7471 = vmatpush.msra.mxu0 %v406
    %7472 = vmatpush.msra.mxu0 %v405
    %7473 = vmatpush.msra.mxu0 %v404
    %7474 = vmatpush.msra.mxu0 %v403
    %7475 = vmatpush.msra.mxu0 %v402
    %7476 = vmatpush.msra.mxu0 %v401
    %7477 = vmatpush.msra.mxu0 %v400
    %7478 = vmatpush.msra.mxu0 %v399
    %7479 = vmatpush.msra.mxu0 %v398
    %7480 = vmatpush.msra.mxu0 %v397
    %7481 = vmatpush.msra.mxu0 %v396
    %7482 = vmatpush.msra.mxu0 %v395
    %7483 = vmatmul.f32.gmra.mxu0 %v7073
    %v7484 = vpop.f32.mrf.mxu0
    %v7485 = vadd.f32 0.0, %v7484
    %7486 = vdwg.mxu0
    %7488 = vrot.lane.b32.xlu0 %v7485, 112
    %v7489 = vpop.permute.xlu0 %7488
    %7491 = vrot.lane.b32.xlu0 %v7485, 96
    %v7492 = vpop.permute.xlu0 %7491
    %7494 = vrot.lane.b32.xlu0 %v7485, 80
    %v7495 = vpop.permute.xlu0 %7494
    %v7497 = vrot.slane %v7492, 4
    %v7498 = vsel %vm983, %v7497, %v7485
    %v7500 = vunpack.c.l.s4 1983009808
    %v7501 = vunpack.c.0.s8 %v7500
    %v7502 = vperm.slane %v7498, %v7501
    %v7503 = vrot.slane %v7495, 4
    %v7504 = vsel %vm983, %v7503, %v7489
    %v7506 = vunpack.c.l.s4 1983009808
    %v7507 = vunpack.c.0.s8 %v7506
    %v7508 = vperm.slane %v7504, %v7507
    %v7509 = vrot.slane %v7508, 4
    %v7510 = vsel %vm983, %v7509, %v7502
    %v7512 = vunpack.c.l.s4 1934713408
    %v7513 = vunpack.c.0.s8 %v7512
    %v7514 = vperm.slane %v7510, %v7513
    %v7515 = vrot.slane %v7514, 4
    %v7516 = vsel %vm983, 0.0, %v7515
    %7517 = vmatpush.msra.mxu0 %v442
    %7518 = vmatpush.msra.mxu0 %v441
    %7519 = vmatpush.msra.mxu0 %v440
    %7520 = vmatpush.msra.mxu0 %v439
    %7521 = vmatpush.msra.mxu0 %v438
    %7522 = vmatpush.msra.mxu0 %v437
    %7523 = vmatpush.msra.mxu0 %v436
    %7524 = vmatpush.msra.mxu0 %v435
    %7525 = vmatpush.msra.mxu0 %v434
    %7526 = vmatpush.msra.mxu0 %v433
    %7527 = vmatpush.msra.mxu0 %v432
    %7528 = vmatpush.msra.mxu0 %v431
    %7529 = vmatpush.msra.mxu0 %v430
    %7530 = vmatpush.msra.mxu0 %v429
    %7531 = vmatpush.msra.mxu0 %v428
    %7532 = vmatpush.msra.mxu0 %v427
    %7533 = vmatmul.f32.gmra.mxu0 %v7073
    %v7534 = vpop.f32.mrf.mxu0
    %v7535 = vadd.f32 0.0, %v7534
    %7536 = vdwg.mxu0
    %7538 = vrot.lane.b32.xlu0 %v7535, 96
    %v7539 = vpop.permute.xlu0 %7538
    %7541 = vrot.lane.b32.xlu0 %v7535, 64
    %v7542 = vpop.permute.xlu0 %7541
    %7544 = vrot.lane.b32.xlu0 %v7535, 32
    %v7545 = vpop.permute.xlu0 %7544
    %v7547 = vrot.slane %v7542, 4
    %v7548 = vsel %vm983, %v7547, %v7535
    %v7550 = vunpack.c.l.s4 1983009808
    %v7551 = vunpack.c.0.s8 %v7550
    %v7552 = vperm.slane %v7548, %v7551
    %v7553 = vrot.slane %v7545, 4
    %v7554 = vsel %vm983, %v7553, %v7539
    %v7556 = vunpack.c.l.s4 1983009808
    %v7557 = vunpack.c.0.s8 %v7556
    %v7558 = vperm.slane %v7554, %v7557
    %v7559 = vrot.slane %v7558, 4
    %v7560 = vsel %vm983, %v7559, %v7552
    %v7562 = vunpack.c.l.s4 1934713408
    %v7563 = vunpack.c.0.s8 %v7562
    %v7564 = vperm.slane %v7560, %v7563
    %v7565 = vrot.slane %v7564, 4
    %v7566 = vsel %vm983, 0.0, %v7565
    %v7568 = vsel %vm1103, %v7464, 0
    %v7571 = vsel %vm1103, %v7514, 0
    %7573 = vmatpush.xpose.msra.mxu0 0.0
    %7574 = vmatpush.xpose.msra.mxu0 0.0
    %7575 = vmatpush.xpose.msra.mxu0 0.0
    %7576 = vmatpush.xpose.msra.mxu0 0.0
    %7577 = vmatpush.xpose.msra.mxu0 0.0
    %7578 = vmatpush.xpose.msra.mxu0 0.0
    %7579 = vmatpush.xpose.msra.mxu0 0.0
    %7580 = vmatpush.xpose.msra.mxu0 0.0
    %7581 = vmatpush.xpose.msra.mxu0 0.0
    %7582 = vmatpush.xpose.msra.mxu0 0.0
    %7583 = vmatpush.xpose.msra.mxu0 0.0
    %7584 = vmatpush.xpose.msra.mxu0 0.0
    %7585 = vmatpush.xpose.msra.mxu0 0.0
    %7586 = vmatpush.xpose.msra.mxu0 0.0
    %7587 = vmatpush.xpose.msra.mxu0 0.0
    %7588 = vmatpush.xpose.msra.mxu0 %v7571
    %7589 = vmatmul.f32.gmra.mxu0 %v7568
    %v7590 = vpop.f32.mrf.mxu0
    %v7591 = vadd.f32 0.0, %v7590
    %7592 = vdwg.mxu0
    %v7594 = vsel %vm1103, %v7466, 0
    %v7597 = vsel %vm1103, %v7516, 0
    %7599 = vmatpush.xpose.msra.mxu0 0.0
    %7600 = vmatpush.xpose.msra.mxu0 0.0
    %7601 = vmatpush.xpose.msra.mxu0 0.0
    %7602 = vmatpush.xpose.msra.mxu0 0.0
    %7603 = vmatpush.xpose.msra.mxu0 0.0
    %7604 = vmatpush.xpose.msra.mxu0 0.0
    %7605 = vmatpush.xpose.msra.mxu0 0.0
    %7606 = vmatpush.xpose.msra.mxu0 0.0
    %7607 = vmatpush.xpose.msra.mxu0 0.0
    %7608 = vmatpush.xpose.msra.mxu0 0.0
    %7609 = vmatpush.xpose.msra.mxu0 0.0
    %7610 = vmatpush.xpose.msra.mxu0 0.0
    %7611 = vmatpush.xpose.msra.mxu0 0.0
    %7612 = vmatpush.xpose.msra.mxu0 0.0
    %7613 = vmatpush.xpose.msra.mxu0 0.0
    %7614 = vmatpush.xpose.msra.mxu0 %v7597
    %7615 = vmatmul.f32.gmra.mxu0 %v7594
    %v7616 = vpop.f32.mrf.mxu0
    %v7617 = vadd.f32 0.0, %v7616
    %7618 = vdwg.mxu0
    %v7619 = vmul.f32 %v7591, 0.25
    %v7620 = vmul.f32 %v7617, 0.25
    %v7621 = vsel %vm556, %v7619, -inf
    %7622 = vmax.xlane.f32.xlu0 %v7621
    %v7623 = vpop.xlane.xlu0 %7622
    %v7624 = vsel %vm556, %v7620, -inf
    %7625 = vmax.xlane.f32.xlu0 %v7624
    %v7626 = vpop.xlane.xlu0 %7625
    %v7627 = vsub.f32 %v7619, %v7623
    %v7628 = vsub.f32 %v7620, %v7626
    %v7629 = vmul.f32 %v7627, 1.442695
    %v7630 = vpow.pop %v7629
    %v7631 = vmul.f32 %v7628, 1.442695
    %v7632 = vpow.pop %v7631
    %v7633 = vsel %vm556, %v7630, 0.0
    %7634 = vadd.xlane.f32.xlu0 %v7633
    %v7635 = vpop.xlane.xlu0 %7634
    %v7636 = vsel %vm556, %v7632, 0.0
    %7637 = vadd.xlane.f32.xlu0 %v7636
    %v7638 = vpop.xlane.xlu0 %7637
    %v7639 = vrcp.pop %v7635
    %v7640 = vmul.f32 %v7635, %v7639
    %v7641 = vsub.f32 1.0, %v7640
    %v7642 = vmul.f32 %v7639, %v7641
    %v7643 = vadd.f32 %v7639, %v7642
    %vm7644 = vweird.f32 %v7635
    %vm7645 = vweird.f32 %v7639
    %vm7646 = vmor %vm7644, %vm7645
    %v7647 = vsel %vm7646, %v7639, %v7643
    %v7648 = vand.u32 2147483647, %v7635
    %vm7649 = vcmp.eq.f32.partialorder %v7648, 8.507059e+37
    %v7650 = vand.u32 %v7635, 2147483648
    %v7651 = vor.u32 1.1754944e-38, %v7650
    %v7652 = vsel %vm7649, %v7651, %v7647
    %v7653 = vmul.f32 %v7630, %v7652
    %v7654 = vrcp.pop %v7638
    %v7655 = vmul.f32 %v7638, %v7654
    %v7656 = vsub.f32 1.0, %v7655
    %v7657 = vmul.f32 %v7654, %v7656
    %v7658 = vadd.f32 %v7654, %v7657
    %vm7659 = vweird.f32 %v7638
    %vm7660 = vweird.f32 %v7654
    %vm7661 = vmor %vm7659, %vm7660
    %v7662 = vsel %vm7661, %v7654, %v7658
    %v7663 = vand.u32 2147483647, %v7638
    %vm7664 = vcmp.eq.f32.partialorder %v7663, 8.507059e+37
    %v7665 = vand.u32 %v7638, 2147483648
    %v7666 = vor.u32 1.1754944e-38, %v7665
    %v7667 = vsel %vm7664, %v7666, %v7662
    %v7668 = vmul.f32 %v7632, %v7667
    %v7670 = vsel %vm660, %v7653, 0
    %v7673 = vsel %vm663, %v7564, 0
    %7675 = vmatpush.msra.mxu0 0.0
    %7676 = vmatpush.msra.mxu0 0.0
    %7677 = vmatpush.msra.mxu0 0.0
    %7678 = vmatpush.msra.mxu0 0.0
    %7679 = vmatpush.msra.mxu0 0.0
    %7680 = vmatpush.msra.mxu0 0.0
    %7681 = vmatpush.msra.mxu0 0.0
    %7682 = vmatpush.msra.mxu0 0.0
    %7683 = vmatpush.msra.mxu0 0.0
    %7684 = vmatpush.msra.mxu0 0.0
    %7685 = vmatpush.msra.mxu0 0.0
    %7686 = vmatpush.msra.mxu0 0.0
    %7687 = vmatpush.msra.mxu0 0.0
    %7688 = vmatpush.msra.mxu0 0.0
    %7689 = vmatpush.msra.mxu0 0.0
    %7690 = vmatpush.msra.mxu0 %v7673
    %7691 = vmatmul.f32.gmra.mxu0 %v7670
    %v7692 = vpop.f32.mrf.mxu0
    %v7693 = vadd.f32 0.0, %v7692
    %7694 = vdwg.mxu0
    %v7696 = vsel %vm660, %v7668, 0
    %v7699 = vsel %vm663, %v7566, 0
    %7701 = vmatpush.msra.mxu0 0.0
    %7702 = vmatpush.msra.mxu0 0.0
    %7703 = vmatpush.msra.mxu0 0.0
    %7704 = vmatpush.msra.mxu0 0.0
    %7705 = vmatpush.msra.mxu0 0.0
    %7706 = vmatpush.msra.mxu0 0.0
    %7707 = vmatpush.msra.mxu0 0.0
    %7708 = vmatpush.msra.mxu0 0.0
    %7709 = vmatpush.msra.mxu0 0.0
    %7710 = vmatpush.msra.mxu0 0.0
    %7711 = vmatpush.msra.mxu0 0.0
    %7712 = vmatpush.msra.mxu0 0.0
    %7713 = vmatpush.msra.mxu0 0.0
    %7714 = vmatpush.msra.mxu0 0.0
    %7715 = vmatpush.msra.mxu0 0.0
    %7716 = vmatpush.msra.mxu0 %v7699
    %7717 = vmatmul.f32.gmra.mxu0 %v7696
    %v7718 = vpop.f32.mrf.mxu0
    %v7719 = vadd.f32 0.0, %v7718
    %7720 = vdwg.mxu0
    %v7722 = vunpack.c.l.s4 1983009808
    %v7723 = vunpack.c.0.s8 %v7722
    %v7724 = vperm.slane %v7693, %v7723
    %v7726 = vunpack.c.l.s4 1983009808
    %v7727 = vunpack.c.0.s8 %v7726
    %v7728 = vperm.slane %v7719, %v7727
    %v7729 = vrot.slane %v7728, 4
    %v7730 = vsel %vm983, %v7729, %v7724
    %v7731 = vrot.slane %v7724, 4
    %v7732 = vsel %vm983, %v7728, %v7731
    %v7734 = vunpack.c.l.s4 1934713408
    %v7735 = vunpack.c.0.s8 %v7734
    %v7736 = vperm.slane %v7730, %v7735
    %v7738 = vunpack.c.l.s4 1934713408
    %v7739 = vunpack.c.0.s8 %v7738
    %v7740 = vperm.slane %v7732, %v7739
    %v7741 = vrot.slane %v7736, 4
    %v7742 = vsel %vm983, 0.0, %v7741
    %v7743 = vrot.slane %v7740, 4
    %v7744 = vsel %vm983, 0.0, %v7743
    %7746 = vrot.lane.b32.xlu0 %v7742, 32
    %v7747 = vpop.permute.xlu0 %7746
    %7750 = vrot.lane.b32.xlu0 %v7740, 64
    %v7751 = vpop.permute.xlu0 %7750
    %7754 = vrot.lane.b32.xlu0 %v7744, 96
    %v7755 = vpop.permute.xlu0 %7754
    %v7757 = vsel %vm1294, %v7736, %v7747
    %v7758 = vsel %vm805, %v7757, %v7751
    %v7759 = vsel %vm1297, %v7758, %v7755
    %7760 = vmatpush.msra.mxu0 %v474
    %7761 = vmatpush.msra.mxu0 %v473
    %7762 = vmatpush.msra.mxu0 %v472
    %7763 = vmatpush.msra.mxu0 %v471
    %7764 = vmatpush.msra.mxu0 %v470
    %7765 = vmatpush.msra.mxu0 %v469
    %7766 = vmatpush.msra.mxu0 %v468
    %7767 = vmatpush.msra.mxu0 %v467
    %7768 = vmatpush.msra.mxu0 %v466
    %7769 = vmatpush.msra.mxu0 %v465
    %7770 = vmatpush.msra.mxu0 %v464
    %7771 = vmatpush.msra.mxu0 %v463
    %7772 = vmatpush.msra.mxu0 %v462
    %7773 = vmatpush.msra.mxu0 %v461
    %7774 = vmatpush.msra.mxu0 %v460
    %7775 = vmatpush.msra.mxu0 %v459
    %7776 = vmatmul.f32.gmra.mxu0 %v7759
    %v7777 = vpop.f32.mrf.mxu0
    %v7778 = vadd.f32 0.0, %v7777
    %7779 = vdwg.mxu0
    %7780 = vmatpush.msra.mxu0 %v458
    %7781 = vmatpush.msra.mxu0 %v457
    %7782 = vmatpush.msra.mxu0 %v456
    %7783 = vmatpush.msra.mxu0 %v455
    %7784 = vmatpush.msra.mxu0 %v454
    %7785 = vmatpush.msra.mxu0 %v453
    %7786 = vmatpush.msra.mxu0 %v452
    %7787 = vmatpush.msra.mxu0 %v451
    %7788 = vmatpush.msra.mxu0 %v450
    %7789 = vmatpush.msra.mxu0 %v449
    %7790 = vmatpush.msra.mxu0 %v448
    %7791 = vmatpush.msra.mxu0 %v447
    %7792 = vmatpush.msra.mxu0 %v446
    %7793 = vmatpush.msra.mxu0 %v445
    %7794 = vmatpush.msra.mxu0 %v444
    %7795 = vmatpush.msra.mxu0 %v443
    %7796 = vmatmul.f32.gmra.mxu0 %v7416
    %v7797 = vpop.f32.mrf.mxu0
    %v7798 = vadd.f32 %v7778, %v7797
    %7799 = vdwg.mxu0
    %v7800 = vadd.f32 %v7798, %v7073
    %v7803 = vperm.slane %v6716, %v540
    %v7804 = vperm.slane %v6717, %v540
    %v7805 = vsel %vm658, %v7804, %v7803
    %v7806 = vsel %vm660, %v7805, 0
    %7808 = vmatpush.msra.mxu0 0.0
    %7809 = vmatpush.msra.mxu0 0.0
    %7810 = vmatpush.msra.mxu0 0.0
    %7811 = vmatpush.msra.mxu0 0.0
    %7812 = vmatpush.msra.mxu0 0.0
    %7813 = vmatpush.msra.mxu0 0.0
    %7814 = vmatpush.msra.mxu0 0.0
    %7815 = vmatpush.msra.mxu0 0.0
    %7816 = vmatpush.msra.mxu0 0.0
    %7817 = vmatpush.msra.mxu0 0.0
    %7818 = vmatpush.msra.mxu0 0.0
    %7819 = vmatpush.msra.mxu0 0.0
    %7820 = vmatpush.msra.mxu0 0.0
    %7821 = vmatpush.msra.mxu0 0.0
    %7822 = vmatpush.msra.mxu0 0.0
    %7823 = vmatpush.msra.mxu0 %v1691
    %7824 = vmatmul.f32.gmra.mxu0 %v7806
    %v7825 = vpop.f32.mrf.mxu0
    %v7826 = vadd.f32 0.0, %v7825
    %7827 = vdwg.mxu0
    %v7828 = vmul.f32 %v7826, %v7800
    %v7829 = vsub.f32 1.0, %v7826
    %v7830 = vmul.f32 %v7829, %v6605
    %v7831 = vadd.f32 %v7828, %v7830
    %v7832 = vmul.f32 %v7826, %v7071
    %v7833 = vmul.f32 %v7829, %v6608
    %v7834 = vadd.f32 %v7832, %v7833
    %v7835 = vrot.slane %v157, 4
    %v7837 = vmul.f32 %v7831, %v7835
    %v7838 = vrot.slane %v185, 4
    %7840 = vmatpush.msra.mxu0 %v247
    %7841 = vmatpush.msra.mxu0 %v246
    %7842 = vmatpush.msra.mxu0 %v245
    %7843 = vmatpush.msra.mxu0 %v244
    %7844 = vmatpush.msra.mxu0 %v243
    %7845 = vmatpush.msra.mxu0 %v242
    %7846 = vmatpush.msra.mxu0 %v241
    %7847 = vmatpush.msra.mxu0 %v240
    %7848 = vmatpush.msra.mxu0 %v239
    %7849 = vmatpush.msra.mxu0 %v238
    %7850 = vmatpush.msra.mxu0 %v237
    %7851 = vmatpush.msra.mxu0 %v236
    %7852 = vmatpush.msra.mxu0 %v235
    %7853 = vmatpush.msra.mxu0 %v234
    %7854 = vmatpush.msra.mxu0 %v233
    %7855 = vmatpush.msra.mxu0 %v232
    %7856 = vmatmul.f32.gmra.mxu0 %v7837
    %v7857 = vpop.f32.mrf.mxu0
    %v7858 = vadd.f32 %v7838, %v7857
    %7859 = vdwg.mxu0
    %7860 = vmatpush.msra.mxu0 %v230
    %7861 = vmatpush.msra.mxu0 %v229
    %7862 = vmatpush.msra.mxu0 %v228
    %7863 = vmatpush.msra.mxu0 %v227
    %7864 = vmatpush.msra.mxu0 %v226
    %7865 = vmatpush.msra.mxu0 %v225
    %7866 = vmatpush.msra.mxu0 %v224
    %7867 = vmatpush.msra.mxu0 %v223
    %7868 = vmatpush.msra.mxu0 %v222
    %7869 = vmatpush.msra.mxu0 %v221
    %7870 = vmatpush.msra.mxu0 %v220
    %7871 = vmatpush.msra.mxu0 %v219
    %7872 = vmatpush.msra.mxu0 %v218
    %7873 = vmatpush.msra.mxu0 %v217
    %7874 = vmatpush.msra.mxu0 %v216
    %7875 = vmatpush.msra.mxu0 %v215
    %7876 = vmatmul.f32.gmra.mxu0 %v7831
    %v7877 = vpop.f32.mrf.mxu0
    %v7878 = vadd.f32 %v499, %v7877
    %7879 = vdwg.mxu0
    %v7880 = vperm.slane %v7858, 0
    %v7881 = vlaneseq
    %v7882 = vshrl.u32 %v7881, 7
    %7884 = vset.pattern.permute.xlu0 %v7882
    %7885 = vperm.xlu0 %7884, %v7880
    %v7886 = vpop.permute.xlu0 %7885
    %v7887 = vperm.slane %v7858, 1
    %v7888 = vlaneseq
    %v7889 = vshrl.u32 %v7888, 7
    %7891 = vset.pattern.permute.xlu0 %v7889
    %7892 = vperm.xlu0 %7891, %v7887
    %v7893 = vpop.permute.xlu0 %7892
    %v7895 = vrot.slane %v7858, 1
    %v7896 = vperm.slane %v7858, 0
    %v7897 = vperm.slane %v7895, 0
    %vm7900 = vcmp.gt.f32.partialorder %v7896, %v7886
    %vm7901 = vcmp.gt.f32.partialorder %v7897, %v7893
    %vm7902 = vcmp.eq.f32.partialorder %v7896, %v7886
    %vm7903 = vcmp.eq.f32.partialorder %v7897, %v7893
    %vm7904 = vmand %vm7902, %vm549
    %vm7905 = vmand %vm7903, %vm549
    %vm7906 = vmor %vm7900, %vm7904
    %vm7907 = vmor %vm7901, %vm7905
    %v7908 = vsel %vm7906, 1, 0
    %v7909 = vsel %vm7907, 1, 0
    %v7910 = vsel %vm556, %v7908, 0
    %v7911 = vand.u32 %v7910, 65535
    %v7912 = vshrl.u32 %v7910, 16
    %v7913 = vcvt.s32.f32 %v7911
    %v7914 = vcvt.s32.f32 %v7912
    %7915 = vadd.xlane.f32.xlu0 %v7913
    %v7916 = vpop.xlane.xlu0 %7915
    %7917 = vadd.xlane.f32.xlu0 %v7914
    %v7918 = vpop.xlane.xlu0 %7917
    %v7919 = vcvt.f32.s32 %v7916
    %v7920 = vcvt.f32.s32 %v7918
    %v7921 = vshll.u32 %v7920, 16
    %v7922 = vadd.s32 %v7921, %v7919
    %v7923 = vsel %vm556, %v7909, 0
    %v7924 = vand.u32 %v7923, 65535
    %v7925 = vshrl.u32 %v7923, 16
    %v7926 = vcvt.s32.f32 %v7924
    %v7927 = vcvt.s32.f32 %v7925
    %7928 = vadd.xlane.f32.xlu0 %v7926
    %v7929 = vpop.xlane.xlu0 %7928
    %7930 = vadd.xlane.f32.xlu0 %v7927
    %v7931 = vpop.xlane.xlu0 %7930
    %v7932 = vcvt.f32.s32 %v7929
    %v7933 = vcvt.f32.s32 %v7931
    %v7934 = vshll.u32 %v7933, 16
    %v7935 = vadd.s32 %v7934, %v7932
    %vm7936 = vcmp.lt.s32.totalorder %v7922, 2
    %vm7937 = vcmp.lt.s32.totalorder %v7935, 2
    %v7938 = vsel %vm7936, 1, 0
    %v7939 = vsel %vm7937, 1, 0
    %v7940 = vcvt.s32.f32 %v7938
    %v7941 = vcvt.s32.f32 %v7939
    %v7942 = vsub.f32 %v7858, %v7878
    %v7943 = vxor.u32 %v7942, 2147483648
    %v7944 = vmul.f32 %v7943, 1.442695
    %v7945 = vpow.pop %v7944
    %v7946 = vadd.f32 %v7945, 1.0
    %v7947 = vrcp.pop %v7946
    %v7948 = vmul.f32 %v7946, %v7947
    %v7949 = vsub.f32 1.0, %v7948
    %v7950 = vmul.f32 %v7947, %v7949
    %v7951 = vadd.f32 %v7947, %v7950
    %vm7952 = vweird.f32 %v7946
    %vm7953 = vweird.f32 %v7947
    %vm7954 = vmor %vm7952, %vm7953
    %v7955 = vsel %vm7954, %v7947, %v7951
    %v7956 = vand.u32 2147483647, %v7946
    %vm7957 = vcmp.eq.f32.partialorder %v7956, 8.507059e+37
    %v7958 = vand.u32 %v7946, 2147483648
    %v7959 = vor.u32 1.1754944e-38, %v7958
    %v7960 = vsel %vm7957, %v7959, %v7955
    %v7961 = vmul.f32 1.0, %v7960
    %v7963 = vperm.slane %v7961, 0
    %v7964 = vlaneseq
    %v7965 = vshrl.u32 %v7964, 7
    %7967 = vset.pattern.permute.xlu0 %v7965
    %7968 = vperm.xlu0 %7967, %v7963
    %v7969 = vpop.permute.xlu0 %7968
    %v7970 = vperm.slane %v7961, 1
    %v7971 = vlaneseq
    %v7972 = vshrl.u32 %v7971, 7
    %7974 = vset.pattern.permute.xlu0 %v7972
    %7975 = vperm.xlu0 %7974, %v7970
    %v7976 = vpop.permute.xlu0 %7975
    %v7979 = vmul.f32 %v7940, %v7969
    %v7980 = vmul.f32 %v7941, %v7976
    %v7981 = vsub.f32 1.0, %v7961
    %v7983 = vperm.slane %v7981, 0
    %v7984 = vlaneseq
    %v7985 = vshrl.u32 %v7984, 7
    %7987 = vset.pattern.permute.xlu0 %v7985
    %7988 = vperm.xlu0 %7987, %v7983
    %v7989 = vpop.permute.xlu0 %7988
    %v7990 = vperm.slane %v7981, 1
    %v7991 = vlaneseq
    %v7992 = vshrl.u32 %v7991, 7
    %7994 = vset.pattern.permute.xlu0 %v7992
    %7995 = vperm.xlu0 %7994, %v7990
    %v7996 = vpop.permute.xlu0 %7995
    %v7999 = vmul.f32 %v7940, %v7989
    %v8000 = vmul.f32 %v7941, %v7996
    %8003 = vset.pattern.permute.xlu0 0
    %8004 = vperm.xlu0 %8003, %v7979
    %v8005 = vpop.permute.xlu0 %8004
    %8006 = vset.pattern.permute.xlu0 0
    %8007 = vperm.xlu0 %8006, %v7980
    %v8008 = vpop.permute.xlu0 %8007
    %v8009 = vperm.slane %v8005, %v540
    %v8010 = vperm.slane %v8008, %v540
    %v8011 = vsel %vm658, %v8010, %v8009
    %v8012 = vsel %vm660, %v8011, 0
    %8014 = vmatpush.msra.mxu0 0.0
    %8015 = vmatpush.msra.mxu0 0.0
    %8016 = vmatpush.msra.mxu0 0.0
    %8017 = vmatpush.msra.mxu0 0.0
    %8018 = vmatpush.msra.mxu0 0.0
    %8019 = vmatpush.msra.mxu0 0.0
    %8020 = vmatpush.msra.mxu0 0.0
    %8021 = vmatpush.msra.mxu0 0.0
    %8022 = vmatpush.msra.mxu0 0.0
    %8023 = vmatpush.msra.mxu0 0.0
    %8024 = vmatpush.msra.mxu0 0.0
    %8025 = vmatpush.msra.mxu0 0.0
    %8026 = vmatpush.msra.mxu0 0.0
    %8027 = vmatpush.msra.mxu0 0.0
    %8028 = vmatpush.msra.mxu0 0.0
    %8029 = vmatpush.msra.mxu0 %v665
    %8030 = vmatmul.f32.gmra.mxu0 %v8012
    %v8031 = vpop.f32.mrf.mxu0
    %v8032 = vadd.f32 0.0, %v8031
    %8033 = vdwg.mxu0
    %v8034 = vrot.slane %v213, 4
    %v8036 = vmul.f32 %v8032, %v8034
    %8039 = vset.pattern.permute.xlu0 0
    %8040 = vperm.xlu0 %8039, %v7999
    %v8041 = vpop.permute.xlu0 %8040
    %8042 = vset.pattern.permute.xlu0 0
    %8043 = vperm.xlu0 %8042, %v8000
    %v8044 = vpop.permute.xlu0 %8043
    %v8045 = vperm.slane %v8041, %v540
    %v8046 = vperm.slane %v8044, %v540
    %v8047 = vsel %vm658, %v8046, %v8045
    %v8048 = vsel %vm660, %v8047, 0
    %8050 = vmatpush.msra.mxu0 0.0
    %8051 = vmatpush.msra.mxu0 0.0
    %8052 = vmatpush.msra.mxu0 0.0
    %8053 = vmatpush.msra.mxu0 0.0
    %8054 = vmatpush.msra.mxu0 0.0
    %8055 = vmatpush.msra.mxu0 0.0
    %8056 = vmatpush.msra.mxu0 0.0
    %8057 = vmatpush.msra.mxu0 0.0
    %8058 = vmatpush.msra.mxu0 0.0
    %8059 = vmatpush.msra.mxu0 0.0
    %8060 = vmatpush.msra.mxu0 0.0
    %8061 = vmatpush.msra.mxu0 0.0
    %8062 = vmatpush.msra.mxu0 0.0
    %8063 = vmatpush.msra.mxu0 0.0
    %8064 = vmatpush.msra.mxu0 0.0
    %8065 = vmatpush.msra.mxu0 %v702
    %8066 = vmatmul.f32.gmra.mxu0 %v8048
    %v8067 = vpop.f32.mrf.mxu0
    %v8068 = vadd.f32 0.0, %v8067
    %8069 = vdwg.mxu0
    %v8070 = vadd.f32 %v8036, %v8068
    %8071 = vmatpush.msra.mxu0 %v343
    %8072 = vmatpush.msra.mxu0 %v339
    %8073 = vmatpush.msra.mxu0 %v335
    %8074 = vmatpush.msra.mxu0 %v331
    %8075 = vmatpush.msra.mxu0 %v327
    %8076 = vmatpush.msra.mxu0 %v323
    %8077 = vmatpush.msra.mxu0 %v319
    %8078 = vmatpush.msra.mxu0 %v315
    %8079 = vmatpush.msra.mxu0 %v311
    %8080 = vmatpush.msra.mxu0 %v307
    %8081 = vmatpush.msra.mxu0 %v303
    %8082 = vmatpush.msra.mxu0 %v299
    %8083 = vmatpush.msra.mxu0 %v295
    %8084 = vmatpush.msra.mxu0 %v291
    %8085 = vmatpush.msra.mxu0 %v287
    %8086 = vmatpush.msra.mxu0 %v283
    %8087 = vmatmul.f32.gmra.mxu0 %v7831
    %v8088 = vpop.f32.mrf.mxu0
    %v8089 = vadd.f32 0.0, %v8088
    %8090 = vdwg.mxu0
    %8091 = vmatpush.msra.mxu0 %v344
    %8092 = vmatpush.msra.mxu0 %v340
    %8093 = vmatpush.msra.mxu0 %v336
    %8094 = vmatpush.msra.mxu0 %v332
    %8095 = vmatpush.msra.mxu0 %v328
    %8096 = vmatpush.msra.mxu0 %v324
    %8097 = vmatpush.msra.mxu0 %v320
    %8098 = vmatpush.msra.mxu0 %v316
    %8099 = vmatpush.msra.mxu0 %v312
    %8100 = vmatpush.msra.mxu0 %v308
    %8101 = vmatpush.msra.mxu0 %v304
    %8102 = vmatpush.msra.mxu0 %v300
    %8103 = vmatpush.msra.mxu0 %v296
    %8104 = vmatpush.msra.mxu0 %v292
    %8105 = vmatpush.msra.mxu0 %v288
    %8106 = vmatpush.msra.mxu0 %v284
    %8107 = vmatmul.f32.gmra.mxu0 %v7831
    %v8108 = vpop.f32.mrf.mxu0
    %v8109 = vadd.f32 0.0, %v8108
    %8110 = vdwg.mxu0
    %8111 = vmatpush.msra.mxu0 %v345
    %8112 = vmatpush.msra.mxu0 %v341
    %8113 = vmatpush.msra.mxu0 %v337
    %8114 = vmatpush.msra.mxu0 %v333
    %8115 = vmatpush.msra.mxu0 %v329
    %8116 = vmatpush.msra.mxu0 %v325
    %8117 = vmatpush.msra.mxu0 %v321
    %8118 = vmatpush.msra.mxu0 %v317
    %8119 = vmatpush.msra.mxu0 %v313
    %8120 = vmatpush.msra.mxu0 %v309
    %8121 = vmatpush.msra.mxu0 %v305
    %8122 = vmatpush.msra.mxu0 %v301
    %8123 = vmatpush.msra.mxu0 %v297
    %8124 = vmatpush.msra.mxu0 %v293
    %8125 = vmatpush.msra.mxu0 %v289
    %8126 = vmatpush.msra.mxu0 %v285
    %8127 = vmatmul.f32.gmra.mxu0 %v7831
    %v8128 = vpop.f32.mrf.mxu0
    %v8129 = vadd.f32 0.0, %v8128
    %8130 = vdwg.mxu0
    %8131 = vmatpush.msra.mxu0 %v346
    %8132 = vmatpush.msra.mxu0 %v342
    %8133 = vmatpush.msra.mxu0 %v338
    %8134 = vmatpush.msra.mxu0 %v334
    %8135 = vmatpush.msra.mxu0 %v330
    %8136 = vmatpush.msra.mxu0 %v326
    %8137 = vmatpush.msra.mxu0 %v322
    %8138 = vmatpush.msra.mxu0 %v318
    %8139 = vmatpush.msra.mxu0 %v314
    %8140 = vmatpush.msra.mxu0 %v310
    %8141 = vmatpush.msra.mxu0 %v306
    %8142 = vmatpush.msra.mxu0 %v302
    %8143 = vmatpush.msra.mxu0 %v298
    %8144 = vmatpush.msra.mxu0 %v294
    %8145 = vmatpush.msra.mxu0 %v290
    %8146 = vmatpush.msra.mxu0 %v286
    %8147 = vmatmul.f32.gmra.mxu0 %v7831
    %v8148 = vpop.f32.mrf.mxu0
    %v8149 = vadd.f32 0.0, %v8148
    %8150 = vdwg.mxu0
    %v8152 = vsel %vm805, %v8070, 0
    %8154 = vmatpush.msra.mxu0 0.0
    %8155 = vmatpush.msra.mxu0 0.0
    %8156 = vmatpush.msra.mxu0 0.0
    %8157 = vmatpush.msra.mxu0 0.0
    %8158 = vmatpush.msra.mxu0 0.0
    %8159 = vmatpush.msra.mxu0 0.0
    %8160 = vmatpush.msra.mxu0 0.0
    %8161 = vmatpush.msra.mxu0 0.0
    %8162 = vmatpush.msra.mxu0 %v279
    %8163 = vmatpush.msra.mxu0 %v275
    %8164 = vmatpush.msra.mxu0 %v271
    %8165 = vmatpush.msra.mxu0 %v267
    %8166 = vmatpush.msra.mxu0 %v263
    %8167 = vmatpush.msra.mxu0 %v259
    %8168 = vmatpush.msra.mxu0 %v255
    %8169 = vmatpush.msra.mxu0 %v251
    %8170 = vmatmul.f32.gmra.mxu0 %v8152
    %v8171 = vpop.f32.mrf.mxu0
    %v8172 = vadd.f32 %v8089, %v8171
    %8173 = vdwg.mxu0
    %8174 = vmatpush.msra.mxu0 0.0
    %8175 = vmatpush.msra.mxu0 0.0
    %8176 = vmatpush.msra.mxu0 0.0
    %8177 = vmatpush.msra.mxu0 0.0
    %8178 = vmatpush.msra.mxu0 0.0
    %8179 = vmatpush.msra.mxu0 0.0
    %8180 = vmatpush.msra.mxu0 0.0
    %8181 = vmatpush.msra.mxu0 0.0
    %8182 = vmatpush.msra.mxu0 %v280
    %8183 = vmatpush.msra.mxu0 %v276
    %8184 = vmatpush.msra.mxu0 %v272
    %8185 = vmatpush.msra.mxu0 %v268
    %8186 = vmatpush.msra.mxu0 %v264
    %8187 = vmatpush.msra.mxu0 %v260
    %8188 = vmatpush.msra.mxu0 %v256
    %8189 = vmatpush.msra.mxu0 %v252
    %8190 = vmatmul.f32.gmra.mxu0 %v8152
    %v8191 = vpop.f32.mrf.mxu0
    %v8192 = vadd.f32 %v8109, %v8191
    %8193 = vdwg.mxu0
    %8194 = vmatpush.msra.mxu0 0.0
    %8195 = vmatpush.msra.mxu0 0.0
    %8196 = vmatpush.msra.mxu0 0.0
    %8197 = vmatpush.msra.mxu0 0.0
    %8198 = vmatpush.msra.mxu0 0.0
    %8199 = vmatpush.msra.mxu0 0.0
    %8200 = vmatpush.msra.mxu0 0.0
    %8201 = vmatpush.msra.mxu0 0.0
    %8202 = vmatpush.msra.mxu0 %v281
    %8203 = vmatpush.msra.mxu0 %v277
    %8204 = vmatpush.msra.mxu0 %v273
    %8205 = vmatpush.msra.mxu0 %v269
    %8206 = vmatpush.msra.mxu0 %v265
    %8207 = vmatpush.msra.mxu0 %v261
    %8208 = vmatpush.msra.mxu0 %v257
    %8209 = vmatpush.msra.mxu0 %v253
    %8210 = vmatmul.f32.gmra.mxu0 %v8152
    %v8211 = vpop.f32.mrf.mxu0
    %v8212 = vadd.f32 %v8129, %v8211
    %8213 = vdwg.mxu0
    %8214 = vmatpush.msra.mxu0 0.0
    %8215 = vmatpush.msra.mxu0 0.0
    %8216 = vmatpush.msra.mxu0 0.0
    %8217 = vmatpush.msra.mxu0 0.0
    %8218 = vmatpush.msra.mxu0 0.0
    %8219 = vmatpush.msra.mxu0 0.0
    %8220 = vmatpush.msra.mxu0 0.0
    %8221 = vmatpush.msra.mxu0 0.0
    %8222 = vmatpush.msra.mxu0 %v282
    %8223 = vmatpush.msra.mxu0 %v278
    %8224 = vmatpush.msra.mxu0 %v274
    %8225 = vmatpush.msra.mxu0 %v270
    %8226 = vmatpush.msra.mxu0 %v266
    %8227 = vmatpush.msra.mxu0 %v262
    %8228 = vmatpush.msra.mxu0 %v258
    %8229 = vmatpush.msra.mxu0 %v254
    %8230 = vmatmul.f32.gmra.mxu0 %v8152
    %v8231 = vpop.f32.mrf.mxu0
    %v8232 = vadd.f32 %v8149, %v8231
    %8233 = vdwg.mxu0
    %v8234 = vxor.u32 %v8172, 2147483648
    %v8235 = vmul.f32 %v8234, 1.442695
    %v8236 = vpow.pop %v8235
    %v8237 = vadd.f32 %v8236, 1.0
    %v8238 = vrcp.pop %v8237
    %v8239 = vmul.f32 %v8237, %v8238
    %v8240 = vsub.f32 1.0, %v8239
    %v8241 = vmul.f32 %v8238, %v8240
    %v8242 = vadd.f32 %v8238, %v8241
    %vm8243 = vweird.f32 %v8237
    %vm8244 = vweird.f32 %v8238
    %vm8245 = vmor %vm8243, %vm8244
    %v8246 = vsel %vm8245, %v8238, %v8242
    %v8247 = vand.u32 2147483647, %v8237
    %vm8248 = vcmp.eq.f32.partialorder %v8247, 8.507059e+37
    %v8249 = vand.u32 %v8237, 2147483648
    %v8250 = vor.u32 1.1754944e-38, %v8249
    %v8251 = vsel %vm8248, %v8250, %v8246
    %v8252 = vmul.f32 1.0, %v8251
    %v8253 = vxor.u32 %v8192, 2147483648
    %v8254 = vmul.f32 %v8253, 1.442695
    %v8255 = vpow.pop %v8254
    %v8256 = vadd.f32 %v8255, 1.0
    %v8257 = vrcp.pop %v8256
    %v8258 = vmul.f32 %v8256, %v8257
    %v8259 = vsub.f32 1.0, %v8258
    %v8260 = vmul.f32 %v8257, %v8259
    %v8261 = vadd.f32 %v8257, %v8260
    %vm8262 = vweird.f32 %v8256
    %vm8263 = vweird.f32 %v8257
    %vm8264 = vmor %vm8262, %vm8263
    %v8265 = vsel %vm8264, %v8257, %v8261
    %v8266 = vand.u32 2147483647, %v8256
    %vm8267 = vcmp.eq.f32.partialorder %v8266, 8.507059e+37
    %v8268 = vand.u32 %v8256, 2147483648
    %v8269 = vor.u32 1.1754944e-38, %v8268
    %v8270 = vsel %vm8267, %v8269, %v8265
    %v8271 = vmul.f32 1.0, %v8270
    %v8272 = vxor.u32 %v8212, 2147483648
    %v8273 = vmul.f32 %v8272, 1.442695
    %v8274 = vpow.pop %v8273
    %v8275 = vadd.f32 %v8274, 1.0
    %v8276 = vrcp.pop %v8275
    %v8277 = vmul.f32 %v8275, %v8276
    %v8278 = vsub.f32 1.0, %v8277
    %v8279 = vmul.f32 %v8276, %v8278
    %v8280 = vadd.f32 %v8276, %v8279
    %vm8281 = vweird.f32 %v8275
    %vm8282 = vweird.f32 %v8276
    %vm8283 = vmor %vm8281, %vm8282
    %v8284 = vsel %vm8283, %v8276, %v8280
    %v8285 = vand.u32 2147483647, %v8275
    %vm8286 = vcmp.eq.f32.partialorder %v8285, 8.507059e+37
    %v8287 = vand.u32 %v8275, 2147483648
    %v8288 = vor.u32 1.1754944e-38, %v8287
    %v8289 = vsel %vm8286, %v8288, %v8284
    %v8290 = vmul.f32 1.0, %v8289
    %v8291 = vtanh.pop %v8232
    %v8292 = vmul.f32 %v7834, %v8271
    %v8293 = vmul.f32 %v8252, %v8291
    %v8294 = vadd.f32 %v8292, %v8293
    %v8295 = vtanh.pop %v8294
    %v8296 = vmul.f32 %v8290, %v8295
    %8297 = vmatpush.msra.mxu0 %v362
    %8298 = vmatpush.msra.mxu0 %v361
    %8299 = vmatpush.msra.mxu0 %v360
    %8300 = vmatpush.msra.mxu0 %v359
    %8301 = vmatpush.msra.mxu0 %v358
    %8302 = vmatpush.msra.mxu0 %v357
    %8303 = vmatpush.msra.mxu0 %v356
    %8304 = vmatpush.msra.mxu0 %v355
    %8305 = vmatpush.msra.mxu0 %v354
    %8306 = vmatpush.msra.mxu0 %v353
    %8307 = vmatpush.msra.mxu0 %v352
    %8308 = vmatpush.msra.mxu0 %v351
    %8309 = vmatpush.msra.mxu0 %v350
    %8310 = vmatpush.msra.mxu0 %v349
    %8311 = vmatpush.msra.mxu0 %v348
    %8312 = vmatpush.msra.mxu0 %v347
    %8313 = vmatmul.f32.gmra.mxu0 %v8296
    %v8314 = vpop.f32.mrf.mxu0
    %v8315 = vadd.f32 0.0, %v8314
    %8316 = vdwg.mxu0
    %8318 = vrot.lane.b32.xlu0 %v8315, 112
    %v8319 = vpop.permute.xlu0 %8318
    %8321 = vrot.lane.b32.xlu0 %v8315, 96
    %v8322 = vpop.permute.xlu0 %8321
    %8324 = vrot.lane.b32.xlu0 %v8315, 80
    %v8325 = vpop.permute.xlu0 %8324
    %v8327 = vrot.slane %v8322, 4
    %v8328 = vsel %vm983, %v8327, %v8315
    %v8330 = vunpack.c.l.s4 1983009808
    %v8331 = vunpack.c.0.s8 %v8330
    %v8332 = vperm.slane %v8328, %v8331
    %v8333 = vrot.slane %v8325, 4
    %v8334 = vsel %vm983, %v8333, %v8319
    %v8336 = vunpack.c.l.s4 1983009808
    %v8337 = vunpack.c.0.s8 %v8336
    %v8338 = vperm.slane %v8334, %v8337
    %v8339 = vrot.slane %v8338, 4
    %v8340 = vsel %vm983, %v8339, %v8332
    %v8342 = vunpack.c.l.s4 1934713408
    %v8343 = vunpack.c.0.s8 %v8342
    %v8344 = vperm.slane %v8340, %v8343
    %v8345 = vrot.slane %v8344, 4
    %v8346 = vsel %vm983, 0.0, %v8345
    %8347 = vmatpush.msra.mxu0 %v394
    %8348 = vmatpush.msra.mxu0 %v393
    %8349 = vmatpush.msra.mxu0 %v392
    %8350 = vmatpush.msra.mxu0 %v391
    %8351 = vmatpush.msra.mxu0 %v390
    %8352 = vmatpush.msra.mxu0 %v389
    %8353 = vmatpush.msra.mxu0 %v388
    %8354 = vmatpush.msra.mxu0 %v387
    %8355 = vmatpush.msra.mxu0 %v386
    %8356 = vmatpush.msra.mxu0 %v385
    %8357 = vmatpush.msra.mxu0 %v384
    %8358 = vmatpush.msra.mxu0 %v383
    %8359 = vmatpush.msra.mxu0 %v382
    %8360 = vmatpush.msra.mxu0 %v381
    %8361 = vmatpush.msra.mxu0 %v380
    %8362 = vmatpush.msra.mxu0 %v379
    %8363 = vmatmul.f32.gmra.mxu0 %v8296
    %v8364 = vpop.f32.mrf.mxu0
    %v8365 = vadd.f32 0.0, %v8364
    %8366 = vdwg.mxu0
    %8368 = vrot.lane.b32.xlu0 %v8365, 112
    %v8369 = vpop.permute.xlu0 %8368
    %8371 = vrot.lane.b32.xlu0 %v8365, 96
    %v8372 = vpop.permute.xlu0 %8371
    %8374 = vrot.lane.b32.xlu0 %v8365, 80
    %v8375 = vpop.permute.xlu0 %8374
    %v8377 = vrot.slane %v8372, 4
    %v8378 = vsel %vm983, %v8377, %v8365
    %v8380 = vunpack.c.l.s4 1983009808
    %v8381 = vunpack.c.0.s8 %v8380
    %v8382 = vperm.slane %v8378, %v8381
    %v8383 = vrot.slane %v8375, 4
    %v8384 = vsel %vm983, %v8383, %v8369
    %v8386 = vunpack.c.l.s4 1983009808
    %v8387 = vunpack.c.0.s8 %v8386
    %v8388 = vperm.slane %v8384, %v8387
    %v8389 = vrot.slane %v8388, 4
    %v8390 = vsel %vm983, %v8389, %v8382
    %v8392 = vunpack.c.l.s4 1934713408
    %v8393 = vunpack.c.0.s8 %v8392
    %v8394 = vperm.slane %v8390, %v8393
    %v8395 = vrot.slane %v8394, 4
    %v8396 = vsel %vm983, 0.0, %v8395
    %8397 = vmatpush.msra.mxu0 %v426
    %8398 = vmatpush.msra.mxu0 %v425
    %8399 = vmatpush.msra.mxu0 %v424
    %8400 = vmatpush.msra.mxu0 %v423
    %8401 = vmatpush.msra.mxu0 %v422
    %8402 = vmatpush.msra.mxu0 %v421
    %8403 = vmatpush.msra.mxu0 %v420
    %8404 = vmatpush.msra.mxu0 %v419
    %8405 = vmatpush.msra.mxu0 %v418
    %8406 = vmatpush.msra.mxu0 %v417
    %8407 = vmatpush.msra.mxu0 %v416
    %8408 = vmatpush.msra.mxu0 %v415
    %8409 = vmatpush.msra.mxu0 %v414
    %8410 = vmatpush.msra.mxu0 %v413
    %8411 = vmatpush.msra.mxu0 %v412
    %8412 = vmatpush.msra.mxu0 %v411
    %8413 = vmatmul.f32.gmra.mxu0 %v8296
    %v8414 = vpop.f32.mrf.mxu0
    %v8415 = vadd.f32 0.0, %v8414
    %8416 = vdwg.mxu0
    %8418 = vrot.lane.b32.xlu0 %v8415, 96
    %v8419 = vpop.permute.xlu0 %8418
    %8421 = vrot.lane.b32.xlu0 %v8415, 64
    %v8422 = vpop.permute.xlu0 %8421
    %8424 = vrot.lane.b32.xlu0 %v8415, 32
    %v8425 = vpop.permute.xlu0 %8424
    %v8427 = vrot.slane %v8422, 4
    %v8428 = vsel %vm983, %v8427, %v8415
    %v8430 = vunpack.c.l.s4 1983009808
    %v8431 = vunpack.c.0.s8 %v8430
    %v8432 = vperm.slane %v8428, %v8431
    %v8433 = vrot.slane %v8425, 4
    %v8434 = vsel %vm983, %v8433, %v8419
    %v8436 = vunpack.c.l.s4 1983009808
    %v8437 = vunpack.c.0.s8 %v8436
    %v8438 = vperm.slane %v8434, %v8437
    %v8439 = vrot.slane %v8438, 4
    %v8440 = vsel %vm983, %v8439, %v8432
    %v8442 = vunpack.c.l.s4 1934713408
    %v8443 = vunpack.c.0.s8 %v8442
    %v8444 = vperm.slane %v8440, %v8443
    %v8445 = vrot.slane %v8444, 4
    %v8446 = vsel %vm983, 0.0, %v8445
    %v8448 = vsel %vm1103, %v8344, 0
    %v8451 = vsel %vm1103, %v8394, 0
    %8453 = vmatpush.xpose.msra.mxu0 0.0
    %8454 = vmatpush.xpose.msra.mxu0 0.0
    %8455 = vmatpush.xpose.msra.mxu0 0.0
    %8456 = vmatpush.xpose.msra.mxu0 0.0
    %8457 = vmatpush.xpose.msra.mxu0 0.0
    %8458 = vmatpush.xpose.msra.mxu0 0.0
    %8459 = vmatpush.xpose.msra.mxu0 0.0
    %8460 = vmatpush.xpose.msra.mxu0 0.0
    %8461 = vmatpush.xpose.msra.mxu0 0.0
    %8462 = vmatpush.xpose.msra.mxu0 0.0
    %8463 = vmatpush.xpose.msra.mxu0 0.0
    %8464 = vmatpush.xpose.msra.mxu0 0.0
    %8465 = vmatpush.xpose.msra.mxu0 0.0
    %8466 = vmatpush.xpose.msra.mxu0 0.0
    %8467 = vmatpush.xpose.msra.mxu0 0.0
    %8468 = vmatpush.xpose.msra.mxu0 %v8451
    %8469 = vmatmul.f32.gmra.mxu0 %v8448
    %v8470 = vpop.f32.mrf.mxu0
    %v8471 = vadd.f32 0.0, %v8470
    %8472 = vdwg.mxu0
    %v8474 = vsel %vm1103, %v8346, 0
    %v8477 = vsel %vm1103, %v8396, 0
    %8479 = vmatpush.xpose.msra.mxu0 0.0
    %8480 = vmatpush.xpose.msra.mxu0 0.0
    %8481 = vmatpush.xpose.msra.mxu0 0.0
    %8482 = vmatpush.xpose.msra.mxu0 0.0
    %8483 = vmatpush.xpose.msra.mxu0 0.0
    %8484 = vmatpush.xpose.msra.mxu0 0.0
    %8485 = vmatpush.xpose.msra.mxu0 0.0
    %8486 = vmatpush.xpose.msra.mxu0 0.0
    %8487 = vmatpush.xpose.msra.mxu0 0.0
    %8488 = vmatpush.xpose.msra.mxu0 0.0
    %8489 = vmatpush.xpose.msra.mxu0 0.0
    %8490 = vmatpush.xpose.msra.mxu0 0.0
    %8491 = vmatpush.xpose.msra.mxu0 0.0
    %8492 = vmatpush.xpose.msra.mxu0 0.0
    %8493 = vmatpush.xpose.msra.mxu0 0.0
    %8494 = vmatpush.xpose.msra.mxu0 %v8477
    %8495 = vmatmul.f32.gmra.mxu0 %v8474
    %v8496 = vpop.f32.mrf.mxu0
    %v8497 = vadd.f32 0.0, %v8496
    %8498 = vdwg.mxu0
    %v8499 = vmul.f32 %v8471, 0.25
    %v8500 = vmul.f32 %v8497, 0.25
    %v8501 = vsel %vm556, %v8499, -inf
    %8502 = vmax.xlane.f32.xlu0 %v8501
    %v8503 = vpop.xlane.xlu0 %8502
    %v8504 = vsel %vm556, %v8500, -inf
    %8505 = vmax.xlane.f32.xlu0 %v8504
    %v8506 = vpop.xlane.xlu0 %8505
    %v8507 = vsub.f32 %v8499, %v8503
    %v8508 = vsub.f32 %v8500, %v8506
    %v8509 = vmul.f32 %v8507, 1.442695
    %v8510 = vpow.pop %v8509
    %v8511 = vmul.f32 %v8508, 1.442695
    %v8512 = vpow.pop %v8511
    %v8513 = vsel %vm556, %v8510, 0.0
    %8514 = vadd.xlane.f32.xlu0 %v8513
    %v8515 = vpop.xlane.xlu0 %8514
    %v8516 = vsel %vm556, %v8512, 0.0
    %8517 = vadd.xlane.f32.xlu0 %v8516
    %v8518 = vpop.xlane.xlu0 %8517
    %v8519 = vrcp.pop %v8515
    %v8520 = vmul.f32 %v8515, %v8519
    %v8521 = vsub.f32 1.0, %v8520
    %v8522 = vmul.f32 %v8519, %v8521
    %v8523 = vadd.f32 %v8519, %v8522
    %vm8524 = vweird.f32 %v8515
    %vm8525 = vweird.f32 %v8519
    %vm8526 = vmor %vm8524, %vm8525
    %v8527 = vsel %vm8526, %v8519, %v8523
    %v8528 = vand.u32 2147483647, %v8515
    %vm8529 = vcmp.eq.f32.partialorder %v8528, 8.507059e+37
    %v8530 = vand.u32 %v8515, 2147483648
    %v8531 = vor.u32 1.1754944e-38, %v8530
    %v8532 = vsel %vm8529, %v8531, %v8527
    %v8533 = vmul.f32 %v8510, %v8532
    %v8534 = vrcp.pop %v8518
    %v8535 = vmul.f32 %v8518, %v8534
    %v8536 = vsub.f32 1.0, %v8535
    %v8537 = vmul.f32 %v8534, %v8536
    %v8538 = vadd.f32 %v8534, %v8537
    %vm8539 = vweird.f32 %v8518
    %vm8540 = vweird.f32 %v8534
    %vm8541 = vmor %vm8539, %vm8540
    %v8542 = vsel %vm8541, %v8534, %v8538
    %v8543 = vand.u32 2147483647, %v8518
    %vm8544 = vcmp.eq.f32.partialorder %v8543, 8.507059e+37
    %v8545 = vand.u32 %v8518, 2147483648
    %v8546 = vor.u32 1.1754944e-38, %v8545
    %v8547 = vsel %vm8544, %v8546, %v8542
    %v8548 = vmul.f32 %v8512, %v8547
    %v8550 = vsel %vm660, %v8533, 0
    %v8553 = vsel %vm663, %v8444, 0
    %8555 = vmatpush.msra.mxu0 0.0
    %8556 = vmatpush.msra.mxu0 0.0
    %8557 = vmatpush.msra.mxu0 0.0
    %8558 = vmatpush.msra.mxu0 0.0
    %8559 = vmatpush.msra.mxu0 0.0
    %8560 = vmatpush.msra.mxu0 0.0
    %8561 = vmatpush.msra.mxu0 0.0
    %8562 = vmatpush.msra.mxu0 0.0
    %8563 = vmatpush.msra.mxu0 0.0
    %8564 = vmatpush.msra.mxu0 0.0
    %8565 = vmatpush.msra.mxu0 0.0
    %8566 = vmatpush.msra.mxu0 0.0
    %8567 = vmatpush.msra.mxu0 0.0
    %8568 = vmatpush.msra.mxu0 0.0
    %8569 = vmatpush.msra.mxu0 0.0
    %8570 = vmatpush.msra.mxu0 %v8553
    %8571 = vmatmul.f32.gmra.mxu0 %v8550
    %v8572 = vpop.f32.mrf.mxu0
    %v8573 = vadd.f32 0.0, %v8572
    %8574 = vdwg.mxu0
    %v8576 = vsel %vm660, %v8548, 0
    %v8579 = vsel %vm663, %v8446, 0
    %8581 = vmatpush.msra.mxu0 0.0
    %8582 = vmatpush.msra.mxu0 0.0
    %8583 = vmatpush.msra.mxu0 0.0
    %8584 = vmatpush.msra.mxu0 0.0
    %8585 = vmatpush.msra.mxu0 0.0
    %8586 = vmatpush.msra.mxu0 0.0
    %8587 = vmatpush.msra.mxu0 0.0
    %8588 = vmatpush.msra.mxu0 0.0
    %8589 = vmatpush.msra.mxu0 0.0
    %8590 = vmatpush.msra.mxu0 0.0
    %8591 = vmatpush.msra.mxu0 0.0
    %8592 = vmatpush.msra.mxu0 0.0
    %8593 = vmatpush.msra.mxu0 0.0
    %8594 = vmatpush.msra.mxu0 0.0
    %8595 = vmatpush.msra.mxu0 0.0
    %8596 = vmatpush.msra.mxu0 %v8579
    %8597 = vmatmul.f32.gmra.mxu0 %v8576
    %v8598 = vpop.f32.mrf.mxu0
    %v8599 = vadd.f32 0.0, %v8598
    %8600 = vdwg.mxu0
    %v8602 = vunpack.c.l.s4 1983009808
    %v8603 = vunpack.c.0.s8 %v8602
    %v8604 = vperm.slane %v8573, %v8603
    %v8606 = vunpack.c.l.s4 1983009808
    %v8607 = vunpack.c.0.s8 %v8606
    %v8608 = vperm.slane %v8599, %v8607
    %v8609 = vrot.slane %v8608, 4
    %v8610 = vsel %vm983, %v8609, %v8604
    %v8611 = vrot.slane %v8604, 4
    %v8612 = vsel %vm983, %v8608, %v8611
    %v8614 = vunpack.c.l.s4 1934713408
    %v8615 = vunpack.c.0.s8 %v8614
    %v8616 = vperm.slane %v8610, %v8615
    %v8618 = vunpack.c.l.s4 1934713408
    %v8619 = vunpack.c.0.s8 %v8618
    %v8620 = vperm.slane %v8612, %v8619
    %v8621 = vrot.slane %v8616, 4
    %v8622 = vsel %vm983, 0.0, %v8621
    %v8623 = vrot.slane %v8620, 4
    %v8624 = vsel %vm983, 0.0, %v8623
    %8626 = vrot.lane.b32.xlu0 %v8622, 32
    %v8627 = vpop.permute.xlu0 %8626
    %8630 = vrot.lane.b32.xlu0 %v8620, 64
    %v8631 = vpop.permute.xlu0 %8630
    %8634 = vrot.lane.b32.xlu0 %v8624, 96
    %v8635 = vpop.permute.xlu0 %8634
    %v8637 = vsel %vm1294, %v8616, %v8627
    %v8638 = vsel %vm805, %v8637, %v8631
    %v8639 = vsel %vm1297, %v8638, %v8635
    %8640 = vmatpush.msra.mxu0 %v378
    %8641 = vmatpush.msra.mxu0 %v377
    %8642 = vmatpush.msra.mxu0 %v376
    %8643 = vmatpush.msra.mxu0 %v375
    %8644 = vmatpush.msra.mxu0 %v374
    %8645 = vmatpush.msra.mxu0 %v373
    %8646 = vmatpush.msra.mxu0 %v372
    %8647 = vmatpush.msra.mxu0 %v371
    %8648 = vmatpush.msra.mxu0 %v370
    %8649 = vmatpush.msra.mxu0 %v369
    %8650 = vmatpush.msra.mxu0 %v368
    %8651 = vmatpush.msra.mxu0 %v367
    %8652 = vmatpush.msra.mxu0 %v366
    %8653 = vmatpush.msra.mxu0 %v365
    %8654 = vmatpush.msra.mxu0 %v364
    %8655 = vmatpush.msra.mxu0 %v363
    %8656 = vmatmul.f32.gmra.mxu0 %v8296
    %v8657 = vpop.f32.mrf.mxu0
    %v8658 = vadd.f32 0.0, %v8657
    %8659 = vdwg.mxu0
    %8661 = vrot.lane.b32.xlu0 %v8658, 112
    %v8662 = vpop.permute.xlu0 %8661
    %8664 = vrot.lane.b32.xlu0 %v8658, 96
    %v8665 = vpop.permute.xlu0 %8664
    %8667 = vrot.lane.b32.xlu0 %v8658, 80
    %v8668 = vpop.permute.xlu0 %8667
    %v8670 = vrot.slane %v8665, 4
    %v8671 = vsel %vm983, %v8670, %v8658
    %v8673 = vunpack.c.l.s4 1983009808
    %v8674 = vunpack.c.0.s8 %v8673
    %v8675 = vperm.slane %v8671, %v8674
    %v8676 = vrot.slane %v8668, 4
    %v8677 = vsel %vm983, %v8676, %v8662
    %v8679 = vunpack.c.l.s4 1983009808
    %v8680 = vunpack.c.0.s8 %v8679
    %v8681 = vperm.slane %v8677, %v8680
    %v8682 = vrot.slane %v8681, 4
    %v8683 = vsel %vm983, %v8682, %v8675
    %v8685 = vunpack.c.l.s4 1934713408
    %v8686 = vunpack.c.0.s8 %v8685
    %v8687 = vperm.slane %v8683, %v8686
    %v8688 = vrot.slane %v8687, 4
    %v8689 = vsel %vm983, 0.0, %v8688
    %8690 = vmatpush.msra.mxu0 %v410
    %8691 = vmatpush.msra.mxu0 %v409
    %8692 = vmatpush.msra.mxu0 %v408
    %8693 = vmatpush.msra.mxu0 %v407
    %8694 = vmatpush.msra.mxu0 %v406
    %8695 = vmatpush.msra.mxu0 %v405
    %8696 = vmatpush.msra.mxu0 %v404
    %8697 = vmatpush.msra.mxu0 %v403
    %8698 = vmatpush.msra.mxu0 %v402
    %8699 = vmatpush.msra.mxu0 %v401
    %8700 = vmatpush.msra.mxu0 %v400
    %8701 = vmatpush.msra.mxu0 %v399
    %8702 = vmatpush.msra.mxu0 %v398
    %8703 = vmatpush.msra.mxu0 %v397
    %8704 = vmatpush.msra.mxu0 %v396
    %8705 = vmatpush.msra.mxu0 %v395
    %8706 = vmatmul.f32.gmra.mxu0 %v8296
    %v8707 = vpop.f32.mrf.mxu0
    %v8708 = vadd.f32 0.0, %v8707
    %8709 = vdwg.mxu0
    %8711 = vrot.lane.b32.xlu0 %v8708, 112
    %v8712 = vpop.permute.xlu0 %8711
    %8714 = vrot.lane.b32.xlu0 %v8708, 96
    %v8715 = vpop.permute.xlu0 %8714
    %8717 = vrot.lane.b32.xlu0 %v8708, 80
    %v8718 = vpop.permute.xlu0 %8717
    %v8720 = vrot.slane %v8715, 4
    %v8721 = vsel %vm983, %v8720, %v8708
    %v8723 = vunpack.c.l.s4 1983009808
    %v8724 = vunpack.c.0.s8 %v8723
    %v8725 = vperm.slane %v8721, %v8724
    %v8726 = vrot.slane %v8718, 4
    %v8727 = vsel %vm983, %v8726, %v8712
    %v8729 = vunpack.c.l.s4 1983009808
    %v8730 = vunpack.c.0.s8 %v8729
    %v8731 = vperm.slane %v8727, %v8730
    %v8732 = vrot.slane %v8731, 4
    %v8733 = vsel %vm983, %v8732, %v8725
    %v8735 = vunpack.c.l.s4 1934713408
    %v8736 = vunpack.c.0.s8 %v8735
    %v8737 = vperm.slane %v8733, %v8736
    %v8738 = vrot.slane %v8737, 4
    %v8739 = vsel %vm983, 0.0, %v8738
    %8740 = vmatpush.msra.mxu0 %v442
    %8741 = vmatpush.msra.mxu0 %v441
    %8742 = vmatpush.msra.mxu0 %v440
    %8743 = vmatpush.msra.mxu0 %v439
    %8744 = vmatpush.msra.mxu0 %v438
    %8745 = vmatpush.msra.mxu0 %v437
    %8746 = vmatpush.msra.mxu0 %v436
    %8747 = vmatpush.msra.mxu0 %v435
    %8748 = vmatpush.msra.mxu0 %v434
    %8749 = vmatpush.msra.mxu0 %v433
    %8750 = vmatpush.msra.mxu0 %v432
    %8751 = vmatpush.msra.mxu0 %v431
    %8752 = vmatpush.msra.mxu0 %v430
    %8753 = vmatpush.msra.mxu0 %v429
    %8754 = vmatpush.msra.mxu0 %v428
    %8755 = vmatpush.msra.mxu0 %v427
    %8756 = vmatmul.f32.gmra.mxu0 %v8296
    %v8757 = vpop.f32.mrf.mxu0
    %v8758 = vadd.f32 0.0, %v8757
    %8759 = vdwg.mxu0
    %8761 = vrot.lane.b32.xlu0 %v8758, 96
    %v8762 = vpop.permute.xlu0 %8761
    %8764 = vrot.lane.b32.xlu0 %v8758, 64
    %v8765 = vpop.permute.xlu0 %8764
    %8767 = vrot.lane.b32.xlu0 %v8758, 32
    %v8768 = vpop.permute.xlu0 %8767
    %v8770 = vrot.slane %v8765, 4
    %v8771 = vsel %vm983, %v8770, %v8758
    %v8773 = vunpack.c.l.s4 1983009808
    %v8774 = vunpack.c.0.s8 %v8773
    %v8775 = vperm.slane %v8771, %v8774
    %v8776 = vrot.slane %v8768, 4
    %v8777 = vsel %vm983, %v8776, %v8762
    %v8779 = vunpack.c.l.s4 1983009808
    %v8780 = vunpack.c.0.s8 %v8779
    %v8781 = vperm.slane %v8777, %v8780
    %v8782 = vrot.slane %v8781, 4
    %v8783 = vsel %vm983, %v8782, %v8775
    %v8785 = vunpack.c.l.s4 1934713408
    %v8786 = vunpack.c.0.s8 %v8785
    %v8787 = vperm.slane %v8783, %v8786
    %v8788 = vrot.slane %v8787, 4
    %v8789 = vsel %vm983, 0.0, %v8788
    %v8791 = vsel %vm1103, %v8687, 0
    %v8794 = vsel %vm1103, %v8737, 0
    %8796 = vmatpush.xpose.msra.mxu0 0.0
    %8797 = vmatpush.xpose.msra.mxu0 0.0
    %8798 = vmatpush.xpose.msra.mxu0 0.0
    %8799 = vmatpush.xpose.msra.mxu0 0.0
    %8800 = vmatpush.xpose.msra.mxu0 0.0
    %8801 = vmatpush.xpose.msra.mxu0 0.0
    %8802 = vmatpush.xpose.msra.mxu0 0.0
    %8803 = vmatpush.xpose.msra.mxu0 0.0
    %8804 = vmatpush.xpose.msra.mxu0 0.0
    %8805 = vmatpush.xpose.msra.mxu0 0.0
    %8806 = vmatpush.xpose.msra.mxu0 0.0
    %8807 = vmatpush.xpose.msra.mxu0 0.0
    %8808 = vmatpush.xpose.msra.mxu0 0.0
    %8809 = vmatpush.xpose.msra.mxu0 0.0
    %8810 = vmatpush.xpose.msra.mxu0 0.0
    %8811 = vmatpush.xpose.msra.mxu0 %v8794
    %8812 = vmatmul.f32.gmra.mxu0 %v8791
    %v8813 = vpop.f32.mrf.mxu0
    %v8814 = vadd.f32 0.0, %v8813
    %8815 = vdwg.mxu0
    %v8817 = vsel %vm1103, %v8689, 0
    %v8820 = vsel %vm1103, %v8739, 0
    %8822 = vmatpush.xpose.msra.mxu0 0.0
    %8823 = vmatpush.xpose.msra.mxu0 0.0
    %8824 = vmatpush.xpose.msra.mxu0 0.0
    %8825 = vmatpush.xpose.msra.mxu0 0.0
    %8826 = vmatpush.xpose.msra.mxu0 0.0
    %8827 = vmatpush.xpose.msra.mxu0 0.0
    %8828 = vmatpush.xpose.msra.mxu0 0.0
    %8829 = vmatpush.xpose.msra.mxu0 0.0
    %8830 = vmatpush.xpose.msra.mxu0 0.0
    %8831 = vmatpush.xpose.msra.mxu0 0.0
    %8832 = vmatpush.xpose.msra.mxu0 0.0
    %8833 = vmatpush.xpose.msra.mxu0 0.0
    %8834 = vmatpush.xpose.msra.mxu0 0.0
    %8835 = vmatpush.xpose.msra.mxu0 0.0
    %8836 = vmatpush.xpose.msra.mxu0 0.0
    %8837 = vmatpush.xpose.msra.mxu0 %v8820
    %8838 = vmatmul.f32.gmra.mxu0 %v8817
    %v8839 = vpop.f32.mrf.mxu0
    %v8840 = vadd.f32 0.0, %v8839
    %8841 = vdwg.mxu0
    %v8842 = vmul.f32 %v8814, 0.25
    %v8843 = vmul.f32 %v8840, 0.25
    %v8844 = vsel %vm556, %v8842, -inf
    %8845 = vmax.xlane.f32.xlu0 %v8844
    %v8846 = vpop.xlane.xlu0 %8845
    %v8847 = vsel %vm556, %v8843, -inf
    %8848 = vmax.xlane.f32.xlu0 %v8847
    %v8849 = vpop.xlane.xlu0 %8848
    %v8850 = vsub.f32 %v8842, %v8846
    %v8851 = vsub.f32 %v8843, %v8849
    %v8852 = vmul.f32 %v8850, 1.442695
    %v8853 = vpow.pop %v8852
    %v8854 = vmul.f32 %v8851, 1.442695
    %v8855 = vpow.pop %v8854
    %v8856 = vsel %vm556, %v8853, 0.0
    %8857 = vadd.xlane.f32.xlu0 %v8856
    %v8858 = vpop.xlane.xlu0 %8857
    %v8859 = vsel %vm556, %v8855, 0.0
    %8860 = vadd.xlane.f32.xlu0 %v8859
    %v8861 = vpop.xlane.xlu0 %8860
    %v8862 = vrcp.pop %v8858
    %v8863 = vmul.f32 %v8858, %v8862
    %v8864 = vsub.f32 1.0, %v8863
    %v8865 = vmul.f32 %v8862, %v8864
    %v8866 = vadd.f32 %v8862, %v8865
    %vm8867 = vweird.f32 %v8858
    %vm8868 = vweird.f32 %v8862
    %vm8869 = vmor %vm8867, %vm8868
    %v8870 = vsel %vm8869, %v8862, %v8866
    %v8871 = vand.u32 2147483647, %v8858
    %vm8872 = vcmp.eq.f32.partialorder %v8871, 8.507059e+37
    %v8873 = vand.u32 %v8858, 2147483648
    %v8874 = vor.u32 1.1754944e-38, %v8873
    %v8875 = vsel %vm8872, %v8874, %v8870
    %v8876 = vmul.f32 %v8853, %v8875
    %v8877 = vrcp.pop %v8861
    %v8878 = vmul.f32 %v8861, %v8877
    %v8879 = vsub.f32 1.0, %v8878
    %v8880 = vmul.f32 %v8877, %v8879
    %v8881 = vadd.f32 %v8877, %v8880
    %vm8882 = vweird.f32 %v8861
    %vm8883 = vweird.f32 %v8877
    %vm8884 = vmor %vm8882, %vm8883
    %v8885 = vsel %vm8884, %v8877, %v8881
    %v8886 = vand.u32 2147483647, %v8861
    %vm8887 = vcmp.eq.f32.partialorder %v8886, 8.507059e+37
    %v8888 = vand.u32 %v8861, 2147483648
    %v8889 = vor.u32 1.1754944e-38, %v8888
    %v8890 = vsel %vm8887, %v8889, %v8885
    %v8891 = vmul.f32 %v8855, %v8890
    %v8893 = vsel %vm660, %v8876, 0
    %v8896 = vsel %vm663, %v8787, 0
    %8898 = vmatpush.msra.mxu0 0.0
    %8899 = vmatpush.msra.mxu0 0.0
    %8900 = vmatpush.msra.mxu0 0.0
    %8901 = vmatpush.msra.mxu0 0.0
    %8902 = vmatpush.msra.mxu0 0.0
    %8903 = vmatpush.msra.mxu0 0.0
    %8904 = vmatpush.msra.mxu0 0.0
    %8905 = vmatpush.msra.mxu0 0.0
    %8906 = vmatpush.msra.mxu0 0.0
    %8907 = vmatpush.msra.mxu0 0.0
    %8908 = vmatpush.msra.mxu0 0.0
    %8909 = vmatpush.msra.mxu0 0.0
    %8910 = vmatpush.msra.mxu0 0.0
    %8911 = vmatpush.msra.mxu0 0.0
    %8912 = vmatpush.msra.mxu0 0.0
    %8913 = vmatpush.msra.mxu0 %v8896
    %8914 = vmatmul.f32.gmra.mxu0 %v8893
    %v8915 = vpop.f32.mrf.mxu0
    %v8916 = vadd.f32 0.0, %v8915
    %8917 = vdwg.mxu0
    %v8919 = vsel %vm660, %v8891, 0
    %v8922 = vsel %vm663, %v8789, 0
    %8924 = vmatpush.msra.mxu0 0.0
    %8925 = vmatpush.msra.mxu0 0.0
    %8926 = vmatpush.msra.mxu0 0.0
    %8927 = vmatpush.msra.mxu0 0.0
    %8928 = vmatpush.msra.mxu0 0.0
    %8929 = vmatpush.msra.mxu0 0.0
    %8930 = vmatpush.msra.mxu0 0.0
    %8931 = vmatpush.msra.mxu0 0.0
    %8932 = vmatpush.msra.mxu0 0.0
    %8933 = vmatpush.msra.mxu0 0.0
    %8934 = vmatpush.msra.mxu0 0.0
    %8935 = vmatpush.msra.mxu0 0.0
    %8936 = vmatpush.msra.mxu0 0.0
    %8937 = vmatpush.msra.mxu0 0.0
    %8938 = vmatpush.msra.mxu0 0.0
    %8939 = vmatpush.msra.mxu0 %v8922
    %8940 = vmatmul.f32.gmra.mxu0 %v8919
    %v8941 = vpop.f32.mrf.mxu0
    %v8942 = vadd.f32 0.0, %v8941
    %8943 = vdwg.mxu0
    %v8945 = vunpack.c.l.s4 1983009808
    %v8946 = vunpack.c.0.s8 %v8945
    %v8947 = vperm.slane %v8916, %v8946
    %v8949 = vunpack.c.l.s4 1983009808
    %v8950 = vunpack.c.0.s8 %v8949
    %v8951 = vperm.slane %v8942, %v8950
    %v8952 = vrot.slane %v8951, 4
    %v8953 = vsel %vm983, %v8952, %v8947
    %v8954 = vrot.slane %v8947, 4
    %v8955 = vsel %vm983, %v8951, %v8954
    %v8957 = vunpack.c.l.s4 1934713408
    %v8958 = vunpack.c.0.s8 %v8957
    %v8959 = vperm.slane %v8953, %v8958
    %v8961 = vunpack.c.l.s4 1934713408
    %v8962 = vunpack.c.0.s8 %v8961
    %v8963 = vperm.slane %v8955, %v8962
    %v8964 = vrot.slane %v8959, 4
    %v8965 = vsel %vm983, 0.0, %v8964
    %v8966 = vrot.slane %v8963, 4
    %v8967 = vsel %vm983, 0.0, %v8966
    %8969 = vrot.lane.b32.xlu0 %v8965, 32
    %v8970 = vpop.permute.xlu0 %8969
    %8973 = vrot.lane.b32.xlu0 %v8963, 64
    %v8974 = vpop.permute.xlu0 %8973
    %8977 = vrot.lane.b32.xlu0 %v8967, 96
    %v8978 = vpop.permute.xlu0 %8977
    %v8980 = vsel %vm1294, %v8959, %v8970
    %v8981 = vsel %vm805, %v8980, %v8974
    %v8982 = vsel %vm1297, %v8981, %v8978
    %8983 = vmatpush.msra.mxu0 %v474
    %8984 = vmatpush.msra.mxu0 %v473
    %8985 = vmatpush.msra.mxu0 %v472
    %8986 = vmatpush.msra.mxu0 %v471
    %8987 = vmatpush.msra.mxu0 %v470
    %8988 = vmatpush.msra.mxu0 %v469
    %8989 = vmatpush.msra.mxu0 %v468
    %8990 = vmatpush.msra.mxu0 %v467
    %8991 = vmatpush.msra.mxu0 %v466
    %8992 = vmatpush.msra.mxu0 %v465
    %8993 = vmatpush.msra.mxu0 %v464
    %8994 = vmatpush.msra.mxu0 %v463
    %8995 = vmatpush.msra.mxu0 %v462
    %8996 = vmatpush.msra.mxu0 %v461
    %8997 = vmatpush.msra.mxu0 %v460
    %8998 = vmatpush.msra.mxu0 %v459
    %8999 = vmatmul.f32.gmra.mxu0 %v8982
    %v9000 = vpop.f32.mrf.mxu0
    %v9001 = vadd.f32 0.0, %v9000
    %9002 = vdwg.mxu0
    %9003 = vmatpush.msra.mxu0 %v458
    %9004 = vmatpush.msra.mxu0 %v457
    %9005 = vmatpush.msra.mxu0 %v456
    %9006 = vmatpush.msra.mxu0 %v455
    %9007 = vmatpush.msra.mxu0 %v454
    %9008 = vmatpush.msra.mxu0 %v453
    %9009 = vmatpush.msra.mxu0 %v452
    %9010 = vmatpush.msra.mxu0 %v451
    %9011 = vmatpush.msra.mxu0 %v450
    %9012 = vmatpush.msra.mxu0 %v449
    %9013 = vmatpush.msra.mxu0 %v448
    %9014 = vmatpush.msra.mxu0 %v447
    %9015 = vmatpush.msra.mxu0 %v446
    %9016 = vmatpush.msra.mxu0 %v445
    %9017 = vmatpush.msra.mxu0 %v444
    %9018 = vmatpush.msra.mxu0 %v443
    %9019 = vmatmul.f32.gmra.mxu0 %v8639
    %v9020 = vpop.f32.mrf.mxu0
    %v9021 = vadd.f32 %v9001, %v9020
    %9022 = vdwg.mxu0
    %v9023 = vadd.f32 %v9021, %v8296
    %v9026 = vperm.slane %v7940, %v540
    %v9027 = vperm.slane %v7941, %v540
    %v9028 = vsel %vm658, %v9027, %v9026
    %v9029 = vsel %vm660, %v9028, 0
    %9031 = vmatpush.msra.mxu0 0.0
    %9032 = vmatpush.msra.mxu0 0.0
    %9033 = vmatpush.msra.mxu0 0.0
    %9034 = vmatpush.msra.mxu0 0.0
    %9035 = vmatpush.msra.mxu0 0.0
    %9036 = vmatpush.msra.mxu0 0.0
    %9037 = vmatpush.msra.mxu0 0.0
    %9038 = vmatpush.msra.mxu0 0.0
    %9039 = vmatpush.msra.mxu0 0.0
    %9040 = vmatpush.msra.mxu0 0.0
    %9041 = vmatpush.msra.mxu0 0.0
    %9042 = vmatpush.msra.mxu0 0.0
    %9043 = vmatpush.msra.mxu0 0.0
    %9044 = vmatpush.msra.mxu0 0.0
    %9045 = vmatpush.msra.mxu0 0.0
    %9046 = vmatpush.msra.mxu0 %v1691
    %9047 = vmatmul.f32.gmra.mxu0 %v9029
    %v9048 = vpop.f32.mrf.mxu0
    %v9049 = vadd.f32 0.0, %v9048
    %9050 = vdwg.mxu0
    %v9051 = vmul.f32 %v9049, %v9023
    %v9052 = vsub.f32 1.0, %v9049
    %v9053 = vmul.f32 %v9052, %v7831
    %v9054 = vadd.f32 %v9051, %v9053
    %v9055 = vld [vmem:[#allocation7] sm:$0xff]
    %v9056 = vld [vmem:[#allocation7 + $0x8] sm:$0xff]
    %v9057 = vld [vmem:[#allocation7 + $0x10] sm:$0xff]
    %v9058 = vld [vmem:[#allocation7 + $0x18] sm:$0xff]
    %v9059 = vld [vmem:[#allocation7 + $0x20] sm:$0xff]
    %v9060 = vld [vmem:[#allocation7 + $0x28] sm:$0xff]
    %v9061 = vld [vmem:[#allocation7 + $0x30] sm:$0xff]
    %v9062 = vld [vmem:[#allocation7 + $0x38] sm:$0xff]
    %v9063 = vld [vmem:[#allocation7 + $0x40] sm:$0xff]
    %v9064 = vld [vmem:[#allocation7 + $0x48] sm:$0xff]
    %v9065 = vld [vmem:[#allocation7 + $0x50] sm:$0xff]
    %v9066 = vld [vmem:[#allocation7 + $0x58] sm:$0xff]
    %v9067 = vld [vmem:[#allocation7 + $0x60] sm:$0xff]
    %v9068 = vld [vmem:[#allocation7 + $0x68] sm:$0xff]
    %v9069 = vld [vmem:[#allocation7 + $0x70] sm:$0xff]
    %v9070 = vld [vmem:[#allocation7 + $0x78] sm:$0xff]
    %v9071 = vld [vmem:[%s22] sm:$0x1]
    %v9073 = vperm.slane %v9071, 0
    %9075 = vmatpush.msra.mxu0 %v9070
    %9076 = vmatpush.msra.mxu0 %v9069
    %9077 = vmatpush.msra.mxu0 %v9068
    %9078 = vmatpush.msra.mxu0 %v9067
    %9079 = vmatpush.msra.mxu0 %v9066
    %9080 = vmatpush.msra.mxu0 %v9065
    %9081 = vmatpush.msra.mxu0 %v9064
    %9082 = vmatpush.msra.mxu0 %v9063
    %9083 = vmatpush.msra.mxu0 %v9062
    %9084 = vmatpush.msra.mxu0 %v9061
    %9085 = vmatpush.msra.mxu0 %v9060
    %9086 = vmatpush.msra.mxu0 %v9059
    %9087 = vmatpush.msra.mxu0 %v9058
    %9088 = vmatpush.msra.mxu0 %v9057
    %9089 = vmatpush.msra.mxu0 %v9056
    %9090 = vmatpush.msra.mxu0 %v9055
    %9091 = vmatmul.f32.gmra.mxu0 %v9054
    %v9092 = vpop.f32.mrf.mxu0
    %v9093 = vadd.f32 %v9073, %v9092
    %9094 = vdwg.mxu0
    %9095 = vst [vmem:[#allocation8] sm:$0x3] %v9093
    // Predicated region
    $region106: #{mnist_forward.1} parent=1 // pred_check
      _
    $region107: #{mnist_forward.1} parent=1 // pred_check_branch
      %9097 = sbr.rel (0) target = $region109
    $region108: #{mnist_forward.1} parent=1 // pred_region
      %9099 = vsyncadd [#allocation4], 0
      %s9101 = sshll.u32 [#allocation8], 4
      %s9102 = int_to_ptr.vmem [resolvable:$true] %s9101
      %s9103 = sshll.u32 %s23, 4
      %s9104 = int_to_ptr.hbm [resolvable:$true] %s9103
      %9106 = dma.vmem_to_hbm [thread:$0]  %s9102, 32, %s9104, [#allocation4]
    $region109: #{mnist_forward.1} parent=1 // pred_fallthru
      _
    // Predicated region
    $region110: #{mnist_forward.1} parent=1 // pred_check
      _
    $region111: #{mnist_forward.1} parent=1 // pred_check_branch
      %9108 = sbr.rel (0) target = $region113
    $region112: #{mnist_forward.1} parent=1 // pred_region
      %9110 = dma.done [#allocation4], 32
    $region113: #{mnist_forward.1} parent=1 // pred_fallthru
      _
    %9111 = vsyncpa [#allocation3], 1
    %9112 = vsyncpa [#allocation6], 1
    %9113 = vsyncpa [#allocation4], 1

</llo_original>
